<compile_context>
chip_gen: v6e
topology: v6e:2x2x1
jax: 0.10.0
libtpu: 0.0.40
codegen_flags: <defaults>
</compile_context>

<pallas_src>
import functools
import math

import numpy as np

import jax
import jax.numpy as jnp
from jax.experimental import pallas as pl
from jax.experimental.pallas import tpu as pltpu


# ----------------------------- in-kernel helpers -----------------------------

def _layernorm(x, g, b, eps):
    mu = jnp.mean(x, axis=-1, keepdims=True)
    var = jnp.mean((x - mu) ** 2, axis=-1, keepdims=True)
    return (x - mu) * jax.lax.rsqrt(var + eps) * g + b


def _gelu(y):
    # TODO(synk): HF BERT uses erf-GELU; tanh approximation kept for robust
    # Mosaic lowering (~1e-3 numerical delta, weights are synthetic).
    c = math.sqrt(2.0 / math.pi)
    return 0.5 * y * (1.0 + jnp.tanh(c * (y + 0.044715 * y * y * y)))


# -------------------------------- fused kernel --------------------------------

def _acd_fused_kernel(
    ids_ref, mask_ref, wemb_ref, pos_ref, blk_ref, pk_ref, pv_ref,
    qkv_w_ref, qkv_b_ref, ao_w_ref, ao_b_ref,
    ln1_g_ref, ln1_b_ref, i_w_ref, i_b_ref,
    o_w_ref, o_b_ref, ln2_g_ref, ln2_b_ref,
    eln_g_ref, eln_b_ref, xq_w_ref, xq_b_ref,
    xkv_w_ref, xkv_b_ref, cls_w_ref, cls_b_ref,
    out_ref,
    *, B, S, H, nh, hd, pre, L, V, eps):

    f32 = jnp.float32
    bf16 = jnp.bfloat16
    scale = 1.0 / math.sqrt(hd)
    BS = B * S

    # ---------------- fused embeddings (one-hot gather + pos/type + LN) -------
    ids = ids_ref[...]                                              # (BS, 1) int32
    onehot = (jax.lax.broadcasted_iota(jnp.int32, (BS, V), 1) == ids).astype(f32)
    w_rows = jnp.dot(onehot, wemb_ref[...], preferred_element_type=f32)   # (BS, H)
    pos = pos_ref[...][pre:pre + S, :]          # (S, H): pos(pre..pre+S) + type0
    emb = w_rows + jnp.concatenate([pos] * B, axis=0)
    x = _layernorm(emb, eln_g_ref[...], eln_b_ref[...], eps)        # (BS, H) f32

    # additive mask bias for sequence keys (prefix keys always unmasked)
    bias = (1.0 - mask_ref[...].astype(f32)) * -10000.0             # (B, S)

    # ---------------- BERT encoder with prefix past K/V -----------------------
    hs = [x]                                    # hidden_states[0] = embedding output
    for l in range(L):
        qkv = jnp.dot(x.astype(bf16), qkv_w_ref[l],
                      preferred_element_type=f32) + qkv_b_ref[l]    # (BS, 3H)
        pk_l = pk_ref[l]                                             # (pre, H) bf16
        pv_l = pv_ref[l]
        ctx_rows = []
        for b in range(B):
            r0 = b * S
            bias_b = bias[b:b + 1, :]                                # (1, S)
            head_ctx = []
            for hh in range(nh):
                lo = hh * hd
                q = qkv[r0:r0 + S, lo:lo + hd].astype(bf16)          # (S, hd)
                k = qkv[r0:r0 + S, H + lo:H + lo + hd].astype(bf16)
                v = qkv[r0:r0 + S, 2 * H + lo:2 * H + lo + hd].astype(bf16)
                pk = pk_l[:, lo:lo + hd]                             # (pre, hd)
                pv = pv_l[:, lo:lo + hd]
                # joint softmax over [prefix keys | sequence keys] without concat
                s_pre = jnp.einsum('qd,kd->qk', q, pk,
                                   preferred_element_type=f32) * scale
                s_self = jnp.einsum('qd,kd->qk', q, k,
                                    preferred_element_type=f32) * scale + bias_b
                m = jnp.maximum(jnp.max(s_pre, axis=-1, keepdims=True),
                                jnp.max(s_self, axis=-1, keepdims=True))
                e_pre = jnp.exp(s_pre - m)
                e_self = jnp.exp(s_self - m)
                denom = (jnp.sum(e_pre, axis=-1, keepdims=True)
                         + jnp.sum(e_self, axis=-1, keepdims=True))
                ctx = (jnp.einsum('qk,kd->qd', e_pre.astype(bf16), pv,
                                  preferred_element_type=f32)
                       + jnp.einsum('qk,kd->qd', e_self.astype(bf16), v,
                                    preferred_element_type=f32))
                head_ctx.append(ctx * pl.reciprocal(denom, approx=True))
            ctx_rows.append(jnp.concatenate(head_ctx, axis=1))       # (S, H)
        ctx_all = jnp.concatenate(ctx_rows, axis=0)                  # (BS, H)
        attn = jnp.dot(ctx_all.astype(bf16), ao_w_ref[l],
                       preferred_element_type=f32) + ao_b_ref[l]
        x1 = _layernorm(attn + x, ln1_g_ref[l], ln1_b_ref[l], eps)
        inter = _gelu(jnp.dot(x1.astype(bf16), i_w_ref[l],
                              preferred_element_type=f32) + i_b_ref[l])
        ffo = jnp.dot(inter.astype(bf16), o_w_ref[l],
                      preferred_element_type=f32) + o_b_ref[l]
        x = _layernorm(ffo + x1, ln2_g_ref[l], ln2_b_ref[l], eps)
        hs.append(x)

    # ---------------- CLS features + batched cross-attention tail -------------
    cls2 = jnp.concatenate([hs[L][b * S:b * S + 1, :] for b in range(B)], axis=0)  # (B,H)
    prompts = jnp.concatenate(
        [hs[li][b * S:b * S + pre, :] for li in range(L + 1) for b in range(B)],
        axis=0)                                                      # (KT, H)

    q_cross = jnp.dot(cls2.astype(bf16), xq_w_ref[...],
                      preferred_element_type=f32) + xq_b_ref[...]    # (B, H)
    kv_all = jnp.dot(prompts.astype(bf16), xkv_w_ref[...],
                     preferred_element_type=f32) + xkv_b_ref[...]    # (KT, 2H)
    blk = blk_ref[...]                                               # (KT, KT) 0/1

    head_ctx = []
    for hh in range(nh):
        lo = hh * hd
        qh = q_cross[:, lo:lo + hd].astype(bf16)                     # (B, hd)
        kh = kv_all[:, lo:lo + hd].astype(bf16)                      # (KT, hd)
        vh = kv_all[:, H + lo:H + lo + hd].astype(bf16)
        s = jnp.einsum('qd,kd->qk', qh, kh,
                       preferred_element_type=f32) * scale           # (B, KT)
        # per-(layer, kv-batch) block softmax: a shared per-row max offset is
        # valid for every block; block sums come from one matmul with the
        # block-diagonal ones matrix.
        m = jnp.max(s, axis=-1, keepdims=True)
        e = jnp.exp(s - m)
        d = jnp.dot(e, blk, preferred_element_type=f32)              # block sums
        p = (e / d).astype(bf16)                                     # exact divide
        # p @ V over the concatenated key axis == sum over (layer,kv-batch) of
        # the per-block cross-attention contexts.
        head_ctx.append(jnp.einsum('qk,kd->qd', p, vh,
                                   preferred_element_type=f32))      # (B, hd)
    ctx_sum = jnp.concatenate(head_ctx, axis=1)                      # (B, H)

    feat = ctx_sum * (1.0 / float((L + 1) * B)) + cls2               # mean + residual
    logits = jnp.dot(feat.astype(bf16), cls_w_ref[...],
                     preferred_element_type=f32) + cls_b_ref[...]    # (B, C)

    # exact final softmax
    m = jnp.max(logits, axis=-1, keepdims=True)
    e = jnp.exp(logits - m)
    out_ref[...] = e / jnp.sum(e, axis=-1, keepdims=True)


# ------------------------------ config / params ------------------------------

class Config:
    vocab_size = 100
    hidden_size = 32
    num_attention_heads = 4
    num_hidden_layers = 2
    intermediate_size = 64
    max_position_embeddings = 64
    type_vocab_size = 2
    pre_seq_len = 4
    num_class = 3
    layer_norm_eps = 1e-12


def init_params(key, cfg):
    H, I = cfg.hidden_size, cfg.intermediate_size

    def nrm(k, shape, scale=0.02):
        return scale * jax.random.normal(k, shape, jnp.float32)

    keys = iter(jax.random.split(key, 128))
    p = {}
    # BERT embeddings
    p["word_emb"] = nrm(next(keys), (cfg.vocab_size, H))
    p["pos_emb"] = nrm(next(keys), (cfg.max_position_embeddings, H))
    p["type_emb"] = nrm(next(keys), (cfg.type_vocab_size, H))
    p["emb_ln_g"] = jnp.ones((H,), jnp.float32)
    p["emb_ln_b"] = jnp.zeros((H,), jnp.float32)
    # BERT encoder layers
    layers = []
    for _ in range(cfg.num_hidden_layers):
        lp = {
            "q_w": nrm(next(keys), (H, H)), "q_b": jnp.zeros((H,), jnp.float32),
            "k_w": nrm(next(keys), (H, H)), "k_b": jnp.zeros((H,), jnp.float32),
            "v_w": nrm(next(keys), (H, H)), "v_b": jnp.zeros((H,), jnp.float32),
            "ao_w": nrm(next(keys), (H, H)), "ao_b": jnp.zeros((H,), jnp.float32),
            "ln1_g": jnp.ones((H,), jnp.float32), "ln1_b": jnp.zeros((H,), jnp.float32),
            "i_w": nrm(next(keys), (H, I)), "i_b": jnp.zeros((I,), jnp.float32),
            "o_w": nrm(next(keys), (I, H)), "o_b": jnp.zeros((H,), jnp.float32),
            "ln2_g": jnp.ones((H,), jnp.float32), "ln2_b": jnp.zeros((H,), jnp.float32),
        }
        layers.append(lp)
    p["layers"] = layers
    # cross-attention (fresh BertSelfAttention, shared across layers)
    p["x_q_w"] = nrm(next(keys), (H, H)); p["x_q_b"] = jnp.zeros((H,), jnp.float32)
    p["x_k_w"] = nrm(next(keys), (H, H)); p["x_k_b"] = jnp.zeros((H,), jnp.float32)
    p["x_v_w"] = nrm(next(keys), (H, H)); p["x_v_b"] = jnp.zeros((H,), jnp.float32)
    # PrefixEncoder (embedding-only variant)
    p["prefix_emb"] = nrm(next(keys),
                          (cfg.pre_seq_len, cfg.num_hidden_layers * 2 * H))
    # classifier
    p["cls_w"] = nrm(next(keys), (H, cfg.num_class))
    p["cls_b"] = jnp.zeros((cfg.num_class,), jnp.float32)
    return p


def pack_params(params, cfg):
    """One-time weight packing (outside the jitted per-call path)."""
    H = cfg.hidden_size
    L = cfg.num_hidden_layers
    nh = cfg.num_attention_heads
    hd = H // nh
    pre = cfg.pre_seq_len
    bf16 = jnp.bfloat16
    lys = params["layers"]

    pk_raw = params["prefix_emb"].reshape(pre, L, 2, nh, hd)
    # lane-packed (L, pre, H): head hh occupies columns [hh*hd, (hh+1)*hd)
    pk = jnp.transpose(pk_raw[:, :, 0], (1, 0, 2, 3)).reshape(L, pre, H).astype(bf16)
    pv = jnp.transpose(pk_raw[:, :, 1], (1, 0, 2, 3)).reshape(L, pre, H).astype(bf16)

    packed = {
        "word_emb": params["word_emb"],                                    # (V, H) f32
        "pos_type": params["pos_emb"] + params["type_emb"][0][None],       # (maxP, H)
        "pk": pk, "pv": pv,
        "qkv_w": jnp.stack([jnp.concatenate([lp["q_w"], lp["k_w"], lp["v_w"]], axis=1)
                            for lp in lys]).astype(bf16),
        "qkv_b": jnp.stack([jnp.concatenate([lp["q_b"], lp["k_b"], lp["v_b"]])[None]
                            for lp in lys]),
        "ao_w": jnp.stack([lp["ao_w"] for lp in lys]).astype(bf16),
        "ao_b": jnp.stack([lp["ao_b"][None] for lp in lys]),
        "ln1_g": jnp.stack([lp["ln1_g"][None] for lp in lys]),
        "ln1_b": jnp.stack([lp["ln1_b"][None] for lp in lys]),
        "i_w": jnp.stack([lp["i_w"] for lp in lys]).astype(bf16),
        "i_b": jnp.stack([lp["i_b"][None] for lp in lys]),
        "o_w": jnp.stack([lp["o_w"] for lp in lys]).astype(bf16),
        "o_b": jnp.stack([lp["o_b"][None] for lp in lys]),
        "ln2_g": jnp.stack([lp["ln2_g"][None] for lp in lys]),
        "ln2_b": jnp.stack([lp["ln2_b"][None] for lp in lys]),
        "eln_g": params["emb_ln_g"][None], "eln_b": params["emb_ln_b"][None],
        "xq_w": params["x_q_w"].astype(bf16), "xq_b": params["x_q_b"][None],
        "xkv_w": jnp.concatenate([params["x_k_w"], params["x_v_w"]], axis=1).astype(bf16),
        "xkv_b": jnp.concatenate([params["x_k_b"], params["x_v_b"]])[None],
        "cls_w": params["cls_w"].astype(bf16), "cls_b": params["cls_b"][None],
    }
    return jax.tree_util.tree_map(jnp.asarray, packed)


# -------------------------------- forward pass --------------------------------

def acd_forward(packed, input_ids, attention_mask, *, cfg):
    B, S = input_ids.shape
    H = cfg.hidden_size
    nh = cfg.num_attention_heads
    hd = H // nh
    pre = cfg.pre_seq_len
    L = cfg.num_hidden_layers
    C = cfg.num_class
    V = cfg.vocab_size

    ids2 = input_ids.reshape(B * S, 1).astype(jnp.int32)
    mask = attention_mask.astype(jnp.int32)

    # block-diagonal ones matrix for per-(layer, kv-batch) cross-softmax sums
    # (static constant; no runtime compute)
    kt = (L + 1) * B * pre
    blk = np.kron(np.eye((L + 1) * B, dtype=np.float32),
                  np.ones((pre, pre), dtype=np.float32))

    operands = [
        ids2, mask, packed["word_emb"], packed["pos_type"], blk,
        packed["pk"], packed["pv"],
        packed["qkv_w"], packed["qkv_b"], packed["ao_w"], packed["ao_b"],
        packed["ln1_g"], packed["ln1_b"], packed["i_w"], packed["i_b"],
        packed["o_w"], packed["o_b"], packed["ln2_g"], packed["ln2_b"],
        packed["eln_g"], packed["eln_b"], packed["xq_w"], packed["xq_b"],
        packed["xkv_w"], packed["xkv_b"], packed["cls_w"], packed["cls_b"],
    ]

    def fullspec(shape):
        return pl.BlockSpec(tuple(shape), lambda i, _r=len(shape): (0,) * _r)

    kernel = functools.partial(
        _acd_fused_kernel, B=B, S=S, H=H, nh=nh, hd=hd, pre=pre, L=L, V=V,
        eps=cfg.layer_norm_eps)
    return pl.pallas_call(
        kernel,
        out_shape=jax.ShapeDtypeStruct((B, C), jnp.float32),
        grid=(1,),
        in_specs=[fullspec(jnp.shape(x)) for x in operands],
        out_specs=fullspec((B, C)),
        compiler_params=pltpu.CompilerParams(dimension_semantics=("arbitrary",)),
    )(*operands)


# ------------------------------------ main ------------------------------------

if __name__ == "__main__":
    cfg = Config()
    key = jax.random.PRNGKey(0)
    pkey, dkey = jax.random.split(key)
    params = init_params(pkey, cfg)
    packed = pack_params(params, cfg)          # one-time packing, outside jit

    B, S = 2, 8
    input_ids = jax.random.randint(dkey, (B, S), 0, cfg.vocab_size)
    attention_mask = jnp.ones((B, S), jnp.int32)

    fwd = jax.jit(functools.partial(acd_forward, cfg=cfg))
    out = fwd(packed, input_ids, attention_mask)
    jax.block_until_ready(out)

    assert out.shape == (B, cfg.num_class)
    assert bool(jnp.all(jnp.isfinite(out)))
    print("KERNEL_OK")
</pallas_src>

<mosaic_0001>
module attributes {stable_mosaic.version = 11 : i64} {
  func.func @_acd_fused_kernel(%arg0: i32, %arg1: memref<16x1xi32, #tpu.memory_space<vmem>>, %arg2: memref<2x8xi32, #tpu.memory_space<vmem>>, %arg3: memref<100x32xf32, #tpu.memory_space<vmem>>, %arg4: memref<64x32xf32, #tpu.memory_space<vmem>>, %arg5: memref<24x24xf32, #tpu.memory_space<vmem>>, %arg6: memref<2x4x32xbf16, #tpu.memory_space<vmem>>, %arg7: memref<2x4x32xbf16, #tpu.memory_space<vmem>>, %arg8: memref<2x32x96xbf16, #tpu.memory_space<vmem>>, %arg9: memref<2x1x96xf32, #tpu.memory_space<vmem>>, %arg10: memref<2x32x32xbf16, #tpu.memory_space<vmem>>, %arg11: memref<2x1x32xf32, #tpu.memory_space<vmem>>, %arg12: memref<2x1x32xf32, #tpu.memory_space<vmem>>, %arg13: memref<2x1x32xf32, #tpu.memory_space<vmem>>, %arg14: memref<2x32x64xbf16, #tpu.memory_space<vmem>>, %arg15: memref<2x1x64xf32, #tpu.memory_space<vmem>>, %arg16: memref<2x64x32xbf16, #tpu.memory_space<vmem>>, %arg17: memref<2x1x32xf32, #tpu.memory_space<vmem>>, %arg18: memref<2x1x32xf32, #tpu.memory_space<vmem>>, %arg19: memref<2x1x32xf32, #tpu.memory_space<vmem>>, %arg20: memref<1x32xf32, #tpu.memory_space<vmem>>, %arg21: memref<1x32xf32, #tpu.memory_space<vmem>>, %arg22: memref<32x32xbf16, #tpu.memory_space<vmem>>, %arg23: memref<1x32xf32, #tpu.memory_space<vmem>>, %arg24: memref<32x64xbf16, #tpu.memory_space<vmem>>, %arg25: memref<1x64xf32, #tpu.memory_space<vmem>>, %arg26: memref<32x3xbf16, #tpu.memory_space<vmem>>, %arg27: memref<1x3xf32, #tpu.memory_space<vmem>>, %arg28: memref<2x3xf32, #tpu.memory_space<vmem>>) attributes {dimension_semantics = [#tpu.dimension_semantics<arbitrary>], iteration_bounds = array<i64: 1>, scalar_prefetch = 0 : i64, scratch_operands = 0 : i64, tpu.core_type = #tpu.core_type<tc>, window_params = [{pipeline_mode = #tpu.pipeline_mode<synchronous>, transform_indices = @transform_0, window_bounds = array<i64: 16, 1>}, {pipeline_mode = #tpu.pipeline_mode<synchronous>, transform_indices = @transform_1, window_bounds = array<i64: 2, 8>}, {pipeline_mode = #tpu.pipeline_mode<synchronous>, transform_indices = @transform_2, window_bounds = array<i64: 100, 32>}, {pipeline_mode = #tpu.pipeline_mode<synchronous>, transform_indices = @transform_3, window_bounds = array<i64: 64, 32>}, {pipeline_mode = #tpu.pipeline_mode<synchronous>, transform_indices = @transform_4, window_bounds = array<i64: 24, 24>}, {pipeline_mode = #tpu.pipeline_mode<synchronous>, transform_indices = @transform_5, window_bounds = array<i64: 2, 4, 32>}, {pipeline_mode = #tpu.pipeline_mode<synchronous>, transform_indices = @transform_6, window_bounds = array<i64: 2, 4, 32>}, {pipeline_mode = #tpu.pipeline_mode<synchronous>, transform_indices = @transform_7, window_bounds = array<i64: 2, 32, 96>}, {pipeline_mode = #tpu.pipeline_mode<synchronous>, transform_indices = @transform_8, window_bounds = array<i64: 2, 1, 96>}, {pipeline_mode = #tpu.pipeline_mode<synchronous>, transform_indices = @transform_9, window_bounds = array<i64: 2, 32, 32>}, {pipeline_mode = #tpu.pipeline_mode<synchronous>, transform_indices = @transform_10, window_bounds = array<i64: 2, 1, 32>}, {pipeline_mode = #tpu.pipeline_mode<synchronous>, transform_indices = @transform_11, window_bounds = array<i64: 2, 1, 32>}, {pipeline_mode = #tpu.pipeline_mode<synchronous>, transform_indices = @transform_12, window_bounds = array<i64: 2, 1, 32>}, {pipeline_mode = #tpu.pipeline_mode<synchronous>, transform_indices = @transform_13, window_bounds = array<i64: 2, 32, 64>}, {pipeline_mode = #tpu.pipeline_mode<synchronous>, transform_indices = @transform_14, window_bounds = array<i64: 2, 1, 64>}, {pipeline_mode = #tpu.pipeline_mode<synchronous>, transform_indices = @transform_15, window_bounds = array<i64: 2, 64, 32>}, {pipeline_mode = #tpu.pipeline_mode<synchronous>, transform_indices = @transform_16, window_bounds = array<i64: 2, 1, 32>}, {pipeline_mode = #tpu.pipeline_mode<synchronous>, transform_indices = @transform_17, window_bounds = array<i64: 2, 1, 32>}, {pipeline_mode = #tpu.pipeline_mode<synchronous>, transform_indices = @transform_18, window_bounds = array<i64: 2, 1, 32>}, {pipeline_mode = #tpu.pipeline_mode<synchronous>, transform_indices = @transform_19, window_bounds = array<i64: 1, 32>}, {pipeline_mode = #tpu.pipeline_mode<synchronous>, transform_indices = @transform_20, window_bounds = array<i64: 1, 32>}, {pipeline_mode = #tpu.pipeline_mode<synchronous>, transform_indices = @transform_21, window_bounds = array<i64: 32, 32>}, {pipeline_mode = #tpu.pipeline_mode<synchronous>, transform_indices = @transform_22, window_bounds = array<i64: 1, 32>}, {pipeline_mode = #tpu.pipeline_mode<synchronous>, transform_indices = @transform_23, window_bounds = array<i64: 32, 64>}, {pipeline_mode = #tpu.pipeline_mode<synchronous>, transform_indices = @transform_24, window_bounds = array<i64: 1, 64>}, {pipeline_mode = #tpu.pipeline_mode<synchronous>, transform_indices = @transform_25, window_bounds = array<i64: 32, 3>}, {pipeline_mode = #tpu.pipeline_mode<synchronous>, transform_indices = @transform_26, window_bounds = array<i64: 1, 3>}, {pipeline_mode = #tpu.pipeline_mode<synchronous>, transform_indices = @transform_27, window_bounds = array<i64: 2, 3>}]} {
    %c0 = arith.constant 0 : index
    %c0_0 = arith.constant 0 : index
    %0 = vector.load %arg1[%c0, %c0_0] : memref<16x1xi32, #tpu.memory_space<vmem>>, vector<16x1xi32>
    %1 = tpu.iota {dimensions = array<i32: 1>} : vector<16x100xi32>
    %2 = vector.broadcast %0 : vector<16x1xi32> to vector<16x100xi32>
    %3 = arith.cmpi eq, %1, %2 : vector<16x100xi32>
    %4 = arith.extui %3 : vector<16x100xi1> to vector<16x100xi32>
    %5 = arith.sitofp %4 : vector<16x100xi32> to vector<16x100xf32>
    %c0_1 = arith.constant 0 : index
    %c0_2 = arith.constant 0 : index
    %6 = vector.load %arg3[%c0_1, %c0_2] : memref<100x32xf32, #tpu.memory_space<vmem>>, vector<100x32xf32>
    %cst = arith.constant dense<0.000000e+00> : vector<16x32xf32>
    %7 = tpu.matmul %5, %6, %cst {dimension_numbers = #tpu.dot_dimension_numbers<[1], [0], [0], [1], [0, 0, 1, 1], [], []>} : vector<16x100xf32>, vector<100x32xf32>, vector<16x32xf32> -> vector<16x32xf32>
    %c0_3 = arith.constant 0 : index
    %c0_4 = arith.constant 0 : index
    %8 = vector.load %arg4[%c0_3, %c0_4] : memref<64x32xf32, #tpu.memory_space<vmem>>, vector<64x32xf32>
    %9 = vector.extract_strided_slice %8 {offsets = [4, 0], sizes = [8, 32], strides = [1, 1]} : vector<64x32xf32> to vector<8x32xf32>
    %10 = tpu.concatenate %9, %9 in 0 : vector<8x32xf32>, vector<8x32xf32> -> vector<16x32xf32>
    %11 = arith.addf %7, %10 : vector<16x32xf32>
    %c0_5 = arith.constant 0 : index
    %c0_6 = arith.constant 0 : index
    %12 = vector.load %arg20[%c0_5, %c0_6] : memref<1x32xf32, #tpu.memory_space<vmem>>, vector<1x32xf32>
    %c0_7 = arith.constant 0 : index
    %c0_8 = arith.constant 0 : index
    %13 = vector.load %arg21[%c0_7, %c0_8] : memref<1x32xf32, #tpu.memory_space<vmem>>, vector<1x32xf32>
    %cst_9 = arith.constant dense<0.000000e+00> : vector<16xf32>
    %14 = vector.multi_reduction <add>, %11, %cst_9 [1] : vector<16x32xf32> to vector<16xf32>
    %15 = vector.shape_cast %14 : vector<16xf32> to vector<16x1xf32>
    %cst_10 = arith.constant 3.200000e+01 : f32
    %16 = vector.broadcast %cst_10 : f32 to vector<16x1xf32>
    %17 = arith.divf %15, %16 : vector<16x1xf32>
    %18 = vector.broadcast %17 : vector<16x1xf32> to vector<16x32xf32>
    %19 = arith.subf %11, %18 : vector<16x32xf32>
    %20 = arith.mulf %19, %19 : vector<16x32xf32>
    %cst_11 = arith.constant dense<0.000000e+00> : vector<16xf32>
    %21 = vector.multi_reduction <add>, %20, %cst_11 [1] : vector<16x32xf32> to vector<16xf32>
    %22 = vector.shape_cast %21 : vector<16xf32> to vector<16x1xf32>
    %cst_12 = arith.constant 3.200000e+01 : f32
    %23 = vector.broadcast %cst_12 : f32 to vector<16x1xf32>
    %24 = arith.divf %22, %23 : vector<16x1xf32>
    %25 = vector.broadcast %17 : vector<16x1xf32> to vector<16x32xf32>
    %26 = arith.subf %11, %25 : vector<16x32xf32>
    %cst_13 = arith.constant 9.99999996E-13 : f32
    %27 = vector.broadcast %cst_13 : f32 to vector<16x1xf32>
    %28 = arith.addf %24, %27 : vector<16x1xf32>
    %29 = math.rsqrt %28 : vector<16x1xf32>
    %30 = vector.broadcast %29 : vector<16x1xf32> to vector<16x32xf32>
    %31 = arith.mulf %26, %30 : vector<16x32xf32>
    %32 = vector.broadcast %12 : vector<1x32xf32> to vector<16x32xf32>
    %33 = arith.mulf %31, %32 : vector<16x32xf32>
    %34 = vector.broadcast %13 : vector<1x32xf32> to vector<16x32xf32>
    %35 = arith.addf %33, %34 : vector<16x32xf32>
    %c0_14 = arith.constant 0 : index
    %c0_15 = arith.constant 0 : index
    %36 = vector.load %arg2[%c0_14, %c0_15] : memref<2x8xi32, #tpu.memory_space<vmem>>, vector<2x8xi32>
    %37 = arith.sitofp %36 : vector<2x8xi32> to vector<2x8xf32>
    %cst_16 = arith.constant 1.000000e+00 : f32
    %38 = vector.broadcast %cst_16 : f32 to vector<2x8xf32>
    %39 = arith.subf %38, %37 : vector<2x8xf32>
    %cst_17 = arith.constant -1.000000e+04 : f32
    %40 = vector.broadcast %cst_17 : f32 to vector<2x8xf32>
    %41 = arith.mulf %39, %40 : vector<2x8xf32>
    %42 = arith.truncf %35 : vector<16x32xf32> to vector<16x32xbf16>
    %c0_18 = arith.constant 0 : index
    %c0_19 = arith.constant 0 : index
    %c0_20 = arith.constant 0 : index
    %43 = vector.load %arg8[%c0_18, %c0_19, %c0_20] : memref<2x32x96xbf16, #tpu.memory_space<vmem>>, vector<1x32x96xbf16>
    %44 = vector.shape_cast %43 : vector<1x32x96xbf16> to vector<32x96xbf16>
    %cst_21 = arith.constant dense<0.000000e+00> : vector<16x96xf32>
    %45 = tpu.matmul %42, %44, %cst_21 {dimension_numbers = #tpu.dot_dimension_numbers<[1], [0], [0], [1], [0, 0, 1, 1], [], []>} : vector<16x32xbf16>, vector<32x96xbf16>, vector<16x96xf32> -> vector<16x96xf32>
    %c0_22 = arith.constant 0 : index
    %c0_23 = arith.constant 0 : index
    %c0_24 = arith.constant 0 : index
    %46 = vector.load %arg9[%c0_22, %c0_23, %c0_24] : memref<2x1x96xf32, #tpu.memory_space<vmem>>, vector<1x1x96xf32>
    %47 = vector.shape_cast %46 : vector<1x1x96xf32> to vector<1x96xf32>
    %48 = vector.broadcast %47 : vector<1x96xf32> to vector<16x96xf32>
    %49 = arith.addf %45, %48 : vector<16x96xf32>
    %c0_25 = arith.constant 0 : index
    %c0_26 = arith.constant 0 : index
    %c0_27 = arith.constant 0 : index
    %50 = vector.load %arg6[%c0_25, %c0_26, %c0_27] : memref<2x4x32xbf16, #tpu.memory_space<vmem>>, vector<1x4x32xbf16>
    %51 = vector.shape_cast %50 : vector<1x4x32xbf16> to vector<4x32xbf16>
    %c0_28 = arith.constant 0 : index
    %c0_29 = arith.constant 0 : index
    %c0_30 = arith.constant 0 : index
    %52 = vector.load %arg7[%c0_28, %c0_29, %c0_30] : memref<2x4x32xbf16, #tpu.memory_space<vmem>>, vector<1x4x32xbf16>
    %53 = vector.shape_cast %52 : vector<1x4x32xbf16> to vector<4x32xbf16>
    %54 = vector.extract_strided_slice %41 {offsets = [0, 0], sizes = [1, 8], strides = [1, 1]} : vector<2x8xf32> to vector<1x8xf32>
    %55 = vector.extract_strided_slice %49 {offsets = [0, 0], sizes = [8, 8], strides = [1, 1]} : vector<16x96xf32> to vector<8x8xf32>
    %56 = arith.truncf %55 : vector<8x8xf32> to vector<8x8xbf16>
    %57 = vector.extract_strided_slice %49 {offsets = [0, 32], sizes = [8, 8], strides = [1, 1]} : vector<16x96xf32> to vector<8x8xf32>
    %58 = arith.truncf %57 : vector<8x8xf32> to vector<8x8xbf16>
    %59 = vector.extract_strided_slice %49 {offsets = [0, 64], sizes = [8, 8], strides = [1, 1]} : vector<16x96xf32> to vector<8x8xf32>
    %60 = arith.truncf %59 : vector<8x8xf32> to vector<8x8xbf16>
    %61 = vector.extract_strided_slice %51 {offsets = [0, 0], sizes = [4, 8], strides = [1, 1]} : vector<4x32xbf16> to vector<4x8xbf16>
    %62 = vector.extract_strided_slice %53 {offsets = [0, 0], sizes = [4, 8], strides = [1, 1]} : vector<4x32xbf16> to vector<4x8xbf16>
    "tpu.trace_start"() <{level = 10 : i32, message = "qd,kd->qk"}> : () -> ()
    %cst_31 = arith.constant dense<0.000000e+00> : vector<8x4xf32>
    %63 = tpu.matmul %56, %61, %cst_31 {dimension_numbers = #tpu.dot_dimension_numbers<[1], [1], [0], [0], [0, 0, 1, 0], [], []>} : vector<8x8xbf16>, vector<4x8xbf16>, vector<8x4xf32> -> vector<8x4xf32>
    "tpu.trace_stop"() : () -> ()
    %cst_32 = arith.constant 0.353553385 : f32
    %64 = vector.broadcast %cst_32 : f32 to vector<8x4xf32>
    %65 = arith.mulf %63, %64 : vector<8x4xf32>
    "tpu.trace_start"() <{level = 10 : i32, message = "qd,kd->qk"}> : () -> ()
    %cst_33 = arith.constant dense<0.000000e+00> : vector<8x8xf32>
    %66 = tpu.matmul %56, %58, %cst_33 {dimension_numbers = #tpu.dot_dimension_numbers<[1], [1], [0], [0], [0, 0, 1, 0], [], []>} : vector<8x8xbf16>, vector<8x8xbf16>, vector<8x8xf32> -> vector<8x8xf32>
    "tpu.trace_stop"() : () -> ()
    %cst_34 = arith.constant 0.353553385 : f32
    %67 = vector.broadcast %cst_34 : f32 to vector<8x8xf32>
    %68 = arith.mulf %66, %67 : vector<8x8xf32>
    %69 = vector.broadcast %54 : vector<1x8xf32> to vector<8x8xf32>
    %70 = arith.addf %68, %69 : vector<8x8xf32>
    %cst_35 = arith.constant dense<0xFF800000> : vector<8xf32>
    %71 = vector.multi_reduction <maximumf>, %65, %cst_35 [1] : vector<8x4xf32> to vector<8xf32>
    %72 = vector.shape_cast %71 : vector<8xf32> to vector<8x1xf32>
    %cst_36 = arith.constant dense<0xFF800000> : vector<8xf32>
    %73 = vector.multi_reduction <maximumf>, %70, %cst_36 [1] : vector<8x8xf32> to vector<8xf32>
    %74 = vector.shape_cast %73 : vector<8xf32> to vector<8x1xf32>
    %75 = arith.maximumf %72, %74 : vector<8x1xf32>
    %76 = vector.broadcast %75 : vector<8x1xf32> to vector<8x4xf32>
    %77 = arith.subf %65, %76 : vector<8x4xf32>
    %78 = math.exp %77 : vector<8x4xf32>
    %79 = vector.broadcast %75 : vector<8x1xf32> to vector<8x8xf32>
    %80 = arith.subf %70, %79 : vector<8x8xf32>
    %81 = math.exp %80 : vector<8x8xf32>
    %cst_37 = arith.constant dense<0.000000e+00> : vector<8xf32>
    %82 = vector.multi_reduction <add>, %78, %cst_37 [1] : vector<8x4xf32> to vector<8xf32>
    %83 = vector.shape_cast %82 : vector<8xf32> to vector<8x1xf32>
    %cst_38 = arith.constant dense<0.000000e+00> : vector<8xf32>
    %84 = vector.multi_reduction <add>, %81, %cst_38 [1] : vector<8x8xf32> to vector<8xf32>
    %85 = vector.shape_cast %84 : vector<8xf32> to vector<8x1xf32>
    %86 = arith.addf %83, %85 : vector<8x1xf32>
    %87 = arith.truncf %78 : vector<8x4xf32> to vector<8x4xbf16>
    "tpu.trace_start"() <{level = 10 : i32, message = "qk,kd->qd"}> : () -> ()
    %cst_39 = arith.constant dense<0.000000e+00> : vector<8x8xf32>
    %88 = tpu.matmul %87, %62, %cst_39 {dimension_numbers = #tpu.dot_dimension_numbers<[1], [0], [0], [1], [0, 0, 1, 1], [], []>} : vector<8x4xbf16>, vector<4x8xbf16>, vector<8x8xf32> -> vector<8x8xf32>
    "tpu.trace_stop"() : () -> ()
    %89 = arith.truncf %81 : vector<8x8xf32> to vector<8x8xbf16>
    "tpu.trace_start"() <{level = 10 : i32, message = "qk,kd->qd"}> : () -> ()
    %cst_40 = arith.constant dense<0.000000e+00> : vector<8x8xf32>
    %90 = tpu.matmul %89, %60, %cst_40 {dimension_numbers = #tpu.dot_dimension_numbers<[1], [0], [0], [1], [0, 0, 1, 1], [], []>} : vector<8x8xbf16>, vector<8x8xbf16>, vector<8x8xf32> -> vector<8x8xf32>
    "tpu.trace_stop"() : () -> ()
    %91 = arith.addf %88, %90 : vector<8x8xf32>
    %92 = tpu.reciprocal %86 {approx = true} : vector<8x1xf32> -> vector<8x1xf32>
    %93 = vector.broadcast %92 : vector<8x1xf32> to vector<8x8xf32>
    %94 = arith.mulf %91, %93 : vector<8x8xf32>
    %95 = vector.extract_strided_slice %49 {offsets = [0, 8], sizes = [8, 8], strides = [1, 1]} : vector<16x96xf32> to vector<8x8xf32>
    %96 = arith.truncf %95 : vector<8x8xf32> to vector<8x8xbf16>
    %97 = vector.extract_strided_slice %49 {offsets = [0, 40], sizes = [8, 8], strides = [1, 1]} : vector<16x96xf32> to vector<8x8xf32>
    %98 = arith.truncf %97 : vector<8x8xf32> to vector<8x8xbf16>
    %99 = vector.extract_strided_slice %49 {offsets = [0, 72], sizes = [8, 8], strides = [1, 1]} : vector<16x96xf32> to vector<8x8xf32>
    %100 = arith.truncf %99 : vector<8x8xf32> to vector<8x8xbf16>
    %101 = vector.extract_strided_slice %51 {offsets = [0, 8], sizes = [4, 8], strides = [1, 1]} : vector<4x32xbf16> to vector<4x8xbf16>
    %102 = vector.extract_strided_slice %53 {offsets = [0, 8], sizes = [4, 8], strides = [1, 1]} : vector<4x32xbf16> to vector<4x8xbf16>
    "tpu.trace_start"() <{level = 10 : i32, message = "qd,kd->qk"}> : () -> ()
    %cst_41 = arith.constant dense<0.000000e+00> : vector<8x4xf32>
    %103 = tpu.matmul %96, %101, %cst_41 {dimension_numbers = #tpu.dot_dimension_numbers<[1], [1], [0], [0], [0, 0, 1, 0], [], []>} : vector<8x8xbf16>, vector<4x8xbf16>, vector<8x4xf32> -> vector<8x4xf32>
    "tpu.trace_stop"() : () -> ()
    %cst_42 = arith.constant 0.353553385 : f32
    %104 = vector.broadcast %cst_42 : f32 to vector<8x4xf32>
    %105 = arith.mulf %103, %104 : vector<8x4xf32>
    "tpu.trace_start"() <{level = 10 : i32, message = "qd,kd->qk"}> : () -> ()
    %cst_43 = arith.constant dense<0.000000e+00> : vector<8x8xf32>
    %106 = tpu.matmul %96, %98, %cst_43 {dimension_numbers = #tpu.dot_dimension_numbers<[1], [1], [0], [0], [0, 0, 1, 0], [], []>} : vector<8x8xbf16>, vector<8x8xbf16>, vector<8x8xf32> -> vector<8x8xf32>
    "tpu.trace_stop"() : () -> ()
    %cst_44 = arith.constant 0.353553385 : f32
    %107 = vector.broadcast %cst_44 : f32 to vector<8x8xf32>
    %108 = arith.mulf %106, %107 : vector<8x8xf32>
    %109 = vector.broadcast %54 : vector<1x8xf32> to vector<8x8xf32>
    %110 = arith.addf %108, %109 : vector<8x8xf32>
    %cst_45 = arith.constant dense<0xFF800000> : vector<8xf32>
    %111 = vector.multi_reduction <maximumf>, %105, %cst_45 [1] : vector<8x4xf32> to vector<8xf32>
    %112 = vector.shape_cast %111 : vector<8xf32> to vector<8x1xf32>
    %cst_46 = arith.constant dense<0xFF800000> : vector<8xf32>
    %113 = vector.multi_reduction <maximumf>, %110, %cst_46 [1] : vector<8x8xf32> to vector<8xf32>
    %114 = vector.shape_cast %113 : vector<8xf32> to vector<8x1xf32>
    %115 = arith.maximumf %112, %114 : vector<8x1xf32>
    %116 = vector.broadcast %115 : vector<8x1xf32> to vector<8x4xf32>
    %117 = arith.subf %105, %116 : vector<8x4xf32>
    %118 = math.exp %117 : vector<8x4xf32>
    %119 = vector.broadcast %115 : vector<8x1xf32> to vector<8x8xf32>
    %120 = arith.subf %110, %119 : vector<8x8xf32>
    %121 = math.exp %120 : vector<8x8xf32>
    %cst_47 = arith.constant dense<0.000000e+00> : vector<8xf32>
    %122 = vector.multi_reduction <add>, %118, %cst_47 [1] : vector<8x4xf32> to vector<8xf32>
    %123 = vector.shape_cast %122 : vector<8xf32> to vector<8x1xf32>
    %cst_48 = arith.constant dense<0.000000e+00> : vector<8xf32>
    %124 = vector.multi_reduction <add>, %121, %cst_48 [1] : vector<8x8xf32> to vector<8xf32>
    %125 = vector.shape_cast %124 : vector<8xf32> to vector<8x1xf32>
    %126 = arith.addf %123, %125 : vector<8x1xf32>
    %127 = arith.truncf %118 : vector<8x4xf32> to vector<8x4xbf16>
    "tpu.trace_start"() <{level = 10 : i32, message = "qk,kd->qd"}> : () -> ()
    %cst_49 = arith.constant dense<0.000000e+00> : vector<8x8xf32>
    %128 = tpu.matmul %127, %102, %cst_49 {dimension_numbers = #tpu.dot_dimension_numbers<[1], [0], [0], [1], [0, 0, 1, 1], [], []>} : vector<8x4xbf16>, vector<4x8xbf16>, vector<8x8xf32> -> vector<8x8xf32>
    "tpu.trace_stop"() : () -> ()
    %129 = arith.truncf %121 : vector<8x8xf32> to vector<8x8xbf16>
    "tpu.trace_start"() <{level = 10 : i32, message = "qk,kd->qd"}> : () -> ()
    %cst_50 = arith.constant dense<0.000000e+00> : vector<8x8xf32>
    %130 = tpu.matmul %129, %100, %cst_50 {dimension_numbers = #tpu.dot_dimension_numbers<[1], [0], [0], [1], [0, 0, 1, 1], [], []>} : vector<8x8xbf16>, vector<8x8xbf16>, vector<8x8xf32> -> vector<8x8xf32>
    "tpu.trace_stop"() : () -> ()
    %131 = arith.addf %128, %130 : vector<8x8xf32>
    %132 = tpu.reciprocal %126 {approx = true} : vector<8x1xf32> -> vector<8x1xf32>
    %133 = vector.broadcast %132 : vector<8x1xf32> to vector<8x8xf32>
    %134 = arith.mulf %131, %133 : vector<8x8xf32>
    %135 = vector.extract_strided_slice %49 {offsets = [0, 16], sizes = [8, 8], strides = [1, 1]} : vector<16x96xf32> to vector<8x8xf32>
    %136 = arith.truncf %135 : vector<8x8xf32> to vector<8x8xbf16>
    %137 = vector.extract_strided_slice %49 {offsets = [0, 48], sizes = [8, 8], strides = [1, 1]} : vector<16x96xf32> to vector<8x8xf32>
    %138 = arith.truncf %137 : vector<8x8xf32> to vector<8x8xbf16>
    %139 = vector.extract_strided_slice %49 {offsets = [0, 80], sizes = [8, 8], strides = [1, 1]} : vector<16x96xf32> to vector<8x8xf32>
    %140 = arith.truncf %139 : vector<8x8xf32> to vector<8x8xbf16>
    %141 = vector.extract_strided_slice %51 {offsets = [0, 16], sizes = [4, 8], strides = [1, 1]} : vector<4x32xbf16> to vector<4x8xbf16>
    %142 = vector.extract_strided_slice %53 {offsets = [0, 16], sizes = [4, 8], strides = [1, 1]} : vector<4x32xbf16> to vector<4x8xbf16>
    "tpu.trace_start"() <{level = 10 : i32, message = "qd,kd->qk"}> : () -> ()
    %cst_51 = arith.constant dense<0.000000e+00> : vector<8x4xf32>
    %143 = tpu.matmul %136, %141, %cst_51 {dimension_numbers = #tpu.dot_dimension_numbers<[1], [1], [0], [0], [0, 0, 1, 0], [], []>} : vector<8x8xbf16>, vector<4x8xbf16>, vector<8x4xf32> -> vector<8x4xf32>
    "tpu.trace_stop"() : () -> ()
    %cst_52 = arith.constant 0.353553385 : f32
    %144 = vector.broadcast %cst_52 : f32 to vector<8x4xf32>
    %145 = arith.mulf %143, %144 : vector<8x4xf32>
    "tpu.trace_start"() <{level = 10 : i32, message = "qd,kd->qk"}> : () -> ()
    %cst_53 = arith.constant dense<0.000000e+00> : vector<8x8xf32>
    %146 = tpu.matmul %136, %138, %cst_53 {dimension_numbers = #tpu.dot_dimension_numbers<[1], [1], [0], [0], [0, 0, 1, 0], [], []>} : vector<8x8xbf16>, vector<8x8xbf16>, vector<8x8xf32> -> vector<8x8xf32>
    "tpu.trace_stop"() : () -> ()
    %cst_54 = arith.constant 0.353553385 : f32
    %147 = vector.broadcast %cst_54 : f32 to vector<8x8xf32>
    %148 = arith.mulf %146, %147 : vector<8x8xf32>
    %149 = vector.broadcast %54 : vector<1x8xf32> to vector<8x8xf32>
    %150 = arith.addf %148, %149 : vector<8x8xf32>
    %cst_55 = arith.constant dense<0xFF800000> : vector<8xf32>
    %151 = vector.multi_reduction <maximumf>, %145, %cst_55 [1] : vector<8x4xf32> to vector<8xf32>
    %152 = vector.shape_cast %151 : vector<8xf32> to vector<8x1xf32>
    %cst_56 = arith.constant dense<0xFF800000> : vector<8xf32>
    %153 = vector.multi_reduction <maximumf>, %150, %cst_56 [1] : vector<8x8xf32> to vector<8xf32>
    %154 = vector.shape_cast %153 : vector<8xf32> to vector<8x1xf32>
    %155 = arith.maximumf %152, %154 : vector<8x1xf32>
    %156 = vector.broadcast %155 : vector<8x1xf32> to vector<8x4xf32>
    %157 = arith.subf %145, %156 : vector<8x4xf32>
    %158 = math.exp %157 : vector<8x4xf32>
    %159 = vector.broadcast %155 : vector<8x1xf32> to vector<8x8xf32>
    %160 = arith.subf %150, %159 : vector<8x8xf32>
    %161 = math.exp %160 : vector<8x8xf32>
    %cst_57 = arith.constant dense<0.000000e+00> : vector<8xf32>
    %162 = vector.multi_reduction <add>, %158, %cst_57 [1] : vector<8x4xf32> to vector<8xf32>
    %163 = vector.shape_cast %162 : vector<8xf32> to vector<8x1xf32>
    %cst_58 = arith.constant dense<0.000000e+00> : vector<8xf32>
    %164 = vector.multi_reduction <add>, %161, %cst_58 [1] : vector<8x8xf32> to vector<8xf32>
    %165 = vector.shape_cast %164 : vector<8xf32> to vector<8x1xf32>
    %166 = arith.addf %163, %165 : vector<8x1xf32>
    %167 = arith.truncf %158 : vector<8x4xf32> to vector<8x4xbf16>
    "tpu.trace_start"() <{level = 10 : i32, message = "qk,kd->qd"}> : () -> ()
    %cst_59 = arith.constant dense<0.000000e+00> : vector<8x8xf32>
    %168 = tpu.matmul %167, %142, %cst_59 {dimension_numbers = #tpu.dot_dimension_numbers<[1], [0], [0], [1], [0, 0, 1, 1], [], []>} : vector<8x4xbf16>, vector<4x8xbf16>, vector<8x8xf32> -> vector<8x8xf32>
    "tpu.trace_stop"() : () -> ()
    %169 = arith.truncf %161 : vector<8x8xf32> to vector<8x8xbf16>
    "tpu.trace_start"() <{level = 10 : i32, message = "qk,kd->qd"}> : () -> ()
    %cst_60 = arith.constant dense<0.000000e+00> : vector<8x8xf32>
    %170 = tpu.matmul %169, %140, %cst_60 {dimension_numbers = #tpu.dot_dimension_numbers<[1], [0], [0], [1], [0, 0, 1, 1], [], []>} : vector<8x8xbf16>, vector<8x8xbf16>, vector<8x8xf32> -> vector<8x8xf32>
    "tpu.trace_stop"() : () -> ()
    %171 = arith.addf %168, %170 : vector<8x8xf32>
    %172 = tpu.reciprocal %166 {approx = true} : vector<8x1xf32> -> vector<8x1xf32>
    %173 = vector.broadcast %172 : vector<8x1xf32> to vector<8x8xf32>
    %174 = arith.mulf %171, %173 : vector<8x8xf32>
    %175 = vector.extract_strided_slice %49 {offsets = [0, 24], sizes = [8, 8], strides = [1, 1]} : vector<16x96xf32> to vector<8x8xf32>
    %176 = arith.truncf %175 : vector<8x8xf32> to vector<8x8xbf16>
    %177 = vector.extract_strided_slice %49 {offsets = [0, 56], sizes = [8, 8], strides = [1, 1]} : vector<16x96xf32> to vector<8x8xf32>
    %178 = arith.truncf %177 : vector<8x8xf32> to vector<8x8xbf16>
    %179 = vector.extract_strided_slice %49 {offsets = [0, 88], sizes = [8, 8], strides = [1, 1]} : vector<16x96xf32> to vector<8x8xf32>
    %180 = arith.truncf %179 : vector<8x8xf32> to vector<8x8xbf16>
    %181 = vector.extract_strided_slice %51 {offsets = [0, 24], sizes = [4, 8], strides = [1, 1]} : vector<4x32xbf16> to vector<4x8xbf16>
    %182 = vector.extract_strided_slice %53 {offsets = [0, 24], sizes = [4, 8], strides = [1, 1]} : vector<4x32xbf16> to vector<4x8xbf16>
    "tpu.trace_start"() <{level = 10 : i32, message = "qd,kd->qk"}> : () -> ()
    %cst_61 = arith.constant dense<0.000000e+00> : vector<8x4xf32>
    %183 = tpu.matmul %176, %181, %cst_61 {dimension_numbers = #tpu.dot_dimension_numbers<[1], [1], [0], [0], [0, 0, 1, 0], [], []>} : vector<8x8xbf16>, vector<4x8xbf16>, vector<8x4xf32> -> vector<8x4xf32>
    "tpu.trace_stop"() : () -> ()
    %cst_62 = arith.constant 0.353553385 : f32
    %184 = vector.broadcast %cst_62 : f32 to vector<8x4xf32>
    %185 = arith.mulf %183, %184 : vector<8x4xf32>
    "tpu.trace_start"() <{level = 10 : i32, message = "qd,kd->qk"}> : () -> ()
    %cst_63 = arith.constant dense<0.000000e+00> : vector<8x8xf32>
    %186 = tpu.matmul %176, %178, %cst_63 {dimension_numbers = #tpu.dot_dimension_numbers<[1], [1], [0], [0], [0, 0, 1, 0], [], []>} : vector<8x8xbf16>, vector<8x8xbf16>, vector<8x8xf32> -> vector<8x8xf32>
    "tpu.trace_stop"() : () -> ()
    %cst_64 = arith.constant 0.353553385 : f32
    %187 = vector.broadcast %cst_64 : f32 to vector<8x8xf32>
    %188 = arith.mulf %186, %187 : vector<8x8xf32>
    %189 = vector.broadcast %54 : vector<1x8xf32> to vector<8x8xf32>
    %190 = arith.addf %188, %189 : vector<8x8xf32>
    %cst_65 = arith.constant dense<0xFF800000> : vector<8xf32>
    %191 = vector.multi_reduction <maximumf>, %185, %cst_65 [1] : vector<8x4xf32> to vector<8xf32>
    %192 = vector.shape_cast %191 : vector<8xf32> to vector<8x1xf32>
    %cst_66 = arith.constant dense<0xFF800000> : vector<8xf32>
    %193 = vector.multi_reduction <maximumf>, %190, %cst_66 [1] : vector<8x8xf32> to vector<8xf32>
    %194 = vector.shape_cast %193 : vector<8xf32> to vector<8x1xf32>
    %195 = arith.maximumf %192, %194 : vector<8x1xf32>
    %196 = vector.broadcast %195 : vector<8x1xf32> to vector<8x4xf32>
    %197 = arith.subf %185, %196 : vector<8x4xf32>
    %198 = math.exp %197 : vector<8x4xf32>
    %199 = vector.broadcast %195 : vector<8x1xf32> to vector<8x8xf32>
    %200 = arith.subf %190, %199 : vector<8x8xf32>
    %201 = math.exp %200 : vector<8x8xf32>
    %cst_67 = arith.constant dense<0.000000e+00> : vector<8xf32>
    %202 = vector.multi_reduction <add>, %198, %cst_67 [1] : vector<8x4xf32> to vector<8xf32>
    %203 = vector.shape_cast %202 : vector<8xf32> to vector<8x1xf32>
    %cst_68 = arith.constant dense<0.000000e+00> : vector<8xf32>
    %204 = vector.multi_reduction <add>, %201, %cst_68 [1] : vector<8x8xf32> to vector<8xf32>
    %205 = vector.shape_cast %204 : vector<8xf32> to vector<8x1xf32>
    %206 = arith.addf %203, %205 : vector<8x1xf32>
    %207 = arith.truncf %198 : vector<8x4xf32> to vector<8x4xbf16>
    "tpu.trace_start"() <{level = 10 : i32, message = "qk,kd->qd"}> : () -> ()
    %cst_69 = arith.constant dense<0.000000e+00> : vector<8x8xf32>
    %208 = tpu.matmul %207, %182, %cst_69 {dimension_numbers = #tpu.dot_dimension_numbers<[1], [0], [0], [1], [0, 0, 1, 1], [], []>} : vector<8x4xbf16>, vector<4x8xbf16>, vector<8x8xf32> -> vector<8x8xf32>
    "tpu.trace_stop"() : () -> ()
    %209 = arith.truncf %201 : vector<8x8xf32> to vector<8x8xbf16>
    "tpu.trace_start"() <{level = 10 : i32, message = "qk,kd->qd"}> : () -> ()
    %cst_70 = arith.constant dense<0.000000e+00> : vector<8x8xf32>
    %210 = tpu.matmul %209, %180, %cst_70 {dimension_numbers = #tpu.dot_dimension_numbers<[1], [0], [0], [1], [0, 0, 1, 1], [], []>} : vector<8x8xbf16>, vector<8x8xbf16>, vector<8x8xf32> -> vector<8x8xf32>
    "tpu.trace_stop"() : () -> ()
    %211 = arith.addf %208, %210 : vector<8x8xf32>
    %212 = tpu.reciprocal %206 {approx = true} : vector<8x1xf32> -> vector<8x1xf32>
    %213 = vector.broadcast %212 : vector<8x1xf32> to vector<8x8xf32>
    %214 = arith.mulf %211, %213 : vector<8x8xf32>
    %215 = tpu.concatenate %94, %134, %174, %214 in 1 : vector<8x8xf32>, vector<8x8xf32>, vector<8x8xf32>, vector<8x8xf32> -> vector<8x32xf32>
    %216 = vector.extract_strided_slice %41 {offsets = [1, 0], sizes = [1, 8], strides = [1, 1]} : vector<2x8xf32> to vector<1x8xf32>
    %217 = vector.extract_strided_slice %49 {offsets = [8, 0], sizes = [8, 8], strides = [1, 1]} : vector<16x96xf32> to vector<8x8xf32>
    %218 = arith.truncf %217 : vector<8x8xf32> to vector<8x8xbf16>
    %219 = vector.extract_strided_slice %49 {offsets = [8, 32], sizes = [8, 8], strides = [1, 1]} : vector<16x96xf32> to vector<8x8xf32>
    %220 = arith.truncf %219 : vector<8x8xf32> to vector<8x8xbf16>
    %221 = vector.extract_strided_slice %49 {offsets = [8, 64], sizes = [8, 8], strides = [1, 1]} : vector<16x96xf32> to vector<8x8xf32>
    %222 = arith.truncf %221 : vector<8x8xf32> to vector<8x8xbf16>
    %223 = vector.extract_strided_slice %51 {offsets = [0, 0], sizes = [4, 8], strides = [1, 1]} : vector<4x32xbf16> to vector<4x8xbf16>
    %224 = vector.extract_strided_slice %53 {offsets = [0, 0], sizes = [4, 8], strides = [1, 1]} : vector<4x32xbf16> to vector<4x8xbf16>
    "tpu.trace_start"() <{level = 10 : i32, message = "qd,kd->qk"}> : () -> ()
    %cst_71 = arith.constant dense<0.000000e+00> : vector<8x4xf32>
    %225 = tpu.matmul %218, %223, %cst_71 {dimension_numbers = #tpu.dot_dimension_numbers<[1], [1], [0], [0], [0, 0, 1, 0], [], []>} : vector<8x8xbf16>, vector<4x8xbf16>, vector<8x4xf32> -> vector<8x4xf32>
    "tpu.trace_stop"() : () -> ()
    %cst_72 = arith.constant 0.353553385 : f32
    %226 = vector.broadcast %cst_72 : f32 to vector<8x4xf32>
    %227 = arith.mulf %225, %226 : vector<8x4xf32>
    "tpu.trace_start"() <{level = 10 : i32, message = "qd,kd->qk"}> : () -> ()
    %cst_73 = arith.constant dense<0.000000e+00> : vector<8x8xf32>
    %228 = tpu.matmul %218, %220, %cst_73 {dimension_numbers = #tpu.dot_dimension_numbers<[1], [1], [0], [0], [0, 0, 1, 0], [], []>} : vector<8x8xbf16>, vector<8x8xbf16>, vector<8x8xf32> -> vector<8x8xf32>
    "tpu.trace_stop"() : () -> ()
    %cst_74 = arith.constant 0.353553385 : f32
    %229 = vector.broadcast %cst_74 : f32 to vector<8x8xf32>
    %230 = arith.mulf %228, %229 : vector<8x8xf32>
    %231 = vector.broadcast %216 : vector<1x8xf32> to vector<8x8xf32>
    %232 = arith.addf %230, %231 : vector<8x8xf32>
    %cst_75 = arith.constant dense<0xFF800000> : vector<8xf32>
    %233 = vector.multi_reduction <maximumf>, %227, %cst_75 [1] : vector<8x4xf32> to vector<8xf32>
    %234 = vector.shape_cast %233 : vector<8xf32> to vector<8x1xf32>
    %cst_76 = arith.constant dense<0xFF800000> : vector<8xf32>
    %235 = vector.multi_reduction <maximumf>, %232, %cst_76 [1] : vector<8x8xf32> to vector<8xf32>
    %236 = vector.shape_cast %235 : vector<8xf32> to vector<8x1xf32>
    %237 = arith.maximumf %234, %236 : vector<8x1xf32>
    %238 = vector.broadcast %237 : vector<8x1xf32> to vector<8x4xf32>
    %239 = arith.subf %227, %238 : vector<8x4xf32>
    %240 = math.exp %239 : vector<8x4xf32>
    %241 = vector.broadcast %237 : vector<8x1xf32> to vector<8x8xf32>
    %242 = arith.subf %232, %241 : vector<8x8xf32>
    %243 = math.exp %242 : vector<8x8xf32>
    %cst_77 = arith.constant dense<0.000000e+00> : vector<8xf32>
    %244 = vector.multi_reduction <add>, %240, %cst_77 [1] : vector<8x4xf32> to vector<8xf32>
    %245 = vector.shape_cast %244 : vector<8xf32> to vector<8x1xf32>
    %cst_78 = arith.constant dense<0.000000e+00> : vector<8xf32>
    %246 = vector.multi_reduction <add>, %243, %cst_78 [1] : vector<8x8xf32> to vector<8xf32>
    %247 = vector.shape_cast %246 : vector<8xf32> to vector<8x1xf32>
    %248 = arith.addf %245, %247 : vector<8x1xf32>
    %249 = arith.truncf %240 : vector<8x4xf32> to vector<8x4xbf16>
    "tpu.trace_start"() <{level = 10 : i32, message = "qk,kd->qd"}> : () -> ()
    %cst_79 = arith.constant dense<0.000000e+00> : vector<8x8xf32>
    %250 = tpu.matmul %249, %224, %cst_79 {dimension_numbers = #tpu.dot_dimension_numbers<[1], [0], [0], [1], [0, 0, 1, 1], [], []>} : vector<8x4xbf16>, vector<4x8xbf16>, vector<8x8xf32> -> vector<8x8xf32>
    "tpu.trace_stop"() : () -> ()
    %251 = arith.truncf %243 : vector<8x8xf32> to vector<8x8xbf16>
    "tpu.trace_start"() <{level = 10 : i32, message = "qk,kd->qd"}> : () -> ()
    %cst_80 = arith.constant dense<0.000000e+00> : vector<8x8xf32>
    %252 = tpu.matmul %251, %222, %cst_80 {dimension_numbers = #tpu.dot_dimension_numbers<[1], [0], [0], [1], [0, 0, 1, 1], [], []>} : vector<8x8xbf16>, vector<8x8xbf16>, vector<8x8xf32> -> vector<8x8xf32>
    "tpu.trace_stop"() : () -> ()
    %253 = arith.addf %250, %252 : vector<8x8xf32>
    %254 = tpu.reciprocal %248 {approx = true} : vector<8x1xf32> -> vector<8x1xf32>
    %255 = vector.broadcast %254 : vector<8x1xf32> to vector<8x8xf32>
    %256 = arith.mulf %253, %255 : vector<8x8xf32>
    %257 = vector.extract_strided_slice %49 {offsets = [8, 8], sizes = [8, 8], strides = [1, 1]} : vector<16x96xf32> to vector<8x8xf32>
    %258 = arith.truncf %257 : vector<8x8xf32> to vector<8x8xbf16>
    %259 = vector.extract_strided_slice %49 {offsets = [8, 40], sizes = [8, 8], strides = [1, 1]} : vector<16x96xf32> to vector<8x8xf32>
    %260 = arith.truncf %259 : vector<8x8xf32> to vector<8x8xbf16>
    %261 = vector.extract_strided_slice %49 {offsets = [8, 72], sizes = [8, 8], strides = [1, 1]} : vector<16x96xf32> to vector<8x8xf32>
    %262 = arith.truncf %261 : vector<8x8xf32> to vector<8x8xbf16>
    %263 = vector.extract_strided_slice %51 {offsets = [0, 8], sizes = [4, 8], strides = [1, 1]} : vector<4x32xbf16> to vector<4x8xbf16>
    %264 = vector.extract_strided_slice %53 {offsets = [0, 8], sizes = [4, 8], strides = [1, 1]} : vector<4x32xbf16> to vector<4x8xbf16>
    "tpu.trace_start"() <{level = 10 : i32, message = "qd,kd->qk"}> : () -> ()
    %cst_81 = arith.constant dense<0.000000e+00> : vector<8x4xf32>
    %265 = tpu.matmul %258, %263, %cst_81 {dimension_numbers = #tpu.dot_dimension_numbers<[1], [1], [0], [0], [0, 0, 1, 0], [], []>} : vector<8x8xbf16>, vector<4x8xbf16>, vector<8x4xf32> -> vector<8x4xf32>
    "tpu.trace_stop"() : () -> ()
    %cst_82 = arith.constant 0.353553385 : f32
    %266 = vector.broadcast %cst_82 : f32 to vector<8x4xf32>
    %267 = arith.mulf %265, %266 : vector<8x4xf32>
    "tpu.trace_start"() <{level = 10 : i32, message = "qd,kd->qk"}> : () -> ()
    %cst_83 = arith.constant dense<0.000000e+00> : vector<8x8xf32>
    %268 = tpu.matmul %258, %260, %cst_83 {dimension_numbers = #tpu.dot_dimension_numbers<[1], [1], [0], [0], [0, 0, 1, 0], [], []>} : vector<8x8xbf16>, vector<8x8xbf16>, vector<8x8xf32> -> vector<8x8xf32>
    "tpu.trace_stop"() : () -> ()
    %cst_84 = arith.constant 0.353553385 : f32
    %269 = vector.broadcast %cst_84 : f32 to vector<8x8xf32>
    %270 = arith.mulf %268, %269 : vector<8x8xf32>
    %271 = vector.broadcast %216 : vector<1x8xf32> to vector<8x8xf32>
    %272 = arith.addf %270, %271 : vector<8x8xf32>
    %cst_85 = arith.constant dense<0xFF800000> : vector<8xf32>
    %273 = vector.multi_reduction <maximumf>, %267, %cst_85 [1] : vector<8x4xf32> to vector<8xf32>
    %274 = vector.shape_cast %273 : vector<8xf32> to vector<8x1xf32>
    %cst_86 = arith.constant dense<0xFF800000> : vector<8xf32>
    %275 = vector.multi_reduction <maximumf>, %272, %cst_86 [1] : vector<8x8xf32> to vector<8xf32>
    %276 = vector.shape_cast %275 : vector<8xf32> to vector<8x1xf32>
    %277 = arith.maximumf %274, %276 : vector<8x1xf32>
    %278 = vector.broadcast %277 : vector<8x1xf32> to vector<8x4xf32>
    %279 = arith.subf %267, %278 : vector<8x4xf32>
    %280 = math.exp %279 : vector<8x4xf32>
    %281 = vector.broadcast %277 : vector<8x1xf32> to vector<8x8xf32>
    %282 = arith.subf %272, %281 : vector<8x8xf32>
    %283 = math.exp %282 : vector<8x8xf32>
    %cst_87 = arith.constant dense<0.000000e+00> : vector<8xf32>
    %284 = vector.multi_reduction <add>, %280, %cst_87 [1] : vector<8x4xf32> to vector<8xf32>
    %285 = vector.shape_cast %284 : vector<8xf32> to vector<8x1xf32>
    %cst_88 = arith.constant dense<0.000000e+00> : vector<8xf32>
    %286 = vector.multi_reduction <add>, %283, %cst_88 [1] : vector<8x8xf32> to vector<8xf32>
    %287 = vector.shape_cast %286 : vector<8xf32> to vector<8x1xf32>
    %288 = arith.addf %285, %287 : vector<8x1xf32>
    %289 = arith.truncf %280 : vector<8x4xf32> to vector<8x4xbf16>
    "tpu.trace_start"() <{level = 10 : i32, message = "qk,kd->qd"}> : () -> ()
    %cst_89 = arith.constant dense<0.000000e+00> : vector<8x8xf32>
    %290 = tpu.matmul %289, %264, %cst_89 {dimension_numbers = #tpu.dot_dimension_numbers<[1], [0], [0], [1], [0, 0, 1, 1], [], []>} : vector<8x4xbf16>, vector<4x8xbf16>, vector<8x8xf32> -> vector<8x8xf32>
    "tpu.trace_stop"() : () -> ()
    %291 = arith.truncf %283 : vector<8x8xf32> to vector<8x8xbf16>
    "tpu.trace_start"() <{level = 10 : i32, message = "qk,kd->qd"}> : () -> ()
    %cst_90 = arith.constant dense<0.000000e+00> : vector<8x8xf32>
    %292 = tpu.matmul %291, %262, %cst_90 {dimension_numbers = #tpu.dot_dimension_numbers<[1], [0], [0], [1], [0, 0, 1, 1], [], []>} : vector<8x8xbf16>, vector<8x8xbf16>, vector<8x8xf32> -> vector<8x8xf32>
    "tpu.trace_stop"() : () -> ()
    %293 = arith.addf %290, %292 : vector<8x8xf32>
    %294 = tpu.reciprocal %288 {approx = true} : vector<8x1xf32> -> vector<8x1xf32>
    %295 = vector.broadcast %294 : vector<8x1xf32> to vector<8x8xf32>
    %296 = arith.mulf %293, %295 : vector<8x8xf32>
    %297 = vector.extract_strided_slice %49 {offsets = [8, 16], sizes = [8, 8], strides = [1, 1]} : vector<16x96xf32> to vector<8x8xf32>
    %298 = arith.truncf %297 : vector<8x8xf32> to vector<8x8xbf16>
    %299 = vector.extract_strided_slice %49 {offsets = [8, 48], sizes = [8, 8], strides = [1, 1]} : vector<16x96xf32> to vector<8x8xf32>
    %300 = arith.truncf %299 : vector<8x8xf32> to vector<8x8xbf16>
    %301 = vector.extract_strided_slice %49 {offsets = [8, 80], sizes = [8, 8], strides = [1, 1]} : vector<16x96xf32> to vector<8x8xf32>
    %302 = arith.truncf %301 : vector<8x8xf32> to vector<8x8xbf16>
    %303 = vector.extract_strided_slice %51 {offsets = [0, 16], sizes = [4, 8], strides = [1, 1]} : vector<4x32xbf16> to vector<4x8xbf16>
    %304 = vector.extract_strided_slice %53 {offsets = [0, 16], sizes = [4, 8], strides = [1, 1]} : vector<4x32xbf16> to vector<4x8xbf16>
    "tpu.trace_start"() <{level = 10 : i32, message = "qd,kd->qk"}> : () -> ()
    %cst_91 = arith.constant dense<0.000000e+00> : vector<8x4xf32>
    %305 = tpu.matmul %298, %303, %cst_91 {dimension_numbers = #tpu.dot_dimension_numbers<[1], [1], [0], [0], [0, 0, 1, 0], [], []>} : vector<8x8xbf16>, vector<4x8xbf16>, vector<8x4xf32> -> vector<8x4xf32>
    "tpu.trace_stop"() : () -> ()
    %cst_92 = arith.constant 0.353553385 : f32
    %306 = vector.broadcast %cst_92 : f32 to vector<8x4xf32>
    %307 = arith.mulf %305, %306 : vector<8x4xf32>
    "tpu.trace_start"() <{level = 10 : i32, message = "qd,kd->qk"}> : () -> ()
    %cst_93 = arith.constant dense<0.000000e+00> : vector<8x8xf32>
    %308 = tpu.matmul %298, %300, %cst_93 {dimension_numbers = #tpu.dot_dimension_numbers<[1], [1], [0], [0], [0, 0, 1, 0], [], []>} : vector<8x8xbf16>, vector<8x8xbf16>, vector<8x8xf32> -> vector<8x8xf32>
    "tpu.trace_stop"() : () -> ()
    %cst_94 = arith.constant 0.353553385 : f32
    %309 = vector.broadcast %cst_94 : f32 to vector<8x8xf32>
    %310 = arith.mulf %308, %309 : vector<8x8xf32>
    %311 = vector.broadcast %216 : vector<1x8xf32> to vector<8x8xf32>
    %312 = arith.addf %310, %311 : vector<8x8xf32>
    %cst_95 = arith.constant dense<0xFF800000> : vector<8xf32>
    %313 = vector.multi_reduction <maximumf>, %307, %cst_95 [1] : vector<8x4xf32> to vector<8xf32>
    %314 = vector.shape_cast %313 : vector<8xf32> to vector<8x1xf32>
    %cst_96 = arith.constant dense<0xFF800000> : vector<8xf32>
    %315 = vector.multi_reduction <maximumf>, %312, %cst_96 [1] : vector<8x8xf32> to vector<8xf32>
    %316 = vector.shape_cast %315 : vector<8xf32> to vector<8x1xf32>
    %317 = arith.maximumf %314, %316 : vector<8x1xf32>
    %318 = vector.broadcast %317 : vector<8x1xf32> to vector<8x4xf32>
    %319 = arith.subf %307, %318 : vector<8x4xf32>
    %320 = math.exp %319 : vector<8x4xf32>
    %321 = vector.broadcast %317 : vector<8x1xf32> to vector<8x8xf32>
    %322 = arith.subf %312, %321 : vector<8x8xf32>
    %323 = math.exp %322 : vector<8x8xf32>
    %cst_97 = arith.constant dense<0.000000e+00> : vector<8xf32>
    %324 = vector.multi_reduction <add>, %320, %cst_97 [1] : vector<8x4xf32> to vector<8xf32>
    %325 = vector.shape_cast %324 : vector<8xf32> to vector<8x1xf32>
    %cst_98 = arith.constant dense<0.000000e+00> : vector<8xf32>
    %326 = vector.multi_reduction <add>, %323, %cst_98 [1] : vector<8x8xf32> to vector<8xf32>
    %327 = vector.shape_cast %326 : vector<8xf32> to vector<8x1xf32>
    %328 = arith.addf %325, %327 : vector<8x1xf32>
    %329 = arith.truncf %320 : vector<8x4xf32> to vector<8x4xbf16>
    "tpu.trace_start"() <{level = 10 : i32, message = "qk,kd->qd"}> : () -> ()
    %cst_99 = arith.constant dense<0.000000e+00> : vector<8x8xf32>
    %330 = tpu.matmul %329, %304, %cst_99 {dimension_numbers = #tpu.dot_dimension_numbers<[1], [0], [0], [1], [0, 0, 1, 1], [], []>} : vector<8x4xbf16>, vector<4x8xbf16>, vector<8x8xf32> -> vector<8x8xf32>
    "tpu.trace_stop"() : () -> ()
    %331 = arith.truncf %323 : vector<8x8xf32> to vector<8x8xbf16>
    "tpu.trace_start"() <{level = 10 : i32, message = "qk,kd->qd"}> : () -> ()
    %cst_100 = arith.constant dense<0.000000e+00> : vector<8x8xf32>
    %332 = tpu.matmul %331, %302, %cst_100 {dimension_numbers = #tpu.dot_dimension_numbers<[1], [0], [0], [1], [0, 0, 1, 1], [], []>} : vector<8x8xbf16>, vector<8x8xbf16>, vector<8x8xf32> -> vector<8x8xf32>
    "tpu.trace_stop"() : () -> ()
    %333 = arith.addf %330, %332 : vector<8x8xf32>
    %334 = tpu.reciprocal %328 {approx = true} : vector<8x1xf32> -> vector<8x1xf32>
    %335 = vector.broadcast %334 : vector<8x1xf32> to vector<8x8xf32>
    %336 = arith.mulf %333, %335 : vector<8x8xf32>
    %337 = vector.extract_strided_slice %49 {offsets = [8, 24], sizes = [8, 8], strides = [1, 1]} : vector<16x96xf32> to vector<8x8xf32>
    %338 = arith.truncf %337 : vector<8x8xf32> to vector<8x8xbf16>
    %339 = vector.extract_strided_slice %49 {offsets = [8, 56], sizes = [8, 8], strides = [1, 1]} : vector<16x96xf32> to vector<8x8xf32>
    %340 = arith.truncf %339 : vector<8x8xf32> to vector<8x8xbf16>
    %341 = vector.extract_strided_slice %49 {offsets = [8, 88], sizes = [8, 8], strides = [1, 1]} : vector<16x96xf32> to vector<8x8xf32>
    %342 = arith.truncf %341 : vector<8x8xf32> to vector<8x8xbf16>
    %343 = vector.extract_strided_slice %51 {offsets = [0, 24], sizes = [4, 8], strides = [1, 1]} : vector<4x32xbf16> to vector<4x8xbf16>
    %344 = vector.extract_strided_slice %53 {offsets = [0, 24], sizes = [4, 8], strides = [1, 1]} : vector<4x32xbf16> to vector<4x8xbf16>
    "tpu.trace_start"() <{level = 10 : i32, message = "qd,kd->qk"}> : () -> ()
    %cst_101 = arith.constant dense<0.000000e+00> : vector<8x4xf32>
    %345 = tpu.matmul %338, %343, %cst_101 {dimension_numbers = #tpu.dot_dimension_numbers<[1], [1], [0], [0], [0, 0, 1, 0], [], []>} : vector<8x8xbf16>, vector<4x8xbf16>, vector<8x4xf32> -> vector<8x4xf32>
    "tpu.trace_stop"() : () -> ()
    %cst_102 = arith.constant 0.353553385 : f32
    %346 = vector.broadcast %cst_102 : f32 to vector<8x4xf32>
    %347 = arith.mulf %345, %346 : vector<8x4xf32>
    "tpu.trace_start"() <{level = 10 : i32, message = "qd,kd->qk"}> : () -> ()
    %cst_103 = arith.constant dense<0.000000e+00> : vector<8x8xf32>
    %348 = tpu.matmul %338, %340, %cst_103 {dimension_numbers = #tpu.dot_dimension_numbers<[1], [1], [0], [0], [0, 0, 1, 0], [], []>} : vector<8x8xbf16>, vector<8x8xbf16>, vector<8x8xf32> -> vector<8x8xf32>
    "tpu.trace_stop"() : () -> ()
    %cst_104 = arith.constant 0.353553385 : f32
    %349 = vector.broadcast %cst_104 : f32 to vector<8x8xf32>
    %350 = arith.mulf %348, %349 : vector<8x8xf32>
    %351 = vector.broadcast %216 : vector<1x8xf32> to vector<8x8xf32>
    %352 = arith.addf %350, %351 : vector<8x8xf32>
    %cst_105 = arith.constant dense<0xFF800000> : vector<8xf32>
    %353 = vector.multi_reduction <maximumf>, %347, %cst_105 [1] : vector<8x4xf32> to vector<8xf32>
    %354 = vector.shape_cast %353 : vector<8xf32> to vector<8x1xf32>
    %cst_106 = arith.constant dense<0xFF800000> : vector<8xf32>
    %355 = vector.multi_reduction <maximumf>, %352, %cst_106 [1] : vector<8x8xf32> to vector<8xf32>
    %356 = vector.shape_cast %355 : vector<8xf32> to vector<8x1xf32>
    %357 = arith.maximumf %354, %356 : vector<8x1xf32>
    %358 = vector.broadcast %357 : vector<8x1xf32> to vector<8x4xf32>
    %359 = arith.subf %347, %358 : vector<8x4xf32>
    %360 = math.exp %359 : vector<8x4xf32>
    %361 = vector.broadcast %357 : vector<8x1xf32> to vector<8x8xf32>
    %362 = arith.subf %352, %361 : vector<8x8xf32>
    %363 = math.exp %362 : vector<8x8xf32>
    %cst_107 = arith.constant dense<0.000000e+00> : vector<8xf32>
    %364 = vector.multi_reduction <add>, %360, %cst_107 [1] : vector<8x4xf32> to vector<8xf32>
    %365 = vector.shape_cast %364 : vector<8xf32> to vector<8x1xf32>
    %cst_108 = arith.constant dense<0.000000e+00> : vector<8xf32>
    %366 = vector.multi_reduction <add>, %363, %cst_108 [1] : vector<8x8xf32> to vector<8xf32>
    %367 = vector.shape_cast %366 : vector<8xf32> to vector<8x1xf32>
    %368 = arith.addf %365, %367 : vector<8x1xf32>
    %369 = arith.truncf %360 : vector<8x4xf32> to vector<8x4xbf16>
    "tpu.trace_start"() <{level = 10 : i32, message = "qk,kd->qd"}> : () -> ()
    %cst_109 = arith.constant dense<0.000000e+00> : vector<8x8xf32>
    %370 = tpu.matmul %369, %344, %cst_109 {dimension_numbers = #tpu.dot_dimension_numbers<[1], [0], [0], [1], [0, 0, 1, 1], [], []>} : vector<8x4xbf16>, vector<4x8xbf16>, vector<8x8xf32> -> vector<8x8xf32>
    "tpu.trace_stop"() : () -> ()
    %371 = arith.truncf %363 : vector<8x8xf32> to vector<8x8xbf16>
    "tpu.trace_start"() <{level = 10 : i32, message = "qk,kd->qd"}> : () -> ()
    %cst_110 = arith.constant dense<0.000000e+00> : vector<8x8xf32>
    %372 = tpu.matmul %371, %342, %cst_110 {dimension_numbers = #tpu.dot_dimension_numbers<[1], [0], [0], [1], [0, 0, 1, 1], [], []>} : vector<8x8xbf16>, vector<8x8xbf16>, vector<8x8xf32> -> vector<8x8xf32>
    "tpu.trace_stop"() : () -> ()
    %373 = arith.addf %370, %372 : vector<8x8xf32>
    %374 = tpu.reciprocal %368 {approx = true} : vector<8x1xf32> -> vector<8x1xf32>
    %375 = vector.broadcast %374 : vector<8x1xf32> to vector<8x8xf32>
    %376 = arith.mulf %373, %375 : vector<8x8xf32>
    %377 = tpu.concatenate %256, %296, %336, %376 in 1 : vector<8x8xf32>, vector<8x8xf32>, vector<8x8xf32>, vector<8x8xf32> -> vector<8x32xf32>
    %378 = tpu.concatenate %215, %377 in 0 : vector<8x32xf32>, vector<8x32xf32> -> vector<16x32xf32>
    %379 = arith.truncf %378 : vector<16x32xf32> to vector<16x32xbf16>
    %c0_111 = arith.constant 0 : index
    %c0_112 = arith.constant 0 : index
    %c0_113 = arith.constant 0 : index
    %380 = vector.load %arg10[%c0_111, %c0_112, %c0_113] : memref<2x32x32xbf16, #tpu.memory_space<vmem>>, vector<1x32x32xbf16>
    %381 = vector.shape_cast %380 : vector<1x32x32xbf16> to vector<32x32xbf16>
    %cst_114 = arith.constant dense<0.000000e+00> : vector<16x32xf32>
    %382 = tpu.matmul %379, %381, %cst_114 {dimension_numbers = #tpu.dot_dimension_numbers<[1], [0], [0], [1], [0, 0, 1, 1], [], []>} : vector<16x32xbf16>, vector<32x32xbf16>, vector<16x32xf32> -> vector<16x32xf32>
    %c0_115 = arith.constant 0 : index
    %c0_116 = arith.constant 0 : index
    %c0_117 = arith.constant 0 : index
    %383 = vector.load %arg11[%c0_115, %c0_116, %c0_117] : memref<2x1x32xf32, #tpu.memory_space<vmem>>, vector<1x1x32xf32>
    %384 = vector.shape_cast %383 : vector<1x1x32xf32> to vector<1x32xf32>
    %385 = vector.broadcast %384 : vector<1x32xf32> to vector<16x32xf32>
    %386 = arith.addf %382, %385 : vector<16x32xf32>
    %387 = arith.addf %386, %35 : vector<16x32xf32>
    %c0_118 = arith.constant 0 : index
    %c0_119 = arith.constant 0 : index
    %c0_120 = arith.constant 0 : index
    %388 = vector.load %arg12[%c0_118, %c0_119, %c0_120] : memref<2x1x32xf32, #tpu.memory_space<vmem>>, vector<1x1x32xf32>
    %389 = vector.shape_cast %388 : vector<1x1x32xf32> to vector<1x32xf32>
    %c0_121 = arith.constant 0 : index
    %c0_122 = arith.constant 0 : index
    %c0_123 = arith.constant 0 : index
    %390 = vector.load %arg13[%c0_121, %c0_122, %c0_123] : memref<2x1x32xf32, #tpu.memory_space<vmem>>, vector<1x1x32xf32>
    %391 = vector.shape_cast %390 : vector<1x1x32xf32> to vector<1x32xf32>
    %cst_124 = arith.constant dense<0.000000e+00> : vector<16xf32>
    %392 = vector.multi_reduction <add>, %387, %cst_124 [1] : vector<16x32xf32> to vector<16xf32>
    %393 = vector.shape_cast %392 : vector<16xf32> to vector<16x1xf32>
    %cst_125 = arith.constant 3.200000e+01 : f32
    %394 = vector.broadcast %cst_125 : f32 to vector<16x1xf32>
    %395 = arith.divf %393, %394 : vector<16x1xf32>
    %396 = vector.broadcast %395 : vector<16x1xf32> to vector<16x32xf32>
    %397 = arith.subf %387, %396 : vector<16x32xf32>
    %398 = arith.mulf %397, %397 : vector<16x32xf32>
    %cst_126 = arith.constant dense<0.000000e+00> : vector<16xf32>
    %399 = vector.multi_reduction <add>, %398, %cst_126 [1] : vector<16x32xf32> to vector<16xf32>
    %400 = vector.shape_cast %399 : vector<16xf32> to vector<16x1xf32>
    %cst_127 = arith.constant 3.200000e+01 : f32
    %401 = vector.broadcast %cst_127 : f32 to vector<16x1xf32>
    %402 = arith.divf %400, %401 : vector<16x1xf32>
    %403 = vector.broadcast %395 : vector<16x1xf32> to vector<16x32xf32>
    %404 = arith.subf %387, %403 : vector<16x32xf32>
    %cst_128 = arith.constant 9.99999996E-13 : f32
    %405 = vector.broadcast %cst_128 : f32 to vector<16x1xf32>
    %406 = arith.addf %402, %405 : vector<16x1xf32>
    %407 = math.rsqrt %406 : vector<16x1xf32>
    %408 = vector.broadcast %407 : vector<16x1xf32> to vector<16x32xf32>
    %409 = arith.mulf %404, %408 : vector<16x32xf32>
    %410 = vector.broadcast %389 : vector<1x32xf32> to vector<16x32xf32>
    %411 = arith.mulf %409, %410 : vector<16x32xf32>
    %412 = vector.broadcast %391 : vector<1x32xf32> to vector<16x32xf32>
    %413 = arith.addf %411, %412 : vector<16x32xf32>
    %414 = arith.truncf %413 : vector<16x32xf32> to vector<16x32xbf16>
    %c0_129 = arith.constant 0 : index
    %c0_130 = arith.constant 0 : index
    %c0_131 = arith.constant 0 : index
    %415 = vector.load %arg14[%c0_129, %c0_130, %c0_131] : memref<2x32x64xbf16, #tpu.memory_space<vmem>>, vector<1x32x64xbf16>
    %416 = vector.shape_cast %415 : vector<1x32x64xbf16> to vector<32x64xbf16>
    %cst_132 = arith.constant dense<0.000000e+00> : vector<16x64xf32>
    %417 = tpu.matmul %414, %416, %cst_132 {dimension_numbers = #tpu.dot_dimension_numbers<[1], [0], [0], [1], [0, 0, 1, 1], [], []>} : vector<16x32xbf16>, vector<32x64xbf16>, vector<16x64xf32> -> vector<16x64xf32>
    %c0_133 = arith.constant 0 : index
    %c0_134 = arith.constant 0 : index
    %c0_135 = arith.constant 0 : index
    %418 = vector.load %arg15[%c0_133, %c0_134, %c0_135] : memref<2x1x64xf32, #tpu.memory_space<vmem>>, vector<1x1x64xf32>
    %419 = vector.shape_cast %418 : vector<1x1x64xf32> to vector<1x64xf32>
    %420 = vector.broadcast %419 : vector<1x64xf32> to vector<16x64xf32>
    %421 = arith.addf %417, %420 : vector<16x64xf32>
    %cst_136 = arith.constant 5.000000e-01 : f32
    %422 = vector.broadcast %cst_136 : f32 to vector<16x64xf32>
    %423 = arith.mulf %422, %421 : vector<16x64xf32>
    %cst_137 = arith.constant 4.471500e-02 : f32
    %424 = vector.broadcast %cst_137 : f32 to vector<16x64xf32>
    %425 = arith.mulf %424, %421 : vector<16x64xf32>
    %426 = arith.mulf %425, %421 : vector<16x64xf32>
    %427 = arith.mulf %426, %421 : vector<16x64xf32>
    %428 = arith.addf %421, %427 : vector<16x64xf32>
    %cst_138 = arith.constant 0.797884583 : f32
    %429 = vector.broadcast %cst_138 : f32 to vector<16x64xf32>
    %430 = arith.mulf %429, %428 : vector<16x64xf32>
    %431 = math.tanh %430 : vector<16x64xf32>
    %cst_139 = arith.constant 1.000000e+00 : f32
    %432 = vector.broadcast %cst_139 : f32 to vector<16x64xf32>
    %433 = arith.addf %432, %431 : vector<16x64xf32>
    %434 = arith.mulf %423, %433 : vector<16x64xf32>
    %435 = arith.truncf %434 : vector<16x64xf32> to vector<16x64xbf16>
    %c0_140 = arith.constant 0 : index
    %c0_141 = arith.constant 0 : index
    %c0_142 = arith.constant 0 : index
    %436 = vector.load %arg16[%c0_140, %c0_141, %c0_142] : memref<2x64x32xbf16, #tpu.memory_space<vmem>>, vector<1x64x32xbf16>
    %437 = vector.shape_cast %436 : vector<1x64x32xbf16> to vector<64x32xbf16>
    %cst_143 = arith.constant dense<0.000000e+00> : vector<16x32xf32>
    %438 = tpu.matmul %435, %437, %cst_143 {dimension_numbers = #tpu.dot_dimension_numbers<[1], [0], [0], [1], [0, 0, 1, 1], [], []>} : vector<16x64xbf16>, vector<64x32xbf16>, vector<16x32xf32> -> vector<16x32xf32>
    %c0_144 = arith.constant 0 : index
    %c0_145 = arith.constant 0 : index
    %c0_146 = arith.constant 0 : index
    %439 = vector.load %arg17[%c0_144, %c0_145, %c0_146] : memref<2x1x32xf32, #tpu.memory_space<vmem>>, vector<1x1x32xf32>
    %440 = vector.shape_cast %439 : vector<1x1x32xf32> to vector<1x32xf32>
    %441 = vector.broadcast %440 : vector<1x32xf32> to vector<16x32xf32>
    %442 = arith.addf %438, %441 : vector<16x32xf32>
    %443 = arith.addf %442, %413 : vector<16x32xf32>
    %c0_147 = arith.constant 0 : index
    %c0_148 = arith.constant 0 : index
    %c0_149 = arith.constant 0 : index
    %444 = vector.load %arg18[%c0_147, %c0_148, %c0_149] : memref<2x1x32xf32, #tpu.memory_space<vmem>>, vector<1x1x32xf32>
    %445 = vector.shape_cast %444 : vector<1x1x32xf32> to vector<1x32xf32>
    %c0_150 = arith.constant 0 : index
    %c0_151 = arith.constant 0 : index
    %c0_152 = arith.constant 0 : index
    %446 = vector.load %arg19[%c0_150, %c0_151, %c0_152] : memref<2x1x32xf32, #tpu.memory_space<vmem>>, vector<1x1x32xf32>
    %447 = vector.shape_cast %446 : vector<1x1x32xf32> to vector<1x32xf32>
    %cst_153 = arith.constant dense<0.000000e+00> : vector<16xf32>
    %448 = vector.multi_reduction <add>, %443, %cst_153 [1] : vector<16x32xf32> to vector<16xf32>
    %449 = vector.shape_cast %448 : vector<16xf32> to vector<16x1xf32>
    %cst_154 = arith.constant 3.200000e+01 : f32
    %450 = vector.broadcast %cst_154 : f32 to vector<16x1xf32>
    %451 = arith.divf %449, %450 : vector<16x1xf32>
    %452 = vector.broadcast %451 : vector<16x1xf32> to vector<16x32xf32>
    %453 = arith.subf %443, %452 : vector<16x32xf32>
    %454 = arith.mulf %453, %453 : vector<16x32xf32>
    %cst_155 = arith.constant dense<0.000000e+00> : vector<16xf32>
    %455 = vector.multi_reduction <add>, %454, %cst_155 [1] : vector<16x32xf32> to vector<16xf32>
    %456 = vector.shape_cast %455 : vector<16xf32> to vector<16x1xf32>
    %cst_156 = arith.constant 3.200000e+01 : f32
    %457 = vector.broadcast %cst_156 : f32 to vector<16x1xf32>
    %458 = arith.divf %456, %457 : vector<16x1xf32>
    %459 = vector.broadcast %451 : vector<16x1xf32> to vector<16x32xf32>
    %460 = arith.subf %443, %459 : vector<16x32xf32>
    %cst_157 = arith.constant 9.99999996E-13 : f32
    %461 = vector.broadcast %cst_157 : f32 to vector<16x1xf32>
    %462 = arith.addf %458, %461 : vector<16x1xf32>
    %463 = math.rsqrt %462 : vector<16x1xf32>
    %464 = vector.broadcast %463 : vector<16x1xf32> to vector<16x32xf32>
    %465 = arith.mulf %460, %464 : vector<16x32xf32>
    %466 = vector.broadcast %445 : vector<1x32xf32> to vector<16x32xf32>
    %467 = arith.mulf %465, %466 : vector<16x32xf32>
    %468 = vector.broadcast %447 : vector<1x32xf32> to vector<16x32xf32>
    %469 = arith.addf %467, %468 : vector<16x32xf32>
    %470 = arith.truncf %469 : vector<16x32xf32> to vector<16x32xbf16>
    %c1 = arith.constant 1 : index
    %c0_158 = arith.constant 0 : index
    %c0_159 = arith.constant 0 : index
    %471 = vector.load %arg8[%c1, %c0_158, %c0_159] : memref<2x32x96xbf16, #tpu.memory_space<vmem>>, vector<1x32x96xbf16>
    %472 = vector.shape_cast %471 : vector<1x32x96xbf16> to vector<32x96xbf16>
    %cst_160 = arith.constant dense<0.000000e+00> : vector<16x96xf32>
    %473 = tpu.matmul %470, %472, %cst_160 {dimension_numbers = #tpu.dot_dimension_numbers<[1], [0], [0], [1], [0, 0, 1, 1], [], []>} : vector<16x32xbf16>, vector<32x96xbf16>, vector<16x96xf32> -> vector<16x96xf32>
    %c1_161 = arith.constant 1 : index
    %c0_162 = arith.constant 0 : index
    %c0_163 = arith.constant 0 : index
    %474 = vector.load %arg9[%c1_161, %c0_162, %c0_163] : memref<2x1x96xf32, #tpu.memory_space<vmem>>, vector<1x1x96xf32>
    %475 = vector.shape_cast %474 : vector<1x1x96xf32> to vector<1x96xf32>
    %476 = vector.broadcast %475 : vector<1x96xf32> to vector<16x96xf32>
    %477 = arith.addf %473, %476 : vector<16x96xf32>
    %c1_164 = arith.constant 1 : index
    %c0_165 = arith.constant 0 : index
    %c0_166 = arith.constant 0 : index
    %478 = vector.load %arg6[%c1_164, %c0_165, %c0_166] : memref<2x4x32xbf16, #tpu.memory_space<vmem>>, vector<1x4x32xbf16>
    %479 = vector.shape_cast %478 : vector<1x4x32xbf16> to vector<4x32xbf16>
    %c1_167 = arith.constant 1 : index
    %c0_168 = arith.constant 0 : index
    %c0_169 = arith.constant 0 : index
    %480 = vector.load %arg7[%c1_167, %c0_168, %c0_169] : memref<2x4x32xbf16, #tpu.memory_space<vmem>>, vector<1x4x32xbf16>
    %481 = vector.shape_cast %480 : vector<1x4x32xbf16> to vector<4x32xbf16>
    %482 = vector.extract_strided_slice %41 {offsets = [0, 0], sizes = [1, 8], strides = [1, 1]} : vector<2x8xf32> to vector<1x8xf32>
    %483 = vector.extract_strided_slice %477 {offsets = [0, 0], sizes = [8, 8], strides = [1, 1]} : vector<16x96xf32> to vector<8x8xf32>
    %484 = arith.truncf %483 : vector<8x8xf32> to vector<8x8xbf16>
    %485 = vector.extract_strided_slice %477 {offsets = [0, 32], sizes = [8, 8], strides = [1, 1]} : vector<16x96xf32> to vector<8x8xf32>
    %486 = arith.truncf %485 : vector<8x8xf32> to vector<8x8xbf16>
    %487 = vector.extract_strided_slice %477 {offsets = [0, 64], sizes = [8, 8], strides = [1, 1]} : vector<16x96xf32> to vector<8x8xf32>
    %488 = arith.truncf %487 : vector<8x8xf32> to vector<8x8xbf16>
    %489 = vector.extract_strided_slice %479 {offsets = [0, 0], sizes = [4, 8], strides = [1, 1]} : vector<4x32xbf16> to vector<4x8xbf16>
    %490 = vector.extract_strided_slice %481 {offsets = [0, 0], sizes = [4, 8], strides = [1, 1]} : vector<4x32xbf16> to vector<4x8xbf16>
    "tpu.trace_start"() <{level = 10 : i32, message = "qd,kd->qk"}> : () -> ()
    %cst_170 = arith.constant dense<0.000000e+00> : vector<8x4xf32>
    %491 = tpu.matmul %484, %489, %cst_170 {dimension_numbers = #tpu.dot_dimension_numbers<[1], [1], [0], [0], [0, 0, 1, 0], [], []>} : vector<8x8xbf16>, vector<4x8xbf16>, vector<8x4xf32> -> vector<8x4xf32>
    "tpu.trace_stop"() : () -> ()
    %cst_171 = arith.constant 0.353553385 : f32
    %492 = vector.broadcast %cst_171 : f32 to vector<8x4xf32>
    %493 = arith.mulf %491, %492 : vector<8x4xf32>
    "tpu.trace_start"() <{level = 10 : i32, message = "qd,kd->qk"}> : () -> ()
    %cst_172 = arith.constant dense<0.000000e+00> : vector<8x8xf32>
    %494 = tpu.matmul %484, %486, %cst_172 {dimension_numbers = #tpu.dot_dimension_numbers<[1], [1], [0], [0], [0, 0, 1, 0], [], []>} : vector<8x8xbf16>, vector<8x8xbf16>, vector<8x8xf32> -> vector<8x8xf32>
    "tpu.trace_stop"() : () -> ()
    %cst_173 = arith.constant 0.353553385 : f32
    %495 = vector.broadcast %cst_173 : f32 to vector<8x8xf32>
    %496 = arith.mulf %494, %495 : vector<8x8xf32>
    %497 = vector.broadcast %482 : vector<1x8xf32> to vector<8x8xf32>
    %498 = arith.addf %496, %497 : vector<8x8xf32>
    %cst_174 = arith.constant dense<0xFF800000> : vector<8xf32>
    %499 = vector.multi_reduction <maximumf>, %493, %cst_174 [1] : vector<8x4xf32> to vector<8xf32>
    %500 = vector.shape_cast %499 : vector<8xf32> to vector<8x1xf32>
    %cst_175 = arith.constant dense<0xFF800000> : vector<8xf32>
    %501 = vector.multi_reduction <maximumf>, %498, %cst_175 [1] : vector<8x8xf32> to vector<8xf32>
    %502 = vector.shape_cast %501 : vector<8xf32> to vector<8x1xf32>
    %503 = arith.maximumf %500, %502 : vector<8x1xf32>
    %504 = vector.broadcast %503 : vector<8x1xf32> to vector<8x4xf32>
    %505 = arith.subf %493, %504 : vector<8x4xf32>
    %506 = math.exp %505 : vector<8x4xf32>
    %507 = vector.broadcast %503 : vector<8x1xf32> to vector<8x8xf32>
    %508 = arith.subf %498, %507 : vector<8x8xf32>
    %509 = math.exp %508 : vector<8x8xf32>
    %cst_176 = arith.constant dense<0.000000e+00> : vector<8xf32>
    %510 = vector.multi_reduction <add>, %506, %cst_176 [1] : vector<8x4xf32> to vector<8xf32>
    %511 = vector.shape_cast %510 : vector<8xf32> to vector<8x1xf32>
    %cst_177 = arith.constant dense<0.000000e+00> : vector<8xf32>
    %512 = vector.multi_reduction <add>, %509, %cst_177 [1] : vector<8x8xf32> to vector<8xf32>
    %513 = vector.shape_cast %512 : vector<8xf32> to vector<8x1xf32>
    %514 = arith.addf %511, %513 : vector<8x1xf32>
    %515 = arith.truncf %506 : vector<8x4xf32> to vector<8x4xbf16>
    "tpu.trace_start"() <{level = 10 : i32, message = "qk,kd->qd"}> : () -> ()
    %cst_178 = arith.constant dense<0.000000e+00> : vector<8x8xf32>
    %516 = tpu.matmul %515, %490, %cst_178 {dimension_numbers = #tpu.dot_dimension_numbers<[1], [0], [0], [1], [0, 0, 1, 1], [], []>} : vector<8x4xbf16>, vector<4x8xbf16>, vector<8x8xf32> -> vector<8x8xf32>
    "tpu.trace_stop"() : () -> ()
    %517 = arith.truncf %509 : vector<8x8xf32> to vector<8x8xbf16>
    "tpu.trace_start"() <{level = 10 : i32, message = "qk,kd->qd"}> : () -> ()
    %cst_179 = arith.constant dense<0.000000e+00> : vector<8x8xf32>
    %518 = tpu.matmul %517, %488, %cst_179 {dimension_numbers = #tpu.dot_dimension_numbers<[1], [0], [0], [1], [0, 0, 1, 1], [], []>} : vector<8x8xbf16>, vector<8x8xbf16>, vector<8x8xf32> -> vector<8x8xf32>
    "tpu.trace_stop"() : () -> ()
    %519 = arith.addf %516, %518 : vector<8x8xf32>
    %520 = tpu.reciprocal %514 {approx = true} : vector<8x1xf32> -> vector<8x1xf32>
    %521 = vector.broadcast %520 : vector<8x1xf32> to vector<8x8xf32>
    %522 = arith.mulf %519, %521 : vector<8x8xf32>
    %523 = vector.extract_strided_slice %477 {offsets = [0, 8], sizes = [8, 8], strides = [1, 1]} : vector<16x96xf32> to vector<8x8xf32>
    %524 = arith.truncf %523 : vector<8x8xf32> to vector<8x8xbf16>
    %525 = vector.extract_strided_slice %477 {offsets = [0, 40], sizes = [8, 8], strides = [1, 1]} : vector<16x96xf32> to vector<8x8xf32>
    %526 = arith.truncf %525 : vector<8x8xf32> to vector<8x8xbf16>
    %527 = vector.extract_strided_slice %477 {offsets = [0, 72], sizes = [8, 8], strides = [1, 1]} : vector<16x96xf32> to vector<8x8xf32>
    %528 = arith.truncf %527 : vector<8x8xf32> to vector<8x8xbf16>
    %529 = vector.extract_strided_slice %479 {offsets = [0, 8], sizes = [4, 8], strides = [1, 1]} : vector<4x32xbf16> to vector<4x8xbf16>
    %530 = vector.extract_strided_slice %481 {offsets = [0, 8], sizes = [4, 8], strides = [1, 1]} : vector<4x32xbf16> to vector<4x8xbf16>
    "tpu.trace_start"() <{level = 10 : i32, message = "qd,kd->qk"}> : () -> ()
    %cst_180 = arith.constant dense<0.000000e+00> : vector<8x4xf32>
    %531 = tpu.matmul %524, %529, %cst_180 {dimension_numbers = #tpu.dot_dimension_numbers<[1], [1], [0], [0], [0, 0, 1, 0], [], []>} : vector<8x8xbf16>, vector<4x8xbf16>, vector<8x4xf32> -> vector<8x4xf32>
    "tpu.trace_stop"() : () -> ()
    %cst_181 = arith.constant 0.353553385 : f32
    %532 = vector.broadcast %cst_181 : f32 to vector<8x4xf32>
    %533 = arith.mulf %531, %532 : vector<8x4xf32>
    "tpu.trace_start"() <{level = 10 : i32, message = "qd,kd->qk"}> : () -> ()
    %cst_182 = arith.constant dense<0.000000e+00> : vector<8x8xf32>
    %534 = tpu.matmul %524, %526, %cst_182 {dimension_numbers = #tpu.dot_dimension_numbers<[1], [1], [0], [0], [0, 0, 1, 0], [], []>} : vector<8x8xbf16>, vector<8x8xbf16>, vector<8x8xf32> -> vector<8x8xf32>
    "tpu.trace_stop"() : () -> ()
    %cst_183 = arith.constant 0.353553385 : f32
    %535 = vector.broadcast %cst_183 : f32 to vector<8x8xf32>
    %536 = arith.mulf %534, %535 : vector<8x8xf32>
    %537 = vector.broadcast %482 : vector<1x8xf32> to vector<8x8xf32>
    %538 = arith.addf %536, %537 : vector<8x8xf32>
    %cst_184 = arith.constant dense<0xFF800000> : vector<8xf32>
    %539 = vector.multi_reduction <maximumf>, %533, %cst_184 [1] : vector<8x4xf32> to vector<8xf32>
    %540 = vector.shape_cast %539 : vector<8xf32> to vector<8x1xf32>
    %cst_185 = arith.constant dense<0xFF800000> : vector<8xf32>
    %541 = vector.multi_reduction <maximumf>, %538, %cst_185 [1] : vector<8x8xf32> to vector<8xf32>
    %542 = vector.shape_cast %541 : vector<8xf32> to vector<8x1xf32>
    %543 = arith.maximumf %540, %542 : vector<8x1xf32>
    %544 = vector.broadcast %543 : vector<8x1xf32> to vector<8x4xf32>
    %545 = arith.subf %533, %544 : vector<8x4xf32>
    %546 = math.exp %545 : vector<8x4xf32>
    %547 = vector.broadcast %543 : vector<8x1xf32> to vector<8x8xf32>
    %548 = arith.subf %538, %547 : vector<8x8xf32>
    %549 = math.exp %548 : vector<8x8xf32>
    %cst_186 = arith.constant dense<0.000000e+00> : vector<8xf32>
    %550 = vector.multi_reduction <add>, %546, %cst_186 [1] : vector<8x4xf32> to vector<8xf32>
    %551 = vector.shape_cast %550 : vector<8xf32> to vector<8x1xf32>
    %cst_187 = arith.constant dense<0.000000e+00> : vector<8xf32>
    %552 = vector.multi_reduction <add>, %549, %cst_187 [1] : vector<8x8xf32> to vector<8xf32>
    %553 = vector.shape_cast %552 : vector<8xf32> to vector<8x1xf32>
    %554 = arith.addf %551, %553 : vector<8x1xf32>
    %555 = arith.truncf %546 : vector<8x4xf32> to vector<8x4xbf16>
    "tpu.trace_start"() <{level = 10 : i32, message = "qk,kd->qd"}> : () -> ()
    %cst_188 = arith.constant dense<0.000000e+00> : vector<8x8xf32>
    %556 = tpu.matmul %555, %530, %cst_188 {dimension_numbers = #tpu.dot_dimension_numbers<[1], [0], [0], [1], [0, 0, 1, 1], [], []>} : vector<8x4xbf16>, vector<4x8xbf16>, vector<8x8xf32> -> vector<8x8xf32>
    "tpu.trace_stop"() : () -> ()
    %557 = arith.truncf %549 : vector<8x8xf32> to vector<8x8xbf16>
    "tpu.trace_start"() <{level = 10 : i32, message = "qk,kd->qd"}> : () -> ()
    %cst_189 = arith.constant dense<0.000000e+00> : vector<8x8xf32>
    %558 = tpu.matmul %557, %528, %cst_189 {dimension_numbers = #tpu.dot_dimension_numbers<[1], [0], [0], [1], [0, 0, 1, 1], [], []>} : vector<8x8xbf16>, vector<8x8xbf16>, vector<8x8xf32> -> vector<8x8xf32>
    "tpu.trace_stop"() : () -> ()
    %559 = arith.addf %556, %558 : vector<8x8xf32>
    %560 = tpu.reciprocal %554 {approx = true} : vector<8x1xf32> -> vector<8x1xf32>
    %561 = vector.broadcast %560 : vector<8x1xf32> to vector<8x8xf32>
    %562 = arith.mulf %559, %561 : vector<8x8xf32>
    %563 = vector.extract_strided_slice %477 {offsets = [0, 16], sizes = [8, 8], strides = [1, 1]} : vector<16x96xf32> to vector<8x8xf32>
    %564 = arith.truncf %563 : vector<8x8xf32> to vector<8x8xbf16>
    %565 = vector.extract_strided_slice %477 {offsets = [0, 48], sizes = [8, 8], strides = [1, 1]} : vector<16x96xf32> to vector<8x8xf32>
    %566 = arith.truncf %565 : vector<8x8xf32> to vector<8x8xbf16>
    %567 = vector.extract_strided_slice %477 {offsets = [0, 80], sizes = [8, 8], strides = [1, 1]} : vector<16x96xf32> to vector<8x8xf32>
    %568 = arith.truncf %567 : vector<8x8xf32> to vector<8x8xbf16>
    %569 = vector.extract_strided_slice %479 {offsets = [0, 16], sizes = [4, 8], strides = [1, 1]} : vector<4x32xbf16> to vector<4x8xbf16>
    %570 = vector.extract_strided_slice %481 {offsets = [0, 16], sizes = [4, 8], strides = [1, 1]} : vector<4x32xbf16> to vector<4x8xbf16>
    "tpu.trace_start"() <{level = 10 : i32, message = "qd,kd->qk"}> : () -> ()
    %cst_190 = arith.constant dense<0.000000e+00> : vector<8x4xf32>
    %571 = tpu.matmul %564, %569, %cst_190 {dimension_numbers = #tpu.dot_dimension_numbers<[1], [1], [0], [0], [0, 0, 1, 0], [], []>} : vector<8x8xbf16>, vector<4x8xbf16>, vector<8x4xf32> -> vector<8x4xf32>
    "tpu.trace_stop"() : () -> ()
    %cst_191 = arith.constant 0.353553385 : f32
    %572 = vector.broadcast %cst_191 : f32 to vector<8x4xf32>
    %573 = arith.mulf %571, %572 : vector<8x4xf32>
    "tpu.trace_start"() <{level = 10 : i32, message = "qd,kd->qk"}> : () -> ()
    %cst_192 = arith.constant dense<0.000000e+00> : vector<8x8xf32>
    %574 = tpu.matmul %564, %566, %cst_192 {dimension_numbers = #tpu.dot_dimension_numbers<[1], [1], [0], [0], [0, 0, 1, 0], [], []>} : vector<8x8xbf16>, vector<8x8xbf16>, vector<8x8xf32> -> vector<8x8xf32>
    "tpu.trace_stop"() : () -> ()
    %cst_193 = arith.constant 0.353553385 : f32
    %575 = vector.broadcast %cst_193 : f32 to vector<8x8xf32>
    %576 = arith.mulf %574, %575 : vector<8x8xf32>
    %577 = vector.broadcast %482 : vector<1x8xf32> to vector<8x8xf32>
    %578 = arith.addf %576, %577 : vector<8x8xf32>
    %cst_194 = arith.constant dense<0xFF800000> : vector<8xf32>
    %579 = vector.multi_reduction <maximumf>, %573, %cst_194 [1] : vector<8x4xf32> to vector<8xf32>
    %580 = vector.shape_cast %579 : vector<8xf32> to vector<8x1xf32>
    %cst_195 = arith.constant dense<0xFF800000> : vector<8xf32>
    %581 = vector.multi_reduction <maximumf>, %578, %cst_195 [1] : vector<8x8xf32> to vector<8xf32>
    %582 = vector.shape_cast %581 : vector<8xf32> to vector<8x1xf32>
    %583 = arith.maximumf %580, %582 : vector<8x1xf32>
    %584 = vector.broadcast %583 : vector<8x1xf32> to vector<8x4xf32>
    %585 = arith.subf %573, %584 : vector<8x4xf32>
    %586 = math.exp %585 : vector<8x4xf32>
    %587 = vector.broadcast %583 : vector<8x1xf32> to vector<8x8xf32>
    %588 = arith.subf %578, %587 : vector<8x8xf32>
    %589 = math.exp %588 : vector<8x8xf32>
    %cst_196 = arith.constant dense<0.000000e+00> : vector<8xf32>
    %590 = vector.multi_reduction <add>, %586, %cst_196 [1] : vector<8x4xf32> to vector<8xf32>
    %591 = vector.shape_cast %590 : vector<8xf32> to vector<8x1xf32>
    %cst_197 = arith.constant dense<0.000000e+00> : vector<8xf32>
    %592 = vector.multi_reduction <add>, %589, %cst_197 [1] : vector<8x8xf32> to vector<8xf32>
    %593 = vector.shape_cast %592 : vector<8xf32> to vector<8x1xf32>
    %594 = arith.addf %591, %593 : vector<8x1xf32>
    %595 = arith.truncf %586 : vector<8x4xf32> to vector<8x4xbf16>
    "tpu.trace_start"() <{level = 10 : i32, message = "qk,kd->qd"}> : () -> ()
    %cst_198 = arith.constant dense<0.000000e+00> : vector<8x8xf32>
    %596 = tpu.matmul %595, %570, %cst_198 {dimension_numbers = #tpu.dot_dimension_numbers<[1], [0], [0], [1], [0, 0, 1, 1], [], []>} : vector<8x4xbf16>, vector<4x8xbf16>, vector<8x8xf32> -> vector<8x8xf32>
    "tpu.trace_stop"() : () -> ()
    %597 = arith.truncf %589 : vector<8x8xf32> to vector<8x8xbf16>
    "tpu.trace_start"() <{level = 10 : i32, message = "qk,kd->qd"}> : () -> ()
    %cst_199 = arith.constant dense<0.000000e+00> : vector<8x8xf32>
    %598 = tpu.matmul %597, %568, %cst_199 {dimension_numbers = #tpu.dot_dimension_numbers<[1], [0], [0], [1], [0, 0, 1, 1], [], []>} : vector<8x8xbf16>, vector<8x8xbf16>, vector<8x8xf32> -> vector<8x8xf32>
    "tpu.trace_stop"() : () -> ()
    %599 = arith.addf %596, %598 : vector<8x8xf32>
    %600 = tpu.reciprocal %594 {approx = true} : vector<8x1xf32> -> vector<8x1xf32>
    %601 = vector.broadcast %600 : vector<8x1xf32> to vector<8x8xf32>
    %602 = arith.mulf %599, %601 : vector<8x8xf32>
    %603 = vector.extract_strided_slice %477 {offsets = [0, 24], sizes = [8, 8], strides = [1, 1]} : vector<16x96xf32> to vector<8x8xf32>
    %604 = arith.truncf %603 : vector<8x8xf32> to vector<8x8xbf16>
    %605 = vector.extract_strided_slice %477 {offsets = [0, 56], sizes = [8, 8], strides = [1, 1]} : vector<16x96xf32> to vector<8x8xf32>
    %606 = arith.truncf %605 : vector<8x8xf32> to vector<8x8xbf16>
    %607 = vector.extract_strided_slice %477 {offsets = [0, 88], sizes = [8, 8], strides = [1, 1]} : vector<16x96xf32> to vector<8x8xf32>
    %608 = arith.truncf %607 : vector<8x8xf32> to vector<8x8xbf16>
    %609 = vector.extract_strided_slice %479 {offsets = [0, 24], sizes = [4, 8], strides = [1, 1]} : vector<4x32xbf16> to vector<4x8xbf16>
    %610 = vector.extract_strided_slice %481 {offsets = [0, 24], sizes = [4, 8], strides = [1, 1]} : vector<4x32xbf16> to vector<4x8xbf16>
    "tpu.trace_start"() <{level = 10 : i32, message = "qd,kd->qk"}> : () -> ()
    %cst_200 = arith.constant dense<0.000000e+00> : vector<8x4xf32>
    %611 = tpu.matmul %604, %609, %cst_200 {dimension_numbers = #tpu.dot_dimension_numbers<[1], [1], [0], [0], [0, 0, 1, 0], [], []>} : vector<8x8xbf16>, vector<4x8xbf16>, vector<8x4xf32> -> vector<8x4xf32>
    "tpu.trace_stop"() : () -> ()
    %cst_201 = arith.constant 0.353553385 : f32
    %612 = vector.broadcast %cst_201 : f32 to vector<8x4xf32>
    %613 = arith.mulf %611, %612 : vector<8x4xf32>
    "tpu.trace_start"() <{level = 10 : i32, message = "qd,kd->qk"}> : () -> ()
    %cst_202 = arith.constant dense<0.000000e+00> : vector<8x8xf32>
    %614 = tpu.matmul %604, %606, %cst_202 {dimension_numbers = #tpu.dot_dimension_numbers<[1], [1], [0], [0], [0, 0, 1, 0], [], []>} : vector<8x8xbf16>, vector<8x8xbf16>, vector<8x8xf32> -> vector<8x8xf32>
    "tpu.trace_stop"() : () -> ()
    %cst_203 = arith.constant 0.353553385 : f32
    %615 = vector.broadcast %cst_203 : f32 to vector<8x8xf32>
    %616 = arith.mulf %614, %615 : vector<8x8xf32>
    %617 = vector.broadcast %482 : vector<1x8xf32> to vector<8x8xf32>
    %618 = arith.addf %616, %617 : vector<8x8xf32>
    %cst_204 = arith.constant dense<0xFF800000> : vector<8xf32>
    %619 = vector.multi_reduction <maximumf>, %613, %cst_204 [1] : vector<8x4xf32> to vector<8xf32>
    %620 = vector.shape_cast %619 : vector<8xf32> to vector<8x1xf32>
    %cst_205 = arith.constant dense<0xFF800000> : vector<8xf32>
    %621 = vector.multi_reduction <maximumf>, %618, %cst_205 [1] : vector<8x8xf32> to vector<8xf32>
    %622 = vector.shape_cast %621 : vector<8xf32> to vector<8x1xf32>
    %623 = arith.maximumf %620, %622 : vector<8x1xf32>
    %624 = vector.broadcast %623 : vector<8x1xf32> to vector<8x4xf32>
    %625 = arith.subf %613, %624 : vector<8x4xf32>
    %626 = math.exp %625 : vector<8x4xf32>
    %627 = vector.broadcast %623 : vector<8x1xf32> to vector<8x8xf32>
    %628 = arith.subf %618, %627 : vector<8x8xf32>
    %629 = math.exp %628 : vector<8x8xf32>
    %cst_206 = arith.constant dense<0.000000e+00> : vector<8xf32>
    %630 = vector.multi_reduction <add>, %626, %cst_206 [1] : vector<8x4xf32> to vector<8xf32>
    %631 = vector.shape_cast %630 : vector<8xf32> to vector<8x1xf32>
    %cst_207 = arith.constant dense<0.000000e+00> : vector<8xf32>
    %632 = vector.multi_reduction <add>, %629, %cst_207 [1] : vector<8x8xf32> to vector<8xf32>
    %633 = vector.shape_cast %632 : vector<8xf32> to vector<8x1xf32>
    %634 = arith.addf %631, %633 : vector<8x1xf32>
    %635 = arith.truncf %626 : vector<8x4xf32> to vector<8x4xbf16>
    "tpu.trace_start"() <{level = 10 : i32, message = "qk,kd->qd"}> : () -> ()
    %cst_208 = arith.constant dense<0.000000e+00> : vector<8x8xf32>
    %636 = tpu.matmul %635, %610, %cst_208 {dimension_numbers = #tpu.dot_dimension_numbers<[1], [0], [0], [1], [0, 0, 1, 1], [], []>} : vector<8x4xbf16>, vector<4x8xbf16>, vector<8x8xf32> -> vector<8x8xf32>
    "tpu.trace_stop"() : () -> ()
    %637 = arith.truncf %629 : vector<8x8xf32> to vector<8x8xbf16>
    "tpu.trace_start"() <{level = 10 : i32, message = "qk,kd->qd"}> : () -> ()
    %cst_209 = arith.constant dense<0.000000e+00> : vector<8x8xf32>
    %638 = tpu.matmul %637, %608, %cst_209 {dimension_numbers = #tpu.dot_dimension_numbers<[1], [0], [0], [1], [0, 0, 1, 1], [], []>} : vector<8x8xbf16>, vector<8x8xbf16>, vector<8x8xf32> -> vector<8x8xf32>
    "tpu.trace_stop"() : () -> ()
    %639 = arith.addf %636, %638 : vector<8x8xf32>
    %640 = tpu.reciprocal %634 {approx = true} : vector<8x1xf32> -> vector<8x1xf32>
    %641 = vector.broadcast %640 : vector<8x1xf32> to vector<8x8xf32>
    %642 = arith.mulf %639, %641 : vector<8x8xf32>
    %643 = tpu.concatenate %522, %562, %602, %642 in 1 : vector<8x8xf32>, vector<8x8xf32>, vector<8x8xf32>, vector<8x8xf32> -> vector<8x32xf32>
    %644 = vector.extract_strided_slice %41 {offsets = [1, 0], sizes = [1, 8], strides = [1, 1]} : vector<2x8xf32> to vector<1x8xf32>
    %645 = vector.extract_strided_slice %477 {offsets = [8, 0], sizes = [8, 8], strides = [1, 1]} : vector<16x96xf32> to vector<8x8xf32>
    %646 = arith.truncf %645 : vector<8x8xf32> to vector<8x8xbf16>
    %647 = vector.extract_strided_slice %477 {offsets = [8, 32], sizes = [8, 8], strides = [1, 1]} : vector<16x96xf32> to vector<8x8xf32>
    %648 = arith.truncf %647 : vector<8x8xf32> to vector<8x8xbf16>
    %649 = vector.extract_strided_slice %477 {offsets = [8, 64], sizes = [8, 8], strides = [1, 1]} : vector<16x96xf32> to vector<8x8xf32>
    %650 = arith.truncf %649 : vector<8x8xf32> to vector<8x8xbf16>
    %651 = vector.extract_strided_slice %479 {offsets = [0, 0], sizes = [4, 8], strides = [1, 1]} : vector<4x32xbf16> to vector<4x8xbf16>
    %652 = vector.extract_strided_slice %481 {offsets = [0, 0], sizes = [4, 8], strides = [1, 1]} : vector<4x32xbf16> to vector<4x8xbf16>
    "tpu.trace_start"() <{level = 10 : i32, message = "qd,kd->qk"}> : () -> ()
    %cst_210 = arith.constant dense<0.000000e+00> : vector<8x4xf32>
    %653 = tpu.matmul %646, %651, %cst_210 {dimension_numbers = #tpu.dot_dimension_numbers<[1], [1], [0], [0], [0, 0, 1, 0], [], []>} : vector<8x8xbf16>, vector<4x8xbf16>, vector<8x4xf32> -> vector<8x4xf32>
    "tpu.trace_stop"() : () -> ()
    %cst_211 = arith.constant 0.353553385 : f32
    %654 = vector.broadcast %cst_211 : f32 to vector<8x4xf32>
    %655 = arith.mulf %653, %654 : vector<8x4xf32>
    "tpu.trace_start"() <{level = 10 : i32, message = "qd,kd->qk"}> : () -> ()
    %cst_212 = arith.constant dense<0.000000e+00> : vector<8x8xf32>
    %656 = tpu.matmul %646, %648, %cst_212 {dimension_numbers = #tpu.dot_dimension_numbers<[1], [1], [0], [0], [0, 0, 1, 0], [], []>} : vector<8x8xbf16>, vector<8x8xbf16>, vector<8x8xf32> -> vector<8x8xf32>
    "tpu.trace_stop"() : () -> ()
    %cst_213 = arith.constant 0.353553385 : f32
    %657 = vector.broadcast %cst_213 : f32 to vector<8x8xf32>
    %658 = arith.mulf %656, %657 : vector<8x8xf32>
    %659 = vector.broadcast %644 : vector<1x8xf32> to vector<8x8xf32>
    %660 = arith.addf %658, %659 : vector<8x8xf32>
    %cst_214 = arith.constant dense<0xFF800000> : vector<8xf32>
    %661 = vector.multi_reduction <maximumf>, %655, %cst_214 [1] : vector<8x4xf32> to vector<8xf32>
    %662 = vector.shape_cast %661 : vector<8xf32> to vector<8x1xf32>
    %cst_215 = arith.constant dense<0xFF800000> : vector<8xf32>
    %663 = vector.multi_reduction <maximumf>, %660, %cst_215 [1] : vector<8x8xf32> to vector<8xf32>
    %664 = vector.shape_cast %663 : vector<8xf32> to vector<8x1xf32>
    %665 = arith.maximumf %662, %664 : vector<8x1xf32>
    %666 = vector.broadcast %665 : vector<8x1xf32> to vector<8x4xf32>
    %667 = arith.subf %655, %666 : vector<8x4xf32>
    %668 = math.exp %667 : vector<8x4xf32>
    %669 = vector.broadcast %665 : vector<8x1xf32> to vector<8x8xf32>
    %670 = arith.subf %660, %669 : vector<8x8xf32>
    %671 = math.exp %670 : vector<8x8xf32>
    %cst_216 = arith.constant dense<0.000000e+00> : vector<8xf32>
    %672 = vector.multi_reduction <add>, %668, %cst_216 [1] : vector<8x4xf32> to vector<8xf32>
    %673 = vector.shape_cast %672 : vector<8xf32> to vector<8x1xf32>
    %cst_217 = arith.constant dense<0.000000e+00> : vector<8xf32>
    %674 = vector.multi_reduction <add>, %671, %cst_217 [1] : vector<8x8xf32> to vector<8xf32>
    %675 = vector.shape_cast %674 : vector<8xf32> to vector<8x1xf32>
    %676 = arith.addf %673, %675 : vector<8x1xf32>
    %677 = arith.truncf %668 : vector<8x4xf32> to vector<8x4xbf16>
    "tpu.trace_start"() <{level = 10 : i32, message = "qk,kd->qd"}> : () -> ()
    %cst_218 = arith.constant dense<0.000000e+00> : vector<8x8xf32>
    %678 = tpu.matmul %677, %652, %cst_218 {dimension_numbers = #tpu.dot_dimension_numbers<[1], [0], [0], [1], [0, 0, 1, 1], [], []>} : vector<8x4xbf16>, vector<4x8xbf16>, vector<8x8xf32> -> vector<8x8xf32>
    "tpu.trace_stop"() : () -> ()
    %679 = arith.truncf %671 : vector<8x8xf32> to vector<8x8xbf16>
    "tpu.trace_start"() <{level = 10 : i32, message = "qk,kd->qd"}> : () -> ()
    %cst_219 = arith.constant dense<0.000000e+00> : vector<8x8xf32>
    %680 = tpu.matmul %679, %650, %cst_219 {dimension_numbers = #tpu.dot_dimension_numbers<[1], [0], [0], [1], [0, 0, 1, 1], [], []>} : vector<8x8xbf16>, vector<8x8xbf16>, vector<8x8xf32> -> vector<8x8xf32>
    "tpu.trace_stop"() : () -> ()
    %681 = arith.addf %678, %680 : vector<8x8xf32>
    %682 = tpu.reciprocal %676 {approx = true} : vector<8x1xf32> -> vector<8x1xf32>
    %683 = vector.broadcast %682 : vector<8x1xf32> to vector<8x8xf32>
    %684 = arith.mulf %681, %683 : vector<8x8xf32>
    %685 = vector.extract_strided_slice %477 {offsets = [8, 8], sizes = [8, 8], strides = [1, 1]} : vector<16x96xf32> to vector<8x8xf32>
    %686 = arith.truncf %685 : vector<8x8xf32> to vector<8x8xbf16>
    %687 = vector.extract_strided_slice %477 {offsets = [8, 40], sizes = [8, 8], strides = [1, 1]} : vector<16x96xf32> to vector<8x8xf32>
    %688 = arith.truncf %687 : vector<8x8xf32> to vector<8x8xbf16>
    %689 = vector.extract_strided_slice %477 {offsets = [8, 72], sizes = [8, 8], strides = [1, 1]} : vector<16x96xf32> to vector<8x8xf32>
    %690 = arith.truncf %689 : vector<8x8xf32> to vector<8x8xbf16>
    %691 = vector.extract_strided_slice %479 {offsets = [0, 8], sizes = [4, 8], strides = [1, 1]} : vector<4x32xbf16> to vector<4x8xbf16>
    %692 = vector.extract_strided_slice %481 {offsets = [0, 8], sizes = [4, 8], strides = [1, 1]} : vector<4x32xbf16> to vector<4x8xbf16>
    "tpu.trace_start"() <{level = 10 : i32, message = "qd,kd->qk"}> : () -> ()
    %cst_220 = arith.constant dense<0.000000e+00> : vector<8x4xf32>
    %693 = tpu.matmul %686, %691, %cst_220 {dimension_numbers = #tpu.dot_dimension_numbers<[1], [1], [0], [0], [0, 0, 1, 0], [], []>} : vector<8x8xbf16>, vector<4x8xbf16>, vector<8x4xf32> -> vector<8x4xf32>
    "tpu.trace_stop"() : () -> ()
    %cst_221 = arith.constant 0.353553385 : f32
    %694 = vector.broadcast %cst_221 : f32 to vector<8x4xf32>
    %695 = arith.mulf %693, %694 : vector<8x4xf32>
    "tpu.trace_start"() <{level = 10 : i32, message = "qd,kd->qk"}> : () -> ()
    %cst_222 = arith.constant dense<0.000000e+00> : vector<8x8xf32>
    %696 = tpu.matmul %686, %688, %cst_222 {dimension_numbers = #tpu.dot_dimension_numbers<[1], [1], [0], [0], [0, 0, 1, 0], [], []>} : vector<8x8xbf16>, vector<8x8xbf16>, vector<8x8xf32> -> vector<8x8xf32>
    "tpu.trace_stop"() : () -> ()
    %cst_223 = arith.constant 0.353553385 : f32
    %697 = vector.broadcast %cst_223 : f32 to vector<8x8xf32>
    %698 = arith.mulf %696, %697 : vector<8x8xf32>
    %699 = vector.broadcast %644 : vector<1x8xf32> to vector<8x8xf32>
    %700 = arith.addf %698, %699 : vector<8x8xf32>
    %cst_224 = arith.constant dense<0xFF800000> : vector<8xf32>
    %701 = vector.multi_reduction <maximumf>, %695, %cst_224 [1] : vector<8x4xf32> to vector<8xf32>
    %702 = vector.shape_cast %701 : vector<8xf32> to vector<8x1xf32>
    %cst_225 = arith.constant dense<0xFF800000> : vector<8xf32>
    %703 = vector.multi_reduction <maximumf>, %700, %cst_225 [1] : vector<8x8xf32> to vector<8xf32>
    %704 = vector.shape_cast %703 : vector<8xf32> to vector<8x1xf32>
    %705 = arith.maximumf %702, %704 : vector<8x1xf32>
    %706 = vector.broadcast %705 : vector<8x1xf32> to vector<8x4xf32>
    %707 = arith.subf %695, %706 : vector<8x4xf32>
    %708 = math.exp %707 : vector<8x4xf32>
    %709 = vector.broadcast %705 : vector<8x1xf32> to vector<8x8xf32>
    %710 = arith.subf %700, %709 : vector<8x8xf32>
    %711 = math.exp %710 : vector<8x8xf32>
    %cst_226 = arith.constant dense<0.000000e+00> : vector<8xf32>
    %712 = vector.multi_reduction <add>, %708, %cst_226 [1] : vector<8x4xf32> to vector<8xf32>
    %713 = vector.shape_cast %712 : vector<8xf32> to vector<8x1xf32>
    %cst_227 = arith.constant dense<0.000000e+00> : vector<8xf32>
    %714 = vector.multi_reduction <add>, %711, %cst_227 [1] : vector<8x8xf32> to vector<8xf32>
    %715 = vector.shape_cast %714 : vector<8xf32> to vector<8x1xf32>
    %716 = arith.addf %713, %715 : vector<8x1xf32>
    %717 = arith.truncf %708 : vector<8x4xf32> to vector<8x4xbf16>
    "tpu.trace_start"() <{level = 10 : i32, message = "qk,kd->qd"}> : () -> ()
    %cst_228 = arith.constant dense<0.000000e+00> : vector<8x8xf32>
    %718 = tpu.matmul %717, %692, %cst_228 {dimension_numbers = #tpu.dot_dimension_numbers<[1], [0], [0], [1], [0, 0, 1, 1], [], []>} : vector<8x4xbf16>, vector<4x8xbf16>, vector<8x8xf32> -> vector<8x8xf32>
    "tpu.trace_stop"() : () -> ()
    %719 = arith.truncf %711 : vector<8x8xf32> to vector<8x8xbf16>
    "tpu.trace_start"() <{level = 10 : i32, message = "qk,kd->qd"}> : () -> ()
    %cst_229 = arith.constant dense<0.000000e+00> : vector<8x8xf32>
    %720 = tpu.matmul %719, %690, %cst_229 {dimension_numbers = #tpu.dot_dimension_numbers<[1], [0], [0], [1], [0, 0, 1, 1], [], []>} : vector<8x8xbf16>, vector<8x8xbf16>, vector<8x8xf32> -> vector<8x8xf32>
    "tpu.trace_stop"() : () -> ()
    %721 = arith.addf %718, %720 : vector<8x8xf32>
    %722 = tpu.reciprocal %716 {approx = true} : vector<8x1xf32> -> vector<8x1xf32>
    %723 = vector.broadcast %722 : vector<8x1xf32> to vector<8x8xf32>
    %724 = arith.mulf %721, %723 : vector<8x8xf32>
    %725 = vector.extract_strided_slice %477 {offsets = [8, 16], sizes = [8, 8], strides = [1, 1]} : vector<16x96xf32> to vector<8x8xf32>
    %726 = arith.truncf %725 : vector<8x8xf32> to vector<8x8xbf16>
    %727 = vector.extract_strided_slice %477 {offsets = [8, 48], sizes = [8, 8], strides = [1, 1]} : vector<16x96xf32> to vector<8x8xf32>
    %728 = arith.truncf %727 : vector<8x8xf32> to vector<8x8xbf16>
    %729 = vector.extract_strided_slice %477 {offsets = [8, 80], sizes = [8, 8], strides = [1, 1]} : vector<16x96xf32> to vector<8x8xf32>
    %730 = arith.truncf %729 : vector<8x8xf32> to vector<8x8xbf16>
    %731 = vector.extract_strided_slice %479 {offsets = [0, 16], sizes = [4, 8], strides = [1, 1]} : vector<4x32xbf16> to vector<4x8xbf16>
    %732 = vector.extract_strided_slice %481 {offsets = [0, 16], sizes = [4, 8], strides = [1, 1]} : vector<4x32xbf16> to vector<4x8xbf16>
    "tpu.trace_start"() <{level = 10 : i32, message = "qd,kd->qk"}> : () -> ()
    %cst_230 = arith.constant dense<0.000000e+00> : vector<8x4xf32>
    %733 = tpu.matmul %726, %731, %cst_230 {dimension_numbers = #tpu.dot_dimension_numbers<[1], [1], [0], [0], [0, 0, 1, 0], [], []>} : vector<8x8xbf16>, vector<4x8xbf16>, vector<8x4xf32> -> vector<8x4xf32>
    "tpu.trace_stop"() : () -> ()
    %cst_231 = arith.constant 0.353553385 : f32
    %734 = vector.broadcast %cst_231 : f32 to vector<8x4xf32>
    %735 = arith.mulf %733, %734 : vector<8x4xf32>
    "tpu.trace_start"() <{level = 10 : i32, message = "qd,kd->qk"}> : () -> ()
    %cst_232 = arith.constant dense<0.000000e+00> : vector<8x8xf32>
    %736 = tpu.matmul %726, %728, %cst_232 {dimension_numbers = #tpu.dot_dimension_numbers<[1], [1], [0], [0], [0, 0, 1, 0], [], []>} : vector<8x8xbf16>, vector<8x8xbf16>, vector<8x8xf32> -> vector<8x8xf32>
    "tpu.trace_stop"() : () -> ()
    %cst_233 = arith.constant 0.353553385 : f32
    %737 = vector.broadcast %cst_233 : f32 to vector<8x8xf32>
    %738 = arith.mulf %736, %737 : vector<8x8xf32>
    %739 = vector.broadcast %644 : vector<1x8xf32> to vector<8x8xf32>
    %740 = arith.addf %738, %739 : vector<8x8xf32>
    %cst_234 = arith.constant dense<0xFF800000> : vector<8xf32>
    %741 = vector.multi_reduction <maximumf>, %735, %cst_234 [1] : vector<8x4xf32> to vector<8xf32>
    %742 = vector.shape_cast %741 : vector<8xf32> to vector<8x1xf32>
    %cst_235 = arith.constant dense<0xFF800000> : vector<8xf32>
    %743 = vector.multi_reduction <maximumf>, %740, %cst_235 [1] : vector<8x8xf32> to vector<8xf32>
    %744 = vector.shape_cast %743 : vector<8xf32> to vector<8x1xf32>
    %745 = arith.maximumf %742, %744 : vector<8x1xf32>
    %746 = vector.broadcast %745 : vector<8x1xf32> to vector<8x4xf32>
    %747 = arith.subf %735, %746 : vector<8x4xf32>
    %748 = math.exp %747 : vector<8x4xf32>
    %749 = vector.broadcast %745 : vector<8x1xf32> to vector<8x8xf32>
    %750 = arith.subf %740, %749 : vector<8x8xf32>
    %751 = math.exp %750 : vector<8x8xf32>
    %cst_236 = arith.constant dense<0.000000e+00> : vector<8xf32>
    %752 = vector.multi_reduction <add>, %748, %cst_236 [1] : vector<8x4xf32> to vector<8xf32>
    %753 = vector.shape_cast %752 : vector<8xf32> to vector<8x1xf32>
    %cst_237 = arith.constant dense<0.000000e+00> : vector<8xf32>
    %754 = vector.multi_reduction <add>, %751, %cst_237 [1] : vector<8x8xf32> to vector<8xf32>
    %755 = vector.shape_cast %754 : vector<8xf32> to vector<8x1xf32>
    %756 = arith.addf %753, %755 : vector<8x1xf32>
    %757 = arith.truncf %748 : vector<8x4xf32> to vector<8x4xbf16>
    "tpu.trace_start"() <{level = 10 : i32, message = "qk,kd->qd"}> : () -> ()
    %cst_238 = arith.constant dense<0.000000e+00> : vector<8x8xf32>
    %758 = tpu.matmul %757, %732, %cst_238 {dimension_numbers = #tpu.dot_dimension_numbers<[1], [0], [0], [1], [0, 0, 1, 1], [], []>} : vector<8x4xbf16>, vector<4x8xbf16>, vector<8x8xf32> -> vector<8x8xf32>
    "tpu.trace_stop"() : () -> ()
    %759 = arith.truncf %751 : vector<8x8xf32> to vector<8x8xbf16>
    "tpu.trace_start"() <{level = 10 : i32, message = "qk,kd->qd"}> : () -> ()
    %cst_239 = arith.constant dense<0.000000e+00> : vector<8x8xf32>
    %760 = tpu.matmul %759, %730, %cst_239 {dimension_numbers = #tpu.dot_dimension_numbers<[1], [0], [0], [1], [0, 0, 1, 1], [], []>} : vector<8x8xbf16>, vector<8x8xbf16>, vector<8x8xf32> -> vector<8x8xf32>
    "tpu.trace_stop"() : () -> ()
    %761 = arith.addf %758, %760 : vector<8x8xf32>
    %762 = tpu.reciprocal %756 {approx = true} : vector<8x1xf32> -> vector<8x1xf32>
    %763 = vector.broadcast %762 : vector<8x1xf32> to vector<8x8xf32>
    %764 = arith.mulf %761, %763 : vector<8x8xf32>
    %765 = vector.extract_strided_slice %477 {offsets = [8, 24], sizes = [8, 8], strides = [1, 1]} : vector<16x96xf32> to vector<8x8xf32>
    %766 = arith.truncf %765 : vector<8x8xf32> to vector<8x8xbf16>
    %767 = vector.extract_strided_slice %477 {offsets = [8, 56], sizes = [8, 8], strides = [1, 1]} : vector<16x96xf32> to vector<8x8xf32>
    %768 = arith.truncf %767 : vector<8x8xf32> to vector<8x8xbf16>
    %769 = vector.extract_strided_slice %477 {offsets = [8, 88], sizes = [8, 8], strides = [1, 1]} : vector<16x96xf32> to vector<8x8xf32>
    %770 = arith.truncf %769 : vector<8x8xf32> to vector<8x8xbf16>
    %771 = vector.extract_strided_slice %479 {offsets = [0, 24], sizes = [4, 8], strides = [1, 1]} : vector<4x32xbf16> to vector<4x8xbf16>
    %772 = vector.extract_strided_slice %481 {offsets = [0, 24], sizes = [4, 8], strides = [1, 1]} : vector<4x32xbf16> to vector<4x8xbf16>
    "tpu.trace_start"() <{level = 10 : i32, message = "qd,kd->qk"}> : () -> ()
    %cst_240 = arith.constant dense<0.000000e+00> : vector<8x4xf32>
    %773 = tpu.matmul %766, %771, %cst_240 {dimension_numbers = #tpu.dot_dimension_numbers<[1], [1], [0], [0], [0, 0, 1, 0], [], []>} : vector<8x8xbf16>, vector<4x8xbf16>, vector<8x4xf32> -> vector<8x4xf32>
    "tpu.trace_stop"() : () -> ()
    %cst_241 = arith.constant 0.353553385 : f32
    %774 = vector.broadcast %cst_241 : f32 to vector<8x4xf32>
    %775 = arith.mulf %773, %774 : vector<8x4xf32>
    "tpu.trace_start"() <{level = 10 : i32, message = "qd,kd->qk"}> : () -> ()
    %cst_242 = arith.constant dense<0.000000e+00> : vector<8x8xf32>
    %776 = tpu.matmul %766, %768, %cst_242 {dimension_numbers = #tpu.dot_dimension_numbers<[1], [1], [0], [0], [0, 0, 1, 0], [], []>} : vector<8x8xbf16>, vector<8x8xbf16>, vector<8x8xf32> -> vector<8x8xf32>
    "tpu.trace_stop"() : () -> ()
    %cst_243 = arith.constant 0.353553385 : f32
    %777 = vector.broadcast %cst_243 : f32 to vector<8x8xf32>
    %778 = arith.mulf %776, %777 : vector<8x8xf32>
    %779 = vector.broadcast %644 : vector<1x8xf32> to vector<8x8xf32>
    %780 = arith.addf %778, %779 : vector<8x8xf32>
    %cst_244 = arith.constant dense<0xFF800000> : vector<8xf32>
    %781 = vector.multi_reduction <maximumf>, %775, %cst_244 [1] : vector<8x4xf32> to vector<8xf32>
    %782 = vector.shape_cast %781 : vector<8xf32> to vector<8x1xf32>
    %cst_245 = arith.constant dense<0xFF800000> : vector<8xf32>
    %783 = vector.multi_reduction <maximumf>, %780, %cst_245 [1] : vector<8x8xf32> to vector<8xf32>
    %784 = vector.shape_cast %783 : vector<8xf32> to vector<8x1xf32>
    %785 = arith.maximumf %782, %784 : vector<8x1xf32>
    %786 = vector.broadcast %785 : vector<8x1xf32> to vector<8x4xf32>
    %787 = arith.subf %775, %786 : vector<8x4xf32>
    %788 = math.exp %787 : vector<8x4xf32>
    %789 = vector.broadcast %785 : vector<8x1xf32> to vector<8x8xf32>
    %790 = arith.subf %780, %789 : vector<8x8xf32>
    %791 = math.exp %790 : vector<8x8xf32>
    %cst_246 = arith.constant dense<0.000000e+00> : vector<8xf32>
    %792 = vector.multi_reduction <add>, %788, %cst_246 [1] : vector<8x4xf32> to vector<8xf32>
    %793 = vector.shape_cast %792 : vector<8xf32> to vector<8x1xf32>
    %cst_247 = arith.constant dense<0.000000e+00> : vector<8xf32>
    %794 = vector.multi_reduction <add>, %791, %cst_247 [1] : vector<8x8xf32> to vector<8xf32>
    %795 = vector.shape_cast %794 : vector<8xf32> to vector<8x1xf32>
    %796 = arith.addf %793, %795 : vector<8x1xf32>
    %797 = arith.truncf %788 : vector<8x4xf32> to vector<8x4xbf16>
    "tpu.trace_start"() <{level = 10 : i32, message = "qk,kd->qd"}> : () -> ()
    %cst_248 = arith.constant dense<0.000000e+00> : vector<8x8xf32>
    %798 = tpu.matmul %797, %772, %cst_248 {dimension_numbers = #tpu.dot_dimension_numbers<[1], [0], [0], [1], [0, 0, 1, 1], [], []>} : vector<8x4xbf16>, vector<4x8xbf16>, vector<8x8xf32> -> vector<8x8xf32>
    "tpu.trace_stop"() : () -> ()
    %799 = arith.truncf %791 : vector<8x8xf32> to vector<8x8xbf16>
    "tpu.trace_start"() <{level = 10 : i32, message = "qk,kd->qd"}> : () -> ()
    %cst_249 = arith.constant dense<0.000000e+00> : vector<8x8xf32>
    %800 = tpu.matmul %799, %770, %cst_249 {dimension_numbers = #tpu.dot_dimension_numbers<[1], [0], [0], [1], [0, 0, 1, 1], [], []>} : vector<8x8xbf16>, vector<8x8xbf16>, vector<8x8xf32> -> vector<8x8xf32>
    "tpu.trace_stop"() : () -> ()
    %801 = arith.addf %798, %800 : vector<8x8xf32>
    %802 = tpu.reciprocal %796 {approx = true} : vector<8x1xf32> -> vector<8x1xf32>
    %803 = vector.broadcast %802 : vector<8x1xf32> to vector<8x8xf32>
    %804 = arith.mulf %801, %803 : vector<8x8xf32>
    %805 = tpu.concatenate %684, %724, %764, %804 in 1 : vector<8x8xf32>, vector<8x8xf32>, vector<8x8xf32>, vector<8x8xf32> -> vector<8x32xf32>
    %806 = tpu.concatenate %643, %805 in 0 : vector<8x32xf32>, vector<8x32xf32> -> vector<16x32xf32>
    %807 = arith.truncf %806 : vector<16x32xf32> to vector<16x32xbf16>
    %c1_250 = arith.constant 1 : index
    %c0_251 = arith.constant 0 : index
    %c0_252 = arith.constant 0 : index
    %808 = vector.load %arg10[%c1_250, %c0_251, %c0_252] : memref<2x32x32xbf16, #tpu.memory_space<vmem>>, vector<1x32x32xbf16>
    %809 = vector.shape_cast %808 : vector<1x32x32xbf16> to vector<32x32xbf16>
    %cst_253 = arith.constant dense<0.000000e+00> : vector<16x32xf32>
    %810 = tpu.matmul %807, %809, %cst_253 {dimension_numbers = #tpu.dot_dimension_numbers<[1], [0], [0], [1], [0, 0, 1, 1], [], []>} : vector<16x32xbf16>, vector<32x32xbf16>, vector<16x32xf32> -> vector<16x32xf32>
    %c1_254 = arith.constant 1 : index
    %c0_255 = arith.constant 0 : index
    %c0_256 = arith.constant 0 : index
    %811 = vector.load %arg11[%c1_254, %c0_255, %c0_256] : memref<2x1x32xf32, #tpu.memory_space<vmem>>, vector<1x1x32xf32>
    %812 = vector.shape_cast %811 : vector<1x1x32xf32> to vector<1x32xf32>
    %813 = vector.broadcast %812 : vector<1x32xf32> to vector<16x32xf32>
    %814 = arith.addf %810, %813 : vector<16x32xf32>
    %815 = arith.addf %814, %469 : vector<16x32xf32>
    %c1_257 = arith.constant 1 : index
    %c0_258 = arith.constant 0 : index
    %c0_259 = arith.constant 0 : index
    %816 = vector.load %arg12[%c1_257, %c0_258, %c0_259] : memref<2x1x32xf32, #tpu.memory_space<vmem>>, vector<1x1x32xf32>
    %817 = vector.shape_cast %816 : vector<1x1x32xf32> to vector<1x32xf32>
    %c1_260 = arith.constant 1 : index
    %c0_261 = arith.constant 0 : index
    %c0_262 = arith.constant 0 : index
    %818 = vector.load %arg13[%c1_260, %c0_261, %c0_262] : memref<2x1x32xf32, #tpu.memory_space<vmem>>, vector<1x1x32xf32>
    %819 = vector.shape_cast %818 : vector<1x1x32xf32> to vector<1x32xf32>
    %cst_263 = arith.constant dense<0.000000e+00> : vector<16xf32>
    %820 = vector.multi_reduction <add>, %815, %cst_263 [1] : vector<16x32xf32> to vector<16xf32>
    %821 = vector.shape_cast %820 : vector<16xf32> to vector<16x1xf32>
    %cst_264 = arith.constant 3.200000e+01 : f32
    %822 = vector.broadcast %cst_264 : f32 to vector<16x1xf32>
    %823 = arith.divf %821, %822 : vector<16x1xf32>
    %824 = vector.broadcast %823 : vector<16x1xf32> to vector<16x32xf32>
    %825 = arith.subf %815, %824 : vector<16x32xf32>
    %826 = arith.mulf %825, %825 : vector<16x32xf32>
    %cst_265 = arith.constant dense<0.000000e+00> : vector<16xf32>
    %827 = vector.multi_reduction <add>, %826, %cst_265 [1] : vector<16x32xf32> to vector<16xf32>
    %828 = vector.shape_cast %827 : vector<16xf32> to vector<16x1xf32>
    %cst_266 = arith.constant 3.200000e+01 : f32
    %829 = vector.broadcast %cst_266 : f32 to vector<16x1xf32>
    %830 = arith.divf %828, %829 : vector<16x1xf32>
    %831 = vector.broadcast %823 : vector<16x1xf32> to vector<16x32xf32>
    %832 = arith.subf %815, %831 : vector<16x32xf32>
    %cst_267 = arith.constant 9.99999996E-13 : f32
    %833 = vector.broadcast %cst_267 : f32 to vector<16x1xf32>
    %834 = arith.addf %830, %833 : vector<16x1xf32>
    %835 = math.rsqrt %834 : vector<16x1xf32>
    %836 = vector.broadcast %835 : vector<16x1xf32> to vector<16x32xf32>
    %837 = arith.mulf %832, %836 : vector<16x32xf32>
    %838 = vector.broadcast %817 : vector<1x32xf32> to vector<16x32xf32>
    %839 = arith.mulf %837, %838 : vector<16x32xf32>
    %840 = vector.broadcast %819 : vector<1x32xf32> to vector<16x32xf32>
    %841 = arith.addf %839, %840 : vector<16x32xf32>
    %842 = arith.truncf %841 : vector<16x32xf32> to vector<16x32xbf16>
    %c1_268 = arith.constant 1 : index
    %c0_269 = arith.constant 0 : index
    %c0_270 = arith.constant 0 : index
    %843 = vector.load %arg14[%c1_268, %c0_269, %c0_270] : memref<2x32x64xbf16, #tpu.memory_space<vmem>>, vector<1x32x64xbf16>
    %844 = vector.shape_cast %843 : vector<1x32x64xbf16> to vector<32x64xbf16>
    %cst_271 = arith.constant dense<0.000000e+00> : vector<16x64xf32>
    %845 = tpu.matmul %842, %844, %cst_271 {dimension_numbers = #tpu.dot_dimension_numbers<[1], [0], [0], [1], [0, 0, 1, 1], [], []>} : vector<16x32xbf16>, vector<32x64xbf16>, vector<16x64xf32> -> vector<16x64xf32>
    %c1_272 = arith.constant 1 : index
    %c0_273 = arith.constant 0 : index
    %c0_274 = arith.constant 0 : index
    %846 = vector.load %arg15[%c1_272, %c0_273, %c0_274] : memref<2x1x64xf32, #tpu.memory_space<vmem>>, vector<1x1x64xf32>
    %847 = vector.shape_cast %846 : vector<1x1x64xf32> to vector<1x64xf32>
    %848 = vector.broadcast %847 : vector<1x64xf32> to vector<16x64xf32>
    %849 = arith.addf %845, %848 : vector<16x64xf32>
    %cst_275 = arith.constant 5.000000e-01 : f32
    %850 = vector.broadcast %cst_275 : f32 to vector<16x64xf32>
    %851 = arith.mulf %850, %849 : vector<16x64xf32>
    %cst_276 = arith.constant 4.471500e-02 : f32
    %852 = vector.broadcast %cst_276 : f32 to vector<16x64xf32>
    %853 = arith.mulf %852, %849 : vector<16x64xf32>
    %854 = arith.mulf %853, %849 : vector<16x64xf32>
    %855 = arith.mulf %854, %849 : vector<16x64xf32>
    %856 = arith.addf %849, %855 : vector<16x64xf32>
    %cst_277 = arith.constant 0.797884583 : f32
    %857 = vector.broadcast %cst_277 : f32 to vector<16x64xf32>
    %858 = arith.mulf %857, %856 : vector<16x64xf32>
    %859 = math.tanh %858 : vector<16x64xf32>
    %cst_278 = arith.constant 1.000000e+00 : f32
    %860 = vector.broadcast %cst_278 : f32 to vector<16x64xf32>
    %861 = arith.addf %860, %859 : vector<16x64xf32>
    %862 = arith.mulf %851, %861 : vector<16x64xf32>
    %863 = arith.truncf %862 : vector<16x64xf32> to vector<16x64xbf16>
    %c1_279 = arith.constant 1 : index
    %c0_280 = arith.constant 0 : index
    %c0_281 = arith.constant 0 : index
    %864 = vector.load %arg16[%c1_279, %c0_280, %c0_281] : memref<2x64x32xbf16, #tpu.memory_space<vmem>>, vector<1x64x32xbf16>
    %865 = vector.shape_cast %864 : vector<1x64x32xbf16> to vector<64x32xbf16>
    %cst_282 = arith.constant dense<0.000000e+00> : vector<16x32xf32>
    %866 = tpu.matmul %863, %865, %cst_282 {dimension_numbers = #tpu.dot_dimension_numbers<[1], [0], [0], [1], [0, 0, 1, 1], [], []>} : vector<16x64xbf16>, vector<64x32xbf16>, vector<16x32xf32> -> vector<16x32xf32>
    %c1_283 = arith.constant 1 : index
    %c0_284 = arith.constant 0 : index
    %c0_285 = arith.constant 0 : index
    %867 = vector.load %arg17[%c1_283, %c0_284, %c0_285] : memref<2x1x32xf32, #tpu.memory_space<vmem>>, vector<1x1x32xf32>
    %868 = vector.shape_cast %867 : vector<1x1x32xf32> to vector<1x32xf32>
    %869 = vector.broadcast %868 : vector<1x32xf32> to vector<16x32xf32>
    %870 = arith.addf %866, %869 : vector<16x32xf32>
    %871 = arith.addf %870, %841 : vector<16x32xf32>
    %c1_286 = arith.constant 1 : index
    %c0_287 = arith.constant 0 : index
    %c0_288 = arith.constant 0 : index
    %872 = vector.load %arg18[%c1_286, %c0_287, %c0_288] : memref<2x1x32xf32, #tpu.memory_space<vmem>>, vector<1x1x32xf32>
    %873 = vector.shape_cast %872 : vector<1x1x32xf32> to vector<1x32xf32>
    %c1_289 = arith.constant 1 : index
    %c0_290 = arith.constant 0 : index
    %c0_291 = arith.constant 0 : index
    %874 = vector.load %arg19[%c1_289, %c0_290, %c0_291] : memref<2x1x32xf32, #tpu.memory_space<vmem>>, vector<1x1x32xf32>
    %875 = vector.shape_cast %874 : vector<1x1x32xf32> to vector<1x32xf32>
    %cst_292 = arith.constant dense<0.000000e+00> : vector<16xf32>
    %876 = vector.multi_reduction <add>, %871, %cst_292 [1] : vector<16x32xf32> to vector<16xf32>
    %877 = vector.shape_cast %876 : vector<16xf32> to vector<16x1xf32>
    %cst_293 = arith.constant 3.200000e+01 : f32
    %878 = vector.broadcast %cst_293 : f32 to vector<16x1xf32>
    %879 = arith.divf %877, %878 : vector<16x1xf32>
    %880 = vector.broadcast %879 : vector<16x1xf32> to vector<16x32xf32>
    %881 = arith.subf %871, %880 : vector<16x32xf32>
    %882 = arith.mulf %881, %881 : vector<16x32xf32>
    %cst_294 = arith.constant dense<0.000000e+00> : vector<16xf32>
    %883 = vector.multi_reduction <add>, %882, %cst_294 [1] : vector<16x32xf32> to vector<16xf32>
    %884 = vector.shape_cast %883 : vector<16xf32> to vector<16x1xf32>
    %cst_295 = arith.constant 3.200000e+01 : f32
    %885 = vector.broadcast %cst_295 : f32 to vector<16x1xf32>
    %886 = arith.divf %884, %885 : vector<16x1xf32>
    %887 = vector.broadcast %879 : vector<16x1xf32> to vector<16x32xf32>
    %888 = arith.subf %871, %887 : vector<16x32xf32>
    %cst_296 = arith.constant 9.99999996E-13 : f32
    %889 = vector.broadcast %cst_296 : f32 to vector<16x1xf32>
    %890 = arith.addf %886, %889 : vector<16x1xf32>
    %891 = math.rsqrt %890 : vector<16x1xf32>
    %892 = vector.broadcast %891 : vector<16x1xf32> to vector<16x32xf32>
    %893 = arith.mulf %888, %892 : vector<16x32xf32>
    %894 = vector.broadcast %873 : vector<1x32xf32> to vector<16x32xf32>
    %895 = arith.mulf %893, %894 : vector<16x32xf32>
    %896 = vector.broadcast %875 : vector<1x32xf32> to vector<16x32xf32>
    %897 = arith.addf %895, %896 : vector<16x32xf32>
    %898 = vector.extract_strided_slice %897 {offsets = [0, 0], sizes = [1, 32], strides = [1, 1]} : vector<16x32xf32> to vector<1x32xf32>
    %899 = vector.extract_strided_slice %897 {offsets = [8, 0], sizes = [1, 32], strides = [1, 1]} : vector<16x32xf32> to vector<1x32xf32>
    %900 = tpu.concatenate %898, %899 in 0 : vector<1x32xf32>, vector<1x32xf32> -> vector<2x32xf32>
    %901 = vector.extract_strided_slice %35 {offsets = [0, 0], sizes = [4, 32], strides = [1, 1]} : vector<16x32xf32> to vector<4x32xf32>
    %902 = vector.extract_strided_slice %35 {offsets = [8, 0], sizes = [4, 32], strides = [1, 1]} : vector<16x32xf32> to vector<4x32xf32>
    %903 = vector.extract_strided_slice %469 {offsets = [0, 0], sizes = [4, 32], strides = [1, 1]} : vector<16x32xf32> to vector<4x32xf32>
    %904 = vector.extract_strided_slice %469 {offsets = [8, 0], sizes = [4, 32], strides = [1, 1]} : vector<16x32xf32> to vector<4x32xf32>
    %905 = vector.extract_strided_slice %897 {offsets = [0, 0], sizes = [4, 32], strides = [1, 1]} : vector<16x32xf32> to vector<4x32xf32>
    %906 = vector.extract_strided_slice %897 {offsets = [8, 0], sizes = [4, 32], strides = [1, 1]} : vector<16x32xf32> to vector<4x32xf32>
    %907 = tpu.concatenate %901, %902, %903, %904, %905, %906 in 0 : vector<4x32xf32>, vector<4x32xf32>, vector<4x32xf32>, vector<4x32xf32>, vector<4x32xf32>, vector<4x32xf32> -> vector<24x32xf32>
    %908 = arith.truncf %900 : vector<2x32xf32> to vector<2x32xbf16>
    %c0_297 = arith.constant 0 : index
    %c0_298 = arith.constant 0 : index
    %909 = vector.load %arg22[%c0_297, %c0_298] : memref<32x32xbf16, #tpu.memory_space<vmem>>, vector<32x32xbf16>
    %cst_299 = arith.constant dense<0.000000e+00> : vector<2x32xf32>
    %910 = tpu.matmul %908, %909, %cst_299 {dimension_numbers = #tpu.dot_dimension_numbers<[1], [0], [0], [1], [0, 0, 1, 1], [], []>} : vector<2x32xbf16>, vector<32x32xbf16>, vector<2x32xf32> -> vector<2x32xf32>
    %c0_300 = arith.constant 0 : index
    %c0_301 = arith.constant 0 : index
    %911 = vector.load %arg23[%c0_300, %c0_301] : memref<1x32xf32, #tpu.memory_space<vmem>>, vector<1x32xf32>
    %912 = vector.broadcast %911 : vector<1x32xf32> to vector<2x32xf32>
    %913 = arith.addf %910, %912 : vector<2x32xf32>
    %914 = arith.truncf %907 : vector<24x32xf32> to vector<24x32xbf16>
    %c0_302 = arith.constant 0 : index
    %c0_303 = arith.constant 0 : index
    %915 = vector.load %arg24[%c0_302, %c0_303] : memref<32x64xbf16, #tpu.memory_space<vmem>>, vector<32x64xbf16>
    %cst_304 = arith.constant dense<0.000000e+00> : vector<24x64xf32>
    %916 = tpu.matmul %914, %915, %cst_304 {dimension_numbers = #tpu.dot_dimension_numbers<[1], [0], [0], [1], [0, 0, 1, 1], [], []>} : vector<24x32xbf16>, vector<32x64xbf16>, vector<24x64xf32> -> vector<24x64xf32>
    %c0_305 = arith.constant 0 : index
    %c0_306 = arith.constant 0 : index
    %917 = vector.load %arg25[%c0_305, %c0_306] : memref<1x64xf32, #tpu.memory_space<vmem>>, vector<1x64xf32>
    %918 = vector.broadcast %917 : vector<1x64xf32> to vector<24x64xf32>
    %919 = arith.addf %916, %918 : vector<24x64xf32>
    %c0_307 = arith.constant 0 : index
    %c0_308 = arith.constant 0 : index
    %920 = vector.load %arg5[%c0_307, %c0_308] : memref<24x24xf32, #tpu.memory_space<vmem>>, vector<24x24xf32>
    %921 = vector.extract_strided_slice %913 {offsets = [0, 0], sizes = [2, 8], strides = [1, 1]} : vector<2x32xf32> to vector<2x8xf32>
    %922 = arith.truncf %921 : vector<2x8xf32> to vector<2x8xbf16>
    %923 = vector.extract_strided_slice %919 {offsets = [0, 0], sizes = [24, 8], strides = [1, 1]} : vector<24x64xf32> to vector<24x8xf32>
    %924 = arith.truncf %923 : vector<24x8xf32> to vector<24x8xbf16>
    %925 = vector.extract_strided_slice %919 {offsets = [0, 32], sizes = [24, 8], strides = [1, 1]} : vector<24x64xf32> to vector<24x8xf32>
    %926 = arith.truncf %925 : vector<24x8xf32> to vector<24x8xbf16>
    "tpu.trace_start"() <{level = 10 : i32, message = "qd,kd->qk"}> : () -> ()
    %cst_309 = arith.constant dense<0.000000e+00> : vector<2x24xf32>
    %927 = tpu.matmul %922, %924, %cst_309 {dimension_numbers = #tpu.dot_dimension_numbers<[1], [1], [0], [0], [0, 0, 1, 0], [], []>} : vector<2x8xbf16>, vector<24x8xbf16>, vector<2x24xf32> -> vector<2x24xf32>
    "tpu.trace_stop"() : () -> ()
    %cst_310 = arith.constant 0.353553385 : f32
    %928 = vector.broadcast %cst_310 : f32 to vector<2x24xf32>
    %929 = arith.mulf %927, %928 : vector<2x24xf32>
    %cst_311 = arith.constant dense<0xFF800000> : vector<2xf32>
    %930 = vector.multi_reduction <maximumf>, %929, %cst_311 [1] : vector<2x24xf32> to vector<2xf32>
    %931 = vector.shape_cast %930 : vector<2xf32> to vector<2x1xf32>
    %932 = vector.broadcast %931 : vector<2x1xf32> to vector<2x24xf32>
    %933 = arith.subf %929, %932 : vector<2x24xf32>
    %934 = math.exp %933 : vector<2x24xf32>
    %cst_312 = arith.constant dense<0.000000e+00> : vector<2x24xf32>
    %935 = tpu.matmul %934, %920, %cst_312 {dimension_numbers = #tpu.dot_dimension_numbers<[1], [0], [0], [1], [0, 0, 1, 1], [], []>} : vector<2x24xf32>, vector<24x24xf32>, vector<2x24xf32> -> vector<2x24xf32>
    %936 = arith.divf %934, %935 : vector<2x24xf32>
    %937 = arith.truncf %936 : vector<2x24xf32> to vector<2x24xbf16>
    "tpu.trace_start"() <{level = 10 : i32, message = "qk,kd->qd"}> : () -> ()
    %cst_313 = arith.constant dense<0.000000e+00> : vector<2x8xf32>
    %938 = tpu.matmul %937, %926, %cst_313 {dimension_numbers = #tpu.dot_dimension_numbers<[1], [0], [0], [1], [0, 0, 1, 1], [], []>} : vector<2x24xbf16>, vector<24x8xbf16>, vector<2x8xf32> -> vector<2x8xf32>
    "tpu.trace_stop"() : () -> ()
    %939 = vector.extract_strided_slice %913 {offsets = [0, 8], sizes = [2, 8], strides = [1, 1]} : vector<2x32xf32> to vector<2x8xf32>
    %940 = arith.truncf %939 : vector<2x8xf32> to vector<2x8xbf16>
    %941 = vector.extract_strided_slice %919 {offsets = [0, 8], sizes = [24, 8], strides = [1, 1]} : vector<24x64xf32> to vector<24x8xf32>
    %942 = arith.truncf %941 : vector<24x8xf32> to vector<24x8xbf16>
    %943 = vector.extract_strided_slice %919 {offsets = [0, 40], sizes = [24, 8], strides = [1, 1]} : vector<24x64xf32> to vector<24x8xf32>
    %944 = arith.truncf %943 : vector<24x8xf32> to vector<24x8xbf16>
    "tpu.trace_start"() <{level = 10 : i32, message = "qd,kd->qk"}> : () -> ()
    %cst_314 = arith.constant dense<0.000000e+00> : vector<2x24xf32>
    %945 = tpu.matmul %940, %942, %cst_314 {dimension_numbers = #tpu.dot_dimension_numbers<[1], [1], [0], [0], [0, 0, 1, 0], [], []>} : vector<2x8xbf16>, vector<24x8xbf16>, vector<2x24xf32> -> vector<2x24xf32>
    "tpu.trace_stop"() : () -> ()
    %cst_315 = arith.constant 0.353553385 : f32
    %946 = vector.broadcast %cst_315 : f32 to vector<2x24xf32>
    %947 = arith.mulf %945, %946 : vector<2x24xf32>
    %cst_316 = arith.constant dense<0xFF800000> : vector<2xf32>
    %948 = vector.multi_reduction <maximumf>, %947, %cst_316 [1] : vector<2x24xf32> to vector<2xf32>
    %949 = vector.shape_cast %948 : vector<2xf32> to vector<2x1xf32>
    %950 = vector.broadcast %949 : vector<2x1xf32> to vector<2x24xf32>
    %951 = arith.subf %947, %950 : vector<2x24xf32>
    %952 = math.exp %951 : vector<2x24xf32>
    %cst_317 = arith.constant dense<0.000000e+00> : vector<2x24xf32>
    %953 = tpu.matmul %952, %920, %cst_317 {dimension_numbers = #tpu.dot_dimension_numbers<[1], [0], [0], [1], [0, 0, 1, 1], [], []>} : vector<2x24xf32>, vector<24x24xf32>, vector<2x24xf32> -> vector<2x24xf32>
    %954 = arith.divf %952, %953 : vector<2x24xf32>
    %955 = arith.truncf %954 : vector<2x24xf32> to vector<2x24xbf16>
    "tpu.trace_start"() <{level = 10 : i32, message = "qk,kd->qd"}> : () -> ()
    %cst_318 = arith.constant dense<0.000000e+00> : vector<2x8xf32>
    %956 = tpu.matmul %955, %944, %cst_318 {dimension_numbers = #tpu.dot_dimension_numbers<[1], [0], [0], [1], [0, 0, 1, 1], [], []>} : vector<2x24xbf16>, vector<24x8xbf16>, vector<2x8xf32> -> vector<2x8xf32>
    "tpu.trace_stop"() : () -> ()
    %957 = vector.extract_strided_slice %913 {offsets = [0, 16], sizes = [2, 8], strides = [1, 1]} : vector<2x32xf32> to vector<2x8xf32>
    %958 = arith.truncf %957 : vector<2x8xf32> to vector<2x8xbf16>
    %959 = vector.extract_strided_slice %919 {offsets = [0, 16], sizes = [24, 8], strides = [1, 1]} : vector<24x64xf32> to vector<24x8xf32>
    %960 = arith.truncf %959 : vector<24x8xf32> to vector<24x8xbf16>
    %961 = vector.extract_strided_slice %919 {offsets = [0, 48], sizes = [24, 8], strides = [1, 1]} : vector<24x64xf32> to vector<24x8xf32>
    %962 = arith.truncf %961 : vector<24x8xf32> to vector<24x8xbf16>
    "tpu.trace_start"() <{level = 10 : i32, message = "qd,kd->qk"}> : () -> ()
    %cst_319 = arith.constant dense<0.000000e+00> : vector<2x24xf32>
    %963 = tpu.matmul %958, %960, %cst_319 {dimension_numbers = #tpu.dot_dimension_numbers<[1], [1], [0], [0], [0, 0, 1, 0], [], []>} : vector<2x8xbf16>, vector<24x8xbf16>, vector<2x24xf32> -> vector<2x24xf32>
    "tpu.trace_stop"() : () -> ()
    %cst_320 = arith.constant 0.353553385 : f32
    %964 = vector.broadcast %cst_320 : f32 to vector<2x24xf32>
    %965 = arith.mulf %963, %964 : vector<2x24xf32>
    %cst_321 = arith.constant dense<0xFF800000> : vector<2xf32>
    %966 = vector.multi_reduction <maximumf>, %965, %cst_321 [1] : vector<2x24xf32> to vector<2xf32>
    %967 = vector.shape_cast %966 : vector<2xf32> to vector<2x1xf32>
    %968 = vector.broadcast %967 : vector<2x1xf32> to vector<2x24xf32>
    %969 = arith.subf %965, %968 : vector<2x24xf32>
    %970 = math.exp %969 : vector<2x24xf32>
    %cst_322 = arith.constant dense<0.000000e+00> : vector<2x24xf32>
    %971 = tpu.matmul %970, %920, %cst_322 {dimension_numbers = #tpu.dot_dimension_numbers<[1], [0], [0], [1], [0, 0, 1, 1], [], []>} : vector<2x24xf32>, vector<24x24xf32>, vector<2x24xf32> -> vector<2x24xf32>
    %972 = arith.divf %970, %971 : vector<2x24xf32>
    %973 = arith.truncf %972 : vector<2x24xf32> to vector<2x24xbf16>
    "tpu.trace_start"() <{level = 10 : i32, message = "qk,kd->qd"}> : () -> ()
    %cst_323 = arith.constant dense<0.000000e+00> : vector<2x8xf32>
    %974 = tpu.matmul %973, %962, %cst_323 {dimension_numbers = #tpu.dot_dimension_numbers<[1], [0], [0], [1], [0, 0, 1, 1], [], []>} : vector<2x24xbf16>, vector<24x8xbf16>, vector<2x8xf32> -> vector<2x8xf32>
    "tpu.trace_stop"() : () -> ()
    %975 = vector.extract_strided_slice %913 {offsets = [0, 24], sizes = [2, 8], strides = [1, 1]} : vector<2x32xf32> to vector<2x8xf32>
    %976 = arith.truncf %975 : vector<2x8xf32> to vector<2x8xbf16>
    %977 = vector.extract_strided_slice %919 {offsets = [0, 24], sizes = [24, 8], strides = [1, 1]} : vector<24x64xf32> to vector<24x8xf32>
    %978 = arith.truncf %977 : vector<24x8xf32> to vector<24x8xbf16>
    %979 = vector.extract_strided_slice %919 {offsets = [0, 56], sizes = [24, 8], strides = [1, 1]} : vector<24x64xf32> to vector<24x8xf32>
    %980 = arith.truncf %979 : vector<24x8xf32> to vector<24x8xbf16>
    "tpu.trace_start"() <{level = 10 : i32, message = "qd,kd->qk"}> : () -> ()
    %cst_324 = arith.constant dense<0.000000e+00> : vector<2x24xf32>
    %981 = tpu.matmul %976, %978, %cst_324 {dimension_numbers = #tpu.dot_dimension_numbers<[1], [1], [0], [0], [0, 0, 1, 0], [], []>} : vector<2x8xbf16>, vector<24x8xbf16>, vector<2x24xf32> -> vector<2x24xf32>
    "tpu.trace_stop"() : () -> ()
    %cst_325 = arith.constant 0.353553385 : f32
    %982 = vector.broadcast %cst_325 : f32 to vector<2x24xf32>
    %983 = arith.mulf %981, %982 : vector<2x24xf32>
    %cst_326 = arith.constant dense<0xFF800000> : vector<2xf32>
    %984 = vector.multi_reduction <maximumf>, %983, %cst_326 [1] : vector<2x24xf32> to vector<2xf32>
    %985 = vector.shape_cast %984 : vector<2xf32> to vector<2x1xf32>
    %986 = vector.broadcast %985 : vector<2x1xf32> to vector<2x24xf32>
    %987 = arith.subf %983, %986 : vector<2x24xf32>
    %988 = math.exp %987 : vector<2x24xf32>
    %cst_327 = arith.constant dense<0.000000e+00> : vector<2x24xf32>
    %989 = tpu.matmul %988, %920, %cst_327 {dimension_numbers = #tpu.dot_dimension_numbers<[1], [0], [0], [1], [0, 0, 1, 1], [], []>} : vector<2x24xf32>, vector<24x24xf32>, vector<2x24xf32> -> vector<2x24xf32>
    %990 = arith.divf %988, %989 : vector<2x24xf32>
    %991 = arith.truncf %990 : vector<2x24xf32> to vector<2x24xbf16>
    "tpu.trace_start"() <{level = 10 : i32, message = "qk,kd->qd"}> : () -> ()
    %cst_328 = arith.constant dense<0.000000e+00> : vector<2x8xf32>
    %992 = tpu.matmul %991, %980, %cst_328 {dimension_numbers = #tpu.dot_dimension_numbers<[1], [0], [0], [1], [0, 0, 1, 1], [], []>} : vector<2x24xbf16>, vector<24x8xbf16>, vector<2x8xf32> -> vector<2x8xf32>
    "tpu.trace_stop"() : () -> ()
    %993 = tpu.concatenate %938, %956, %974, %992 in 1 : vector<2x8xf32>, vector<2x8xf32>, vector<2x8xf32>, vector<2x8xf32> -> vector<2x32xf32>
    %cst_329 = arith.constant 0.166666672 : f32
    %994 = vector.broadcast %cst_329 : f32 to vector<2x32xf32>
    %995 = arith.mulf %993, %994 : vector<2x32xf32>
    %996 = arith.addf %995, %900 : vector<2x32xf32>
    %997 = arith.truncf %996 : vector<2x32xf32> to vector<2x32xbf16>
    %c0_330 = arith.constant 0 : index
    %c0_331 = arith.constant 0 : index
    %998 = vector.load %arg26[%c0_330, %c0_331] : memref<32x3xbf16, #tpu.memory_space<vmem>>, vector<32x3xbf16>
    %cst_332 = arith.constant dense<0.000000e+00> : vector<2x3xf32>
    %999 = tpu.matmul %997, %998, %cst_332 {dimension_numbers = #tpu.dot_dimension_numbers<[1], [0], [0], [1], [0, 0, 1, 1], [], []>} : vector<2x32xbf16>, vector<32x3xbf16>, vector<2x3xf32> -> vector<2x3xf32>
    %c0_333 = arith.constant 0 : index
    %c0_334 = arith.constant 0 : index
    %1000 = vector.load %arg27[%c0_333, %c0_334] : memref<1x3xf32, #tpu.memory_space<vmem>>, vector<1x3xf32>
    %1001 = vector.broadcast %1000 : vector<1x3xf32> to vector<2x3xf32>
    %1002 = arith.addf %999, %1001 : vector<2x3xf32>
    %cst_335 = arith.constant dense<0xFF800000> : vector<2xf32>
    %1003 = vector.multi_reduction <maximumf>, %1002, %cst_335 [1] : vector<2x3xf32> to vector<2xf32>
    %1004 = vector.shape_cast %1003 : vector<2xf32> to vector<2x1xf32>
    %1005 = vector.broadcast %1004 : vector<2x1xf32> to vector<2x3xf32>
    %1006 = arith.subf %1002, %1005 : vector<2x3xf32>
    %1007 = math.exp %1006 : vector<2x3xf32>
    %cst_336 = arith.constant dense<0.000000e+00> : vector<2xf32>
    %1008 = vector.multi_reduction <add>, %1007, %cst_336 [1] : vector<2x3xf32> to vector<2xf32>
    %1009 = vector.shape_cast %1008 : vector<2xf32> to vector<2x1xf32>
    %1010 = vector.broadcast %1009 : vector<2x1xf32> to vector<2x3xf32>
    %1011 = arith.divf %1007, %1010 : vector<2x3xf32>
    %c0_337 = arith.constant 0 : index
    %c0_338 = arith.constant 0 : index
    %1012 = vector.load %arg28[%c0_337, %c0_338] : memref<2x3xf32, #tpu.memory_space<vmem>>, vector<2x3xf32>
    tpu.vector_store %arg28[%c0_337, %c0_338], %1011 {strides = array<i32>} : memref<2x3xf32, #tpu.memory_space<vmem>>, vector<2x3xf32>,
    return
  }
  func.func @transform_0(%arg0: i32) -> (i32, i32) {
    %c0_i32 = arith.constant 0 : i32
    %c0_i32_0 = arith.constant 0 : i32
    %c0_i32_1 = arith.constant 0 : i32
    return %c0_i32, %c0_i32_0 : i32, i32
  }
  func.func @transform_1(%arg0: i32) -> (i32, i32) {
    %c0_i32 = arith.constant 0 : i32
    %c0_i32_0 = arith.constant 0 : i32
    %c0_i32_1 = arith.constant 0 : i32
    return %c0_i32, %c0_i32_0 : i32, i32
  }
  func.func @transform_2(%arg0: i32) -> (i32, i32) {
    %c0_i32 = arith.constant 0 : i32
    %c0_i32_0 = arith.constant 0 : i32
    %c0_i32_1 = arith.constant 0 : i32
    return %c0_i32, %c0_i32_0 : i32, i32
  }
  func.func @transform_3(%arg0: i32) -> (i32, i32) {
    %c0_i32 = arith.constant 0 : i32
    %c0_i32_0 = arith.constant 0 : i32
    %c0_i32_1 = arith.constant 0 : i32
    return %c0_i32, %c0_i32_0 : i32, i32
  }
  func.func @transform_4(%arg0: i32) -> (i32, i32) {
    %c0_i32 = arith.constant 0 : i32
    %c0_i32_0 = arith.constant 0 : i32
    %c0_i32_1 = arith.constant 0 : i32
    return %c0_i32, %c0_i32_0 : i32, i32
  }
  func.func @transform_5(%arg0: i32) -> (i32, i32, i32) {
    %c0_i32 = arith.constant 0 : i32
    %c0_i32_0 = arith.constant 0 : i32
    %c0_i32_1 = arith.constant 0 : i32
    %c0_i32_2 = arith.constant 0 : i32
    return %c0_i32, %c0_i32_0, %c0_i32_1 : i32, i32, i32
  }
  func.func @transform_6(%arg0: i32) -> (i32, i32, i32) {
    %c0_i32 = arith.constant 0 : i32
    %c0_i32_0 = arith.constant 0 : i32
    %c0_i32_1 = arith.constant 0 : i32
    %c0_i32_2 = arith.constant 0 : i32
    return %c0_i32, %c0_i32_0, %c0_i32_1 : i32, i32, i32
  }
  func.func @transform_7(%arg0: i32) -> (i32, i32, i32) {
    %c0_i32 = arith.constant 0 : i32
    %c0_i32_0 = arith.constant 0 : i32
    %c0_i32_1 = arith.constant 0 : i32
    %c0_i32_2 = arith.constant 0 : i32
    return %c0_i32, %c0_i32_0, %c0_i32_1 : i32, i32, i32
  }
  func.func @transform_8(%arg0: i32) -> (i32, i32, i32) {
    %c0_i32 = arith.constant 0 : i32
    %c0_i32_0 = arith.constant 0 : i32
    %c0_i32_1 = arith.constant 0 : i32
    %c0_i32_2 = arith.constant 0 : i32
    return %c0_i32, %c0_i32_0, %c0_i32_1 : i32, i32, i32
  }
  func.func @transform_9(%arg0: i32) -> (i32, i32, i32) {
    %c0_i32 = arith.constant 0 : i32
    %c0_i32_0 = arith.constant 0 : i32
    %c0_i32_1 = arith.constant 0 : i32
    %c0_i32_2 = arith.constant 0 : i32
    return %c0_i32, %c0_i32_0, %c0_i32_1 : i32, i32, i32
  }
  func.func @transform_10(%arg0: i32) -> (i32, i32, i32) {
    %c0_i32 = arith.constant 0 : i32
    %c0_i32_0 = arith.constant 0 : i32
    %c0_i32_1 = arith.constant 0 : i32
    %c0_i32_2 = arith.constant 0 : i32
    return %c0_i32, %c0_i32_0, %c0_i32_1 : i32, i32, i32
  }
  func.func @transform_11(%arg0: i32) -> (i32, i32, i32) {
    %c0_i32 = arith.constant 0 : i32
    %c0_i32_0 = arith.constant 0 : i32
    %c0_i32_1 = arith.constant 0 : i32
    %c0_i32_2 = arith.constant 0 : i32
    return %c0_i32, %c0_i32_0, %c0_i32_1 : i32, i32, i32
  }
  func.func @transform_12(%arg0: i32) -> (i32, i32, i32) {
    %c0_i32 = arith.constant 0 : i32
    %c0_i32_0 = arith.constant 0 : i32
    %c0_i32_1 = arith.constant 0 : i32
    %c0_i32_2 = arith.constant 0 : i32
    return %c0_i32, %c0_i32_0, %c0_i32_1 : i32, i32, i32
  }
  func.func @transform_13(%arg0: i32) -> (i32, i32, i32) {
    %c0_i32 = arith.constant 0 : i32
    %c0_i32_0 = arith.constant 0 : i32
    %c0_i32_1 = arith.constant 0 : i32
    %c0_i32_2 = arith.constant 0 : i32
    return %c0_i32, %c0_i32_0, %c0_i32_1 : i32, i32, i32
  }
  func.func @transform_14(%arg0: i32) -> (i32, i32, i32) {
    %c0_i32 = arith.constant 0 : i32
    %c0_i32_0 = arith.constant 0 : i32
    %c0_i32_1 = arith.constant 0 : i32
    %c0_i32_2 = arith.constant 0 : i32
    return %c0_i32, %c0_i32_0, %c0_i32_1 : i32, i32, i32
  }
  func.func @transform_15(%arg0: i32) -> (i32, i32, i32) {
    %c0_i32 = arith.constant 0 : i32
    %c0_i32_0 = arith.constant 0 : i32
    %c0_i32_1 = arith.constant 0 : i32
    %c0_i32_2 = arith.constant 0 : i32
    return %c0_i32, %c0_i32_0, %c0_i32_1 : i32, i32, i32
  }
  func.func @transform_16(%arg0: i32) -> (i32, i32, i32) {
    %c0_i32 = arith.constant 0 : i32
    %c0_i32_0 = arith.constant 0 : i32
    %c0_i32_1 = arith.constant 0 : i32
    %c0_i32_2 = arith.constant 0 : i32
    return %c0_i32, %c0_i32_0, %c0_i32_1 : i32, i32, i32
  }
  func.func @transform_17(%arg0: i32) -> (i32, i32, i32) {
    %c0_i32 = arith.constant 0 : i32
    %c0_i32_0 = arith.constant 0 : i32
    %c0_i32_1 = arith.constant 0 : i32
    %c0_i32_2 = arith.constant 0 : i32
    return %c0_i32, %c0_i32_0, %c0_i32_1 : i32, i32, i32
  }
  func.func @transform_18(%arg0: i32) -> (i32, i32, i32) {
    %c0_i32 = arith.constant 0 : i32
    %c0_i32_0 = arith.constant 0 : i32
    %c0_i32_1 = arith.constant 0 : i32
    %c0_i32_2 = arith.constant 0 : i32
    return %c0_i32, %c0_i32_0, %c0_i32_1 : i32, i32, i32
  }
  func.func @transform_19(%arg0: i32) -> (i32, i32) {
    %c0_i32 = arith.constant 0 : i32
    %c0_i32_0 = arith.constant 0 : i32
    %c0_i32_1 = arith.constant 0 : i32
    return %c0_i32, %c0_i32_0 : i32, i32
  }
  func.func @transform_20(%arg0: i32) -> (i32, i32) {
    %c0_i32 = arith.constant 0 : i32
    %c0_i32_0 = arith.constant 0 : i32
    %c0_i32_1 = arith.constant 0 : i32
    return %c0_i32, %c0_i32_0 : i32, i32
  }
  func.func @transform_21(%arg0: i32) -> (i32, i32) {
    %c0_i32 = arith.constant 0 : i32
    %c0_i32_0 = arith.constant 0 : i32
    %c0_i32_1 = arith.constant 0 : i32
    return %c0_i32, %c0_i32_0 : i32, i32
  }
  func.func @transform_22(%arg0: i32) -> (i32, i32) {
    %c0_i32 = arith.constant 0 : i32
    %c0_i32_0 = arith.constant 0 : i32
    %c0_i32_1 = arith.constant 0 : i32
    return %c0_i32, %c0_i32_0 : i32, i32
  }
  func.func @transform_23(%arg0: i32) -> (i32, i32) {
    %c0_i32 = arith.constant 0 : i32
    %c0_i32_0 = arith.constant 0 : i32
    %c0_i32_1 = arith.constant 0 : i32
    return %c0_i32, %c0_i32_0 : i32, i32
  }
  func.func @transform_24(%arg0: i32) -> (i32, i32) {
    %c0_i32 = arith.constant 0 : i32
    %c0_i32_0 = arith.constant 0 : i32
    %c0_i32_1 = arith.constant 0 : i32
    return %c0_i32, %c0_i32_0 : i32, i32
  }
  func.func @transform_25(%arg0: i32) -> (i32, i32) {
    %c0_i32 = arith.constant 0 : i32
    %c0_i32_0 = arith.constant 0 : i32
    %c0_i32_1 = arith.constant 0 : i32
    return %c0_i32, %c0_i32_0 : i32, i32
  }
  func.func @transform_26(%arg0: i32) -> (i32, i32) {
    %c0_i32 = arith.constant 0 : i32
    %c0_i32_0 = arith.constant 0 : i32
    %c0_i32_1 = arith.constant 0 : i32
    return %c0_i32, %c0_i32_0 : i32, i32
  }
  func.func @transform_27(%arg0: i32) -> (i32, i32) {
    %c0_i32 = arith.constant 0 : i32
    %c0_i32_0 = arith.constant 0 : i32
    %c0_i32_1 = arith.constant 0 : i32
    return %c0_i32, %c0_i32_0 : i32, i32
  }
}

</mosaic_0001>

<llo_original>
// kernel: acd_forward.1
$region0: #{acd_forward.1}
  #allocation0 [shape = 'u32[]', space=smem, size = 0x4, offset = 0x4, fixed_abs, tag = 'smem constant byte address 0x4 - core index']
  #allocation1 [shape = 'u32[144,128]{1,0:T(1,128)}', space=vmem, size = 0x12000, scoped, tag = 'internal scratch']
  %s0 = inlined_call_operand.vmem [shape: s32[16,1], index: 0, kind: input, shape index: {}]
  %s1 = inlined_call_operand.vmem [shape: s32[2,8], index: 1, kind: input, shape index: {}]
  %s2 = inlined_call_operand.vmem [shape: f32[100,32], index: 2, kind: input, shape index: {}]
  %s3 = inlined_call_operand.vmem [shape: f32[64,32], index: 3, kind: input, shape index: {}]
  %s4 = inlined_call_operand.vmem [shape: f32[24,24], index: 4, kind: input, shape index: {}]
  %s5 = inlined_call_operand.vmem [shape: bf16[2,4,32], index: 5, kind: input, shape index: {}]
  %s6 = inlined_call_operand.vmem [shape: bf16[2,4,32], index: 6, kind: input, shape index: {}]
  %s7 = inlined_call_operand.vmem [shape: bf16[2,32,96], index: 7, kind: input, shape index: {}]
  %s8 = inlined_call_operand.vmem [shape: f32[2,1,96], index: 8, kind: input, shape index: {}]
  %s9 = inlined_call_operand.vmem [shape: bf16[2,32,32], index: 9, kind: input, shape index: {}]
  %s10 = inlined_call_operand.vmem [shape: f32[2,1,32], index: 10, kind: input, shape index: {}]
  %s11 = inlined_call_operand.vmem [shape: f32[2,1,32], index: 11, kind: input, shape index: {}]
  %s12 = inlined_call_operand.vmem [shape: f32[2,1,32], index: 12, kind: input, shape index: {}]
  %s13 = inlined_call_operand.vmem [shape: bf16[2,32,64], index: 13, kind: input, shape index: {}]
  %s14 = inlined_call_operand.vmem [shape: f32[2,1,64], index: 14, kind: input, shape index: {}]
  %s15 = inlined_call_operand.vmem [shape: bf16[2,64,32], index: 15, kind: input, shape index: {}]
  %s16 = inlined_call_operand.vmem [shape: f32[2,1,32], index: 16, kind: input, shape index: {}]
  %s17 = inlined_call_operand.vmem [shape: f32[2,1,32], index: 17, kind: input, shape index: {}]
  %s18 = inlined_call_operand.vmem [shape: f32[2,1,32], index: 18, kind: input, shape index: {}]
  %s19 = inlined_call_operand.vmem [shape: f32[1,32], index: 19, kind: input, shape index: {}]
  %s20 = inlined_call_operand.vmem [shape: f32[1,32], index: 20, kind: input, shape index: {}]
  %s21 = inlined_call_operand.vmem [shape: bf16[32,32], index: 21, kind: input, shape index: {}]
  %s22 = inlined_call_operand.vmem [shape: f32[1,32], index: 22, kind: input, shape index: {}]
  %s23 = inlined_call_operand.vmem [shape: bf16[32,64], index: 23, kind: input, shape index: {}]
  %s24 = inlined_call_operand.vmem [shape: f32[1,64], index: 24, kind: input, shape index: {}]
  %s25 = inlined_call_operand.vmem [shape: bf16[32,3], index: 25, kind: input, shape index: {}]
  %s26 = inlined_call_operand.vmem [shape: f32[1,3], index: 26, kind: input, shape index: {}]
  %s27 = inlined_call_operand.hbm [shape: f32[2,3], index: 27, kind: output, shape index: {}]
  %s28 = sld [smem:[#allocation0]]
  $region118: #{acd_forward.1} parent=0
    _
  %s30 = ssub.s32 1, %s28
  %s31 = scalar_select 0, %s30, %s28
  $region1: #{acd_forward.1} parent=0
    #allocation2 [shape = 'u8[1024]{0}', space=vmem, size = 0x400, scoped, tag = 'output window, operand 0, single buffered']
    #allocation3 [shape = 's32[1]{0}', space=sflag, size = 0x4, scoped, tag = 'scoped memory for acd_forward.1']
    %32 = vsyncpa [#allocation3], 0
    // Predicated region
    $region2: #{acd_forward.1} parent=1 // pred_check
      _
    $region3: #{acd_forward.1} parent=1 // pred_check_branch
      %34 = sbr.rel (0) target = $region5
    $region4: #{acd_forward.1} parent=1 // pred_region
      _
    $region5: #{acd_forward.1} parent=1 // pred_fallthru
      _
    // Predicated region
    $region6: #{acd_forward.1} parent=1 // pred_check
      _
    $region7: #{acd_forward.1} parent=1 // pred_check_branch
      %36 = sbr.rel (0) target = $region9
    $region8: #{acd_forward.1} parent=1 // pred_region
      _
    $region9: #{acd_forward.1} parent=1 // pred_fallthru
      _
    // Predicated region
    $region10: #{acd_forward.1} parent=1 // pred_check
      _
    $region11: #{acd_forward.1} parent=1 // pred_check_branch
      %38 = sbr.rel (0) target = $region13
    $region12: #{acd_forward.1} parent=1 // pred_region
      _
    $region13: #{acd_forward.1} parent=1 // pred_fallthru
      _
    // Predicated region
    $region14: #{acd_forward.1} parent=1 // pred_check
      _
    $region15: #{acd_forward.1} parent=1 // pred_check_branch
      %40 = sbr.rel (0) target = $region17
    $region16: #{acd_forward.1} parent=1 // pred_region
      _
    $region17: #{acd_forward.1} parent=1 // pred_fallthru
      _
    // Predicated region
    $region18: #{acd_forward.1} parent=1 // pred_check
      _
    $region19: #{acd_forward.1} parent=1 // pred_check_branch
      %42 = sbr.rel (0) target = $region21
    $region20: #{acd_forward.1} parent=1 // pred_region
      _
    $region21: #{acd_forward.1} parent=1 // pred_fallthru
      _
    // Predicated region
    $region22: #{acd_forward.1} parent=1 // pred_check
      _
    $region23: #{acd_forward.1} parent=1 // pred_check_branch
      %44 = sbr.rel (0) target = $region25
    $region24: #{acd_forward.1} parent=1 // pred_region
      _
    $region25: #{acd_forward.1} parent=1 // pred_fallthru
      _
    // Predicated region
    $region26: #{acd_forward.1} parent=1 // pred_check
      _
    $region27: #{acd_forward.1} parent=1 // pred_check_branch
      %46 = sbr.rel (0) target = $region29
    $region28: #{acd_forward.1} parent=1 // pred_region
      _
    $region29: #{acd_forward.1} parent=1 // pred_fallthru
      _
    // Predicated region
    $region30: #{acd_forward.1} parent=1 // pred_check
      _
    $region31: #{acd_forward.1} parent=1 // pred_check_branch
      %48 = sbr.rel (0) target = $region33
    $region32: #{acd_forward.1} parent=1 // pred_region
      _
    $region33: #{acd_forward.1} parent=1 // pred_fallthru
      _
    // Predicated region
    $region34: #{acd_forward.1} parent=1 // pred_check
      _
    $region35: #{acd_forward.1} parent=1 // pred_check_branch
      %50 = sbr.rel (0) target = $region37
    $region36: #{acd_forward.1} parent=1 // pred_region
      _
    $region37: #{acd_forward.1} parent=1 // pred_fallthru
      _
    // Predicated region
    $region38: #{acd_forward.1} parent=1 // pred_check
      _
    $region39: #{acd_forward.1} parent=1 // pred_check_branch
      %52 = sbr.rel (0) target = $region41
    $region40: #{acd_forward.1} parent=1 // pred_region
      _
    $region41: #{acd_forward.1} parent=1 // pred_fallthru
      _
    // Predicated region
    $region42: #{acd_forward.1} parent=1 // pred_check
      _
    $region43: #{acd_forward.1} parent=1 // pred_check_branch
      %54 = sbr.rel (0) target = $region45
    $region44: #{acd_forward.1} parent=1 // pred_region
      _
    $region45: #{acd_forward.1} parent=1 // pred_fallthru
      _
    // Predicated region
    $region46: #{acd_forward.1} parent=1 // pred_check
      _
    $region47: #{acd_forward.1} parent=1 // pred_check_branch
      %56 = sbr.rel (0) target = $region49
    $region48: #{acd_forward.1} parent=1 // pred_region
      _
    $region49: #{acd_forward.1} parent=1 // pred_fallthru
      _
    // Predicated region
    $region50: #{acd_forward.1} parent=1 // pred_check
      _
    $region51: #{acd_forward.1} parent=1 // pred_check_branch
      %58 = sbr.rel (0) target = $region53
    $region52: #{acd_forward.1} parent=1 // pred_region
      _
    $region53: #{acd_forward.1} parent=1 // pred_fallthru
      _
    // Predicated region
    $region54: #{acd_forward.1} parent=1 // pred_check
      _
    $region55: #{acd_forward.1} parent=1 // pred_check_branch
      %60 = sbr.rel (0) target = $region57
    $region56: #{acd_forward.1} parent=1 // pred_region
      _
    $region57: #{acd_forward.1} parent=1 // pred_fallthru
      _
    // Predicated region
    $region58: #{acd_forward.1} parent=1 // pred_check
      _
    $region59: #{acd_forward.1} parent=1 // pred_check_branch
      %62 = sbr.rel (0) target = $region61
    $region60: #{acd_forward.1} parent=1 // pred_region
      _
    $region61: #{acd_forward.1} parent=1 // pred_fallthru
      _
    // Predicated region
    $region62: #{acd_forward.1} parent=1 // pred_check
      _
    $region63: #{acd_forward.1} parent=1 // pred_check_branch
      %64 = sbr.rel (0) target = $region65
    $region64: #{acd_forward.1} parent=1 // pred_region
      _
    $region65: #{acd_forward.1} parent=1 // pred_fallthru
      _
    // Predicated region
    $region66: #{acd_forward.1} parent=1 // pred_check
      _
    $region67: #{acd_forward.1} parent=1 // pred_check_branch
      %66 = sbr.rel (0) target = $region69
    $region68: #{acd_forward.1} parent=1 // pred_region
      _
    $region69: #{acd_forward.1} parent=1 // pred_fallthru
      _
    // Predicated region
    $region70: #{acd_forward.1} parent=1 // pred_check
      _
    $region71: #{acd_forward.1} parent=1 // pred_check_branch
      %68 = sbr.rel (0) target = $region73
    $region72: #{acd_forward.1} parent=1 // pred_region
      _
    $region73: #{acd_forward.1} parent=1 // pred_fallthru
      _
    // Predicated region
    $region74: #{acd_forward.1} parent=1 // pred_check
      _
    $region75: #{acd_forward.1} parent=1 // pred_check_branch
      %70 = sbr.rel (0) target = $region77
    $region76: #{acd_forward.1} parent=1 // pred_region
      _
    $region77: #{acd_forward.1} parent=1 // pred_fallthru
      _
    // Predicated region
    $region78: #{acd_forward.1} parent=1 // pred_check
      _
    $region79: #{acd_forward.1} parent=1 // pred_check_branch
      %72 = sbr.rel (0) target = $region81
    $region80: #{acd_forward.1} parent=1 // pred_region
      _
    $region81: #{acd_forward.1} parent=1 // pred_fallthru
      _
    // Predicated region
    $region82: #{acd_forward.1} parent=1 // pred_check
      _
    $region83: #{acd_forward.1} parent=1 // pred_check_branch
      %74 = sbr.rel (0) target = $region85
    $region84: #{acd_forward.1} parent=1 // pred_region
      _
    $region85: #{acd_forward.1} parent=1 // pred_fallthru
      _
    // Predicated region
    $region86: #{acd_forward.1} parent=1 // pred_check
      _
    $region87: #{acd_forward.1} parent=1 // pred_check_branch
      %76 = sbr.rel (0) target = $region89
    $region88: #{acd_forward.1} parent=1 // pred_region
      _
    $region89: #{acd_forward.1} parent=1 // pred_fallthru
      _
    // Predicated region
    $region90: #{acd_forward.1} parent=1 // pred_check
      _
    $region91: #{acd_forward.1} parent=1 // pred_check_branch
      %78 = sbr.rel (0) target = $region93
    $region92: #{acd_forward.1} parent=1 // pred_region
      _
    $region93: #{acd_forward.1} parent=1 // pred_fallthru
      _
    // Predicated region
    $region94: #{acd_forward.1} parent=1 // pred_check
      _
    $region95: #{acd_forward.1} parent=1 // pred_check_branch
      %80 = sbr.rel (0) target = $region97
    $region96: #{acd_forward.1} parent=1 // pred_region
      _
    $region97: #{acd_forward.1} parent=1 // pred_fallthru
      _
    // Predicated region
    $region98: #{acd_forward.1} parent=1 // pred_check
      _
    $region99: #{acd_forward.1} parent=1 // pred_check_branch
      %82 = sbr.rel (0) target = $region101
    $region100: #{acd_forward.1} parent=1 // pred_region
      _
    $region101: #{acd_forward.1} parent=1 // pred_fallthru
      _
    // Predicated region
    $region102: #{acd_forward.1} parent=1 // pred_check
      _
    $region103: #{acd_forward.1} parent=1 // pred_check_branch
      %84 = sbr.rel (0) target = $region105
    $region104: #{acd_forward.1} parent=1 // pred_region
      _
    $region105: #{acd_forward.1} parent=1 // pred_fallthru
      _
    // Predicated region
    $region106: #{acd_forward.1} parent=1 // pred_check
      _
    $region107: #{acd_forward.1} parent=1 // pred_check_branch
      %86 = sbr.rel (0) target = $region109
    $region108: #{acd_forward.1} parent=1 // pred_region
      _
    $region109: #{acd_forward.1} parent=1 // pred_fallthru
      _
    %v88 = vld [vmem:[%s0] sm:$0xff]
    %v89 = vld [vmem:[%s0 + $0x8] sm:$0xff]
    %v90 = vlaneseq
    %v91 = vand.u32 %v90, 127
    %92 = vset.pattern.permute.xlu0 0
    %93 = vperm.xlu0 %92, %v88
    %v94 = vpop.permute.xlu0 %93
    %95 = vset.pattern.permute.xlu0 0
    %96 = vperm.xlu0 %95, %v89
    %v97 = vpop.permute.xlu0 %96
    %vm98 = vcmp.eq.s32.totalorder %v91, %v94
    %vm99 = vcmp.eq.s32.totalorder %v91, %v97
    %v100 = vsel %vm98, 1, 0
    %v101 = vsel %vm99, 1, 0
    %v102 = vcvt.s32.f32 %v100
    %v103 = vcvt.s32.f32 %v101
    %v104 = vld [vmem:[%s2] sm:$0xff]
    %v105 = vld [vmem:[%s2 + $0x8] sm:$0xff]
    %v106 = vld [vmem:[%s2 + $0x10] sm:$0xff]
    %v107 = vld [vmem:[%s2 + $0x18] sm:$0xff]
    %v108 = vld [vmem:[%s2 + $0x20] sm:$0xff]
    %v109 = vld [vmem:[%s2 + $0x28] sm:$0xff]
    %v110 = vld [vmem:[%s2 + $0x30] sm:$0xff]
    %v111 = vld [vmem:[%s2 + $0x38] sm:$0xff]
    %v112 = vld [vmem:[%s2 + $0x40] sm:$0xff]
    %v113 = vld [vmem:[%s2 + $0x48] sm:$0xff]
    %v114 = vld [vmem:[%s2 + $0x50] sm:$0xff]
    %v115 = vld [vmem:[%s2 + $0x58] sm:$0xff]
    %v116 = vld [vmem:[%s2 + $0x60] sm:$0xf]
    %v117 = vld [vmem:[%s3] sm:$0xff]
    %v118 = vld [vmem:[%s3 + $0x8] sm:$0xff]
    %vm121 = vcmask 1043456
    %v122 = vrot.slane %v117, 4
    %v123 = vrot.slane %v118, 4
    %v124 = vsel %vm121, %v122, %v123
    %vm126 = vcmask 818176
    %v128 = vsel %vm126, %v102, 0
    %v131 = vsel %vm126, %v103, 0
    %v134 = vsel %vm121, %v116, 0
    %136 = vmatprep.subr.mxu0 0.0
    %137 = vmatpush1.msra.mxu0 0.0
    %138 = vmatprep.subr.mxu0 0.0
    %139 = vmatpush1.msra.mxu0 0.0
    %140 = vmatprep.subr.mxu0 0.0
    %141 = vmatpush1.msra.mxu0 0.0
    %142 = vmatprep.subr.mxu0 0.0
    %143 = vmatpush1.msra.mxu0 %v134
    %144 = vmatprep.subr.mxu0 0.0
    %145 = vmatpush1.msra.mxu0 %v115
    %146 = vmatprep.subr.mxu0 0.0
    %147 = vmatpush1.msra.mxu0 %v114
    %148 = vmatprep.subr.mxu0 0.0
    %149 = vmatpush1.msra.mxu0 %v113
    %150 = vmatprep.subr.mxu0 0.0
    %151 = vmatpush1.msra.mxu0 %v112
    %152 = vmatprep.subr.mxu0 0.0
    %153 = vmatpush1.msra.mxu0 %v111
    %154 = vmatprep.subr.mxu0 0.0
    %155 = vmatpush1.msra.mxu0 %v110
    %156 = vmatprep.subr.mxu0 0.0
    %157 = vmatpush1.msra.mxu0 %v109
    %158 = vmatprep.subr.mxu0 0.0
    %159 = vmatpush1.msra.mxu0 %v108
    %160 = vmatprep.subr.mxu0 0.0
    %161 = vmatpush1.msra.mxu0 %v107
    %162 = vmatprep.subr.mxu0 0.0
    %163 = vmatpush1.msra.mxu0 %v106
    %164 = vmatprep.subr.mxu0 0.0
    %165 = vmatpush1.msra.mxu0 %v105
    %166 = vmatprep.subr.mxu0 0.0
    %167 = vmatpush1.msra.mxu0 %v104
    %168 = vmatprep.subr.mxu0 0.0
    %169 = vmatpush2.msra.mxu0 0.0
    %170 = vmatprep.subr.mxu0 0.0
    %171 = vmatpush2.msra.mxu0 0.0
    %172 = vmatprep.subr.mxu0 0.0
    %173 = vmatpush2.msra.mxu0 0.0
    %174 = vmatprep.subr.mxu0 0.0
    %175 = vmatpush2.msra.mxu0 0.0
    %176 = vmatprep.subr.mxu0 0.0
    %177 = vmatpush2.msra.mxu0 0.0
    %178 = vmatprep.subr.mxu0 0.0
    %179 = vmatpush2.msra.mxu0 0.0
    %180 = vmatprep.subr.mxu0 0.0
    %181 = vmatpush2.msra.mxu0 0.0
    %182 = vmatprep.subr.mxu0 0.0
    %183 = vmatpush2.msra.mxu0 0.0
    %184 = vmatprep.subr.mxu0 0.0
    %185 = vmatpush2.msra.mxu0 0.0
    %186 = vmatprep.subr.mxu0 0.0
    %187 = vmatpush2.msra.mxu0 0.0
    %188 = vmatprep.subr.mxu0 0.0
    %189 = vmatpush2.msra.mxu0 0.0
    %190 = vmatprep.subr.mxu0 0.0
    %191 = vmatpush2.msra.mxu0 0.0
    %192 = vmatprep.subr.mxu0 0.0
    %193 = vmatpush2.msra.mxu0 0.0
    %194 = vmatprep.subr.mxu0 0.0
    %195 = vmatpush2.msra.mxu0 0.0
    %196 = vmatprep.subr.mxu0 0.0
    %197 = vmatpush2.msra.mxu0 0.0
    %198 = vmatprep.subr.mxu0 0.0
    %199 = vmatpush2.msra.mxu0 0.0
    %200 = vmatprep.mubr.f32.mxu0 0.0
    %201 = vmatmul.mubr.f32.gmra.mxu0 %v128
    %v202 = vpop.f32.mrf.mxu0
    %v203 = vadd.f32 %v124, %v202
    %v204 = vpop.f32.mrf.mxu0
    %205 = vmatprep.mubr.f32.mxu0 0.0
    %206 = vmatmul.mubr.f32.gmra.mxu0 %v131
    %v207 = vpop.f32.mrf.mxu0
    %v208 = vadd.f32 %v124, %v207
    %v209 = vpop.f32.mrf.mxu0
    %210 = vdwg.mxu0
    %v211 = vld [vmem:[%s19] sm:$0x1]
    %v212 = vld [vmem:[%s20] sm:$0x1]
    %vm213 = vcmask 261120
    %v214 = vsel %vm213, %v203, 0.0
    %215 = vadd.xlane.f32.xlu0 %v214
    %v216 = vpop.xlane.xlu0 %215
    %v217 = vsel %vm213, %v208, 0.0
    %218 = vadd.xlane.f32.xlu0 %v217
    %v219 = vpop.xlane.xlu0 %218
    %v220 = vrcp.pop 32.0
    %v221 = vmul.f32 %v216, %v220
    %v222 = vmul.f32 %v219, %v220
    %v223 = vsub.f32 %v203, %v221
    %v224 = vsub.f32 %v208, %v222
    %v225 = vmul.f32 %v223, %v223
    %v226 = vmul.f32 %v224, %v224
    %v227 = vsel %vm213, %v225, 0.0
    %228 = vadd.xlane.f32.xlu0 %v227
    %v229 = vpop.xlane.xlu0 %228
    %v230 = vsel %vm213, %v226, 0.0
    %231 = vadd.xlane.f32.xlu0 %v230
    %v232 = vpop.xlane.xlu0 %231
    %v233 = vmul.f32 %v229, %v220
    %v234 = vmul.f32 %v232, %v220
    %v235 = vadd.f32 %v233, 1e-12
    %v236 = vadd.f32 %v234, 1e-12
    %v237 = vrsqrt.pop %v235
    %v238 = vrsqrt.pop %v236
    %v239 = vmul.f32 %v223, %v237
    %v240 = vmul.f32 %v224, %v238
    %v242 = vlaneseq
    %v243 = vshrl.u32 %v242, 7
    %v244 = vsub.s32 0, %v243
    %v245 = vrot.slane %v211, %v244
    %v247 = vmul.f32 %v239, %v245
    %v248 = vmul.f32 %v240, %v245
    %v250 = vlaneseq
    %v251 = vshrl.u32 %v250, 7
    %v252 = vsub.s32 0, %v251
    %v253 = vrot.slane %v212, %v252
    %v255 = vadd.f32 %v247, %v253
    %v256 = vadd.f32 %v248, %v253
    %v257 = vld [vmem:[%s1] sm:$0x3]
    %v258 = vcvt.s32.f32 %v257
    %v259 = vsub.f32 1.0, %v258
    %v260 = vmul.f32 %v259, -10000.0
    %v261 = vpack.c.bf16 %v256, %v255
    %v262 = vld [vmem:[%s7] sm:$0xf]
    %v263 = vld [vmem:[%s7 + $0x4] sm:$0xf]
    %v264 = vld [vmem:[%s7 + $0x8] sm:$0xf]
    %v265 = vld [vmem:[%s7 + $0xc] sm:$0xf]
    %v266 = vld [vmem:[%s8] sm:$0x1]
    %v268 = vlaneseq
    %v269 = vshrl.u32 %v268, 7
    %v270 = vsub.s32 0, %v269
    %v271 = vrot.slane %v266, %v270
    %v277 = vunpack.c.l.b16 %v262
    %v278 = vunpack.c.l.b16 %v263
    %v279 = vunpack.c.l.b16 %v264
    %v280 = vunpack.c.l.b16 %v265
    %v281 = vpack.c.b16 %v278, %v277
    %v282 = vpack.c.b16 %v280, %v279
    %v286 = vsel %vm213, %v261, 0
    %288 = vmatprep.subr.bf16.mxu0 0
    %289 = vmatpush1.bf16.msra.mxu0 0
    %290 = vmatprep.subr.bf16.mxu0 0
    %291 = vmatpush1.bf16.msra.mxu0 0
    %292 = vmatprep.subr.bf16.mxu0 0
    %293 = vmatpush1.bf16.msra.mxu0 0
    %294 = vmatprep.subr.bf16.mxu0 0
    %295 = vmatpush1.bf16.msra.mxu0 0
    %296 = vmatprep.subr.bf16.mxu0 0
    %297 = vmatpush1.bf16.msra.mxu0 0
    %298 = vmatprep.subr.bf16.mxu0 0
    %299 = vmatpush1.bf16.msra.mxu0 0
    %300 = vmatprep.subr.bf16.mxu0 0
    %301 = vmatpush1.bf16.msra.mxu0 %v282
    %302 = vmatprep.subr.bf16.mxu0 0
    %303 = vmatpush1.bf16.msra.mxu0 %v281
    %304 = vmatprep.subr.bf16.mxu0 0
    %305 = vmatpush2.bf16.msra.mxu0 0
    %306 = vmatprep.subr.bf16.mxu0 0
    %307 = vmatpush2.bf16.msra.mxu0 0
    %308 = vmatprep.subr.bf16.mxu0 0
    %309 = vmatpush2.bf16.msra.mxu0 0
    %310 = vmatprep.subr.bf16.mxu0 0
    %311 = vmatpush2.bf16.msra.mxu0 0
    %312 = vmatprep.subr.bf16.mxu0 0
    %313 = vmatpush2.bf16.msra.mxu0 0
    %314 = vmatprep.subr.bf16.mxu0 0
    %315 = vmatpush2.bf16.msra.mxu0 0
    %316 = vmatprep.subr.bf16.mxu0 0
    %317 = vmatpush2.bf16.msra.mxu0 0
    %318 = vmatprep.subr.bf16.mxu0 0
    %319 = vmatpush2.bf16.msra.mxu0 0
    %320 = vmatprep.mubr.bf16.mxu0 0
    %321 = vmatmul.mubr.bf16.gmra.mxu0 %v286
    %v322 = vpop.f32.mrf.mxu0
    %v323 = vadd.f32 %v271, %v322
    %v324 = vpop.f32.mrf.mxu0
    %v325 = vpop.f32.mrf.mxu0
    %v326 = vadd.f32 %v271, %v325
    %v327 = vpop.f32.mrf.mxu0
    %328 = vdwg.mxu0
    %v329 = vld [vmem:[%s5] sm:$0x3]
    %v330 = vld [vmem:[%s6] sm:$0x3]
    %v331 = vpack.c.bf16 %v323, %v323
    %vm332 = vcmask 64512
    %v334 = vsel %vm332, %v331, 0
    %v337 = vsel %vm332, %v329, 0
    %339 = vmatprep.subr.bf16.mxu0 0
    %340 = vmatpush1.bf16.xpose.msra.mxu0 0
    %341 = vmatprep.subr.bf16.mxu0 0
    %342 = vmatpush1.bf16.xpose.msra.mxu0 0
    %343 = vmatprep.subr.bf16.mxu0 0
    %344 = vmatpush1.bf16.xpose.msra.mxu0 0
    %345 = vmatprep.subr.bf16.mxu0 0
    %346 = vmatpush1.bf16.xpose.msra.mxu0 0
    %347 = vmatprep.subr.bf16.mxu0 0
    %348 = vmatpush1.bf16.xpose.msra.mxu0 0
    %349 = vmatprep.subr.bf16.mxu0 0
    %350 = vmatpush1.bf16.xpose.msra.mxu0 0
    %351 = vmatprep.subr.bf16.mxu0 0
    %352 = vmatpush1.bf16.xpose.msra.mxu0 0
    %353 = vmatprep.subr.bf16.mxu0 0
    %354 = vmatpush1.bf16.xpose.msra.mxu0 %v337
    %355 = vmatprep.subr.bf16.mxu0 0
    %356 = vmatpush2.bf16.xpose.msra.mxu0 0
    %357 = vmatprep.subr.bf16.mxu0 0
    %358 = vmatpush2.bf16.xpose.msra.mxu0 0
    %359 = vmatprep.subr.bf16.mxu0 0
    %360 = vmatpush2.bf16.xpose.msra.mxu0 0
    %361 = vmatprep.subr.bf16.mxu0 0
    %362 = vmatpush2.bf16.xpose.msra.mxu0 0
    %363 = vmatprep.subr.bf16.mxu0 0
    %364 = vmatpush2.bf16.xpose.msra.mxu0 0
    %365 = vmatprep.subr.bf16.mxu0 0
    %366 = vmatpush2.bf16.xpose.msra.mxu0 0
    %367 = vmatprep.subr.bf16.mxu0 0
    %368 = vmatpush2.bf16.xpose.msra.mxu0 0
    %369 = vmatprep.subr.bf16.mxu0 0
    %370 = vmatpush2.bf16.xpose.msra.mxu0 0
    %371 = vmatprep.mubr.bf16.mxu0 0
    %372 = vmatmul.mubr.bf16.gmra.mxu0 %v334
    %v373 = vpop.f32.mrf.mxu0
    %v374 = vadd.f32 0.0, %v373
    %v375 = vpop.f32.mrf.mxu0
    %v376 = vpop.f32.mrf.mxu0
    %v377 = vpop.f32.mrf.mxu0
    %378 = vdwg.mxu0
    %v379 = vmul.f32 %v374, 0.35355338
    %381 = vrot.lane.b32.xlu0 %v331, 96
    %v382 = vpop.permute.xlu0 %381
    %v384 = vsel %vm332, %v382, 0
    %386 = vmatprep.subr.bf16.mxu0 0
    %387 = vmatpush1.bf16.xpose.msra.mxu0 0
    %388 = vmatprep.subr.bf16.mxu0 0
    %389 = vmatpush1.bf16.xpose.msra.mxu0 0
    %390 = vmatprep.subr.bf16.mxu0 0
    %391 = vmatpush1.bf16.xpose.msra.mxu0 0
    %392 = vmatprep.subr.bf16.mxu0 0
    %393 = vmatpush1.bf16.xpose.msra.mxu0 0
    %394 = vmatprep.subr.bf16.mxu0 0
    %395 = vmatpush1.bf16.xpose.msra.mxu0 0
    %396 = vmatprep.subr.bf16.mxu0 0
    %397 = vmatpush1.bf16.xpose.msra.mxu0 0
    %398 = vmatprep.subr.bf16.mxu0 0
    %399 = vmatpush1.bf16.xpose.msra.mxu0 0
    %400 = vmatprep.subr.bf16.mxu0 0
    %401 = vmatpush1.bf16.xpose.msra.mxu0 %v384
    %402 = vmatprep.subr.bf16.mxu0 0
    %403 = vmatpush2.bf16.xpose.msra.mxu0 0
    %404 = vmatprep.subr.bf16.mxu0 0
    %405 = vmatpush2.bf16.xpose.msra.mxu0 0
    %406 = vmatprep.subr.bf16.mxu0 0
    %407 = vmatpush2.bf16.xpose.msra.mxu0 0
    %408 = vmatprep.subr.bf16.mxu0 0
    %409 = vmatpush2.bf16.xpose.msra.mxu0 0
    %410 = vmatprep.subr.bf16.mxu0 0
    %411 = vmatpush2.bf16.xpose.msra.mxu0 0
    %412 = vmatprep.subr.bf16.mxu0 0
    %413 = vmatpush2.bf16.xpose.msra.mxu0 0
    %414 = vmatprep.subr.bf16.mxu0 0
    %415 = vmatpush2.bf16.xpose.msra.mxu0 0
    %416 = vmatprep.subr.bf16.mxu0 0
    %417 = vmatpush2.bf16.xpose.msra.mxu0 0
    %418 = vmatprep.mubr.bf16.mxu0 0
    %419 = vmatmul.mubr.bf16.gmra.mxu0 %v334
    %v420 = vpop.f32.mrf.mxu0
    %v421 = vadd.f32 0.0, %v420
    %v422 = vpop.f32.mrf.mxu0
    %v423 = vpop.f32.mrf.mxu0
    %v424 = vpop.f32.mrf.mxu0
    %425 = vdwg.mxu0
    %v426 = vmul.f32 %v421, 0.35355338
    %v427 = vlaneseq
    %v428 = vshrl.u32 %v427, 7
    %v429 = vsub.s32 0, %v428
    %v430 = vrot.slane %v260, %v429
    %v431 = vadd.f32 %v426, %v430
    %vm432 = vcmask 31744
    %v433 = vsel %vm432, %v379, -inf
    %434 = vmax.xlane.f32.xlu0 %v433
    %v435 = vpop.xlane.xlu0 %434
    %v436 = vsel %vm332, %v431, -inf
    %437 = vmax.xlane.f32.xlu0 %v436
    %v438 = vpop.xlane.xlu0 %437
    %v439 = vmax.f32 %v435, %v438
    %v440 = vsub.f32 %v379, %v439
    %v441 = vmul.f32 %v440, 1.442695
    %v442 = vpow.pop %v441
    %v443 = vsub.f32 %v431, %v439
    %v444 = vmul.f32 %v443, 1.442695
    %v445 = vpow.pop %v444
    %v446 = vsel %vm432, %v442, 0.0
    %447 = vadd.xlane.f32.xlu0 %v446
    %v448 = vpop.xlane.xlu0 %447
    %v449 = vsel %vm332, %v445, 0.0
    %450 = vadd.xlane.f32.xlu0 %v449
    %v451 = vpop.xlane.xlu0 %450
    %v452 = vadd.f32 %v448, %v451
    %v453 = vpack.c.bf16 %v442, %v442
    %v454 = vpack.c.bf16 %v445, %v445
    %455 = vrot.lane.b32.xlu0 %v331, 64
    %v456 = vpop.permute.xlu0 %455
    %v458 = vsel %vm332, %v454, 0
    %v461 = vsel %vm121, %v456, 0
    %463 = vmatprep.subr.bf16.mxu0 0
    %464 = vmatpush1.bf16.msra.mxu0 0
    %465 = vmatprep.subr.bf16.mxu0 0
    %466 = vmatpush1.bf16.msra.mxu0 0
    %467 = vmatprep.subr.bf16.mxu0 0
    %468 = vmatpush1.bf16.msra.mxu0 0
    %469 = vmatprep.subr.bf16.mxu0 0
    %470 = vmatpush1.bf16.msra.mxu0 0
    %471 = vmatprep.subr.bf16.mxu0 0
    %472 = vmatpush1.bf16.msra.mxu0 0
    %473 = vmatprep.subr.bf16.mxu0 0
    %474 = vmatpush1.bf16.msra.mxu0 0
    %475 = vmatprep.subr.bf16.mxu0 0
    %476 = vmatpush1.bf16.msra.mxu0 0
    %477 = vmatprep.subr.bf16.mxu0 0
    %478 = vmatpush1.bf16.msra.mxu0 %v461
    %479 = vmatprep.subr.bf16.mxu0 0
    %480 = vmatpush2.bf16.msra.mxu0 0
    %481 = vmatprep.subr.bf16.mxu0 0
    %482 = vmatpush2.bf16.msra.mxu0 0
    %483 = vmatprep.subr.bf16.mxu0 0
    %484 = vmatpush2.bf16.msra.mxu0 0
    %485 = vmatprep.subr.bf16.mxu0 0
    %486 = vmatpush2.bf16.msra.mxu0 0
    %487 = vmatprep.subr.bf16.mxu0 0
    %488 = vmatpush2.bf16.msra.mxu0 0
    %489 = vmatprep.subr.bf16.mxu0 0
    %490 = vmatpush2.bf16.msra.mxu0 0
    %491 = vmatprep.subr.bf16.mxu0 0
    %492 = vmatpush2.bf16.msra.mxu0 0
    %493 = vmatprep.subr.bf16.mxu0 0
    %494 = vmatpush2.bf16.msra.mxu0 0
    %495 = vmatprep.mubr.bf16.mxu0 0
    %496 = vmatmul.mubr.bf16.gmra.mxu0 %v458
    %v497 = vpop.f32.mrf.mxu0
    %v498 = vadd.f32 0.0, %v497
    %v499 = vpop.f32.mrf.mxu0
    %v500 = vpop.f32.mrf.mxu0
    %v501 = vpop.f32.mrf.mxu0
    %502 = vdwg.mxu0
    %v504 = vsel %vm432, %v453, 0
    %vm506 = vcmask 1041408
    %v508 = vsel %vm506, %v330, 0
    %510 = vmatprep.subr.bf16.mxu0 0
    %511 = vmatpush1.bf16.msra.mxu0 0
    %512 = vmatprep.subr.bf16.mxu0 0
    %513 = vmatpush1.bf16.msra.mxu0 0
    %514 = vmatprep.subr.bf16.mxu0 0
    %515 = vmatpush1.bf16.msra.mxu0 0
    %516 = vmatprep.subr.bf16.mxu0 0
    %517 = vmatpush1.bf16.msra.mxu0 0
    %518 = vmatprep.subr.bf16.mxu0 0
    %519 = vmatpush1.bf16.msra.mxu0 0
    %520 = vmatprep.subr.bf16.mxu0 0
    %521 = vmatpush1.bf16.msra.mxu0 0
    %522 = vmatprep.subr.bf16.mxu0 0
    %523 = vmatpush1.bf16.msra.mxu0 0
    %524 = vmatprep.subr.bf16.mxu0 0
    %525 = vmatpush1.bf16.msra.mxu0 %v508
    %526 = vmatprep.subr.bf16.mxu0 0
    %527 = vmatpush2.bf16.msra.mxu0 0
    %528 = vmatprep.subr.bf16.mxu0 0
    %529 = vmatpush2.bf16.msra.mxu0 0
    %530 = vmatprep.subr.bf16.mxu0 0
    %531 = vmatpush2.bf16.msra.mxu0 0
    %532 = vmatprep.subr.bf16.mxu0 0
    %533 = vmatpush2.bf16.msra.mxu0 0
    %534 = vmatprep.subr.bf16.mxu0 0
    %535 = vmatpush2.bf16.msra.mxu0 0
    %536 = vmatprep.subr.bf16.mxu0 0
    %537 = vmatpush2.bf16.msra.mxu0 0
    %538 = vmatprep.subr.bf16.mxu0 0
    %539 = vmatpush2.bf16.msra.mxu0 0
    %540 = vmatprep.subr.bf16.mxu0 0
    %541 = vmatpush2.bf16.msra.mxu0 0
    %542 = vmatprep.mubr.bf16.mxu0 0
    %543 = vmatmul.mubr.bf16.gmra.mxu0 %v504
    %v544 = vpop.f32.mrf.mxu0
    %v545 = vadd.f32 %v498, %v544
    %v546 = vpop.f32.mrf.mxu0
    %v547 = vpop.f32.mrf.mxu0
    %v548 = vpop.f32.mrf.mxu0
    %549 = vdwg.mxu0
    %v550 = vrcp.pop %v452
    %v551 = vmul.f32 %v545, %v550
    %552 = vrot.lane.b32.xlu0 %v331, 120
    %v553 = vpop.permute.xlu0 %552
    %v556 = vunpack.c.l.s4 1983009808
    %v557 = vunpack.c.0.s8 %v556
    %v558 = vlaneseq
    %v559 = vshrl.u32 %v558, 7
    %v560 = vsub.s32 %v557, %v559
    %v561 = vrot.slane %v329, %v560
    %562 = vrot.lane.b32.xlu0 %v561, 120
    %v563 = vpop.permute.xlu0 %562
    %v565 = vsel %vm332, %v553, 0
    %v568 = vsel %vm332, %v563, 0
    %570 = vmatprep.subr.bf16.mxu0 0
    %571 = vmatpush1.bf16.xpose.msra.mxu0 0
    %572 = vmatprep.subr.bf16.mxu0 0
    %573 = vmatpush1.bf16.xpose.msra.mxu0 0
    %574 = vmatprep.subr.bf16.mxu0 0
    %575 = vmatpush1.bf16.xpose.msra.mxu0 0
    %576 = vmatprep.subr.bf16.mxu0 0
    %577 = vmatpush1.bf16.xpose.msra.mxu0 0
    %578 = vmatprep.subr.bf16.mxu0 0
    %579 = vmatpush1.bf16.xpose.msra.mxu0 0
    %580 = vmatprep.subr.bf16.mxu0 0
    %581 = vmatpush1.bf16.xpose.msra.mxu0 0
    %582 = vmatprep.subr.bf16.mxu0 0
    %583 = vmatpush1.bf16.xpose.msra.mxu0 0
    %584 = vmatprep.subr.bf16.mxu0 0
    %585 = vmatpush1.bf16.xpose.msra.mxu0 %v568
    %586 = vmatprep.subr.bf16.mxu0 0
    %587 = vmatpush2.bf16.xpose.msra.mxu0 0
    %588 = vmatprep.subr.bf16.mxu0 0
    %589 = vmatpush2.bf16.xpose.msra.mxu0 0
    %590 = vmatprep.subr.bf16.mxu0 0
    %591 = vmatpush2.bf16.xpose.msra.mxu0 0
    %592 = vmatprep.subr.bf16.mxu0 0
    %593 = vmatpush2.bf16.xpose.msra.mxu0 0
    %594 = vmatprep.subr.bf16.mxu0 0
    %595 = vmatpush2.bf16.xpose.msra.mxu0 0
    %596 = vmatprep.subr.bf16.mxu0 0
    %597 = vmatpush2.bf16.xpose.msra.mxu0 0
    %598 = vmatprep.subr.bf16.mxu0 0
    %599 = vmatpush2.bf16.xpose.msra.mxu0 0
    %600 = vmatprep.subr.bf16.mxu0 0
    %601 = vmatpush2.bf16.xpose.msra.mxu0 0
    %602 = vmatprep.mubr.bf16.mxu0 0
    %603 = vmatmul.mubr.bf16.gmra.mxu0 %v565
    %v604 = vpop.f32.mrf.mxu0
    %v605 = vadd.f32 0.0, %v604
    %v606 = vpop.f32.mrf.mxu0
    %v607 = vpop.f32.mrf.mxu0
    %v608 = vpop.f32.mrf.mxu0
    %609 = vdwg.mxu0
    %v610 = vmul.f32 %v605, 0.35355338
    %611 = vrot.lane.b32.xlu0 %v331, 88
    %v612 = vpop.permute.xlu0 %611
    %v614 = vsel %vm332, %v612, 0
    %616 = vmatprep.subr.bf16.mxu0 0
    %617 = vmatpush1.bf16.xpose.msra.mxu0 0
    %618 = vmatprep.subr.bf16.mxu0 0
    %619 = vmatpush1.bf16.xpose.msra.mxu0 0
    %620 = vmatprep.subr.bf16.mxu0 0
    %621 = vmatpush1.bf16.xpose.msra.mxu0 0
    %622 = vmatprep.subr.bf16.mxu0 0
    %623 = vmatpush1.bf16.xpose.msra.mxu0 0
    %624 = vmatprep.subr.bf16.mxu0 0
    %625 = vmatpush1.bf16.xpose.msra.mxu0 0
    %626 = vmatprep.subr.bf16.mxu0 0
    %627 = vmatpush1.bf16.xpose.msra.mxu0 0
    %628 = vmatprep.subr.bf16.mxu0 0
    %629 = vmatpush1.bf16.xpose.msra.mxu0 0
    %630 = vmatprep.subr.bf16.mxu0 0
    %631 = vmatpush1.bf16.xpose.msra.mxu0 %v614
    %632 = vmatprep.subr.bf16.mxu0 0
    %633 = vmatpush2.bf16.xpose.msra.mxu0 0
    %634 = vmatprep.subr.bf16.mxu0 0
    %635 = vmatpush2.bf16.xpose.msra.mxu0 0
    %636 = vmatprep.subr.bf16.mxu0 0
    %637 = vmatpush2.bf16.xpose.msra.mxu0 0
    %638 = vmatprep.subr.bf16.mxu0 0
    %639 = vmatpush2.bf16.xpose.msra.mxu0 0
    %640 = vmatprep.subr.bf16.mxu0 0
    %641 = vmatpush2.bf16.xpose.msra.mxu0 0
    %642 = vmatprep.subr.bf16.mxu0 0
    %643 = vmatpush2.bf16.xpose.msra.mxu0 0
    %644 = vmatprep.subr.bf16.mxu0 0
    %645 = vmatpush2.bf16.xpose.msra.mxu0 0
    %646 = vmatprep.subr.bf16.mxu0 0
    %647 = vmatpush2.bf16.xpose.msra.mxu0 0
    %648 = vmatprep.mubr.bf16.mxu0 0
    %649 = vmatmul.mubr.bf16.gmra.mxu0 %v565
    %v650 = vpop.f32.mrf.mxu0
    %v651 = vadd.f32 0.0, %v650
    %v652 = vpop.f32.mrf.mxu0
    %v653 = vpop.f32.mrf.mxu0
    %v654 = vpop.f32.mrf.mxu0
    %655 = vdwg.mxu0
    %v656 = vmul.f32 %v651, 0.35355338
    %v657 = vadd.f32 %v656, %v430
    %v658 = vsel %vm432, %v610, -inf
    %659 = vmax.xlane.f32.xlu0 %v658
    %v660 = vpop.xlane.xlu0 %659
    %v661 = vsel %vm332, %v657, -inf
    %662 = vmax.xlane.f32.xlu0 %v661
    %v663 = vpop.xlane.xlu0 %662
    %v664 = vmax.f32 %v660, %v663
    %v665 = vsub.f32 %v610, %v664
    %v666 = vmul.f32 %v665, 1.442695
    %v667 = vpow.pop %v666
    %v668 = vsub.f32 %v657, %v664
    %v669 = vmul.f32 %v668, 1.442695
    %v670 = vpow.pop %v669
    %v671 = vsel %vm432, %v667, 0.0
    %672 = vadd.xlane.f32.xlu0 %v671
    %v673 = vpop.xlane.xlu0 %672
    %v674 = vsel %vm332, %v670, 0.0
    %675 = vadd.xlane.f32.xlu0 %v674
    %v676 = vpop.xlane.xlu0 %675
    %v677 = vadd.f32 %v673, %v676
    %v678 = vpack.c.bf16 %v667, %v667
    %v679 = vpack.c.bf16 %v670, %v670
    %680 = vrot.lane.b32.xlu0 %v331, 56
    %v681 = vpop.permute.xlu0 %680
    %v683 = vsel %vm332, %v679, 0
    %v686 = vsel %vm121, %v681, 0
    %688 = vmatprep.subr.bf16.mxu0 0
    %689 = vmatpush1.bf16.msra.mxu0 0
    %690 = vmatprep.subr.bf16.mxu0 0
    %691 = vmatpush1.bf16.msra.mxu0 0
    %692 = vmatprep.subr.bf16.mxu0 0
    %693 = vmatpush1.bf16.msra.mxu0 0
    %694 = vmatprep.subr.bf16.mxu0 0
    %695 = vmatpush1.bf16.msra.mxu0 0
    %696 = vmatprep.subr.bf16.mxu0 0
    %697 = vmatpush1.bf16.msra.mxu0 0
    %698 = vmatprep.subr.bf16.mxu0 0
    %699 = vmatpush1.bf16.msra.mxu0 0
    %700 = vmatprep.subr.bf16.mxu0 0
    %701 = vmatpush1.bf16.msra.mxu0 0
    %702 = vmatprep.subr.bf16.mxu0 0
    %703 = vmatpush1.bf16.msra.mxu0 %v686
    %704 = vmatprep.subr.bf16.mxu0 0
    %705 = vmatpush2.bf16.msra.mxu0 0
    %706 = vmatprep.subr.bf16.mxu0 0
    %707 = vmatpush2.bf16.msra.mxu0 0
    %708 = vmatprep.subr.bf16.mxu0 0
    %709 = vmatpush2.bf16.msra.mxu0 0
    %710 = vmatprep.subr.bf16.mxu0 0
    %711 = vmatpush2.bf16.msra.mxu0 0
    %712 = vmatprep.subr.bf16.mxu0 0
    %713 = vmatpush2.bf16.msra.mxu0 0
    %714 = vmatprep.subr.bf16.mxu0 0
    %715 = vmatpush2.bf16.msra.mxu0 0
    %716 = vmatprep.subr.bf16.mxu0 0
    %717 = vmatpush2.bf16.msra.mxu0 0
    %718 = vmatprep.subr.bf16.mxu0 0
    %719 = vmatpush2.bf16.msra.mxu0 0
    %720 = vmatprep.mubr.bf16.mxu0 0
    %721 = vmatmul.mubr.bf16.gmra.mxu0 %v683
    %v722 = vpop.f32.mrf.mxu0
    %v723 = vadd.f32 0.0, %v722
    %v724 = vpop.f32.mrf.mxu0
    %v725 = vpop.f32.mrf.mxu0
    %v726 = vpop.f32.mrf.mxu0
    %727 = vdwg.mxu0
    %v730 = vunpack.c.l.s4 1983009808
    %v731 = vunpack.c.0.s8 %v730
    %v732 = vlaneseq
    %v733 = vshrl.u32 %v732, 7
    %v734 = vsub.s32 %v731, %v733
    %v735 = vrot.slane %v330, %v734
    %736 = vrot.lane.b32.xlu0 %v735, 120
    %v737 = vpop.permute.xlu0 %736
    %v739 = vsel %vm432, %v678, 0
    %v742 = vsel %vm506, %v737, 0
    %744 = vmatprep.subr.bf16.mxu0 0
    %745 = vmatpush1.bf16.msra.mxu0 0
    %746 = vmatprep.subr.bf16.mxu0 0
    %747 = vmatpush1.bf16.msra.mxu0 0
    %748 = vmatprep.subr.bf16.mxu0 0
    %749 = vmatpush1.bf16.msra.mxu0 0
    %750 = vmatprep.subr.bf16.mxu0 0
    %751 = vmatpush1.bf16.msra.mxu0 0
    %752 = vmatprep.subr.bf16.mxu0 0
    %753 = vmatpush1.bf16.msra.mxu0 0
    %754 = vmatprep.subr.bf16.mxu0 0
    %755 = vmatpush1.bf16.msra.mxu0 0
    %756 = vmatprep.subr.bf16.mxu0 0
    %757 = vmatpush1.bf16.msra.mxu0 0
    %758 = vmatprep.subr.bf16.mxu0 0
    %759 = vmatpush1.bf16.msra.mxu0 %v742
    %760 = vmatprep.subr.bf16.mxu0 0
    %761 = vmatpush2.bf16.msra.mxu0 0
    %762 = vmatprep.subr.bf16.mxu0 0
    %763 = vmatpush2.bf16.msra.mxu0 0
    %764 = vmatprep.subr.bf16.mxu0 0
    %765 = vmatpush2.bf16.msra.mxu0 0
    %766 = vmatprep.subr.bf16.mxu0 0
    %767 = vmatpush2.bf16.msra.mxu0 0
    %768 = vmatprep.subr.bf16.mxu0 0
    %769 = vmatpush2.bf16.msra.mxu0 0
    %770 = vmatprep.subr.bf16.mxu0 0
    %771 = vmatpush2.bf16.msra.mxu0 0
    %772 = vmatprep.subr.bf16.mxu0 0
    %773 = vmatpush2.bf16.msra.mxu0 0
    %774 = vmatprep.subr.bf16.mxu0 0
    %775 = vmatpush2.bf16.msra.mxu0 0
    %776 = vmatprep.mubr.bf16.mxu0 0
    %777 = vmatmul.mubr.bf16.gmra.mxu0 %v739
    %v778 = vpop.f32.mrf.mxu0
    %v779 = vadd.f32 %v723, %v778
    %v780 = vpop.f32.mrf.mxu0
    %v781 = vpop.f32.mrf.mxu0
    %v782 = vpop.f32.mrf.mxu0
    %783 = vdwg.mxu0
    %v784 = vrcp.pop %v677
    %v785 = vmul.f32 %v779, %v784
    %786 = vrot.lane.b32.xlu0 %v331, 112
    %v787 = vpop.permute.xlu0 %786
    %788 = vrot.lane.b32.xlu0 %v561, 112
    %v789 = vpop.permute.xlu0 %788
    %v791 = vsel %vm332, %v787, 0
    %v794 = vsel %vm332, %v789, 0
    %796 = vmatprep.subr.bf16.mxu0 0
    %797 = vmatpush1.bf16.xpose.msra.mxu0 0
    %798 = vmatprep.subr.bf16.mxu0 0
    %799 = vmatpush1.bf16.xpose.msra.mxu0 0
    %800 = vmatprep.subr.bf16.mxu0 0
    %801 = vmatpush1.bf16.xpose.msra.mxu0 0
    %802 = vmatprep.subr.bf16.mxu0 0
    %803 = vmatpush1.bf16.xpose.msra.mxu0 0
    %804 = vmatprep.subr.bf16.mxu0 0
    %805 = vmatpush1.bf16.xpose.msra.mxu0 0
    %806 = vmatprep.subr.bf16.mxu0 0
    %807 = vmatpush1.bf16.xpose.msra.mxu0 0
    %808 = vmatprep.subr.bf16.mxu0 0
    %809 = vmatpush1.bf16.xpose.msra.mxu0 0
    %810 = vmatprep.subr.bf16.mxu0 0
    %811 = vmatpush1.bf16.xpose.msra.mxu0 %v794
    %812 = vmatprep.subr.bf16.mxu0 0
    %813 = vmatpush2.bf16.xpose.msra.mxu0 0
    %814 = vmatprep.subr.bf16.mxu0 0
    %815 = vmatpush2.bf16.xpose.msra.mxu0 0
    %816 = vmatprep.subr.bf16.mxu0 0
    %817 = vmatpush2.bf16.xpose.msra.mxu0 0
    %818 = vmatprep.subr.bf16.mxu0 0
    %819 = vmatpush2.bf16.xpose.msra.mxu0 0
    %820 = vmatprep.subr.bf16.mxu0 0
    %821 = vmatpush2.bf16.xpose.msra.mxu0 0
    %822 = vmatprep.subr.bf16.mxu0 0
    %823 = vmatpush2.bf16.xpose.msra.mxu0 0
    %824 = vmatprep.subr.bf16.mxu0 0
    %825 = vmatpush2.bf16.xpose.msra.mxu0 0
    %826 = vmatprep.subr.bf16.mxu0 0
    %827 = vmatpush2.bf16.xpose.msra.mxu0 0
    %828 = vmatprep.mubr.bf16.mxu0 0
    %829 = vmatmul.mubr.bf16.gmra.mxu0 %v791
    %v830 = vpop.f32.mrf.mxu0
    %v831 = vadd.f32 0.0, %v830
    %v832 = vpop.f32.mrf.mxu0
    %v833 = vpop.f32.mrf.mxu0
    %v834 = vpop.f32.mrf.mxu0
    %835 = vdwg.mxu0
    %v836 = vmul.f32 %v831, 0.35355338
    %837 = vrot.lane.b32.xlu0 %v331, 80
    %v838 = vpop.permute.xlu0 %837
    %v840 = vsel %vm332, %v838, 0
    %842 = vmatprep.subr.bf16.mxu0 0
    %843 = vmatpush1.bf16.xpose.msra.mxu0 0
    %844 = vmatprep.subr.bf16.mxu0 0
    %845 = vmatpush1.bf16.xpose.msra.mxu0 0
    %846 = vmatprep.subr.bf16.mxu0 0
    %847 = vmatpush1.bf16.xpose.msra.mxu0 0
    %848 = vmatprep.subr.bf16.mxu0 0
    %849 = vmatpush1.bf16.xpose.msra.mxu0 0
    %850 = vmatprep.subr.bf16.mxu0 0
    %851 = vmatpush1.bf16.xpose.msra.mxu0 0
    %852 = vmatprep.subr.bf16.mxu0 0
    %853 = vmatpush1.bf16.xpose.msra.mxu0 0
    %854 = vmatprep.subr.bf16.mxu0 0
    %855 = vmatpush1.bf16.xpose.msra.mxu0 0
    %856 = vmatprep.subr.bf16.mxu0 0
    %857 = vmatpush1.bf16.xpose.msra.mxu0 %v840
    %858 = vmatprep.subr.bf16.mxu0 0
    %859 = vmatpush2.bf16.xpose.msra.mxu0 0
    %860 = vmatprep.subr.bf16.mxu0 0
    %861 = vmatpush2.bf16.xpose.msra.mxu0 0
    %862 = vmatprep.subr.bf16.mxu0 0
    %863 = vmatpush2.bf16.xpose.msra.mxu0 0
    %864 = vmatprep.subr.bf16.mxu0 0
    %865 = vmatpush2.bf16.xpose.msra.mxu0 0
    %866 = vmatprep.subr.bf16.mxu0 0
    %867 = vmatpush2.bf16.xpose.msra.mxu0 0
    %868 = vmatprep.subr.bf16.mxu0 0
    %869 = vmatpush2.bf16.xpose.msra.mxu0 0
    %870 = vmatprep.subr.bf16.mxu0 0
    %871 = vmatpush2.bf16.xpose.msra.mxu0 0
    %872 = vmatprep.subr.bf16.mxu0 0
    %873 = vmatpush2.bf16.xpose.msra.mxu0 0
    %874 = vmatprep.mubr.bf16.mxu0 0
    %875 = vmatmul.mubr.bf16.gmra.mxu0 %v791
    %v876 = vpop.f32.mrf.mxu0
    %v877 = vadd.f32 0.0, %v876
    %v878 = vpop.f32.mrf.mxu0
    %v879 = vpop.f32.mrf.mxu0
    %v880 = vpop.f32.mrf.mxu0
    %881 = vdwg.mxu0
    %v882 = vmul.f32 %v877, 0.35355338
    %v883 = vadd.f32 %v882, %v430
    %v884 = vsel %vm432, %v836, -inf
    %885 = vmax.xlane.f32.xlu0 %v884
    %v886 = vpop.xlane.xlu0 %885
    %v887 = vsel %vm332, %v883, -inf
    %888 = vmax.xlane.f32.xlu0 %v887
    %v889 = vpop.xlane.xlu0 %888
    %v890 = vmax.f32 %v886, %v889
    %v891 = vsub.f32 %v836, %v890
    %v892 = vmul.f32 %v891, 1.442695
    %v893 = vpow.pop %v892
    %v894 = vsub.f32 %v883, %v890
    %v895 = vmul.f32 %v894, 1.442695
    %v896 = vpow.pop %v895
    %v897 = vsel %vm432, %v893, 0.0
    %898 = vadd.xlane.f32.xlu0 %v897
    %v899 = vpop.xlane.xlu0 %898
    %v900 = vsel %vm332, %v896, 0.0
    %901 = vadd.xlane.f32.xlu0 %v900
    %v902 = vpop.xlane.xlu0 %901
    %v903 = vadd.f32 %v899, %v902
    %v904 = vpack.c.bf16 %v893, %v893
    %v905 = vpack.c.bf16 %v896, %v896
    %906 = vrot.lane.b32.xlu0 %v331, 48
    %v907 = vpop.permute.xlu0 %906
    %v909 = vsel %vm332, %v905, 0
    %v912 = vsel %vm121, %v907, 0
    %914 = vmatprep.subr.bf16.mxu0 0
    %915 = vmatpush1.bf16.msra.mxu0 0
    %916 = vmatprep.subr.bf16.mxu0 0
    %917 = vmatpush1.bf16.msra.mxu0 0
    %918 = vmatprep.subr.bf16.mxu0 0
    %919 = vmatpush1.bf16.msra.mxu0 0
    %920 = vmatprep.subr.bf16.mxu0 0
    %921 = vmatpush1.bf16.msra.mxu0 0
    %922 = vmatprep.subr.bf16.mxu0 0
    %923 = vmatpush1.bf16.msra.mxu0 0
    %924 = vmatprep.subr.bf16.mxu0 0
    %925 = vmatpush1.bf16.msra.mxu0 0
    %926 = vmatprep.subr.bf16.mxu0 0
    %927 = vmatpush1.bf16.msra.mxu0 0
    %928 = vmatprep.subr.bf16.mxu0 0
    %929 = vmatpush1.bf16.msra.mxu0 %v912
    %930 = vmatprep.subr.bf16.mxu0 0
    %931 = vmatpush2.bf16.msra.mxu0 0
    %932 = vmatprep.subr.bf16.mxu0 0
    %933 = vmatpush2.bf16.msra.mxu0 0
    %934 = vmatprep.subr.bf16.mxu0 0
    %935 = vmatpush2.bf16.msra.mxu0 0
    %936 = vmatprep.subr.bf16.mxu0 0
    %937 = vmatpush2.bf16.msra.mxu0 0
    %938 = vmatprep.subr.bf16.mxu0 0
    %939 = vmatpush2.bf16.msra.mxu0 0
    %940 = vmatprep.subr.bf16.mxu0 0
    %941 = vmatpush2.bf16.msra.mxu0 0
    %942 = vmatprep.subr.bf16.mxu0 0
    %943 = vmatpush2.bf16.msra.mxu0 0
    %944 = vmatprep.subr.bf16.mxu0 0
    %945 = vmatpush2.bf16.msra.mxu0 0
    %946 = vmatprep.mubr.bf16.mxu0 0
    %947 = vmatmul.mubr.bf16.gmra.mxu0 %v909
    %v948 = vpop.f32.mrf.mxu0
    %v949 = vadd.f32 0.0, %v948
    %v950 = vpop.f32.mrf.mxu0
    %v951 = vpop.f32.mrf.mxu0
    %v952 = vpop.f32.mrf.mxu0
    %953 = vdwg.mxu0
    %954 = vrot.lane.b32.xlu0 %v735, 112
    %v955 = vpop.permute.xlu0 %954
    %v957 = vsel %vm432, %v904, 0
    %v960 = vsel %vm506, %v955, 0
    %962 = vmatprep.subr.bf16.mxu0 0
    %963 = vmatpush1.bf16.msra.mxu0 0
    %964 = vmatprep.subr.bf16.mxu0 0
    %965 = vmatpush1.bf16.msra.mxu0 0
    %966 = vmatprep.subr.bf16.mxu0 0
    %967 = vmatpush1.bf16.msra.mxu0 0
    %968 = vmatprep.subr.bf16.mxu0 0
    %969 = vmatpush1.bf16.msra.mxu0 0
    %970 = vmatprep.subr.bf16.mxu0 0
    %971 = vmatpush1.bf16.msra.mxu0 0
    %972 = vmatprep.subr.bf16.mxu0 0
    %973 = vmatpush1.bf16.msra.mxu0 0
    %974 = vmatprep.subr.bf16.mxu0 0
    %975 = vmatpush1.bf16.msra.mxu0 0
    %976 = vmatprep.subr.bf16.mxu0 0
    %977 = vmatpush1.bf16.msra.mxu0 %v960
    %978 = vmatprep.subr.bf16.mxu0 0
    %979 = vmatpush2.bf16.msra.mxu0 0
    %980 = vmatprep.subr.bf16.mxu0 0
    %981 = vmatpush2.bf16.msra.mxu0 0
    %982 = vmatprep.subr.bf16.mxu0 0
    %983 = vmatpush2.bf16.msra.mxu0 0
    %984 = vmatprep.subr.bf16.mxu0 0
    %985 = vmatpush2.bf16.msra.mxu0 0
    %986 = vmatprep.subr.bf16.mxu0 0
    %987 = vmatpush2.bf16.msra.mxu0 0
    %988 = vmatprep.subr.bf16.mxu0 0
    %989 = vmatpush2.bf16.msra.mxu0 0
    %990 = vmatprep.subr.bf16.mxu0 0
    %991 = vmatpush2.bf16.msra.mxu0 0
    %992 = vmatprep.subr.bf16.mxu0 0
    %993 = vmatpush2.bf16.msra.mxu0 0
    %994 = vmatprep.mubr.bf16.mxu0 0
    %995 = vmatmul.mubr.bf16.gmra.mxu0 %v957
    %v996 = vpop.f32.mrf.mxu0
    %v997 = vadd.f32 %v949, %v996
    %v998 = vpop.f32.mrf.mxu0
    %v999 = vpop.f32.mrf.mxu0
    %v1000 = vpop.f32.mrf.mxu0
    %1001 = vdwg.mxu0
    %v1002 = vrcp.pop %v903
    %v1003 = vmul.f32 %v997, %v1002
    %1004 = vrot.lane.b32.xlu0 %v331, 104
    %v1005 = vpop.permute.xlu0 %1004
    %1006 = vrot.lane.b32.xlu0 %v561, 104
    %v1007 = vpop.permute.xlu0 %1006
    %v1009 = vsel %vm332, %v1005, 0
    %v1012 = vsel %vm332, %v1007, 0
    %1014 = vmatprep.subr.bf16.mxu0 0
    %1015 = vmatpush1.bf16.xpose.msra.mxu0 0
    %1016 = vmatprep.subr.bf16.mxu0 0
    %1017 = vmatpush1.bf16.xpose.msra.mxu0 0
    %1018 = vmatprep.subr.bf16.mxu0 0
    %1019 = vmatpush1.bf16.xpose.msra.mxu0 0
    %1020 = vmatprep.subr.bf16.mxu0 0
    %1021 = vmatpush1.bf16.xpose.msra.mxu0 0
    %1022 = vmatprep.subr.bf16.mxu0 0
    %1023 = vmatpush1.bf16.xpose.msra.mxu0 0
    %1024 = vmatprep.subr.bf16.mxu0 0
    %1025 = vmatpush1.bf16.xpose.msra.mxu0 0
    %1026 = vmatprep.subr.bf16.mxu0 0
    %1027 = vmatpush1.bf16.xpose.msra.mxu0 0
    %1028 = vmatprep.subr.bf16.mxu0 0
    %1029 = vmatpush1.bf16.xpose.msra.mxu0 %v1012
    %1030 = vmatprep.subr.bf16.mxu0 0
    %1031 = vmatpush2.bf16.xpose.msra.mxu0 0
    %1032 = vmatprep.subr.bf16.mxu0 0
    %1033 = vmatpush2.bf16.xpose.msra.mxu0 0
    %1034 = vmatprep.subr.bf16.mxu0 0
    %1035 = vmatpush2.bf16.xpose.msra.mxu0 0
    %1036 = vmatprep.subr.bf16.mxu0 0
    %1037 = vmatpush2.bf16.xpose.msra.mxu0 0
    %1038 = vmatprep.subr.bf16.mxu0 0
    %1039 = vmatpush2.bf16.xpose.msra.mxu0 0
    %1040 = vmatprep.subr.bf16.mxu0 0
    %1041 = vmatpush2.bf16.xpose.msra.mxu0 0
    %1042 = vmatprep.subr.bf16.mxu0 0
    %1043 = vmatpush2.bf16.xpose.msra.mxu0 0
    %1044 = vmatprep.subr.bf16.mxu0 0
    %1045 = vmatpush2.bf16.xpose.msra.mxu0 0
    %1046 = vmatprep.mubr.bf16.mxu0 0
    %1047 = vmatmul.mubr.bf16.gmra.mxu0 %v1009
    %v1048 = vpop.f32.mrf.mxu0
    %v1049 = vadd.f32 0.0, %v1048
    %v1050 = vpop.f32.mrf.mxu0
    %v1051 = vpop.f32.mrf.mxu0
    %v1052 = vpop.f32.mrf.mxu0
    %1053 = vdwg.mxu0
    %v1054 = vmul.f32 %v1049, 0.35355338
    %1055 = vrot.lane.b32.xlu0 %v331, 72
    %v1056 = vpop.permute.xlu0 %1055
    %v1058 = vsel %vm332, %v1056, 0
    %1060 = vmatprep.subr.bf16.mxu0 0
    %1061 = vmatpush1.bf16.xpose.msra.mxu0 0
    %1062 = vmatprep.subr.bf16.mxu0 0
    %1063 = vmatpush1.bf16.xpose.msra.mxu0 0
    %1064 = vmatprep.subr.bf16.mxu0 0
    %1065 = vmatpush1.bf16.xpose.msra.mxu0 0
    %1066 = vmatprep.subr.bf16.mxu0 0
    %1067 = vmatpush1.bf16.xpose.msra.mxu0 0
    %1068 = vmatprep.subr.bf16.mxu0 0
    %1069 = vmatpush1.bf16.xpose.msra.mxu0 0
    %1070 = vmatprep.subr.bf16.mxu0 0
    %1071 = vmatpush1.bf16.xpose.msra.mxu0 0
    %1072 = vmatprep.subr.bf16.mxu0 0
    %1073 = vmatpush1.bf16.xpose.msra.mxu0 0
    %1074 = vmatprep.subr.bf16.mxu0 0
    %1075 = vmatpush1.bf16.xpose.msra.mxu0 %v1058
    %1076 = vmatprep.subr.bf16.mxu0 0
    %1077 = vmatpush2.bf16.xpose.msra.mxu0 0
    %1078 = vmatprep.subr.bf16.mxu0 0
    %1079 = vmatpush2.bf16.xpose.msra.mxu0 0
    %1080 = vmatprep.subr.bf16.mxu0 0
    %1081 = vmatpush2.bf16.xpose.msra.mxu0 0
    %1082 = vmatprep.subr.bf16.mxu0 0
    %1083 = vmatpush2.bf16.xpose.msra.mxu0 0
    %1084 = vmatprep.subr.bf16.mxu0 0
    %1085 = vmatpush2.bf16.xpose.msra.mxu0 0
    %1086 = vmatprep.subr.bf16.mxu0 0
    %1087 = vmatpush2.bf16.xpose.msra.mxu0 0
    %1088 = vmatprep.subr.bf16.mxu0 0
    %1089 = vmatpush2.bf16.xpose.msra.mxu0 0
    %1090 = vmatprep.subr.bf16.mxu0 0
    %1091 = vmatpush2.bf16.xpose.msra.mxu0 0
    %1092 = vmatprep.mubr.bf16.mxu0 0
    %1093 = vmatmul.mubr.bf16.gmra.mxu0 %v1009
    %v1094 = vpop.f32.mrf.mxu0
    %v1095 = vadd.f32 0.0, %v1094
    %v1096 = vpop.f32.mrf.mxu0
    %v1097 = vpop.f32.mrf.mxu0
    %v1098 = vpop.f32.mrf.mxu0
    %1099 = vdwg.mxu0
    %v1100 = vmul.f32 %v1095, 0.35355338
    %v1101 = vadd.f32 %v1100, %v430
    %v1102 = vsel %vm432, %v1054, -inf
    %1103 = vmax.xlane.f32.xlu0 %v1102
    %v1104 = vpop.xlane.xlu0 %1103
    %v1105 = vsel %vm332, %v1101, -inf
    %1106 = vmax.xlane.f32.xlu0 %v1105
    %v1107 = vpop.xlane.xlu0 %1106
    %v1108 = vmax.f32 %v1104, %v1107
    %v1109 = vsub.f32 %v1054, %v1108
    %v1110 = vmul.f32 %v1109, 1.442695
    %v1111 = vpow.pop %v1110
    %v1112 = vsub.f32 %v1101, %v1108
    %v1113 = vmul.f32 %v1112, 1.442695
    %v1114 = vpow.pop %v1113
    %v1115 = vsel %vm432, %v1111, 0.0
    %1116 = vadd.xlane.f32.xlu0 %v1115
    %v1117 = vpop.xlane.xlu0 %1116
    %v1118 = vsel %vm332, %v1114, 0.0
    %1119 = vadd.xlane.f32.xlu0 %v1118
    %v1120 = vpop.xlane.xlu0 %1119
    %v1121 = vadd.f32 %v1117, %v1120
    %v1122 = vpack.c.bf16 %v1111, %v1111
    %v1123 = vpack.c.bf16 %v1114, %v1114
    %1124 = vrot.lane.b32.xlu0 %v331, 40
    %v1125 = vpop.permute.xlu0 %1124
    %v1127 = vsel %vm332, %v1123, 0
    %v1130 = vsel %vm121, %v1125, 0
    %1132 = vmatprep.subr.bf16.mxu0 0
    %1133 = vmatpush1.bf16.msra.mxu0 0
    %1134 = vmatprep.subr.bf16.mxu0 0
    %1135 = vmatpush1.bf16.msra.mxu0 0
    %1136 = vmatprep.subr.bf16.mxu0 0
    %1137 = vmatpush1.bf16.msra.mxu0 0
    %1138 = vmatprep.subr.bf16.mxu0 0
    %1139 = vmatpush1.bf16.msra.mxu0 0
    %1140 = vmatprep.subr.bf16.mxu0 0
    %1141 = vmatpush1.bf16.msra.mxu0 0
    %1142 = vmatprep.subr.bf16.mxu0 0
    %1143 = vmatpush1.bf16.msra.mxu0 0
    %1144 = vmatprep.subr.bf16.mxu0 0
    %1145 = vmatpush1.bf16.msra.mxu0 0
    %1146 = vmatprep.subr.bf16.mxu0 0
    %1147 = vmatpush1.bf16.msra.mxu0 %v1130
    %1148 = vmatprep.subr.bf16.mxu0 0
    %1149 = vmatpush2.bf16.msra.mxu0 0
    %1150 = vmatprep.subr.bf16.mxu0 0
    %1151 = vmatpush2.bf16.msra.mxu0 0
    %1152 = vmatprep.subr.bf16.mxu0 0
    %1153 = vmatpush2.bf16.msra.mxu0 0
    %1154 = vmatprep.subr.bf16.mxu0 0
    %1155 = vmatpush2.bf16.msra.mxu0 0
    %1156 = vmatprep.subr.bf16.mxu0 0
    %1157 = vmatpush2.bf16.msra.mxu0 0
    %1158 = vmatprep.subr.bf16.mxu0 0
    %1159 = vmatpush2.bf16.msra.mxu0 0
    %1160 = vmatprep.subr.bf16.mxu0 0
    %1161 = vmatpush2.bf16.msra.mxu0 0
    %1162 = vmatprep.subr.bf16.mxu0 0
    %1163 = vmatpush2.bf16.msra.mxu0 0
    %1164 = vmatprep.mubr.bf16.mxu0 0
    %1165 = vmatmul.mubr.bf16.gmra.mxu0 %v1127
    %v1166 = vpop.f32.mrf.mxu0
    %v1167 = vadd.f32 0.0, %v1166
    %v1168 = vpop.f32.mrf.mxu0
    %v1169 = vpop.f32.mrf.mxu0
    %v1170 = vpop.f32.mrf.mxu0
    %1171 = vdwg.mxu0
    %1172 = vrot.lane.b32.xlu0 %v735, 104
    %v1173 = vpop.permute.xlu0 %1172
    %v1175 = vsel %vm432, %v1122, 0
    %v1178 = vsel %vm506, %v1173, 0
    %1180 = vmatprep.subr.bf16.mxu0 0
    %1181 = vmatpush1.bf16.msra.mxu0 0
    %1182 = vmatprep.subr.bf16.mxu0 0
    %1183 = vmatpush1.bf16.msra.mxu0 0
    %1184 = vmatprep.subr.bf16.mxu0 0
    %1185 = vmatpush1.bf16.msra.mxu0 0
    %1186 = vmatprep.subr.bf16.mxu0 0
    %1187 = vmatpush1.bf16.msra.mxu0 0
    %1188 = vmatprep.subr.bf16.mxu0 0
    %1189 = vmatpush1.bf16.msra.mxu0 0
    %1190 = vmatprep.subr.bf16.mxu0 0
    %1191 = vmatpush1.bf16.msra.mxu0 0
    %1192 = vmatprep.subr.bf16.mxu0 0
    %1193 = vmatpush1.bf16.msra.mxu0 0
    %1194 = vmatprep.subr.bf16.mxu0 0
    %1195 = vmatpush1.bf16.msra.mxu0 %v1178
    %1196 = vmatprep.subr.bf16.mxu0 0
    %1197 = vmatpush2.bf16.msra.mxu0 0
    %1198 = vmatprep.subr.bf16.mxu0 0
    %1199 = vmatpush2.bf16.msra.mxu0 0
    %1200 = vmatprep.subr.bf16.mxu0 0
    %1201 = vmatpush2.bf16.msra.mxu0 0
    %1202 = vmatprep.subr.bf16.mxu0 0
    %1203 = vmatpush2.bf16.msra.mxu0 0
    %1204 = vmatprep.subr.bf16.mxu0 0
    %1205 = vmatpush2.bf16.msra.mxu0 0
    %1206 = vmatprep.subr.bf16.mxu0 0
    %1207 = vmatpush2.bf16.msra.mxu0 0
    %1208 = vmatprep.subr.bf16.mxu0 0
    %1209 = vmatpush2.bf16.msra.mxu0 0
    %1210 = vmatprep.subr.bf16.mxu0 0
    %1211 = vmatpush2.bf16.msra.mxu0 0
    %1212 = vmatprep.mubr.bf16.mxu0 0
    %1213 = vmatmul.mubr.bf16.gmra.mxu0 %v1175
    %v1214 = vpop.f32.mrf.mxu0
    %v1215 = vadd.f32 %v1167, %v1214
    %v1216 = vpop.f32.mrf.mxu0
    %v1217 = vpop.f32.mrf.mxu0
    %v1218 = vpop.f32.mrf.mxu0
    %1219 = vdwg.mxu0
    %v1220 = vrcp.pop %v1121
    %v1221 = vmul.f32 %v1215, %v1220
    %1223 = vrot.lane.b32.xlu0 %v785, 8
    %v1224 = vpop.permute.xlu0 %1223
    %1227 = vrot.lane.b32.xlu0 %v1003, 16
    %v1228 = vpop.permute.xlu0 %1227
    %1231 = vrot.lane.b32.xlu0 %v1221, 24
    %v1232 = vpop.permute.xlu0 %1231
    %v1234 = vsel %vm332, %v551, %v1224
    %vm1235 = vcmask 130048
    %v1236 = vsel %vm1235, %v1234, %v1228
    %vm1237 = vcmask 195584
    %v1238 = vsel %vm1237, %v1236, %v1232
    %v1239 = vpack.c.bf16 %v326, %v326
    %v1241 = vsel %vm332, %v1239, 0
    %1243 = vmatprep.subr.bf16.mxu0 0
    %1244 = vmatpush1.bf16.xpose.msra.mxu0 0
    %1245 = vmatprep.subr.bf16.mxu0 0
    %1246 = vmatpush1.bf16.xpose.msra.mxu0 0
    %1247 = vmatprep.subr.bf16.mxu0 0
    %1248 = vmatpush1.bf16.xpose.msra.mxu0 0
    %1249 = vmatprep.subr.bf16.mxu0 0
    %1250 = vmatpush1.bf16.xpose.msra.mxu0 0
    %1251 = vmatprep.subr.bf16.mxu0 0
    %1252 = vmatpush1.bf16.xpose.msra.mxu0 0
    %1253 = vmatprep.subr.bf16.mxu0 0
    %1254 = vmatpush1.bf16.xpose.msra.mxu0 0
    %1255 = vmatprep.subr.bf16.mxu0 0
    %1256 = vmatpush1.bf16.xpose.msra.mxu0 0
    %1257 = vmatprep.subr.bf16.mxu0 0
    %1258 = vmatpush1.bf16.xpose.msra.mxu0 %v337
    %1259 = vmatprep.subr.bf16.mxu0 0
    %1260 = vmatpush2.bf16.xpose.msra.mxu0 0
    %1261 = vmatprep.subr.bf16.mxu0 0
    %1262 = vmatpush2.bf16.xpose.msra.mxu0 0
    %1263 = vmatprep.subr.bf16.mxu0 0
    %1264 = vmatpush2.bf16.xpose.msra.mxu0 0
    %1265 = vmatprep.subr.bf16.mxu0 0
    %1266 = vmatpush2.bf16.xpose.msra.mxu0 0
    %1267 = vmatprep.subr.bf16.mxu0 0
    %1268 = vmatpush2.bf16.xpose.msra.mxu0 0
    %1269 = vmatprep.subr.bf16.mxu0 0
    %1270 = vmatpush2.bf16.xpose.msra.mxu0 0
    %1271 = vmatprep.subr.bf16.mxu0 0
    %1272 = vmatpush2.bf16.xpose.msra.mxu0 0
    %1273 = vmatprep.subr.bf16.mxu0 0
    %1274 = vmatpush2.bf16.xpose.msra.mxu0 0
    %1275 = vmatprep.mubr.bf16.mxu0 0
    %1276 = vmatmul.mubr.bf16.gmra.mxu0 %v1241
    %v1277 = vpop.f32.mrf.mxu0
    %v1278 = vadd.f32 0.0, %v1277
    %v1279 = vpop.f32.mrf.mxu0
    %v1280 = vpop.f32.mrf.mxu0
    %v1281 = vpop.f32.mrf.mxu0
    %1282 = vdwg.mxu0
    %v1283 = vmul.f32 %v1278, 0.35355338
    %1285 = vrot.lane.b32.xlu0 %v1239, 96
    %v1286 = vpop.permute.xlu0 %1285
    %v1288 = vsel %vm332, %v1286, 0
    %1290 = vmatprep.subr.bf16.mxu0 0
    %1291 = vmatpush1.bf16.xpose.msra.mxu0 0
    %1292 = vmatprep.subr.bf16.mxu0 0
    %1293 = vmatpush1.bf16.xpose.msra.mxu0 0
    %1294 = vmatprep.subr.bf16.mxu0 0
    %1295 = vmatpush1.bf16.xpose.msra.mxu0 0
    %1296 = vmatprep.subr.bf16.mxu0 0
    %1297 = vmatpush1.bf16.xpose.msra.mxu0 0
    %1298 = vmatprep.subr.bf16.mxu0 0
    %1299 = vmatpush1.bf16.xpose.msra.mxu0 0
    %1300 = vmatprep.subr.bf16.mxu0 0
    %1301 = vmatpush1.bf16.xpose.msra.mxu0 0
    %1302 = vmatprep.subr.bf16.mxu0 0
    %1303 = vmatpush1.bf16.xpose.msra.mxu0 0
    %1304 = vmatprep.subr.bf16.mxu0 0
    %1305 = vmatpush1.bf16.xpose.msra.mxu0 %v1288
    %1306 = vmatprep.subr.bf16.mxu0 0
    %1307 = vmatpush2.bf16.xpose.msra.mxu0 0
    %1308 = vmatprep.subr.bf16.mxu0 0
    %1309 = vmatpush2.bf16.xpose.msra.mxu0 0
    %1310 = vmatprep.subr.bf16.mxu0 0
    %1311 = vmatpush2.bf16.xpose.msra.mxu0 0
    %1312 = vmatprep.subr.bf16.mxu0 0
    %1313 = vmatpush2.bf16.xpose.msra.mxu0 0
    %1314 = vmatprep.subr.bf16.mxu0 0
    %1315 = vmatpush2.bf16.xpose.msra.mxu0 0
    %1316 = vmatprep.subr.bf16.mxu0 0
    %1317 = vmatpush2.bf16.xpose.msra.mxu0 0
    %1318 = vmatprep.subr.bf16.mxu0 0
    %1319 = vmatpush2.bf16.xpose.msra.mxu0 0
    %1320 = vmatprep.subr.bf16.mxu0 0
    %1321 = vmatpush2.bf16.xpose.msra.mxu0 0
    %1322 = vmatprep.mubr.bf16.mxu0 0
    %1323 = vmatmul.mubr.bf16.gmra.mxu0 %v1241
    %v1324 = vpop.f32.mrf.mxu0
    %v1325 = vadd.f32 0.0, %v1324
    %v1326 = vpop.f32.mrf.mxu0
    %v1327 = vpop.f32.mrf.mxu0
    %v1328 = vpop.f32.mrf.mxu0
    %1329 = vdwg.mxu0
    %v1330 = vmul.f32 %v1325, 0.35355338
    %v1331 = vlaneseq
    %v1332 = vshrl.u32 %v1331, 7
    %v1333 = vsub.s32 1, %v1332
    %v1334 = vrot.slane %v260, %v1333
    %v1335 = vadd.f32 %v1330, %v1334
    %v1336 = vsel %vm432, %v1283, -inf
    %1337 = vmax.xlane.f32.xlu0 %v1336
    %v1338 = vpop.xlane.xlu0 %1337
    %v1339 = vsel %vm332, %v1335, -inf
    %1340 = vmax.xlane.f32.xlu0 %v1339
    %v1341 = vpop.xlane.xlu0 %1340
    %v1342 = vmax.f32 %v1338, %v1341
    %v1343 = vsub.f32 %v1283, %v1342
    %v1344 = vmul.f32 %v1343, 1.442695
    %v1345 = vpow.pop %v1344
    %v1346 = vsub.f32 %v1335, %v1342
    %v1347 = vmul.f32 %v1346, 1.442695
    %v1348 = vpow.pop %v1347
    %v1349 = vsel %vm432, %v1345, 0.0
    %1350 = vadd.xlane.f32.xlu0 %v1349
    %v1351 = vpop.xlane.xlu0 %1350
    %v1352 = vsel %vm332, %v1348, 0.0
    %1353 = vadd.xlane.f32.xlu0 %v1352
    %v1354 = vpop.xlane.xlu0 %1353
    %v1355 = vadd.f32 %v1351, %v1354
    %v1356 = vpack.c.bf16 %v1345, %v1345
    %v1357 = vpack.c.bf16 %v1348, %v1348
    %1358 = vrot.lane.b32.xlu0 %v1239, 64
    %v1359 = vpop.permute.xlu0 %1358
    %v1361 = vsel %vm332, %v1357, 0
    %v1364 = vsel %vm121, %v1359, 0
    %1366 = vmatprep.subr.bf16.mxu0 0
    %1367 = vmatpush1.bf16.msra.mxu0 0
    %1368 = vmatprep.subr.bf16.mxu0 0
    %1369 = vmatpush1.bf16.msra.mxu0 0
    %1370 = vmatprep.subr.bf16.mxu0 0
    %1371 = vmatpush1.bf16.msra.mxu0 0
    %1372 = vmatprep.subr.bf16.mxu0 0
    %1373 = vmatpush1.bf16.msra.mxu0 0
    %1374 = vmatprep.subr.bf16.mxu0 0
    %1375 = vmatpush1.bf16.msra.mxu0 0
    %1376 = vmatprep.subr.bf16.mxu0 0
    %1377 = vmatpush1.bf16.msra.mxu0 0
    %1378 = vmatprep.subr.bf16.mxu0 0
    %1379 = vmatpush1.bf16.msra.mxu0 0
    %1380 = vmatprep.subr.bf16.mxu0 0
    %1381 = vmatpush1.bf16.msra.mxu0 %v1364
    %1382 = vmatprep.subr.bf16.mxu0 0
    %1383 = vmatpush2.bf16.msra.mxu0 0
    %1384 = vmatprep.subr.bf16.mxu0 0
    %1385 = vmatpush2.bf16.msra.mxu0 0
    %1386 = vmatprep.subr.bf16.mxu0 0
    %1387 = vmatpush2.bf16.msra.mxu0 0
    %1388 = vmatprep.subr.bf16.mxu0 0
    %1389 = vmatpush2.bf16.msra.mxu0 0
    %1390 = vmatprep.subr.bf16.mxu0 0
    %1391 = vmatpush2.bf16.msra.mxu0 0
    %1392 = vmatprep.subr.bf16.mxu0 0
    %1393 = vmatpush2.bf16.msra.mxu0 0
    %1394 = vmatprep.subr.bf16.mxu0 0
    %1395 = vmatpush2.bf16.msra.mxu0 0
    %1396 = vmatprep.subr.bf16.mxu0 0
    %1397 = vmatpush2.bf16.msra.mxu0 0
    %1398 = vmatprep.mubr.bf16.mxu0 0
    %1399 = vmatmul.mubr.bf16.gmra.mxu0 %v1361
    %v1400 = vpop.f32.mrf.mxu0
    %v1401 = vadd.f32 0.0, %v1400
    %v1402 = vpop.f32.mrf.mxu0
    %v1403 = vpop.f32.mrf.mxu0
    %v1404 = vpop.f32.mrf.mxu0
    %1405 = vdwg.mxu0
    %v1407 = vsel %vm432, %v1356, 0
    %1409 = vmatprep.subr.bf16.mxu0 0
    %1410 = vmatpush1.bf16.msra.mxu0 0
    %1411 = vmatprep.subr.bf16.mxu0 0
    %1412 = vmatpush1.bf16.msra.mxu0 0
    %1413 = vmatprep.subr.bf16.mxu0 0
    %1414 = vmatpush1.bf16.msra.mxu0 0
    %1415 = vmatprep.subr.bf16.mxu0 0
    %1416 = vmatpush1.bf16.msra.mxu0 0
    %1417 = vmatprep.subr.bf16.mxu0 0
    %1418 = vmatpush1.bf16.msra.mxu0 0
    %1419 = vmatprep.subr.bf16.mxu0 0
    %1420 = vmatpush1.bf16.msra.mxu0 0
    %1421 = vmatprep.subr.bf16.mxu0 0
    %1422 = vmatpush1.bf16.msra.mxu0 0
    %1423 = vmatprep.subr.bf16.mxu0 0
    %1424 = vmatpush1.bf16.msra.mxu0 %v508
    %1425 = vmatprep.subr.bf16.mxu0 0
    %1426 = vmatpush2.bf16.msra.mxu0 0
    %1427 = vmatprep.subr.bf16.mxu0 0
    %1428 = vmatpush2.bf16.msra.mxu0 0
    %1429 = vmatprep.subr.bf16.mxu0 0
    %1430 = vmatpush2.bf16.msra.mxu0 0
    %1431 = vmatprep.subr.bf16.mxu0 0
    %1432 = vmatpush2.bf16.msra.mxu0 0
    %1433 = vmatprep.subr.bf16.mxu0 0
    %1434 = vmatpush2.bf16.msra.mxu0 0
    %1435 = vmatprep.subr.bf16.mxu0 0
    %1436 = vmatpush2.bf16.msra.mxu0 0
    %1437 = vmatprep.subr.bf16.mxu0 0
    %1438 = vmatpush2.bf16.msra.mxu0 0
    %1439 = vmatprep.subr.bf16.mxu0 0
    %1440 = vmatpush2.bf16.msra.mxu0 0
    %1441 = vmatprep.mubr.bf16.mxu0 0
    %1442 = vmatmul.mubr.bf16.gmra.mxu0 %v1407
    %v1443 = vpop.f32.mrf.mxu0
    %v1444 = vadd.f32 %v1401, %v1443
    %v1445 = vpop.f32.mrf.mxu0
    %v1446 = vpop.f32.mrf.mxu0
    %v1447 = vpop.f32.mrf.mxu0
    %1448 = vdwg.mxu0
    %v1449 = vrcp.pop %v1355
    %v1450 = vmul.f32 %v1444, %v1449
    %1451 = vrot.lane.b32.xlu0 %v1239, 120
    %v1452 = vpop.permute.xlu0 %1451
    %v1454 = vsel %vm332, %v1452, 0
    %1456 = vmatprep.subr.bf16.mxu0 0
    %1457 = vmatpush1.bf16.xpose.msra.mxu0 0
    %1458 = vmatprep.subr.bf16.mxu0 0
    %1459 = vmatpush1.bf16.xpose.msra.mxu0 0
    %1460 = vmatprep.subr.bf16.mxu0 0
    %1461 = vmatpush1.bf16.xpose.msra.mxu0 0
    %1462 = vmatprep.subr.bf16.mxu0 0
    %1463 = vmatpush1.bf16.xpose.msra.mxu0 0
    %1464 = vmatprep.subr.bf16.mxu0 0
    %1465 = vmatpush1.bf16.xpose.msra.mxu0 0
    %1466 = vmatprep.subr.bf16.mxu0 0
    %1467 = vmatpush1.bf16.xpose.msra.mxu0 0
    %1468 = vmatprep.subr.bf16.mxu0 0
    %1469 = vmatpush1.bf16.xpose.msra.mxu0 0
    %1470 = vmatprep.subr.bf16.mxu0 0
    %1471 = vmatpush1.bf16.xpose.msra.mxu0 %v568
    %1472 = vmatprep.subr.bf16.mxu0 0
    %1473 = vmatpush2.bf16.xpose.msra.mxu0 0
    %1474 = vmatprep.subr.bf16.mxu0 0
    %1475 = vmatpush2.bf16.xpose.msra.mxu0 0
    %1476 = vmatprep.subr.bf16.mxu0 0
    %1477 = vmatpush2.bf16.xpose.msra.mxu0 0
    %1478 = vmatprep.subr.bf16.mxu0 0
    %1479 = vmatpush2.bf16.xpose.msra.mxu0 0
    %1480 = vmatprep.subr.bf16.mxu0 0
    %1481 = vmatpush2.bf16.xpose.msra.mxu0 0
    %1482 = vmatprep.subr.bf16.mxu0 0
    %1483 = vmatpush2.bf16.xpose.msra.mxu0 0
    %1484 = vmatprep.subr.bf16.mxu0 0
    %1485 = vmatpush2.bf16.xpose.msra.mxu0 0
    %1486 = vmatprep.subr.bf16.mxu0 0
    %1487 = vmatpush2.bf16.xpose.msra.mxu0 0
    %1488 = vmatprep.mubr.bf16.mxu0 0
    %1489 = vmatmul.mubr.bf16.gmra.mxu0 %v1454
    %v1490 = vpop.f32.mrf.mxu0
    %v1491 = vadd.f32 0.0, %v1490
    %v1492 = vpop.f32.mrf.mxu0
    %v1493 = vpop.f32.mrf.mxu0
    %v1494 = vpop.f32.mrf.mxu0
    %1495 = vdwg.mxu0
    %v1496 = vmul.f32 %v1491, 0.35355338
    %1497 = vrot.lane.b32.xlu0 %v1239, 88
    %v1498 = vpop.permute.xlu0 %1497
    %v1500 = vsel %vm332, %v1498, 0
    %1502 = vmatprep.subr.bf16.mxu0 0
    %1503 = vmatpush1.bf16.xpose.msra.mxu0 0
    %1504 = vmatprep.subr.bf16.mxu0 0
    %1505 = vmatpush1.bf16.xpose.msra.mxu0 0
    %1506 = vmatprep.subr.bf16.mxu0 0
    %1507 = vmatpush1.bf16.xpose.msra.mxu0 0
    %1508 = vmatprep.subr.bf16.mxu0 0
    %1509 = vmatpush1.bf16.xpose.msra.mxu0 0
    %1510 = vmatprep.subr.bf16.mxu0 0
    %1511 = vmatpush1.bf16.xpose.msra.mxu0 0
    %1512 = vmatprep.subr.bf16.mxu0 0
    %1513 = vmatpush1.bf16.xpose.msra.mxu0 0
    %1514 = vmatprep.subr.bf16.mxu0 0
    %1515 = vmatpush1.bf16.xpose.msra.mxu0 0
    %1516 = vmatprep.subr.bf16.mxu0 0
    %1517 = vmatpush1.bf16.xpose.msra.mxu0 %v1500
    %1518 = vmatprep.subr.bf16.mxu0 0
    %1519 = vmatpush2.bf16.xpose.msra.mxu0 0
    %1520 = vmatprep.subr.bf16.mxu0 0
    %1521 = vmatpush2.bf16.xpose.msra.mxu0 0
    %1522 = vmatprep.subr.bf16.mxu0 0
    %1523 = vmatpush2.bf16.xpose.msra.mxu0 0
    %1524 = vmatprep.subr.bf16.mxu0 0
    %1525 = vmatpush2.bf16.xpose.msra.mxu0 0
    %1526 = vmatprep.subr.bf16.mxu0 0
    %1527 = vmatpush2.bf16.xpose.msra.mxu0 0
    %1528 = vmatprep.subr.bf16.mxu0 0
    %1529 = vmatpush2.bf16.xpose.msra.mxu0 0
    %1530 = vmatprep.subr.bf16.mxu0 0
    %1531 = vmatpush2.bf16.xpose.msra.mxu0 0
    %1532 = vmatprep.subr.bf16.mxu0 0
    %1533 = vmatpush2.bf16.xpose.msra.mxu0 0
    %1534 = vmatprep.mubr.bf16.mxu0 0
    %1535 = vmatmul.mubr.bf16.gmra.mxu0 %v1454
    %v1536 = vpop.f32.mrf.mxu0
    %v1537 = vadd.f32 0.0, %v1536
    %v1538 = vpop.f32.mrf.mxu0
    %v1539 = vpop.f32.mrf.mxu0
    %v1540 = vpop.f32.mrf.mxu0
    %1541 = vdwg.mxu0
    %v1542 = vmul.f32 %v1537, 0.35355338
    %v1543 = vadd.f32 %v1542, %v1334
    %v1544 = vsel %vm432, %v1496, -inf
    %1545 = vmax.xlane.f32.xlu0 %v1544
    %v1546 = vpop.xlane.xlu0 %1545
    %v1547 = vsel %vm332, %v1543, -inf
    %1548 = vmax.xlane.f32.xlu0 %v1547
    %v1549 = vpop.xlane.xlu0 %1548
    %v1550 = vmax.f32 %v1546, %v1549
    %v1551 = vsub.f32 %v1496, %v1550
    %v1552 = vmul.f32 %v1551, 1.442695
    %v1553 = vpow.pop %v1552
    %v1554 = vsub.f32 %v1543, %v1550
    %v1555 = vmul.f32 %v1554, 1.442695
    %v1556 = vpow.pop %v1555
    %v1557 = vsel %vm432, %v1553, 0.0
    %1558 = vadd.xlane.f32.xlu0 %v1557
    %v1559 = vpop.xlane.xlu0 %1558
    %v1560 = vsel %vm332, %v1556, 0.0
    %1561 = vadd.xlane.f32.xlu0 %v1560
    %v1562 = vpop.xlane.xlu0 %1561
    %v1563 = vadd.f32 %v1559, %v1562
    %v1564 = vpack.c.bf16 %v1553, %v1553
    %v1565 = vpack.c.bf16 %v1556, %v1556
    %1566 = vrot.lane.b32.xlu0 %v1239, 56
    %v1567 = vpop.permute.xlu0 %1566
    %v1569 = vsel %vm332, %v1565, 0
    %v1572 = vsel %vm121, %v1567, 0
    %1574 = vmatprep.subr.bf16.mxu0 0
    %1575 = vmatpush1.bf16.msra.mxu0 0
    %1576 = vmatprep.subr.bf16.mxu0 0
    %1577 = vmatpush1.bf16.msra.mxu0 0
    %1578 = vmatprep.subr.bf16.mxu0 0
    %1579 = vmatpush1.bf16.msra.mxu0 0
    %1580 = vmatprep.subr.bf16.mxu0 0
    %1581 = vmatpush1.bf16.msra.mxu0 0
    %1582 = vmatprep.subr.bf16.mxu0 0
    %1583 = vmatpush1.bf16.msra.mxu0 0
    %1584 = vmatprep.subr.bf16.mxu0 0
    %1585 = vmatpush1.bf16.msra.mxu0 0
    %1586 = vmatprep.subr.bf16.mxu0 0
    %1587 = vmatpush1.bf16.msra.mxu0 0
    %1588 = vmatprep.subr.bf16.mxu0 0
    %1589 = vmatpush1.bf16.msra.mxu0 %v1572
    %1590 = vmatprep.subr.bf16.mxu0 0
    %1591 = vmatpush2.bf16.msra.mxu0 0
    %1592 = vmatprep.subr.bf16.mxu0 0
    %1593 = vmatpush2.bf16.msra.mxu0 0
    %1594 = vmatprep.subr.bf16.mxu0 0
    %1595 = vmatpush2.bf16.msra.mxu0 0
    %1596 = vmatprep.subr.bf16.mxu0 0
    %1597 = vmatpush2.bf16.msra.mxu0 0
    %1598 = vmatprep.subr.bf16.mxu0 0
    %1599 = vmatpush2.bf16.msra.mxu0 0
    %1600 = vmatprep.subr.bf16.mxu0 0
    %1601 = vmatpush2.bf16.msra.mxu0 0
    %1602 = vmatprep.subr.bf16.mxu0 0
    %1603 = vmatpush2.bf16.msra.mxu0 0
    %1604 = vmatprep.subr.bf16.mxu0 0
    %1605 = vmatpush2.bf16.msra.mxu0 0
    %1606 = vmatprep.mubr.bf16.mxu0 0
    %1607 = vmatmul.mubr.bf16.gmra.mxu0 %v1569
    %v1608 = vpop.f32.mrf.mxu0
    %v1609 = vadd.f32 0.0, %v1608
    %v1610 = vpop.f32.mrf.mxu0
    %v1611 = vpop.f32.mrf.mxu0
    %v1612 = vpop.f32.mrf.mxu0
    %1613 = vdwg.mxu0
    %v1615 = vsel %vm432, %v1564, 0
    %1617 = vmatprep.subr.bf16.mxu0 0
    %1618 = vmatpush1.bf16.msra.mxu0 0
    %1619 = vmatprep.subr.bf16.mxu0 0
    %1620 = vmatpush1.bf16.msra.mxu0 0
    %1621 = vmatprep.subr.bf16.mxu0 0
    %1622 = vmatpush1.bf16.msra.mxu0 0
    %1623 = vmatprep.subr.bf16.mxu0 0
    %1624 = vmatpush1.bf16.msra.mxu0 0
    %1625 = vmatprep.subr.bf16.mxu0 0
    %1626 = vmatpush1.bf16.msra.mxu0 0
    %1627 = vmatprep.subr.bf16.mxu0 0
    %1628 = vmatpush1.bf16.msra.mxu0 0
    %1629 = vmatprep.subr.bf16.mxu0 0
    %1630 = vmatpush1.bf16.msra.mxu0 0
    %1631 = vmatprep.subr.bf16.mxu0 0
    %1632 = vmatpush1.bf16.msra.mxu0 %v742
    %1633 = vmatprep.subr.bf16.mxu0 0
    %1634 = vmatpush2.bf16.msra.mxu0 0
    %1635 = vmatprep.subr.bf16.mxu0 0
    %1636 = vmatpush2.bf16.msra.mxu0 0
    %1637 = vmatprep.subr.bf16.mxu0 0
    %1638 = vmatpush2.bf16.msra.mxu0 0
    %1639 = vmatprep.subr.bf16.mxu0 0
    %1640 = vmatpush2.bf16.msra.mxu0 0
    %1641 = vmatprep.subr.bf16.mxu0 0
    %1642 = vmatpush2.bf16.msra.mxu0 0
    %1643 = vmatprep.subr.bf16.mxu0 0
    %1644 = vmatpush2.bf16.msra.mxu0 0
    %1645 = vmatprep.subr.bf16.mxu0 0
    %1646 = vmatpush2.bf16.msra.mxu0 0
    %1647 = vmatprep.subr.bf16.mxu0 0
    %1648 = vmatpush2.bf16.msra.mxu0 0
    %1649 = vmatprep.mubr.bf16.mxu0 0
    %1650 = vmatmul.mubr.bf16.gmra.mxu0 %v1615
    %v1651 = vpop.f32.mrf.mxu0
    %v1652 = vadd.f32 %v1609, %v1651
    %v1653 = vpop.f32.mrf.mxu0
    %v1654 = vpop.f32.mrf.mxu0
    %v1655 = vpop.f32.mrf.mxu0
    %1656 = vdwg.mxu0
    %v1657 = vrcp.pop %v1563
    %v1658 = vmul.f32 %v1652, %v1657
    %1659 = vrot.lane.b32.xlu0 %v1239, 112
    %v1660 = vpop.permute.xlu0 %1659
    %v1662 = vsel %vm332, %v1660, 0
    %1664 = vmatprep.subr.bf16.mxu0 0
    %1665 = vmatpush1.bf16.xpose.msra.mxu0 0
    %1666 = vmatprep.subr.bf16.mxu0 0
    %1667 = vmatpush1.bf16.xpose.msra.mxu0 0
    %1668 = vmatprep.subr.bf16.mxu0 0
    %1669 = vmatpush1.bf16.xpose.msra.mxu0 0
    %1670 = vmatprep.subr.bf16.mxu0 0
    %1671 = vmatpush1.bf16.xpose.msra.mxu0 0
    %1672 = vmatprep.subr.bf16.mxu0 0
    %1673 = vmatpush1.bf16.xpose.msra.mxu0 0
    %1674 = vmatprep.subr.bf16.mxu0 0
    %1675 = vmatpush1.bf16.xpose.msra.mxu0 0
    %1676 = vmatprep.subr.bf16.mxu0 0
    %1677 = vmatpush1.bf16.xpose.msra.mxu0 0
    %1678 = vmatprep.subr.bf16.mxu0 0
    %1679 = vmatpush1.bf16.xpose.msra.mxu0 %v794
    %1680 = vmatprep.subr.bf16.mxu0 0
    %1681 = vmatpush2.bf16.xpose.msra.mxu0 0
    %1682 = vmatprep.subr.bf16.mxu0 0
    %1683 = vmatpush2.bf16.xpose.msra.mxu0 0
    %1684 = vmatprep.subr.bf16.mxu0 0
    %1685 = vmatpush2.bf16.xpose.msra.mxu0 0
    %1686 = vmatprep.subr.bf16.mxu0 0
    %1687 = vmatpush2.bf16.xpose.msra.mxu0 0
    %1688 = vmatprep.subr.bf16.mxu0 0
    %1689 = vmatpush2.bf16.xpose.msra.mxu0 0
    %1690 = vmatprep.subr.bf16.mxu0 0
    %1691 = vmatpush2.bf16.xpose.msra.mxu0 0
    %1692 = vmatprep.subr.bf16.mxu0 0
    %1693 = vmatpush2.bf16.xpose.msra.mxu0 0
    %1694 = vmatprep.subr.bf16.mxu0 0
    %1695 = vmatpush2.bf16.xpose.msra.mxu0 0
    %1696 = vmatprep.mubr.bf16.mxu0 0
    %1697 = vmatmul.mubr.bf16.gmra.mxu0 %v1662
    %v1698 = vpop.f32.mrf.mxu0
    %v1699 = vadd.f32 0.0, %v1698
    %v1700 = vpop.f32.mrf.mxu0
    %v1701 = vpop.f32.mrf.mxu0
    %v1702 = vpop.f32.mrf.mxu0
    %1703 = vdwg.mxu0
    %v1704 = vmul.f32 %v1699, 0.35355338
    %1705 = vrot.lane.b32.xlu0 %v1239, 80
    %v1706 = vpop.permute.xlu0 %1705
    %v1708 = vsel %vm332, %v1706, 0
    %1710 = vmatprep.subr.bf16.mxu0 0
    %1711 = vmatpush1.bf16.xpose.msra.mxu0 0
    %1712 = vmatprep.subr.bf16.mxu0 0
    %1713 = vmatpush1.bf16.xpose.msra.mxu0 0
    %1714 = vmatprep.subr.bf16.mxu0 0
    %1715 = vmatpush1.bf16.xpose.msra.mxu0 0
    %1716 = vmatprep.subr.bf16.mxu0 0
    %1717 = vmatpush1.bf16.xpose.msra.mxu0 0
    %1718 = vmatprep.subr.bf16.mxu0 0
    %1719 = vmatpush1.bf16.xpose.msra.mxu0 0
    %1720 = vmatprep.subr.bf16.mxu0 0
    %1721 = vmatpush1.bf16.xpose.msra.mxu0 0
    %1722 = vmatprep.subr.bf16.mxu0 0
    %1723 = vmatpush1.bf16.xpose.msra.mxu0 0
    %1724 = vmatprep.subr.bf16.mxu0 0
    %1725 = vmatpush1.bf16.xpose.msra.mxu0 %v1708
    %1726 = vmatprep.subr.bf16.mxu0 0
    %1727 = vmatpush2.bf16.xpose.msra.mxu0 0
    %1728 = vmatprep.subr.bf16.mxu0 0
    %1729 = vmatpush2.bf16.xpose.msra.mxu0 0
    %1730 = vmatprep.subr.bf16.mxu0 0
    %1731 = vmatpush2.bf16.xpose.msra.mxu0 0
    %1732 = vmatprep.subr.bf16.mxu0 0
    %1733 = vmatpush2.bf16.xpose.msra.mxu0 0
    %1734 = vmatprep.subr.bf16.mxu0 0
    %1735 = vmatpush2.bf16.xpose.msra.mxu0 0
    %1736 = vmatprep.subr.bf16.mxu0 0
    %1737 = vmatpush2.bf16.xpose.msra.mxu0 0
    %1738 = vmatprep.subr.bf16.mxu0 0
    %1739 = vmatpush2.bf16.xpose.msra.mxu0 0
    %1740 = vmatprep.subr.bf16.mxu0 0
    %1741 = vmatpush2.bf16.xpose.msra.mxu0 0
    %1742 = vmatprep.mubr.bf16.mxu0 0
    %1743 = vmatmul.mubr.bf16.gmra.mxu0 %v1662
    %v1744 = vpop.f32.mrf.mxu0
    %v1745 = vadd.f32 0.0, %v1744
    %v1746 = vpop.f32.mrf.mxu0
    %v1747 = vpop.f32.mrf.mxu0
    %v1748 = vpop.f32.mrf.mxu0
    %1749 = vdwg.mxu0
    %v1750 = vmul.f32 %v1745, 0.35355338
    %v1751 = vadd.f32 %v1750, %v1334
    %v1752 = vsel %vm432, %v1704, -inf
    %1753 = vmax.xlane.f32.xlu0 %v1752
    %v1754 = vpop.xlane.xlu0 %1753
    %v1755 = vsel %vm332, %v1751, -inf
    %1756 = vmax.xlane.f32.xlu0 %v1755
    %v1757 = vpop.xlane.xlu0 %1756
    %v1758 = vmax.f32 %v1754, %v1757
    %v1759 = vsub.f32 %v1704, %v1758
    %v1760 = vmul.f32 %v1759, 1.442695
    %v1761 = vpow.pop %v1760
    %v1762 = vsub.f32 %v1751, %v1758
    %v1763 = vmul.f32 %v1762, 1.442695
    %v1764 = vpow.pop %v1763
    %v1765 = vsel %vm432, %v1761, 0.0
    %1766 = vadd.xlane.f32.xlu0 %v1765
    %v1767 = vpop.xlane.xlu0 %1766
    %v1768 = vsel %vm332, %v1764, 0.0
    %1769 = vadd.xlane.f32.xlu0 %v1768
    %v1770 = vpop.xlane.xlu0 %1769
    %v1771 = vadd.f32 %v1767, %v1770
    %v1772 = vpack.c.bf16 %v1761, %v1761
    %v1773 = vpack.c.bf16 %v1764, %v1764
    %1774 = vrot.lane.b32.xlu0 %v1239, 48
    %v1775 = vpop.permute.xlu0 %1774
    %v1777 = vsel %vm332, %v1773, 0
    %v1780 = vsel %vm121, %v1775, 0
    %1782 = vmatprep.subr.bf16.mxu0 0
    %1783 = vmatpush1.bf16.msra.mxu0 0
    %1784 = vmatprep.subr.bf16.mxu0 0
    %1785 = vmatpush1.bf16.msra.mxu0 0
    %1786 = vmatprep.subr.bf16.mxu0 0
    %1787 = vmatpush1.bf16.msra.mxu0 0
    %1788 = vmatprep.subr.bf16.mxu0 0
    %1789 = vmatpush1.bf16.msra.mxu0 0
    %1790 = vmatprep.subr.bf16.mxu0 0
    %1791 = vmatpush1.bf16.msra.mxu0 0
    %1792 = vmatprep.subr.bf16.mxu0 0
    %1793 = vmatpush1.bf16.msra.mxu0 0
    %1794 = vmatprep.subr.bf16.mxu0 0
    %1795 = vmatpush1.bf16.msra.mxu0 0
    %1796 = vmatprep.subr.bf16.mxu0 0
    %1797 = vmatpush1.bf16.msra.mxu0 %v1780
    %1798 = vmatprep.subr.bf16.mxu0 0
    %1799 = vmatpush2.bf16.msra.mxu0 0
    %1800 = vmatprep.subr.bf16.mxu0 0
    %1801 = vmatpush2.bf16.msra.mxu0 0
    %1802 = vmatprep.subr.bf16.mxu0 0
    %1803 = vmatpush2.bf16.msra.mxu0 0
    %1804 = vmatprep.subr.bf16.mxu0 0
    %1805 = vmatpush2.bf16.msra.mxu0 0
    %1806 = vmatprep.subr.bf16.mxu0 0
    %1807 = vmatpush2.bf16.msra.mxu0 0
    %1808 = vmatprep.subr.bf16.mxu0 0
    %1809 = vmatpush2.bf16.msra.mxu0 0
    %1810 = vmatprep.subr.bf16.mxu0 0
    %1811 = vmatpush2.bf16.msra.mxu0 0
    %1812 = vmatprep.subr.bf16.mxu0 0
    %1813 = vmatpush2.bf16.msra.mxu0 0
    %1814 = vmatprep.mubr.bf16.mxu0 0
    %1815 = vmatmul.mubr.bf16.gmra.mxu0 %v1777
    %v1816 = vpop.f32.mrf.mxu0
    %v1817 = vadd.f32 0.0, %v1816
    %v1818 = vpop.f32.mrf.mxu0
    %v1819 = vpop.f32.mrf.mxu0
    %v1820 = vpop.f32.mrf.mxu0
    %1821 = vdwg.mxu0
    %v1823 = vsel %vm432, %v1772, 0
    %1825 = vmatprep.subr.bf16.mxu0 0
    %1826 = vmatpush1.bf16.msra.mxu0 0
    %1827 = vmatprep.subr.bf16.mxu0 0
    %1828 = vmatpush1.bf16.msra.mxu0 0
    %1829 = vmatprep.subr.bf16.mxu0 0
    %1830 = vmatpush1.bf16.msra.mxu0 0
    %1831 = vmatprep.subr.bf16.mxu0 0
    %1832 = vmatpush1.bf16.msra.mxu0 0
    %1833 = vmatprep.subr.bf16.mxu0 0
    %1834 = vmatpush1.bf16.msra.mxu0 0
    %1835 = vmatprep.subr.bf16.mxu0 0
    %1836 = vmatpush1.bf16.msra.mxu0 0
    %1837 = vmatprep.subr.bf16.mxu0 0
    %1838 = vmatpush1.bf16.msra.mxu0 0
    %1839 = vmatprep.subr.bf16.mxu0 0
    %1840 = vmatpush1.bf16.msra.mxu0 %v960
    %1841 = vmatprep.subr.bf16.mxu0 0
    %1842 = vmatpush2.bf16.msra.mxu0 0
    %1843 = vmatprep.subr.bf16.mxu0 0
    %1844 = vmatpush2.bf16.msra.mxu0 0
    %1845 = vmatprep.subr.bf16.mxu0 0
    %1846 = vmatpush2.bf16.msra.mxu0 0
    %1847 = vmatprep.subr.bf16.mxu0 0
    %1848 = vmatpush2.bf16.msra.mxu0 0
    %1849 = vmatprep.subr.bf16.mxu0 0
    %1850 = vmatpush2.bf16.msra.mxu0 0
    %1851 = vmatprep.subr.bf16.mxu0 0
    %1852 = vmatpush2.bf16.msra.mxu0 0
    %1853 = vmatprep.subr.bf16.mxu0 0
    %1854 = vmatpush2.bf16.msra.mxu0 0
    %1855 = vmatprep.subr.bf16.mxu0 0
    %1856 = vmatpush2.bf16.msra.mxu0 0
    %1857 = vmatprep.mubr.bf16.mxu0 0
    %1858 = vmatmul.mubr.bf16.gmra.mxu0 %v1823
    %v1859 = vpop.f32.mrf.mxu0
    %v1860 = vadd.f32 %v1817, %v1859
    %v1861 = vpop.f32.mrf.mxu0
    %v1862 = vpop.f32.mrf.mxu0
    %v1863 = vpop.f32.mrf.mxu0
    %1864 = vdwg.mxu0
    %v1865 = vrcp.pop %v1771
    %v1866 = vmul.f32 %v1860, %v1865
    %1867 = vrot.lane.b32.xlu0 %v1239, 104
    %v1868 = vpop.permute.xlu0 %1867
    %v1870 = vsel %vm332, %v1868, 0
    %1872 = vmatprep.subr.bf16.mxu0 0
    %1873 = vmatpush1.bf16.xpose.msra.mxu0 0
    %1874 = vmatprep.subr.bf16.mxu0 0
    %1875 = vmatpush1.bf16.xpose.msra.mxu0 0
    %1876 = vmatprep.subr.bf16.mxu0 0
    %1877 = vmatpush1.bf16.xpose.msra.mxu0 0
    %1878 = vmatprep.subr.bf16.mxu0 0
    %1879 = vmatpush1.bf16.xpose.msra.mxu0 0
    %1880 = vmatprep.subr.bf16.mxu0 0
    %1881 = vmatpush1.bf16.xpose.msra.mxu0 0
    %1882 = vmatprep.subr.bf16.mxu0 0
    %1883 = vmatpush1.bf16.xpose.msra.mxu0 0
    %1884 = vmatprep.subr.bf16.mxu0 0
    %1885 = vmatpush1.bf16.xpose.msra.mxu0 0
    %1886 = vmatprep.subr.bf16.mxu0 0
    %1887 = vmatpush1.bf16.xpose.msra.mxu0 %v1012
    %1888 = vmatprep.subr.bf16.mxu0 0
    %1889 = vmatpush2.bf16.xpose.msra.mxu0 0
    %1890 = vmatprep.subr.bf16.mxu0 0
    %1891 = vmatpush2.bf16.xpose.msra.mxu0 0
    %1892 = vmatprep.subr.bf16.mxu0 0
    %1893 = vmatpush2.bf16.xpose.msra.mxu0 0
    %1894 = vmatprep.subr.bf16.mxu0 0
    %1895 = vmatpush2.bf16.xpose.msra.mxu0 0
    %1896 = vmatprep.subr.bf16.mxu0 0
    %1897 = vmatpush2.bf16.xpose.msra.mxu0 0
    %1898 = vmatprep.subr.bf16.mxu0 0
    %1899 = vmatpush2.bf16.xpose.msra.mxu0 0
    %1900 = vmatprep.subr.bf16.mxu0 0
    %1901 = vmatpush2.bf16.xpose.msra.mxu0 0
    %1902 = vmatprep.subr.bf16.mxu0 0
    %1903 = vmatpush2.bf16.xpose.msra.mxu0 0
    %1904 = vmatprep.mubr.bf16.mxu0 0
    %1905 = vmatmul.mubr.bf16.gmra.mxu0 %v1870
    %v1906 = vpop.f32.mrf.mxu0
    %v1907 = vadd.f32 0.0, %v1906
    %v1908 = vpop.f32.mrf.mxu0
    %v1909 = vpop.f32.mrf.mxu0
    %v1910 = vpop.f32.mrf.mxu0
    %1911 = vdwg.mxu0
    %v1912 = vmul.f32 %v1907, 0.35355338
    %1913 = vrot.lane.b32.xlu0 %v1239, 72
    %v1914 = vpop.permute.xlu0 %1913
    %v1916 = vsel %vm332, %v1914, 0
    %1918 = vmatprep.subr.bf16.mxu0 0
    %1919 = vmatpush1.bf16.xpose.msra.mxu0 0
    %1920 = vmatprep.subr.bf16.mxu0 0
    %1921 = vmatpush1.bf16.xpose.msra.mxu0 0
    %1922 = vmatprep.subr.bf16.mxu0 0
    %1923 = vmatpush1.bf16.xpose.msra.mxu0 0
    %1924 = vmatprep.subr.bf16.mxu0 0
    %1925 = vmatpush1.bf16.xpose.msra.mxu0 0
    %1926 = vmatprep.subr.bf16.mxu0 0
    %1927 = vmatpush1.bf16.xpose.msra.mxu0 0
    %1928 = vmatprep.subr.bf16.mxu0 0
    %1929 = vmatpush1.bf16.xpose.msra.mxu0 0
    %1930 = vmatprep.subr.bf16.mxu0 0
    %1931 = vmatpush1.bf16.xpose.msra.mxu0 0
    %1932 = vmatprep.subr.bf16.mxu0 0
    %1933 = vmatpush1.bf16.xpose.msra.mxu0 %v1916
    %1934 = vmatprep.subr.bf16.mxu0 0
    %1935 = vmatpush2.bf16.xpose.msra.mxu0 0
    %1936 = vmatprep.subr.bf16.mxu0 0
    %1937 = vmatpush2.bf16.xpose.msra.mxu0 0
    %1938 = vmatprep.subr.bf16.mxu0 0
    %1939 = vmatpush2.bf16.xpose.msra.mxu0 0
    %1940 = vmatprep.subr.bf16.mxu0 0
    %1941 = vmatpush2.bf16.xpose.msra.mxu0 0
    %1942 = vmatprep.subr.bf16.mxu0 0
    %1943 = vmatpush2.bf16.xpose.msra.mxu0 0
    %1944 = vmatprep.subr.bf16.mxu0 0
    %1945 = vmatpush2.bf16.xpose.msra.mxu0 0
    %1946 = vmatprep.subr.bf16.mxu0 0
    %1947 = vmatpush2.bf16.xpose.msra.mxu0 0
    %1948 = vmatprep.subr.bf16.mxu0 0
    %1949 = vmatpush2.bf16.xpose.msra.mxu0 0
    %1950 = vmatprep.mubr.bf16.mxu0 0
    %1951 = vmatmul.mubr.bf16.gmra.mxu0 %v1870
    %v1952 = vpop.f32.mrf.mxu0
    %v1953 = vadd.f32 0.0, %v1952
    %v1954 = vpop.f32.mrf.mxu0
    %v1955 = vpop.f32.mrf.mxu0
    %v1956 = vpop.f32.mrf.mxu0
    %1957 = vdwg.mxu0
    %v1958 = vmul.f32 %v1953, 0.35355338
    %v1959 = vadd.f32 %v1958, %v1334
    %v1960 = vsel %vm432, %v1912, -inf
    %1961 = vmax.xlane.f32.xlu0 %v1960
    %v1962 = vpop.xlane.xlu0 %1961
    %v1963 = vsel %vm332, %v1959, -inf
    %1964 = vmax.xlane.f32.xlu0 %v1963
    %v1965 = vpop.xlane.xlu0 %1964
    %v1966 = vmax.f32 %v1962, %v1965
    %v1967 = vsub.f32 %v1912, %v1966
    %v1968 = vmul.f32 %v1967, 1.442695
    %v1969 = vpow.pop %v1968
    %v1970 = vsub.f32 %v1959, %v1966
    %v1971 = vmul.f32 %v1970, 1.442695
    %v1972 = vpow.pop %v1971
    %v1973 = vsel %vm432, %v1969, 0.0
    %1974 = vadd.xlane.f32.xlu0 %v1973
    %v1975 = vpop.xlane.xlu0 %1974
    %v1976 = vsel %vm332, %v1972, 0.0
    %1977 = vadd.xlane.f32.xlu0 %v1976
    %v1978 = vpop.xlane.xlu0 %1977
    %v1979 = vadd.f32 %v1975, %v1978
    %v1980 = vpack.c.bf16 %v1969, %v1969
    %v1981 = vpack.c.bf16 %v1972, %v1972
    %1982 = vrot.lane.b32.xlu0 %v1239, 40
    %v1983 = vpop.permute.xlu0 %1982
    %v1985 = vsel %vm332, %v1981, 0
    %v1988 = vsel %vm121, %v1983, 0
    %1990 = vmatprep.subr.bf16.mxu0 0
    %1991 = vmatpush1.bf16.msra.mxu0 0
    %1992 = vmatprep.subr.bf16.mxu0 0
    %1993 = vmatpush1.bf16.msra.mxu0 0
    %1994 = vmatprep.subr.bf16.mxu0 0
    %1995 = vmatpush1.bf16.msra.mxu0 0
    %1996 = vmatprep.subr.bf16.mxu0 0
    %1997 = vmatpush1.bf16.msra.mxu0 0
    %1998 = vmatprep.subr.bf16.mxu0 0
    %1999 = vmatpush1.bf16.msra.mxu0 0
    %2000 = vmatprep.subr.bf16.mxu0 0
    %2001 = vmatpush1.bf16.msra.mxu0 0
    %2002 = vmatprep.subr.bf16.mxu0 0
    %2003 = vmatpush1.bf16.msra.mxu0 0
    %2004 = vmatprep.subr.bf16.mxu0 0
    %2005 = vmatpush1.bf16.msra.mxu0 %v1988
    %2006 = vmatprep.subr.bf16.mxu0 0
    %2007 = vmatpush2.bf16.msra.mxu0 0
    %2008 = vmatprep.subr.bf16.mxu0 0
    %2009 = vmatpush2.bf16.msra.mxu0 0
    %2010 = vmatprep.subr.bf16.mxu0 0
    %2011 = vmatpush2.bf16.msra.mxu0 0
    %2012 = vmatprep.subr.bf16.mxu0 0
    %2013 = vmatpush2.bf16.msra.mxu0 0
    %2014 = vmatprep.subr.bf16.mxu0 0
    %2015 = vmatpush2.bf16.msra.mxu0 0
    %2016 = vmatprep.subr.bf16.mxu0 0
    %2017 = vmatpush2.bf16.msra.mxu0 0
    %2018 = vmatprep.subr.bf16.mxu0 0
    %2019 = vmatpush2.bf16.msra.mxu0 0
    %2020 = vmatprep.subr.bf16.mxu0 0
    %2021 = vmatpush2.bf16.msra.mxu0 0
    %2022 = vmatprep.mubr.bf16.mxu0 0
    %2023 = vmatmul.mubr.bf16.gmra.mxu0 %v1985
    %v2024 = vpop.f32.mrf.mxu0
    %v2025 = vadd.f32 0.0, %v2024
    %v2026 = vpop.f32.mrf.mxu0
    %v2027 = vpop.f32.mrf.mxu0
    %v2028 = vpop.f32.mrf.mxu0
    %2029 = vdwg.mxu0
    %v2031 = vsel %vm432, %v1980, 0
    %2033 = vmatprep.subr.bf16.mxu0 0
    %2034 = vmatpush1.bf16.msra.mxu0 0
    %2035 = vmatprep.subr.bf16.mxu0 0
    %2036 = vmatpush1.bf16.msra.mxu0 0
    %2037 = vmatprep.subr.bf16.mxu0 0
    %2038 = vmatpush1.bf16.msra.mxu0 0
    %2039 = vmatprep.subr.bf16.mxu0 0
    %2040 = vmatpush1.bf16.msra.mxu0 0
    %2041 = vmatprep.subr.bf16.mxu0 0
    %2042 = vmatpush1.bf16.msra.mxu0 0
    %2043 = vmatprep.subr.bf16.mxu0 0
    %2044 = vmatpush1.bf16.msra.mxu0 0
    %2045 = vmatprep.subr.bf16.mxu0 0
    %2046 = vmatpush1.bf16.msra.mxu0 0
    %2047 = vmatprep.subr.bf16.mxu0 0
    %2048 = vmatpush1.bf16.msra.mxu0 %v1178
    %2049 = vmatprep.subr.bf16.mxu0 0
    %2050 = vmatpush2.bf16.msra.mxu0 0
    %2051 = vmatprep.subr.bf16.mxu0 0
    %2052 = vmatpush2.bf16.msra.mxu0 0
    %2053 = vmatprep.subr.bf16.mxu0 0
    %2054 = vmatpush2.bf16.msra.mxu0 0
    %2055 = vmatprep.subr.bf16.mxu0 0
    %2056 = vmatpush2.bf16.msra.mxu0 0
    %2057 = vmatprep.subr.bf16.mxu0 0
    %2058 = vmatpush2.bf16.msra.mxu0 0
    %2059 = vmatprep.subr.bf16.mxu0 0
    %2060 = vmatpush2.bf16.msra.mxu0 0
    %2061 = vmatprep.subr.bf16.mxu0 0
    %2062 = vmatpush2.bf16.msra.mxu0 0
    %2063 = vmatprep.subr.bf16.mxu0 0
    %2064 = vmatpush2.bf16.msra.mxu0 0
    %2065 = vmatprep.mubr.bf16.mxu0 0
    %2066 = vmatmul.mubr.bf16.gmra.mxu0 %v2031
    %v2067 = vpop.f32.mrf.mxu0
    %v2068 = vadd.f32 %v2025, %v2067
    %v2069 = vpop.f32.mrf.mxu0
    %v2070 = vpop.f32.mrf.mxu0
    %v2071 = vpop.f32.mrf.mxu0
    %2072 = vdwg.mxu0
    %v2073 = vrcp.pop %v1979
    %v2074 = vmul.f32 %v2068, %v2073
    %2076 = vrot.lane.b32.xlu0 %v1658, 8
    %v2077 = vpop.permute.xlu0 %2076
    %2080 = vrot.lane.b32.xlu0 %v1866, 16
    %v2081 = vpop.permute.xlu0 %2080
    %2084 = vrot.lane.b32.xlu0 %v2074, 24
    %v2085 = vpop.permute.xlu0 %2084
    %v2087 = vsel %vm332, %v1450, %v2077
    %v2088 = vsel %vm1235, %v2087, %v2081
    %v2089 = vsel %vm1237, %v2088, %v2085
    %v2090 = vpack.c.bf16 %v2089, %v1238
    %v2091 = vld [vmem:[%s9] sm:$0xf]
    %v2092 = vld [vmem:[%s9 + $0x4] sm:$0xf]
    %v2093 = vld [vmem:[%s9 + $0x8] sm:$0xf]
    %v2094 = vld [vmem:[%s9 + $0xc] sm:$0xf]
    %v2095 = vld [vmem:[%s10] sm:$0x1]
    %v2097 = vlaneseq
    %v2098 = vshrl.u32 %v2097, 7
    %v2099 = vsub.s32 0, %v2098
    %v2100 = vrot.slane %v2095, %v2099
    %v2106 = vunpack.c.l.b16 %v2091
    %v2107 = vunpack.c.l.b16 %v2092
    %v2108 = vunpack.c.l.b16 %v2093
    %v2109 = vunpack.c.l.b16 %v2094
    %v2110 = vpack.c.b16 %v2107, %v2106
    %v2111 = vpack.c.b16 %v2109, %v2108
    %v2115 = vsel %vm213, %v2090, 0
    %2117 = vmatprep.subr.bf16.mxu0 0
    %2118 = vmatpush1.bf16.msra.mxu0 0
    %2119 = vmatprep.subr.bf16.mxu0 0
    %2120 = vmatpush1.bf16.msra.mxu0 0
    %2121 = vmatprep.subr.bf16.mxu0 0
    %2122 = vmatpush1.bf16.msra.mxu0 0
    %2123 = vmatprep.subr.bf16.mxu0 0
    %2124 = vmatpush1.bf16.msra.mxu0 0
    %2125 = vmatprep.subr.bf16.mxu0 0
    %2126 = vmatpush1.bf16.msra.mxu0 0
    %2127 = vmatprep.subr.bf16.mxu0 0
    %2128 = vmatpush1.bf16.msra.mxu0 0
    %2129 = vmatprep.subr.bf16.mxu0 0
    %2130 = vmatpush1.bf16.msra.mxu0 %v2111
    %2131 = vmatprep.subr.bf16.mxu0 0
    %2132 = vmatpush1.bf16.msra.mxu0 %v2110
    %2133 = vmatprep.subr.bf16.mxu0 0
    %2134 = vmatpush2.bf16.msra.mxu0 0
    %2135 = vmatprep.subr.bf16.mxu0 0
    %2136 = vmatpush2.bf16.msra.mxu0 0
    %2137 = vmatprep.subr.bf16.mxu0 0
    %2138 = vmatpush2.bf16.msra.mxu0 0
    %2139 = vmatprep.subr.bf16.mxu0 0
    %2140 = vmatpush2.bf16.msra.mxu0 0
    %2141 = vmatprep.subr.bf16.mxu0 0
    %2142 = vmatpush2.bf16.msra.mxu0 0
    %2143 = vmatprep.subr.bf16.mxu0 0
    %2144 = vmatpush2.bf16.msra.mxu0 0
    %2145 = vmatprep.subr.bf16.mxu0 0
    %2146 = vmatpush2.bf16.msra.mxu0 0
    %2147 = vmatprep.subr.bf16.mxu0 0
    %2148 = vmatpush2.bf16.msra.mxu0 0
    %2149 = vmatprep.mubr.bf16.mxu0 0
    %2150 = vmatmul.mubr.bf16.gmra.mxu0 %v2115
    %v2151 = vpop.f32.mrf.mxu0
    %v2152 = vadd.f32 %v2100, %v2151
    %v2153 = vpop.f32.mrf.mxu0
    %v2154 = vpop.f32.mrf.mxu0
    %v2155 = vadd.f32 %v2100, %v2154
    %v2156 = vpop.f32.mrf.mxu0
    %2157 = vdwg.mxu0
    %v2158 = vadd.f32 %v2152, %v255
    %v2159 = vadd.f32 %v2155, %v256
    %v2160 = vld [vmem:[%s11] sm:$0x1]
    %v2161 = vld [vmem:[%s12] sm:$0x1]
    %v2162 = vsel %vm213, %v2158, 0.0
    %2163 = vadd.xlane.f32.xlu0 %v2162
    %v2164 = vpop.xlane.xlu0 %2163
    %v2165 = vsel %vm213, %v2159, 0.0
    %2166 = vadd.xlane.f32.xlu0 %v2165
    %v2167 = vpop.xlane.xlu0 %2166
    %v2168 = vmul.f32 %v2164, %v220
    %v2169 = vmul.f32 %v2167, %v220
    %v2170 = vsub.f32 %v2158, %v2168
    %v2171 = vsub.f32 %v2159, %v2169
    %v2172 = vmul.f32 %v2170, %v2170
    %v2173 = vmul.f32 %v2171, %v2171
    %v2174 = vsel %vm213, %v2172, 0.0
    %2175 = vadd.xlane.f32.xlu0 %v2174
    %v2176 = vpop.xlane.xlu0 %2175
    %v2177 = vsel %vm213, %v2173, 0.0
    %2178 = vadd.xlane.f32.xlu0 %v2177
    %v2179 = vpop.xlane.xlu0 %2178
    %v2180 = vmul.f32 %v2176, %v220
    %v2181 = vmul.f32 %v2179, %v220
    %v2182 = vadd.f32 %v2180, 1e-12
    %v2183 = vadd.f32 %v2181, 1e-12
    %v2184 = vrsqrt.pop %v2182
    %v2185 = vrsqrt.pop %v2183
    %v2186 = vmul.f32 %v2170, %v2184
    %v2187 = vmul.f32 %v2171, %v2185
    %v2189 = vlaneseq
    %v2190 = vshrl.u32 %v2189, 7
    %v2191 = vsub.s32 0, %v2190
    %v2192 = vrot.slane %v2160, %v2191
    %v2194 = vmul.f32 %v2186, %v2192
    %v2195 = vmul.f32 %v2187, %v2192
    %v2197 = vlaneseq
    %v2198 = vshrl.u32 %v2197, 7
    %v2199 = vsub.s32 0, %v2198
    %v2200 = vrot.slane %v2161, %v2199
    %v2202 = vadd.f32 %v2194, %v2200
    %v2203 = vadd.f32 %v2195, %v2200
    %v2204 = vpack.c.bf16 %v2203, %v2202
    %v2205 = vld [vmem:[%s13] sm:$0xf]
    %v2206 = vld [vmem:[%s13 + $0x4] sm:$0xf]
    %v2207 = vld [vmem:[%s13 + $0x8] sm:$0xf]
    %v2208 = vld [vmem:[%s13 + $0xc] sm:$0xf]
    %v2209 = vld [vmem:[%s14] sm:$0x1]
    %v2211 = vlaneseq
    %v2212 = vshrl.u32 %v2211, 7
    %v2213 = vsub.s32 0, %v2212
    %v2214 = vrot.slane %v2209, %v2213
    %v2220 = vunpack.c.l.b16 %v2205
    %v2221 = vunpack.c.l.b16 %v2206
    %v2222 = vunpack.c.l.b16 %v2207
    %v2223 = vunpack.c.l.b16 %v2208
    %v2224 = vpack.c.b16 %v2221, %v2220
    %v2225 = vpack.c.b16 %v2223, %v2222
    %v2229 = vsel %vm213, %v2204, 0
    %2231 = vmatprep.subr.bf16.mxu0 0
    %2232 = vmatpush1.bf16.msra.mxu0 0
    %2233 = vmatprep.subr.bf16.mxu0 0
    %2234 = vmatpush1.bf16.msra.mxu0 0
    %2235 = vmatprep.subr.bf16.mxu0 0
    %2236 = vmatpush1.bf16.msra.mxu0 0
    %2237 = vmatprep.subr.bf16.mxu0 0
    %2238 = vmatpush1.bf16.msra.mxu0 0
    %2239 = vmatprep.subr.bf16.mxu0 0
    %2240 = vmatpush1.bf16.msra.mxu0 0
    %2241 = vmatprep.subr.bf16.mxu0 0
    %2242 = vmatpush1.bf16.msra.mxu0 0
    %2243 = vmatprep.subr.bf16.mxu0 0
    %2244 = vmatpush1.bf16.msra.mxu0 %v2225
    %2245 = vmatprep.subr.bf16.mxu0 0
    %2246 = vmatpush1.bf16.msra.mxu0 %v2224
    %2247 = vmatprep.subr.bf16.mxu0 0
    %2248 = vmatpush2.bf16.msra.mxu0 0
    %2249 = vmatprep.subr.bf16.mxu0 0
    %2250 = vmatpush2.bf16.msra.mxu0 0
    %2251 = vmatprep.subr.bf16.mxu0 0
    %2252 = vmatpush2.bf16.msra.mxu0 0
    %2253 = vmatprep.subr.bf16.mxu0 0
    %2254 = vmatpush2.bf16.msra.mxu0 0
    %2255 = vmatprep.subr.bf16.mxu0 0
    %2256 = vmatpush2.bf16.msra.mxu0 0
    %2257 = vmatprep.subr.bf16.mxu0 0
    %2258 = vmatpush2.bf16.msra.mxu0 0
    %2259 = vmatprep.subr.bf16.mxu0 0
    %2260 = vmatpush2.bf16.msra.mxu0 0
    %2261 = vmatprep.subr.bf16.mxu0 0
    %2262 = vmatpush2.bf16.msra.mxu0 0
    %2263 = vmatprep.mubr.bf16.mxu0 0
    %2264 = vmatmul.mubr.bf16.gmra.mxu0 %v2229
    %v2265 = vpop.f32.mrf.mxu0
    %v2266 = vadd.f32 %v2214, %v2265
    %v2267 = vpop.f32.mrf.mxu0
    %v2268 = vpop.f32.mrf.mxu0
    %v2269 = vadd.f32 %v2214, %v2268
    %v2270 = vpop.f32.mrf.mxu0
    %2271 = vdwg.mxu0
    %v2272 = vmul.f32 %v2266, 0.5
    %v2273 = vmul.f32 %v2269, 0.5
    %v2274 = vmul.f32 %v2266, 0.044715
    %v2275 = vmul.f32 %v2269, 0.044715
    %v2276 = vmul.f32 %v2274, %v2266
    %v2277 = vmul.f32 %v2275, %v2269
    %v2278 = vmul.f32 %v2276, %v2266
    %v2279 = vmul.f32 %v2277, %v2269
    %v2280 = vadd.f32 %v2266, %v2278
    %v2281 = vadd.f32 %v2269, %v2279
    %v2282 = vmul.f32 %v2280, 0.7978846
    %v2283 = vmul.f32 %v2281, 0.7978846
    %v2284 = vtanh.pop %v2282
    %v2285 = vtanh.pop %v2283
    %v2286 = vadd.f32 %v2284, 1.0
    %v2287 = vadd.f32 %v2285, 1.0
    %v2288 = vmul.f32 %v2272, %v2286
    %v2289 = vmul.f32 %v2273, %v2287
    %v2290 = vpack.c.bf16 %v2289, %v2288
    %v2291 = vld [vmem:[%s15] sm:$0xf]
    %v2292 = vld [vmem:[%s15 + $0x4] sm:$0xf]
    %v2293 = vld [vmem:[%s15 + $0x8] sm:$0xf]
    %v2294 = vld [vmem:[%s15 + $0xc] sm:$0xf]
    %v2295 = vld [vmem:[%s15 + $0x10] sm:$0xf]
    %v2296 = vld [vmem:[%s15 + $0x14] sm:$0xf]
    %v2297 = vld [vmem:[%s15 + $0x18] sm:$0xf]
    %v2298 = vld [vmem:[%s15 + $0x1c] sm:$0xf]
    %v2299 = vld [vmem:[%s16] sm:$0x1]
    %v2301 = vlaneseq
    %v2302 = vshrl.u32 %v2301, 7
    %v2303 = vsub.s32 0, %v2302
    %v2304 = vrot.slane %v2299, %v2303
    %v2314 = vunpack.c.l.b16 %v2291
    %v2315 = vunpack.c.l.b16 %v2292
    %v2316 = vunpack.c.l.b16 %v2293
    %v2317 = vunpack.c.l.b16 %v2294
    %v2318 = vunpack.c.l.b16 %v2295
    %v2319 = vunpack.c.l.b16 %v2296
    %v2320 = vunpack.c.l.b16 %v2297
    %v2321 = vunpack.c.l.b16 %v2298
    %v2322 = vpack.c.b16 %v2315, %v2314
    %v2323 = vpack.c.b16 %v2317, %v2316
    %v2324 = vpack.c.b16 %v2319, %v2318
    %v2325 = vpack.c.b16 %v2321, %v2320
    %vm2330 = vcmask 523264
    %v2332 = vsel %vm2330, %v2290, 0
    %2334 = vmatprep.subr.bf16.mxu0 0
    %2335 = vmatpush1.bf16.msra.mxu0 0
    %2336 = vmatprep.subr.bf16.mxu0 0
    %2337 = vmatpush1.bf16.msra.mxu0 0
    %2338 = vmatprep.subr.bf16.mxu0 0
    %2339 = vmatpush1.bf16.msra.mxu0 0
    %2340 = vmatprep.subr.bf16.mxu0 0
    %2341 = vmatpush1.bf16.msra.mxu0 0
    %2342 = vmatprep.subr.bf16.mxu0 0
    %2343 = vmatpush1.bf16.msra.mxu0 %v2325
    %2344 = vmatprep.subr.bf16.mxu0 0
    %2345 = vmatpush1.bf16.msra.mxu0 %v2324
    %2346 = vmatprep.subr.bf16.mxu0 0
    %2347 = vmatpush1.bf16.msra.mxu0 %v2323
    %2348 = vmatprep.subr.bf16.mxu0 0
    %2349 = vmatpush1.bf16.msra.mxu0 %v2322
    %2350 = vmatprep.subr.bf16.mxu0 0
    %2351 = vmatpush2.bf16.msra.mxu0 0
    %2352 = vmatprep.subr.bf16.mxu0 0
    %2353 = vmatpush2.bf16.msra.mxu0 0
    %2354 = vmatprep.subr.bf16.mxu0 0
    %2355 = vmatpush2.bf16.msra.mxu0 0
    %2356 = vmatprep.subr.bf16.mxu0 0
    %2357 = vmatpush2.bf16.msra.mxu0 0
    %2358 = vmatprep.subr.bf16.mxu0 0
    %2359 = vmatpush2.bf16.msra.mxu0 0
    %2360 = vmatprep.subr.bf16.mxu0 0
    %2361 = vmatpush2.bf16.msra.mxu0 0
    %2362 = vmatprep.subr.bf16.mxu0 0
    %2363 = vmatpush2.bf16.msra.mxu0 0
    %2364 = vmatprep.subr.bf16.mxu0 0
    %2365 = vmatpush2.bf16.msra.mxu0 0
    %2366 = vmatprep.mubr.bf16.mxu0 0
    %2367 = vmatmul.mubr.bf16.gmra.mxu0 %v2332
    %v2368 = vpop.f32.mrf.mxu0
    %v2369 = vadd.f32 %v2304, %v2368
    %v2370 = vpop.f32.mrf.mxu0
    %v2371 = vpop.f32.mrf.mxu0
    %v2372 = vadd.f32 %v2304, %v2371
    %v2373 = vpop.f32.mrf.mxu0
    %2374 = vdwg.mxu0
    %v2375 = vadd.f32 %v2369, %v2202
    %v2376 = vadd.f32 %v2372, %v2203
    %v2377 = vld [vmem:[%s17] sm:$0x1]
    %v2378 = vld [vmem:[%s18] sm:$0x1]
    %v2379 = vsel %vm213, %v2375, 0.0
    %2380 = vadd.xlane.f32.xlu0 %v2379
    %v2381 = vpop.xlane.xlu0 %2380
    %v2382 = vsel %vm213, %v2376, 0.0
    %2383 = vadd.xlane.f32.xlu0 %v2382
    %v2384 = vpop.xlane.xlu0 %2383
    %v2385 = vmul.f32 %v2381, %v220
    %v2386 = vmul.f32 %v2384, %v220
    %v2387 = vsub.f32 %v2375, %v2385
    %v2388 = vsub.f32 %v2376, %v2386
    %v2389 = vmul.f32 %v2387, %v2387
    %v2390 = vmul.f32 %v2388, %v2388
    %v2391 = vsel %vm213, %v2389, 0.0
    %2392 = vadd.xlane.f32.xlu0 %v2391
    %v2393 = vpop.xlane.xlu0 %2392
    %v2394 = vsel %vm213, %v2390, 0.0
    %2395 = vadd.xlane.f32.xlu0 %v2394
    %v2396 = vpop.xlane.xlu0 %2395
    %v2397 = vmul.f32 %v2393, %v220
    %v2398 = vmul.f32 %v2396, %v220
    %v2399 = vadd.f32 %v2397, 1e-12
    %v2400 = vadd.f32 %v2398, 1e-12
    %v2401 = vrsqrt.pop %v2399
    %v2402 = vrsqrt.pop %v2400
    %v2403 = vmul.f32 %v2387, %v2401
    %v2404 = vmul.f32 %v2388, %v2402
    %v2406 = vlaneseq
    %v2407 = vshrl.u32 %v2406, 7
    %v2408 = vsub.s32 0, %v2407
    %v2409 = vrot.slane %v2377, %v2408
    %v2411 = vmul.f32 %v2403, %v2409
    %v2412 = vmul.f32 %v2404, %v2409
    %v2414 = vlaneseq
    %v2415 = vshrl.u32 %v2414, 7
    %v2416 = vsub.s32 0, %v2415
    %v2417 = vrot.slane %v2378, %v2416
    %v2419 = vadd.f32 %v2411, %v2417
    %v2420 = vadd.f32 %v2412, %v2417
    %v2421 = vpack.c.bf16 %v2420, %v2419
    %s2422 = scalar_lea.vmem %s7, 16
    %v2423 = vld [vmem:[%s2422] sm:$0xf]
    %v2424 = vld [vmem:[%s2422 + $0x4] sm:$0xf]
    %v2425 = vld [vmem:[%s2422 + $0x8] sm:$0xf]
    %v2426 = vld [vmem:[%s2422 + $0xc] sm:$0xf]
    %s2427 = scalar_lea.vmem %s8, 1
    %v2428 = vld [vmem:[%s2427] sm:$0x1]
    %v2430 = vlaneseq
    %v2431 = vshrl.u32 %v2430, 7
    %v2432 = vsub.s32 0, %v2431
    %v2433 = vrot.slane %v2428, %v2432
    %v2439 = vunpack.c.l.b16 %v2423
    %v2440 = vunpack.c.l.b16 %v2424
    %v2441 = vunpack.c.l.b16 %v2425
    %v2442 = vunpack.c.l.b16 %v2426
    %v2443 = vpack.c.b16 %v2440, %v2439
    %v2444 = vpack.c.b16 %v2442, %v2441
    %v2448 = vsel %vm213, %v2421, 0
    %2450 = vmatprep.subr.bf16.mxu0 0
    %2451 = vmatpush1.bf16.msra.mxu0 0
    %2452 = vmatprep.subr.bf16.mxu0 0
    %2453 = vmatpush1.bf16.msra.mxu0 0
    %2454 = vmatprep.subr.bf16.mxu0 0
    %2455 = vmatpush1.bf16.msra.mxu0 0
    %2456 = vmatprep.subr.bf16.mxu0 0
    %2457 = vmatpush1.bf16.msra.mxu0 0
    %2458 = vmatprep.subr.bf16.mxu0 0
    %2459 = vmatpush1.bf16.msra.mxu0 0
    %2460 = vmatprep.subr.bf16.mxu0 0
    %2461 = vmatpush1.bf16.msra.mxu0 0
    %2462 = vmatprep.subr.bf16.mxu0 0
    %2463 = vmatpush1.bf16.msra.mxu0 %v2444
    %2464 = vmatprep.subr.bf16.mxu0 0
    %2465 = vmatpush1.bf16.msra.mxu0 %v2443
    %2466 = vmatprep.subr.bf16.mxu0 0
    %2467 = vmatpush2.bf16.msra.mxu0 0
    %2468 = vmatprep.subr.bf16.mxu0 0
    %2469 = vmatpush2.bf16.msra.mxu0 0
    %2470 = vmatprep.subr.bf16.mxu0 0
    %2471 = vmatpush2.bf16.msra.mxu0 0
    %2472 = vmatprep.subr.bf16.mxu0 0
    %2473 = vmatpush2.bf16.msra.mxu0 0
    %2474 = vmatprep.subr.bf16.mxu0 0
    %2475 = vmatpush2.bf16.msra.mxu0 0
    %2476 = vmatprep.subr.bf16.mxu0 0
    %2477 = vmatpush2.bf16.msra.mxu0 0
    %2478 = vmatprep.subr.bf16.mxu0 0
    %2479 = vmatpush2.bf16.msra.mxu0 0
    %2480 = vmatprep.subr.bf16.mxu0 0
    %2481 = vmatpush2.bf16.msra.mxu0 0
    %2482 = vmatprep.mubr.bf16.mxu0 0
    %2483 = vmatmul.mubr.bf16.gmra.mxu0 %v2448
    %v2484 = vpop.f32.mrf.mxu0
    %v2485 = vadd.f32 %v2433, %v2484
    %v2486 = vpop.f32.mrf.mxu0
    %v2487 = vpop.f32.mrf.mxu0
    %v2488 = vadd.f32 %v2433, %v2487
    %v2489 = vpop.f32.mrf.mxu0
    %2490 = vdwg.mxu0
    %s2491 = scalar_lea.vmem %s5, 2
    %v2492 = vld [vmem:[%s2491] sm:$0x3]
    %s2493 = scalar_lea.vmem %s6, 2
    %v2494 = vld [vmem:[%s2493] sm:$0x3]
    %v2495 = vpack.c.bf16 %v2485, %v2485
    %v2497 = vsel %vm332, %v2495, 0
    %v2500 = vsel %vm332, %v2492, 0
    %2502 = vmatprep.subr.bf16.mxu0 0
    %2503 = vmatpush1.bf16.xpose.msra.mxu0 0
    %2504 = vmatprep.subr.bf16.mxu0 0
    %2505 = vmatpush1.bf16.xpose.msra.mxu0 0
    %2506 = vmatprep.subr.bf16.mxu0 0
    %2507 = vmatpush1.bf16.xpose.msra.mxu0 0
    %2508 = vmatprep.subr.bf16.mxu0 0
    %2509 = vmatpush1.bf16.xpose.msra.mxu0 0
    %2510 = vmatprep.subr.bf16.mxu0 0
    %2511 = vmatpush1.bf16.xpose.msra.mxu0 0
    %2512 = vmatprep.subr.bf16.mxu0 0
    %2513 = vmatpush1.bf16.xpose.msra.mxu0 0
    %2514 = vmatprep.subr.bf16.mxu0 0
    %2515 = vmatpush1.bf16.xpose.msra.mxu0 0
    %2516 = vmatprep.subr.bf16.mxu0 0
    %2517 = vmatpush1.bf16.xpose.msra.mxu0 %v2500
    %2518 = vmatprep.subr.bf16.mxu0 0
    %2519 = vmatpush2.bf16.xpose.msra.mxu0 0
    %2520 = vmatprep.subr.bf16.mxu0 0
    %2521 = vmatpush2.bf16.xpose.msra.mxu0 0
    %2522 = vmatprep.subr.bf16.mxu0 0
    %2523 = vmatpush2.bf16.xpose.msra.mxu0 0
    %2524 = vmatprep.subr.bf16.mxu0 0
    %2525 = vmatpush2.bf16.xpose.msra.mxu0 0
    %2526 = vmatprep.subr.bf16.mxu0 0
    %2527 = vmatpush2.bf16.xpose.msra.mxu0 0
    %2528 = vmatprep.subr.bf16.mxu0 0
    %2529 = vmatpush2.bf16.xpose.msra.mxu0 0
    %2530 = vmatprep.subr.bf16.mxu0 0
    %2531 = vmatpush2.bf16.xpose.msra.mxu0 0
    %2532 = vmatprep.subr.bf16.mxu0 0
    %2533 = vmatpush2.bf16.xpose.msra.mxu0 0
    %2534 = vmatprep.mubr.bf16.mxu0 0
    %2535 = vmatmul.mubr.bf16.gmra.mxu0 %v2497
    %v2536 = vpop.f32.mrf.mxu0
    %v2537 = vadd.f32 0.0, %v2536
    %v2538 = vpop.f32.mrf.mxu0
    %v2539 = vpop.f32.mrf.mxu0
    %v2540 = vpop.f32.mrf.mxu0
    %2541 = vdwg.mxu0
    %v2542 = vmul.f32 %v2537, 0.35355338
    %2544 = vrot.lane.b32.xlu0 %v2495, 96
    %v2545 = vpop.permute.xlu0 %2544
    %v2547 = vsel %vm332, %v2545, 0
    %2549 = vmatprep.subr.bf16.mxu0 0
    %2550 = vmatpush1.bf16.xpose.msra.mxu0 0
    %2551 = vmatprep.subr.bf16.mxu0 0
    %2552 = vmatpush1.bf16.xpose.msra.mxu0 0
    %2553 = vmatprep.subr.bf16.mxu0 0
    %2554 = vmatpush1.bf16.xpose.msra.mxu0 0
    %2555 = vmatprep.subr.bf16.mxu0 0
    %2556 = vmatpush1.bf16.xpose.msra.mxu0 0
    %2557 = vmatprep.subr.bf16.mxu0 0
    %2558 = vmatpush1.bf16.xpose.msra.mxu0 0
    %2559 = vmatprep.subr.bf16.mxu0 0
    %2560 = vmatpush1.bf16.xpose.msra.mxu0 0
    %2561 = vmatprep.subr.bf16.mxu0 0
    %2562 = vmatpush1.bf16.xpose.msra.mxu0 0
    %2563 = vmatprep.subr.bf16.mxu0 0
    %2564 = vmatpush1.bf16.xpose.msra.mxu0 %v2547
    %2565 = vmatprep.subr.bf16.mxu0 0
    %2566 = vmatpush2.bf16.xpose.msra.mxu0 0
    %2567 = vmatprep.subr.bf16.mxu0 0
    %2568 = vmatpush2.bf16.xpose.msra.mxu0 0
    %2569 = vmatprep.subr.bf16.mxu0 0
    %2570 = vmatpush2.bf16.xpose.msra.mxu0 0
    %2571 = vmatprep.subr.bf16.mxu0 0
    %2572 = vmatpush2.bf16.xpose.msra.mxu0 0
    %2573 = vmatprep.subr.bf16.mxu0 0
    %2574 = vmatpush2.bf16.xpose.msra.mxu0 0
    %2575 = vmatprep.subr.bf16.mxu0 0
    %2576 = vmatpush2.bf16.xpose.msra.mxu0 0
    %2577 = vmatprep.subr.bf16.mxu0 0
    %2578 = vmatpush2.bf16.xpose.msra.mxu0 0
    %2579 = vmatprep.subr.bf16.mxu0 0
    %2580 = vmatpush2.bf16.xpose.msra.mxu0 0
    %2581 = vmatprep.mubr.bf16.mxu0 0
    %2582 = vmatmul.mubr.bf16.gmra.mxu0 %v2497
    %v2583 = vpop.f32.mrf.mxu0
    %v2584 = vadd.f32 0.0, %v2583
    %v2585 = vpop.f32.mrf.mxu0
    %v2586 = vpop.f32.mrf.mxu0
    %v2587 = vpop.f32.mrf.mxu0
    %2588 = vdwg.mxu0
    %v2589 = vmul.f32 %v2584, 0.35355338
    %v2590 = vadd.f32 %v2589, %v430
    %v2591 = vsel %vm432, %v2542, -inf
    %2592 = vmax.xlane.f32.xlu0 %v2591
    %v2593 = vpop.xlane.xlu0 %2592
    %v2594 = vsel %vm332, %v2590, -inf
    %2595 = vmax.xlane.f32.xlu0 %v2594
    %v2596 = vpop.xlane.xlu0 %2595
    %v2597 = vmax.f32 %v2593, %v2596
    %v2598 = vsub.f32 %v2542, %v2597
    %v2599 = vmul.f32 %v2598, 1.442695
    %v2600 = vpow.pop %v2599
    %v2601 = vsub.f32 %v2590, %v2597
    %v2602 = vmul.f32 %v2601, 1.442695
    %v2603 = vpow.pop %v2602
    %v2604 = vsel %vm432, %v2600, 0.0
    %2605 = vadd.xlane.f32.xlu0 %v2604
    %v2606 = vpop.xlane.xlu0 %2605
    %v2607 = vsel %vm332, %v2603, 0.0
    %2608 = vadd.xlane.f32.xlu0 %v2607
    %v2609 = vpop.xlane.xlu0 %2608
    %v2610 = vadd.f32 %v2606, %v2609
    %v2611 = vpack.c.bf16 %v2600, %v2600
    %v2612 = vpack.c.bf16 %v2603, %v2603
    %2613 = vrot.lane.b32.xlu0 %v2495, 64
    %v2614 = vpop.permute.xlu0 %2613
    %v2616 = vsel %vm332, %v2612, 0
    %v2619 = vsel %vm121, %v2614, 0
    %2621 = vmatprep.subr.bf16.mxu0 0
    %2622 = vmatpush1.bf16.msra.mxu0 0
    %2623 = vmatprep.subr.bf16.mxu0 0
    %2624 = vmatpush1.bf16.msra.mxu0 0
    %2625 = vmatprep.subr.bf16.mxu0 0
    %2626 = vmatpush1.bf16.msra.mxu0 0
    %2627 = vmatprep.subr.bf16.mxu0 0
    %2628 = vmatpush1.bf16.msra.mxu0 0
    %2629 = vmatprep.subr.bf16.mxu0 0
    %2630 = vmatpush1.bf16.msra.mxu0 0
    %2631 = vmatprep.subr.bf16.mxu0 0
    %2632 = vmatpush1.bf16.msra.mxu0 0
    %2633 = vmatprep.subr.bf16.mxu0 0
    %2634 = vmatpush1.bf16.msra.mxu0 0
    %2635 = vmatprep.subr.bf16.mxu0 0
    %2636 = vmatpush1.bf16.msra.mxu0 %v2619
    %2637 = vmatprep.subr.bf16.mxu0 0
    %2638 = vmatpush2.bf16.msra.mxu0 0
    %2639 = vmatprep.subr.bf16.mxu0 0
    %2640 = vmatpush2.bf16.msra.mxu0 0
    %2641 = vmatprep.subr.bf16.mxu0 0
    %2642 = vmatpush2.bf16.msra.mxu0 0
    %2643 = vmatprep.subr.bf16.mxu0 0
    %2644 = vmatpush2.bf16.msra.mxu0 0
    %2645 = vmatprep.subr.bf16.mxu0 0
    %2646 = vmatpush2.bf16.msra.mxu0 0
    %2647 = vmatprep.subr.bf16.mxu0 0
    %2648 = vmatpush2.bf16.msra.mxu0 0
    %2649 = vmatprep.subr.bf16.mxu0 0
    %2650 = vmatpush2.bf16.msra.mxu0 0
    %2651 = vmatprep.subr.bf16.mxu0 0
    %2652 = vmatpush2.bf16.msra.mxu0 0
    %2653 = vmatprep.mubr.bf16.mxu0 0
    %2654 = vmatmul.mubr.bf16.gmra.mxu0 %v2616
    %v2655 = vpop.f32.mrf.mxu0
    %v2656 = vadd.f32 0.0, %v2655
    %v2657 = vpop.f32.mrf.mxu0
    %v2658 = vpop.f32.mrf.mxu0
    %v2659 = vpop.f32.mrf.mxu0
    %2660 = vdwg.mxu0
    %v2662 = vsel %vm432, %v2611, 0
    %v2665 = vsel %vm506, %v2494, 0
    %2667 = vmatprep.subr.bf16.mxu0 0
    %2668 = vmatpush1.bf16.msra.mxu0 0
    %2669 = vmatprep.subr.bf16.mxu0 0
    %2670 = vmatpush1.bf16.msra.mxu0 0
    %2671 = vmatprep.subr.bf16.mxu0 0
    %2672 = vmatpush1.bf16.msra.mxu0 0
    %2673 = vmatprep.subr.bf16.mxu0 0
    %2674 = vmatpush1.bf16.msra.mxu0 0
    %2675 = vmatprep.subr.bf16.mxu0 0
    %2676 = vmatpush1.bf16.msra.mxu0 0
    %2677 = vmatprep.subr.bf16.mxu0 0
    %2678 = vmatpush1.bf16.msra.mxu0 0
    %2679 = vmatprep.subr.bf16.mxu0 0
    %2680 = vmatpush1.bf16.msra.mxu0 0
    %2681 = vmatprep.subr.bf16.mxu0 0
    %2682 = vmatpush1.bf16.msra.mxu0 %v2665
    %2683 = vmatprep.subr.bf16.mxu0 0
    %2684 = vmatpush2.bf16.msra.mxu0 0
    %2685 = vmatprep.subr.bf16.mxu0 0
    %2686 = vmatpush2.bf16.msra.mxu0 0
    %2687 = vmatprep.subr.bf16.mxu0 0
    %2688 = vmatpush2.bf16.msra.mxu0 0
    %2689 = vmatprep.subr.bf16.mxu0 0
    %2690 = vmatpush2.bf16.msra.mxu0 0
    %2691 = vmatprep.subr.bf16.mxu0 0
    %2692 = vmatpush2.bf16.msra.mxu0 0
    %2693 = vmatprep.subr.bf16.mxu0 0
    %2694 = vmatpush2.bf16.msra.mxu0 0
    %2695 = vmatprep.subr.bf16.mxu0 0
    %2696 = vmatpush2.bf16.msra.mxu0 0
    %2697 = vmatprep.subr.bf16.mxu0 0
    %2698 = vmatpush2.bf16.msra.mxu0 0
    %2699 = vmatprep.mubr.bf16.mxu0 0
    %2700 = vmatmul.mubr.bf16.gmra.mxu0 %v2662
    %v2701 = vpop.f32.mrf.mxu0
    %v2702 = vadd.f32 %v2656, %v2701
    %v2703 = vpop.f32.mrf.mxu0
    %v2704 = vpop.f32.mrf.mxu0
    %v2705 = vpop.f32.mrf.mxu0
    %2706 = vdwg.mxu0
    %v2707 = vrcp.pop %v2610
    %v2708 = vmul.f32 %v2702, %v2707
    %2709 = vrot.lane.b32.xlu0 %v2495, 120
    %v2710 = vpop.permute.xlu0 %2709
    %v2713 = vunpack.c.l.s4 1983009808
    %v2714 = vunpack.c.0.s8 %v2713
    %v2715 = vlaneseq
    %v2716 = vshrl.u32 %v2715, 7
    %v2717 = vsub.s32 %v2714, %v2716
    %v2718 = vrot.slane %v2492, %v2717
    %2719 = vrot.lane.b32.xlu0 %v2718, 120
    %v2720 = vpop.permute.xlu0 %2719
    %v2722 = vsel %vm332, %v2710, 0
    %v2725 = vsel %vm332, %v2720, 0
    %2727 = vmatprep.subr.bf16.mxu0 0
    %2728 = vmatpush1.bf16.xpose.msra.mxu0 0
    %2729 = vmatprep.subr.bf16.mxu0 0
    %2730 = vmatpush1.bf16.xpose.msra.mxu0 0
    %2731 = vmatprep.subr.bf16.mxu0 0
    %2732 = vmatpush1.bf16.xpose.msra.mxu0 0
    %2733 = vmatprep.subr.bf16.mxu0 0
    %2734 = vmatpush1.bf16.xpose.msra.mxu0 0
    %2735 = vmatprep.subr.bf16.mxu0 0
    %2736 = vmatpush1.bf16.xpose.msra.mxu0 0
    %2737 = vmatprep.subr.bf16.mxu0 0
    %2738 = vmatpush1.bf16.xpose.msra.mxu0 0
    %2739 = vmatprep.subr.bf16.mxu0 0
    %2740 = vmatpush1.bf16.xpose.msra.mxu0 0
    %2741 = vmatprep.subr.bf16.mxu0 0
    %2742 = vmatpush1.bf16.xpose.msra.mxu0 %v2725
    %2743 = vmatprep.subr.bf16.mxu0 0
    %2744 = vmatpush2.bf16.xpose.msra.mxu0 0
    %2745 = vmatprep.subr.bf16.mxu0 0
    %2746 = vmatpush2.bf16.xpose.msra.mxu0 0
    %2747 = vmatprep.subr.bf16.mxu0 0
    %2748 = vmatpush2.bf16.xpose.msra.mxu0 0
    %2749 = vmatprep.subr.bf16.mxu0 0
    %2750 = vmatpush2.bf16.xpose.msra.mxu0 0
    %2751 = vmatprep.subr.bf16.mxu0 0
    %2752 = vmatpush2.bf16.xpose.msra.mxu0 0
    %2753 = vmatprep.subr.bf16.mxu0 0
    %2754 = vmatpush2.bf16.xpose.msra.mxu0 0
    %2755 = vmatprep.subr.bf16.mxu0 0
    %2756 = vmatpush2.bf16.xpose.msra.mxu0 0
    %2757 = vmatprep.subr.bf16.mxu0 0
    %2758 = vmatpush2.bf16.xpose.msra.mxu0 0
    %2759 = vmatprep.mubr.bf16.mxu0 0
    %2760 = vmatmul.mubr.bf16.gmra.mxu0 %v2722
    %v2761 = vpop.f32.mrf.mxu0
    %v2762 = vadd.f32 0.0, %v2761
    %v2763 = vpop.f32.mrf.mxu0
    %v2764 = vpop.f32.mrf.mxu0
    %v2765 = vpop.f32.mrf.mxu0
    %2766 = vdwg.mxu0
    %v2767 = vmul.f32 %v2762, 0.35355338
    %2768 = vrot.lane.b32.xlu0 %v2495, 88
    %v2769 = vpop.permute.xlu0 %2768
    %v2771 = vsel %vm332, %v2769, 0
    %2773 = vmatprep.subr.bf16.mxu0 0
    %2774 = vmatpush1.bf16.xpose.msra.mxu0 0
    %2775 = vmatprep.subr.bf16.mxu0 0
    %2776 = vmatpush1.bf16.xpose.msra.mxu0 0
    %2777 = vmatprep.subr.bf16.mxu0 0
    %2778 = vmatpush1.bf16.xpose.msra.mxu0 0
    %2779 = vmatprep.subr.bf16.mxu0 0
    %2780 = vmatpush1.bf16.xpose.msra.mxu0 0
    %2781 = vmatprep.subr.bf16.mxu0 0
    %2782 = vmatpush1.bf16.xpose.msra.mxu0 0
    %2783 = vmatprep.subr.bf16.mxu0 0
    %2784 = vmatpush1.bf16.xpose.msra.mxu0 0
    %2785 = vmatprep.subr.bf16.mxu0 0
    %2786 = vmatpush1.bf16.xpose.msra.mxu0 0
    %2787 = vmatprep.subr.bf16.mxu0 0
    %2788 = vmatpush1.bf16.xpose.msra.mxu0 %v2771
    %2789 = vmatprep.subr.bf16.mxu0 0
    %2790 = vmatpush2.bf16.xpose.msra.mxu0 0
    %2791 = vmatprep.subr.bf16.mxu0 0
    %2792 = vmatpush2.bf16.xpose.msra.mxu0 0
    %2793 = vmatprep.subr.bf16.mxu0 0
    %2794 = vmatpush2.bf16.xpose.msra.mxu0 0
    %2795 = vmatprep.subr.bf16.mxu0 0
    %2796 = vmatpush2.bf16.xpose.msra.mxu0 0
    %2797 = vmatprep.subr.bf16.mxu0 0
    %2798 = vmatpush2.bf16.xpose.msra.mxu0 0
    %2799 = vmatprep.subr.bf16.mxu0 0
    %2800 = vmatpush2.bf16.xpose.msra.mxu0 0
    %2801 = vmatprep.subr.bf16.mxu0 0
    %2802 = vmatpush2.bf16.xpose.msra.mxu0 0
    %2803 = vmatprep.subr.bf16.mxu0 0
    %2804 = vmatpush2.bf16.xpose.msra.mxu0 0
    %2805 = vmatprep.mubr.bf16.mxu0 0
    %2806 = vmatmul.mubr.bf16.gmra.mxu0 %v2722
    %v2807 = vpop.f32.mrf.mxu0
    %v2808 = vadd.f32 0.0, %v2807
    %v2809 = vpop.f32.mrf.mxu0
    %v2810 = vpop.f32.mrf.mxu0
    %v2811 = vpop.f32.mrf.mxu0
    %2812 = vdwg.mxu0
    %v2813 = vmul.f32 %v2808, 0.35355338
    %v2814 = vadd.f32 %v2813, %v430
    %v2815 = vsel %vm432, %v2767, -inf
    %2816 = vmax.xlane.f32.xlu0 %v2815
    %v2817 = vpop.xlane.xlu0 %2816
    %v2818 = vsel %vm332, %v2814, -inf
    %2819 = vmax.xlane.f32.xlu0 %v2818
    %v2820 = vpop.xlane.xlu0 %2819
    %v2821 = vmax.f32 %v2817, %v2820
    %v2822 = vsub.f32 %v2767, %v2821
    %v2823 = vmul.f32 %v2822, 1.442695
    %v2824 = vpow.pop %v2823
    %v2825 = vsub.f32 %v2814, %v2821
    %v2826 = vmul.f32 %v2825, 1.442695
    %v2827 = vpow.pop %v2826
    %v2828 = vsel %vm432, %v2824, 0.0
    %2829 = vadd.xlane.f32.xlu0 %v2828
    %v2830 = vpop.xlane.xlu0 %2829
    %v2831 = vsel %vm332, %v2827, 0.0
    %2832 = vadd.xlane.f32.xlu0 %v2831
    %v2833 = vpop.xlane.xlu0 %2832
    %v2834 = vadd.f32 %v2830, %v2833
    %v2835 = vpack.c.bf16 %v2824, %v2824
    %v2836 = vpack.c.bf16 %v2827, %v2827
    %2837 = vrot.lane.b32.xlu0 %v2495, 56
    %v2838 = vpop.permute.xlu0 %2837
    %v2840 = vsel %vm332, %v2836, 0
    %v2843 = vsel %vm121, %v2838, 0
    %2845 = vmatprep.subr.bf16.mxu0 0
    %2846 = vmatpush1.bf16.msra.mxu0 0
    %2847 = vmatprep.subr.bf16.mxu0 0
    %2848 = vmatpush1.bf16.msra.mxu0 0
    %2849 = vmatprep.subr.bf16.mxu0 0
    %2850 = vmatpush1.bf16.msra.mxu0 0
    %2851 = vmatprep.subr.bf16.mxu0 0
    %2852 = vmatpush1.bf16.msra.mxu0 0
    %2853 = vmatprep.subr.bf16.mxu0 0
    %2854 = vmatpush1.bf16.msra.mxu0 0
    %2855 = vmatprep.subr.bf16.mxu0 0
    %2856 = vmatpush1.bf16.msra.mxu0 0
    %2857 = vmatprep.subr.bf16.mxu0 0
    %2858 = vmatpush1.bf16.msra.mxu0 0
    %2859 = vmatprep.subr.bf16.mxu0 0
    %2860 = vmatpush1.bf16.msra.mxu0 %v2843
    %2861 = vmatprep.subr.bf16.mxu0 0
    %2862 = vmatpush2.bf16.msra.mxu0 0
    %2863 = vmatprep.subr.bf16.mxu0 0
    %2864 = vmatpush2.bf16.msra.mxu0 0
    %2865 = vmatprep.subr.bf16.mxu0 0
    %2866 = vmatpush2.bf16.msra.mxu0 0
    %2867 = vmatprep.subr.bf16.mxu0 0
    %2868 = vmatpush2.bf16.msra.mxu0 0
    %2869 = vmatprep.subr.bf16.mxu0 0
    %2870 = vmatpush2.bf16.msra.mxu0 0
    %2871 = vmatprep.subr.bf16.mxu0 0
    %2872 = vmatpush2.bf16.msra.mxu0 0
    %2873 = vmatprep.subr.bf16.mxu0 0
    %2874 = vmatpush2.bf16.msra.mxu0 0
    %2875 = vmatprep.subr.bf16.mxu0 0
    %2876 = vmatpush2.bf16.msra.mxu0 0
    %2877 = vmatprep.mubr.bf16.mxu0 0
    %2878 = vmatmul.mubr.bf16.gmra.mxu0 %v2840
    %v2879 = vpop.f32.mrf.mxu0
    %v2880 = vadd.f32 0.0, %v2879
    %v2881 = vpop.f32.mrf.mxu0
    %v2882 = vpop.f32.mrf.mxu0
    %v2883 = vpop.f32.mrf.mxu0
    %2884 = vdwg.mxu0
    %v2887 = vunpack.c.l.s4 1983009808
    %v2888 = vunpack.c.0.s8 %v2887
    %v2889 = vlaneseq
    %v2890 = vshrl.u32 %v2889, 7
    %v2891 = vsub.s32 %v2888, %v2890
    %v2892 = vrot.slane %v2494, %v2891
    %2893 = vrot.lane.b32.xlu0 %v2892, 120
    %v2894 = vpop.permute.xlu0 %2893
    %v2896 = vsel %vm432, %v2835, 0
    %v2899 = vsel %vm506, %v2894, 0
    %2901 = vmatprep.subr.bf16.mxu0 0
    %2902 = vmatpush1.bf16.msra.mxu0 0
    %2903 = vmatprep.subr.bf16.mxu0 0
    %2904 = vmatpush1.bf16.msra.mxu0 0
    %2905 = vmatprep.subr.bf16.mxu0 0
    %2906 = vmatpush1.bf16.msra.mxu0 0
    %2907 = vmatprep.subr.bf16.mxu0 0
    %2908 = vmatpush1.bf16.msra.mxu0 0
    %2909 = vmatprep.subr.bf16.mxu0 0
    %2910 = vmatpush1.bf16.msra.mxu0 0
    %2911 = vmatprep.subr.bf16.mxu0 0
    %2912 = vmatpush1.bf16.msra.mxu0 0
    %2913 = vmatprep.subr.bf16.mxu0 0
    %2914 = vmatpush1.bf16.msra.mxu0 0
    %2915 = vmatprep.subr.bf16.mxu0 0
    %2916 = vmatpush1.bf16.msra.mxu0 %v2899
    %2917 = vmatprep.subr.bf16.mxu0 0
    %2918 = vmatpush2.bf16.msra.mxu0 0
    %2919 = vmatprep.subr.bf16.mxu0 0
    %2920 = vmatpush2.bf16.msra.mxu0 0
    %2921 = vmatprep.subr.bf16.mxu0 0
    %2922 = vmatpush2.bf16.msra.mxu0 0
    %2923 = vmatprep.subr.bf16.mxu0 0
    %2924 = vmatpush2.bf16.msra.mxu0 0
    %2925 = vmatprep.subr.bf16.mxu0 0
    %2926 = vmatpush2.bf16.msra.mxu0 0
    %2927 = vmatprep.subr.bf16.mxu0 0
    %2928 = vmatpush2.bf16.msra.mxu0 0
    %2929 = vmatprep.subr.bf16.mxu0 0
    %2930 = vmatpush2.bf16.msra.mxu0 0
    %2931 = vmatprep.subr.bf16.mxu0 0
    %2932 = vmatpush2.bf16.msra.mxu0 0
    %2933 = vmatprep.mubr.bf16.mxu0 0
    %2934 = vmatmul.mubr.bf16.gmra.mxu0 %v2896
    %v2935 = vpop.f32.mrf.mxu0
    %v2936 = vadd.f32 %v2880, %v2935
    %v2937 = vpop.f32.mrf.mxu0
    %v2938 = vpop.f32.mrf.mxu0
    %v2939 = vpop.f32.mrf.mxu0
    %2940 = vdwg.mxu0
    %v2941 = vrcp.pop %v2834
    %v2942 = vmul.f32 %v2936, %v2941
    %2943 = vrot.lane.b32.xlu0 %v2495, 112
    %v2944 = vpop.permute.xlu0 %2943
    %2945 = vrot.lane.b32.xlu0 %v2718, 112
    %v2946 = vpop.permute.xlu0 %2945
    %v2948 = vsel %vm332, %v2944, 0
    %v2951 = vsel %vm332, %v2946, 0
    %2953 = vmatprep.subr.bf16.mxu0 0
    %2954 = vmatpush1.bf16.xpose.msra.mxu0 0
    %2955 = vmatprep.subr.bf16.mxu0 0
    %2956 = vmatpush1.bf16.xpose.msra.mxu0 0
    %2957 = vmatprep.subr.bf16.mxu0 0
    %2958 = vmatpush1.bf16.xpose.msra.mxu0 0
    %2959 = vmatprep.subr.bf16.mxu0 0
    %2960 = vmatpush1.bf16.xpose.msra.mxu0 0
    %2961 = vmatprep.subr.bf16.mxu0 0
    %2962 = vmatpush1.bf16.xpose.msra.mxu0 0
    %2963 = vmatprep.subr.bf16.mxu0 0
    %2964 = vmatpush1.bf16.xpose.msra.mxu0 0
    %2965 = vmatprep.subr.bf16.mxu0 0
    %2966 = vmatpush1.bf16.xpose.msra.mxu0 0
    %2967 = vmatprep.subr.bf16.mxu0 0
    %2968 = vmatpush1.bf16.xpose.msra.mxu0 %v2951
    %2969 = vmatprep.subr.bf16.mxu0 0
    %2970 = vmatpush2.bf16.xpose.msra.mxu0 0
    %2971 = vmatprep.subr.bf16.mxu0 0
    %2972 = vmatpush2.bf16.xpose.msra.mxu0 0
    %2973 = vmatprep.subr.bf16.mxu0 0
    %2974 = vmatpush2.bf16.xpose.msra.mxu0 0
    %2975 = vmatprep.subr.bf16.mxu0 0
    %2976 = vmatpush2.bf16.xpose.msra.mxu0 0
    %2977 = vmatprep.subr.bf16.mxu0 0
    %2978 = vmatpush2.bf16.xpose.msra.mxu0 0
    %2979 = vmatprep.subr.bf16.mxu0 0
    %2980 = vmatpush2.bf16.xpose.msra.mxu0 0
    %2981 = vmatprep.subr.bf16.mxu0 0
    %2982 = vmatpush2.bf16.xpose.msra.mxu0 0
    %2983 = vmatprep.subr.bf16.mxu0 0
    %2984 = vmatpush2.bf16.xpose.msra.mxu0 0
    %2985 = vmatprep.mubr.bf16.mxu0 0
    %2986 = vmatmul.mubr.bf16.gmra.mxu0 %v2948
    %v2987 = vpop.f32.mrf.mxu0
    %v2988 = vadd.f32 0.0, %v2987
    %v2989 = vpop.f32.mrf.mxu0
    %v2990 = vpop.f32.mrf.mxu0
    %v2991 = vpop.f32.mrf.mxu0
    %2992 = vdwg.mxu0
    %v2993 = vmul.f32 %v2988, 0.35355338
    %2994 = vrot.lane.b32.xlu0 %v2495, 80
    %v2995 = vpop.permute.xlu0 %2994
    %v2997 = vsel %vm332, %v2995, 0
    %2999 = vmatprep.subr.bf16.mxu0 0
    %3000 = vmatpush1.bf16.xpose.msra.mxu0 0
    %3001 = vmatprep.subr.bf16.mxu0 0
    %3002 = vmatpush1.bf16.xpose.msra.mxu0 0
    %3003 = vmatprep.subr.bf16.mxu0 0
    %3004 = vmatpush1.bf16.xpose.msra.mxu0 0
    %3005 = vmatprep.subr.bf16.mxu0 0
    %3006 = vmatpush1.bf16.xpose.msra.mxu0 0
    %3007 = vmatprep.subr.bf16.mxu0 0
    %3008 = vmatpush1.bf16.xpose.msra.mxu0 0
    %3009 = vmatprep.subr.bf16.mxu0 0
    %3010 = vmatpush1.bf16.xpose.msra.mxu0 0
    %3011 = vmatprep.subr.bf16.mxu0 0
    %3012 = vmatpush1.bf16.xpose.msra.mxu0 0
    %3013 = vmatprep.subr.bf16.mxu0 0
    %3014 = vmatpush1.bf16.xpose.msra.mxu0 %v2997
    %3015 = vmatprep.subr.bf16.mxu0 0
    %3016 = vmatpush2.bf16.xpose.msra.mxu0 0
    %3017 = vmatprep.subr.bf16.mxu0 0
    %3018 = vmatpush2.bf16.xpose.msra.mxu0 0
    %3019 = vmatprep.subr.bf16.mxu0 0
    %3020 = vmatpush2.bf16.xpose.msra.mxu0 0
    %3021 = vmatprep.subr.bf16.mxu0 0
    %3022 = vmatpush2.bf16.xpose.msra.mxu0 0
    %3023 = vmatprep.subr.bf16.mxu0 0
    %3024 = vmatpush2.bf16.xpose.msra.mxu0 0
    %3025 = vmatprep.subr.bf16.mxu0 0
    %3026 = vmatpush2.bf16.xpose.msra.mxu0 0
    %3027 = vmatprep.subr.bf16.mxu0 0
    %3028 = vmatpush2.bf16.xpose.msra.mxu0 0
    %3029 = vmatprep.subr.bf16.mxu0 0
    %3030 = vmatpush2.bf16.xpose.msra.mxu0 0
    %3031 = vmatprep.mubr.bf16.mxu0 0
    %3032 = vmatmul.mubr.bf16.gmra.mxu0 %v2948
    %v3033 = vpop.f32.mrf.mxu0
    %v3034 = vadd.f32 0.0, %v3033
    %v3035 = vpop.f32.mrf.mxu0
    %v3036 = vpop.f32.mrf.mxu0
    %v3037 = vpop.f32.mrf.mxu0
    %3038 = vdwg.mxu0
    %v3039 = vmul.f32 %v3034, 0.35355338
    %v3040 = vadd.f32 %v3039, %v430
    %v3041 = vsel %vm432, %v2993, -inf
    %3042 = vmax.xlane.f32.xlu0 %v3041
    %v3043 = vpop.xlane.xlu0 %3042
    %v3044 = vsel %vm332, %v3040, -inf
    %3045 = vmax.xlane.f32.xlu0 %v3044
    %v3046 = vpop.xlane.xlu0 %3045
    %v3047 = vmax.f32 %v3043, %v3046
    %v3048 = vsub.f32 %v2993, %v3047
    %v3049 = vmul.f32 %v3048, 1.442695
    %v3050 = vpow.pop %v3049
    %v3051 = vsub.f32 %v3040, %v3047
    %v3052 = vmul.f32 %v3051, 1.442695
    %v3053 = vpow.pop %v3052
    %v3054 = vsel %vm432, %v3050, 0.0
    %3055 = vadd.xlane.f32.xlu0 %v3054
    %v3056 = vpop.xlane.xlu0 %3055
    %v3057 = vsel %vm332, %v3053, 0.0
    %3058 = vadd.xlane.f32.xlu0 %v3057
    %v3059 = vpop.xlane.xlu0 %3058
    %v3060 = vadd.f32 %v3056, %v3059
    %v3061 = vpack.c.bf16 %v3050, %v3050
    %v3062 = vpack.c.bf16 %v3053, %v3053
    %3063 = vrot.lane.b32.xlu0 %v2495, 48
    %v3064 = vpop.permute.xlu0 %3063
    %v3066 = vsel %vm332, %v3062, 0
    %v3069 = vsel %vm121, %v3064, 0
    %3071 = vmatprep.subr.bf16.mxu0 0
    %3072 = vmatpush1.bf16.msra.mxu0 0
    %3073 = vmatprep.subr.bf16.mxu0 0
    %3074 = vmatpush1.bf16.msra.mxu0 0
    %3075 = vmatprep.subr.bf16.mxu0 0
    %3076 = vmatpush1.bf16.msra.mxu0 0
    %3077 = vmatprep.subr.bf16.mxu0 0
    %3078 = vmatpush1.bf16.msra.mxu0 0
    %3079 = vmatprep.subr.bf16.mxu0 0
    %3080 = vmatpush1.bf16.msra.mxu0 0
    %3081 = vmatprep.subr.bf16.mxu0 0
    %3082 = vmatpush1.bf16.msra.mxu0 0
    %3083 = vmatprep.subr.bf16.mxu0 0
    %3084 = vmatpush1.bf16.msra.mxu0 0
    %3085 = vmatprep.subr.bf16.mxu0 0
    %3086 = vmatpush1.bf16.msra.mxu0 %v3069
    %3087 = vmatprep.subr.bf16.mxu0 0
    %3088 = vmatpush2.bf16.msra.mxu0 0
    %3089 = vmatprep.subr.bf16.mxu0 0
    %3090 = vmatpush2.bf16.msra.mxu0 0
    %3091 = vmatprep.subr.bf16.mxu0 0
    %3092 = vmatpush2.bf16.msra.mxu0 0
    %3093 = vmatprep.subr.bf16.mxu0 0
    %3094 = vmatpush2.bf16.msra.mxu0 0
    %3095 = vmatprep.subr.bf16.mxu0 0
    %3096 = vmatpush2.bf16.msra.mxu0 0
    %3097 = vmatprep.subr.bf16.mxu0 0
    %3098 = vmatpush2.bf16.msra.mxu0 0
    %3099 = vmatprep.subr.bf16.mxu0 0
    %3100 = vmatpush2.bf16.msra.mxu0 0
    %3101 = vmatprep.subr.bf16.mxu0 0
    %3102 = vmatpush2.bf16.msra.mxu0 0
    %3103 = vmatprep.mubr.bf16.mxu0 0
    %3104 = vmatmul.mubr.bf16.gmra.mxu0 %v3066
    %v3105 = vpop.f32.mrf.mxu0
    %v3106 = vadd.f32 0.0, %v3105
    %v3107 = vpop.f32.mrf.mxu0
    %v3108 = vpop.f32.mrf.mxu0
    %v3109 = vpop.f32.mrf.mxu0
    %3110 = vdwg.mxu0
    %3111 = vrot.lane.b32.xlu0 %v2892, 112
    %v3112 = vpop.permute.xlu0 %3111
    %v3114 = vsel %vm432, %v3061, 0
    %v3117 = vsel %vm506, %v3112, 0
    %3119 = vmatprep.subr.bf16.mxu0 0
    %3120 = vmatpush1.bf16.msra.mxu0 0
    %3121 = vmatprep.subr.bf16.mxu0 0
    %3122 = vmatpush1.bf16.msra.mxu0 0
    %3123 = vmatprep.subr.bf16.mxu0 0
    %3124 = vmatpush1.bf16.msra.mxu0 0
    %3125 = vmatprep.subr.bf16.mxu0 0
    %3126 = vmatpush1.bf16.msra.mxu0 0
    %3127 = vmatprep.subr.bf16.mxu0 0
    %3128 = vmatpush1.bf16.msra.mxu0 0
    %3129 = vmatprep.subr.bf16.mxu0 0
    %3130 = vmatpush1.bf16.msra.mxu0 0
    %3131 = vmatprep.subr.bf16.mxu0 0
    %3132 = vmatpush1.bf16.msra.mxu0 0
    %3133 = vmatprep.subr.bf16.mxu0 0
    %3134 = vmatpush1.bf16.msra.mxu0 %v3117
    %3135 = vmatprep.subr.bf16.mxu0 0
    %3136 = vmatpush2.bf16.msra.mxu0 0
    %3137 = vmatprep.subr.bf16.mxu0 0
    %3138 = vmatpush2.bf16.msra.mxu0 0
    %3139 = vmatprep.subr.bf16.mxu0 0
    %3140 = vmatpush2.bf16.msra.mxu0 0
    %3141 = vmatprep.subr.bf16.mxu0 0
    %3142 = vmatpush2.bf16.msra.mxu0 0
    %3143 = vmatprep.subr.bf16.mxu0 0
    %3144 = vmatpush2.bf16.msra.mxu0 0
    %3145 = vmatprep.subr.bf16.mxu0 0
    %3146 = vmatpush2.bf16.msra.mxu0 0
    %3147 = vmatprep.subr.bf16.mxu0 0
    %3148 = vmatpush2.bf16.msra.mxu0 0
    %3149 = vmatprep.subr.bf16.mxu0 0
    %3150 = vmatpush2.bf16.msra.mxu0 0
    %3151 = vmatprep.mubr.bf16.mxu0 0
    %3152 = vmatmul.mubr.bf16.gmra.mxu0 %v3114
    %v3153 = vpop.f32.mrf.mxu0
    %v3154 = vadd.f32 %v3106, %v3153
    %v3155 = vpop.f32.mrf.mxu0
    %v3156 = vpop.f32.mrf.mxu0
    %v3157 = vpop.f32.mrf.mxu0
    %3158 = vdwg.mxu0
    %v3159 = vrcp.pop %v3060
    %v3160 = vmul.f32 %v3154, %v3159
    %3161 = vrot.lane.b32.xlu0 %v2495, 104
    %v3162 = vpop.permute.xlu0 %3161
    %3163 = vrot.lane.b32.xlu0 %v2718, 104
    %v3164 = vpop.permute.xlu0 %3163
    %v3166 = vsel %vm332, %v3162, 0
    %v3169 = vsel %vm332, %v3164, 0
    %3171 = vmatprep.subr.bf16.mxu0 0
    %3172 = vmatpush1.bf16.xpose.msra.mxu0 0
    %3173 = vmatprep.subr.bf16.mxu0 0
    %3174 = vmatpush1.bf16.xpose.msra.mxu0 0
    %3175 = vmatprep.subr.bf16.mxu0 0
    %3176 = vmatpush1.bf16.xpose.msra.mxu0 0
    %3177 = vmatprep.subr.bf16.mxu0 0
    %3178 = vmatpush1.bf16.xpose.msra.mxu0 0
    %3179 = vmatprep.subr.bf16.mxu0 0
    %3180 = vmatpush1.bf16.xpose.msra.mxu0 0
    %3181 = vmatprep.subr.bf16.mxu0 0
    %3182 = vmatpush1.bf16.xpose.msra.mxu0 0
    %3183 = vmatprep.subr.bf16.mxu0 0
    %3184 = vmatpush1.bf16.xpose.msra.mxu0 0
    %3185 = vmatprep.subr.bf16.mxu0 0
    %3186 = vmatpush1.bf16.xpose.msra.mxu0 %v3169
    %3187 = vmatprep.subr.bf16.mxu0 0
    %3188 = vmatpush2.bf16.xpose.msra.mxu0 0
    %3189 = vmatprep.subr.bf16.mxu0 0
    %3190 = vmatpush2.bf16.xpose.msra.mxu0 0
    %3191 = vmatprep.subr.bf16.mxu0 0
    %3192 = vmatpush2.bf16.xpose.msra.mxu0 0
    %3193 = vmatprep.subr.bf16.mxu0 0
    %3194 = vmatpush2.bf16.xpose.msra.mxu0 0
    %3195 = vmatprep.subr.bf16.mxu0 0
    %3196 = vmatpush2.bf16.xpose.msra.mxu0 0
    %3197 = vmatprep.subr.bf16.mxu0 0
    %3198 = vmatpush2.bf16.xpose.msra.mxu0 0
    %3199 = vmatprep.subr.bf16.mxu0 0
    %3200 = vmatpush2.bf16.xpose.msra.mxu0 0
    %3201 = vmatprep.subr.bf16.mxu0 0
    %3202 = vmatpush2.bf16.xpose.msra.mxu0 0
    %3203 = vmatprep.mubr.bf16.mxu0 0
    %3204 = vmatmul.mubr.bf16.gmra.mxu0 %v3166
    %v3205 = vpop.f32.mrf.mxu0
    %v3206 = vadd.f32 0.0, %v3205
    %v3207 = vpop.f32.mrf.mxu0
    %v3208 = vpop.f32.mrf.mxu0
    %v3209 = vpop.f32.mrf.mxu0
    %3210 = vdwg.mxu0
    %v3211 = vmul.f32 %v3206, 0.35355338
    %3212 = vrot.lane.b32.xlu0 %v2495, 72
    %v3213 = vpop.permute.xlu0 %3212
    %v3215 = vsel %vm332, %v3213, 0
    %3217 = vmatprep.subr.bf16.mxu0 0
    %3218 = vmatpush1.bf16.xpose.msra.mxu0 0
    %3219 = vmatprep.subr.bf16.mxu0 0
    %3220 = vmatpush1.bf16.xpose.msra.mxu0 0
    %3221 = vmatprep.subr.bf16.mxu0 0
    %3222 = vmatpush1.bf16.xpose.msra.mxu0 0
    %3223 = vmatprep.subr.bf16.mxu0 0
    %3224 = vmatpush1.bf16.xpose.msra.mxu0 0
    %3225 = vmatprep.subr.bf16.mxu0 0
    %3226 = vmatpush1.bf16.xpose.msra.mxu0 0
    %3227 = vmatprep.subr.bf16.mxu0 0
    %3228 = vmatpush1.bf16.xpose.msra.mxu0 0
    %3229 = vmatprep.subr.bf16.mxu0 0
    %3230 = vmatpush1.bf16.xpose.msra.mxu0 0
    %3231 = vmatprep.subr.bf16.mxu0 0
    %3232 = vmatpush1.bf16.xpose.msra.mxu0 %v3215
    %3233 = vmatprep.subr.bf16.mxu0 0
    %3234 = vmatpush2.bf16.xpose.msra.mxu0 0
    %3235 = vmatprep.subr.bf16.mxu0 0
    %3236 = vmatpush2.bf16.xpose.msra.mxu0 0
    %3237 = vmatprep.subr.bf16.mxu0 0
    %3238 = vmatpush2.bf16.xpose.msra.mxu0 0
    %3239 = vmatprep.subr.bf16.mxu0 0
    %3240 = vmatpush2.bf16.xpose.msra.mxu0 0
    %3241 = vmatprep.subr.bf16.mxu0 0
    %3242 = vmatpush2.bf16.xpose.msra.mxu0 0
    %3243 = vmatprep.subr.bf16.mxu0 0
    %3244 = vmatpush2.bf16.xpose.msra.mxu0 0
    %3245 = vmatprep.subr.bf16.mxu0 0
    %3246 = vmatpush2.bf16.xpose.msra.mxu0 0
    %3247 = vmatprep.subr.bf16.mxu0 0
    %3248 = vmatpush2.bf16.xpose.msra.mxu0 0
    %3249 = vmatprep.mubr.bf16.mxu0 0
    %3250 = vmatmul.mubr.bf16.gmra.mxu0 %v3166
    %v3251 = vpop.f32.mrf.mxu0
    %v3252 = vadd.f32 0.0, %v3251
    %v3253 = vpop.f32.mrf.mxu0
    %v3254 = vpop.f32.mrf.mxu0
    %v3255 = vpop.f32.mrf.mxu0
    %3256 = vdwg.mxu0
    %v3257 = vmul.f32 %v3252, 0.35355338
    %v3258 = vadd.f32 %v3257, %v430
    %v3259 = vsel %vm432, %v3211, -inf
    %3260 = vmax.xlane.f32.xlu0 %v3259
    %v3261 = vpop.xlane.xlu0 %3260
    %v3262 = vsel %vm332, %v3258, -inf
    %3263 = vmax.xlane.f32.xlu0 %v3262
    %v3264 = vpop.xlane.xlu0 %3263
    %v3265 = vmax.f32 %v3261, %v3264
    %v3266 = vsub.f32 %v3211, %v3265
    %v3267 = vmul.f32 %v3266, 1.442695
    %v3268 = vpow.pop %v3267
    %v3269 = vsub.f32 %v3258, %v3265
    %v3270 = vmul.f32 %v3269, 1.442695
    %v3271 = vpow.pop %v3270
    %v3272 = vsel %vm432, %v3268, 0.0
    %3273 = vadd.xlane.f32.xlu0 %v3272
    %v3274 = vpop.xlane.xlu0 %3273
    %v3275 = vsel %vm332, %v3271, 0.0
    %3276 = vadd.xlane.f32.xlu0 %v3275
    %v3277 = vpop.xlane.xlu0 %3276
    %v3278 = vadd.f32 %v3274, %v3277
    %v3279 = vpack.c.bf16 %v3268, %v3268
    %v3280 = vpack.c.bf16 %v3271, %v3271
    %3281 = vrot.lane.b32.xlu0 %v2495, 40
    %v3282 = vpop.permute.xlu0 %3281
    %v3284 = vsel %vm332, %v3280, 0
    %v3287 = vsel %vm121, %v3282, 0
    %3289 = vmatprep.subr.bf16.mxu0 0
    %3290 = vmatpush1.bf16.msra.mxu0 0
    %3291 = vmatprep.subr.bf16.mxu0 0
    %3292 = vmatpush1.bf16.msra.mxu0 0
    %3293 = vmatprep.subr.bf16.mxu0 0
    %3294 = vmatpush1.bf16.msra.mxu0 0
    %3295 = vmatprep.subr.bf16.mxu0 0
    %3296 = vmatpush1.bf16.msra.mxu0 0
    %3297 = vmatprep.subr.bf16.mxu0 0
    %3298 = vmatpush1.bf16.msra.mxu0 0
    %3299 = vmatprep.subr.bf16.mxu0 0
    %3300 = vmatpush1.bf16.msra.mxu0 0
    %3301 = vmatprep.subr.bf16.mxu0 0
    %3302 = vmatpush1.bf16.msra.mxu0 0
    %3303 = vmatprep.subr.bf16.mxu0 0
    %3304 = vmatpush1.bf16.msra.mxu0 %v3287
    %3305 = vmatprep.subr.bf16.mxu0 0
    %3306 = vmatpush2.bf16.msra.mxu0 0
    %3307 = vmatprep.subr.bf16.mxu0 0
    %3308 = vmatpush2.bf16.msra.mxu0 0
    %3309 = vmatprep.subr.bf16.mxu0 0
    %3310 = vmatpush2.bf16.msra.mxu0 0
    %3311 = vmatprep.subr.bf16.mxu0 0
    %3312 = vmatpush2.bf16.msra.mxu0 0
    %3313 = vmatprep.subr.bf16.mxu0 0
    %3314 = vmatpush2.bf16.msra.mxu0 0
    %3315 = vmatprep.subr.bf16.mxu0 0
    %3316 = vmatpush2.bf16.msra.mxu0 0
    %3317 = vmatprep.subr.bf16.mxu0 0
    %3318 = vmatpush2.bf16.msra.mxu0 0
    %3319 = vmatprep.subr.bf16.mxu0 0
    %3320 = vmatpush2.bf16.msra.mxu0 0
    %3321 = vmatprep.mubr.bf16.mxu0 0
    %3322 = vmatmul.mubr.bf16.gmra.mxu0 %v3284
    %v3323 = vpop.f32.mrf.mxu0
    %v3324 = vadd.f32 0.0, %v3323
    %v3325 = vpop.f32.mrf.mxu0
    %v3326 = vpop.f32.mrf.mxu0
    %v3327 = vpop.f32.mrf.mxu0
    %3328 = vdwg.mxu0
    %3329 = vrot.lane.b32.xlu0 %v2892, 104
    %v3330 = vpop.permute.xlu0 %3329
    %v3332 = vsel %vm432, %v3279, 0
    %v3335 = vsel %vm506, %v3330, 0
    %3337 = vmatprep.subr.bf16.mxu0 0
    %3338 = vmatpush1.bf16.msra.mxu0 0
    %3339 = vmatprep.subr.bf16.mxu0 0
    %3340 = vmatpush1.bf16.msra.mxu0 0
    %3341 = vmatprep.subr.bf16.mxu0 0
    %3342 = vmatpush1.bf16.msra.mxu0 0
    %3343 = vmatprep.subr.bf16.mxu0 0
    %3344 = vmatpush1.bf16.msra.mxu0 0
    %3345 = vmatprep.subr.bf16.mxu0 0
    %3346 = vmatpush1.bf16.msra.mxu0 0
    %3347 = vmatprep.subr.bf16.mxu0 0
    %3348 = vmatpush1.bf16.msra.mxu0 0
    %3349 = vmatprep.subr.bf16.mxu0 0
    %3350 = vmatpush1.bf16.msra.mxu0 0
    %3351 = vmatprep.subr.bf16.mxu0 0
    %3352 = vmatpush1.bf16.msra.mxu0 %v3335
    %3353 = vmatprep.subr.bf16.mxu0 0
    %3354 = vmatpush2.bf16.msra.mxu0 0
    %3355 = vmatprep.subr.bf16.mxu0 0
    %3356 = vmatpush2.bf16.msra.mxu0 0
    %3357 = vmatprep.subr.bf16.mxu0 0
    %3358 = vmatpush2.bf16.msra.mxu0 0
    %3359 = vmatprep.subr.bf16.mxu0 0
    %3360 = vmatpush2.bf16.msra.mxu0 0
    %3361 = vmatprep.subr.bf16.mxu0 0
    %3362 = vmatpush2.bf16.msra.mxu0 0
    %3363 = vmatprep.subr.bf16.mxu0 0
    %3364 = vmatpush2.bf16.msra.mxu0 0
    %3365 = vmatprep.subr.bf16.mxu0 0
    %3366 = vmatpush2.bf16.msra.mxu0 0
    %3367 = vmatprep.subr.bf16.mxu0 0
    %3368 = vmatpush2.bf16.msra.mxu0 0
    %3369 = vmatprep.mubr.bf16.mxu0 0
    %3370 = vmatmul.mubr.bf16.gmra.mxu0 %v3332
    %v3371 = vpop.f32.mrf.mxu0
    %v3372 = vadd.f32 %v3324, %v3371
    %v3373 = vpop.f32.mrf.mxu0
    %v3374 = vpop.f32.mrf.mxu0
    %v3375 = vpop.f32.mrf.mxu0
    %3376 = vdwg.mxu0
    %v3377 = vrcp.pop %v3278
    %v3378 = vmul.f32 %v3372, %v3377
    %3380 = vrot.lane.b32.xlu0 %v2942, 8
    %v3381 = vpop.permute.xlu0 %3380
    %3384 = vrot.lane.b32.xlu0 %v3160, 16
    %v3385 = vpop.permute.xlu0 %3384
    %3388 = vrot.lane.b32.xlu0 %v3378, 24
    %v3389 = vpop.permute.xlu0 %3388
    %v3391 = vsel %vm332, %v2708, %v3381
    %v3392 = vsel %vm1235, %v3391, %v3385
    %v3393 = vsel %vm1237, %v3392, %v3389
    %v3394 = vpack.c.bf16 %v2488, %v2488
    %v3396 = vsel %vm332, %v3394, 0
    %3398 = vmatprep.subr.bf16.mxu0 0
    %3399 = vmatpush1.bf16.xpose.msra.mxu0 0
    %3400 = vmatprep.subr.bf16.mxu0 0
    %3401 = vmatpush1.bf16.xpose.msra.mxu0 0
    %3402 = vmatprep.subr.bf16.mxu0 0
    %3403 = vmatpush1.bf16.xpose.msra.mxu0 0
    %3404 = vmatprep.subr.bf16.mxu0 0
    %3405 = vmatpush1.bf16.xpose.msra.mxu0 0
    %3406 = vmatprep.subr.bf16.mxu0 0
    %3407 = vmatpush1.bf16.xpose.msra.mxu0 0
    %3408 = vmatprep.subr.bf16.mxu0 0
    %3409 = vmatpush1.bf16.xpose.msra.mxu0 0
    %3410 = vmatprep.subr.bf16.mxu0 0
    %3411 = vmatpush1.bf16.xpose.msra.mxu0 0
    %3412 = vmatprep.subr.bf16.mxu0 0
    %3413 = vmatpush1.bf16.xpose.msra.mxu0 %v2500
    %3414 = vmatprep.subr.bf16.mxu0 0
    %3415 = vmatpush2.bf16.xpose.msra.mxu0 0
    %3416 = vmatprep.subr.bf16.mxu0 0
    %3417 = vmatpush2.bf16.xpose.msra.mxu0 0
    %3418 = vmatprep.subr.bf16.mxu0 0
    %3419 = vmatpush2.bf16.xpose.msra.mxu0 0
    %3420 = vmatprep.subr.bf16.mxu0 0
    %3421 = vmatpush2.bf16.xpose.msra.mxu0 0
    %3422 = vmatprep.subr.bf16.mxu0 0
    %3423 = vmatpush2.bf16.xpose.msra.mxu0 0
    %3424 = vmatprep.subr.bf16.mxu0 0
    %3425 = vmatpush2.bf16.xpose.msra.mxu0 0
    %3426 = vmatprep.subr.bf16.mxu0 0
    %3427 = vmatpush2.bf16.xpose.msra.mxu0 0
    %3428 = vmatprep.subr.bf16.mxu0 0
    %3429 = vmatpush2.bf16.xpose.msra.mxu0 0
    %3430 = vmatprep.mubr.bf16.mxu0 0
    %3431 = vmatmul.mubr.bf16.gmra.mxu0 %v3396
    %v3432 = vpop.f32.mrf.mxu0
    %v3433 = vadd.f32 0.0, %v3432
    %v3434 = vpop.f32.mrf.mxu0
    %v3435 = vpop.f32.mrf.mxu0
    %v3436 = vpop.f32.mrf.mxu0
    %3437 = vdwg.mxu0
    %v3438 = vmul.f32 %v3433, 0.35355338
    %3440 = vrot.lane.b32.xlu0 %v3394, 96
    %v3441 = vpop.permute.xlu0 %3440
    %v3443 = vsel %vm332, %v3441, 0
    %3445 = vmatprep.subr.bf16.mxu0 0
    %3446 = vmatpush1.bf16.xpose.msra.mxu0 0
    %3447 = vmatprep.subr.bf16.mxu0 0
    %3448 = vmatpush1.bf16.xpose.msra.mxu0 0
    %3449 = vmatprep.subr.bf16.mxu0 0
    %3450 = vmatpush1.bf16.xpose.msra.mxu0 0
    %3451 = vmatprep.subr.bf16.mxu0 0
    %3452 = vmatpush1.bf16.xpose.msra.mxu0 0
    %3453 = vmatprep.subr.bf16.mxu0 0
    %3454 = vmatpush1.bf16.xpose.msra.mxu0 0
    %3455 = vmatprep.subr.bf16.mxu0 0
    %3456 = vmatpush1.bf16.xpose.msra.mxu0 0
    %3457 = vmatprep.subr.bf16.mxu0 0
    %3458 = vmatpush1.bf16.xpose.msra.mxu0 0
    %3459 = vmatprep.subr.bf16.mxu0 0
    %3460 = vmatpush1.bf16.xpose.msra.mxu0 %v3443
    %3461 = vmatprep.subr.bf16.mxu0 0
    %3462 = vmatpush2.bf16.xpose.msra.mxu0 0
    %3463 = vmatprep.subr.bf16.mxu0 0
    %3464 = vmatpush2.bf16.xpose.msra.mxu0 0
    %3465 = vmatprep.subr.bf16.mxu0 0
    %3466 = vmatpush2.bf16.xpose.msra.mxu0 0
    %3467 = vmatprep.subr.bf16.mxu0 0
    %3468 = vmatpush2.bf16.xpose.msra.mxu0 0
    %3469 = vmatprep.subr.bf16.mxu0 0
    %3470 = vmatpush2.bf16.xpose.msra.mxu0 0
    %3471 = vmatprep.subr.bf16.mxu0 0
    %3472 = vmatpush2.bf16.xpose.msra.mxu0 0
    %3473 = vmatprep.subr.bf16.mxu0 0
    %3474 = vmatpush2.bf16.xpose.msra.mxu0 0
    %3475 = vmatprep.subr.bf16.mxu0 0
    %3476 = vmatpush2.bf16.xpose.msra.mxu0 0
    %3477 = vmatprep.mubr.bf16.mxu0 0
    %3478 = vmatmul.mubr.bf16.gmra.mxu0 %v3396
    %v3479 = vpop.f32.mrf.mxu0
    %v3480 = vadd.f32 0.0, %v3479
    %v3481 = vpop.f32.mrf.mxu0
    %v3482 = vpop.f32.mrf.mxu0
    %v3483 = vpop.f32.mrf.mxu0
    %3484 = vdwg.mxu0
    %v3485 = vmul.f32 %v3480, 0.35355338
    %v3486 = vadd.f32 %v3485, %v1334
    %v3487 = vsel %vm432, %v3438, -inf
    %3488 = vmax.xlane.f32.xlu0 %v3487
    %v3489 = vpop.xlane.xlu0 %3488
    %v3490 = vsel %vm332, %v3486, -inf
    %3491 = vmax.xlane.f32.xlu0 %v3490
    %v3492 = vpop.xlane.xlu0 %3491
    %v3493 = vmax.f32 %v3489, %v3492
    %v3494 = vsub.f32 %v3438, %v3493
    %v3495 = vmul.f32 %v3494, 1.442695
    %v3496 = vpow.pop %v3495
    %v3497 = vsub.f32 %v3486, %v3493
    %v3498 = vmul.f32 %v3497, 1.442695
    %v3499 = vpow.pop %v3498
    %v3500 = vsel %vm432, %v3496, 0.0
    %3501 = vadd.xlane.f32.xlu0 %v3500
    %v3502 = vpop.xlane.xlu0 %3501
    %v3503 = vsel %vm332, %v3499, 0.0
    %3504 = vadd.xlane.f32.xlu0 %v3503
    %v3505 = vpop.xlane.xlu0 %3504
    %v3506 = vadd.f32 %v3502, %v3505
    %v3507 = vpack.c.bf16 %v3496, %v3496
    %v3508 = vpack.c.bf16 %v3499, %v3499
    %3509 = vrot.lane.b32.xlu0 %v3394, 64
    %v3510 = vpop.permute.xlu0 %3509
    %v3512 = vsel %vm332, %v3508, 0
    %v3515 = vsel %vm121, %v3510, 0
    %3517 = vmatprep.subr.bf16.mxu0 0
    %3518 = vmatpush1.bf16.msra.mxu0 0
    %3519 = vmatprep.subr.bf16.mxu0 0
    %3520 = vmatpush1.bf16.msra.mxu0 0
    %3521 = vmatprep.subr.bf16.mxu0 0
    %3522 = vmatpush1.bf16.msra.mxu0 0
    %3523 = vmatprep.subr.bf16.mxu0 0
    %3524 = vmatpush1.bf16.msra.mxu0 0
    %3525 = vmatprep.subr.bf16.mxu0 0
    %3526 = vmatpush1.bf16.msra.mxu0 0
    %3527 = vmatprep.subr.bf16.mxu0 0
    %3528 = vmatpush1.bf16.msra.mxu0 0
    %3529 = vmatprep.subr.bf16.mxu0 0
    %3530 = vmatpush1.bf16.msra.mxu0 0
    %3531 = vmatprep.subr.bf16.mxu0 0
    %3532 = vmatpush1.bf16.msra.mxu0 %v3515
    %3533 = vmatprep.subr.bf16.mxu0 0
    %3534 = vmatpush2.bf16.msra.mxu0 0
    %3535 = vmatprep.subr.bf16.mxu0 0
    %3536 = vmatpush2.bf16.msra.mxu0 0
    %3537 = vmatprep.subr.bf16.mxu0 0
    %3538 = vmatpush2.bf16.msra.mxu0 0
    %3539 = vmatprep.subr.bf16.mxu0 0
    %3540 = vmatpush2.bf16.msra.mxu0 0
    %3541 = vmatprep.subr.bf16.mxu0 0
    %3542 = vmatpush2.bf16.msra.mxu0 0
    %3543 = vmatprep.subr.bf16.mxu0 0
    %3544 = vmatpush2.bf16.msra.mxu0 0
    %3545 = vmatprep.subr.bf16.mxu0 0
    %3546 = vmatpush2.bf16.msra.mxu0 0
    %3547 = vmatprep.subr.bf16.mxu0 0
    %3548 = vmatpush2.bf16.msra.mxu0 0
    %3549 = vmatprep.mubr.bf16.mxu0 0
    %3550 = vmatmul.mubr.bf16.gmra.mxu0 %v3512
    %v3551 = vpop.f32.mrf.mxu0
    %v3552 = vadd.f32 0.0, %v3551
    %v3553 = vpop.f32.mrf.mxu0
    %v3554 = vpop.f32.mrf.mxu0
    %v3555 = vpop.f32.mrf.mxu0
    %3556 = vdwg.mxu0
    %v3558 = vsel %vm432, %v3507, 0
    %3560 = vmatprep.subr.bf16.mxu0 0
    %3561 = vmatpush1.bf16.msra.mxu0 0
    %3562 = vmatprep.subr.bf16.mxu0 0
    %3563 = vmatpush1.bf16.msra.mxu0 0
    %3564 = vmatprep.subr.bf16.mxu0 0
    %3565 = vmatpush1.bf16.msra.mxu0 0
    %3566 = vmatprep.subr.bf16.mxu0 0
    %3567 = vmatpush1.bf16.msra.mxu0 0
    %3568 = vmatprep.subr.bf16.mxu0 0
    %3569 = vmatpush1.bf16.msra.mxu0 0
    %3570 = vmatprep.subr.bf16.mxu0 0
    %3571 = vmatpush1.bf16.msra.mxu0 0
    %3572 = vmatprep.subr.bf16.mxu0 0
    %3573 = vmatpush1.bf16.msra.mxu0 0
    %3574 = vmatprep.subr.bf16.mxu0 0
    %3575 = vmatpush1.bf16.msra.mxu0 %v2665
    %3576 = vmatprep.subr.bf16.mxu0 0
    %3577 = vmatpush2.bf16.msra.mxu0 0
    %3578 = vmatprep.subr.bf16.mxu0 0
    %3579 = vmatpush2.bf16.msra.mxu0 0
    %3580 = vmatprep.subr.bf16.mxu0 0
    %3581 = vmatpush2.bf16.msra.mxu0 0
    %3582 = vmatprep.subr.bf16.mxu0 0
    %3583 = vmatpush2.bf16.msra.mxu0 0
    %3584 = vmatprep.subr.bf16.mxu0 0
    %3585 = vmatpush2.bf16.msra.mxu0 0
    %3586 = vmatprep.subr.bf16.mxu0 0
    %3587 = vmatpush2.bf16.msra.mxu0 0
    %3588 = vmatprep.subr.bf16.mxu0 0
    %3589 = vmatpush2.bf16.msra.mxu0 0
    %3590 = vmatprep.subr.bf16.mxu0 0
    %3591 = vmatpush2.bf16.msra.mxu0 0
    %3592 = vmatprep.mubr.bf16.mxu0 0
    %3593 = vmatmul.mubr.bf16.gmra.mxu0 %v3558
    %v3594 = vpop.f32.mrf.mxu0
    %v3595 = vadd.f32 %v3552, %v3594
    %v3596 = vpop.f32.mrf.mxu0
    %v3597 = vpop.f32.mrf.mxu0
    %v3598 = vpop.f32.mrf.mxu0
    %3599 = vdwg.mxu0
    %v3600 = vrcp.pop %v3506
    %v3601 = vmul.f32 %v3595, %v3600
    %3602 = vrot.lane.b32.xlu0 %v3394, 120
    %v3603 = vpop.permute.xlu0 %3602
    %v3605 = vsel %vm332, %v3603, 0
    %3607 = vmatprep.subr.bf16.mxu0 0
    %3608 = vmatpush1.bf16.xpose.msra.mxu0 0
    %3609 = vmatprep.subr.bf16.mxu0 0
    %3610 = vmatpush1.bf16.xpose.msra.mxu0 0
    %3611 = vmatprep.subr.bf16.mxu0 0
    %3612 = vmatpush1.bf16.xpose.msra.mxu0 0
    %3613 = vmatprep.subr.bf16.mxu0 0
    %3614 = vmatpush1.bf16.xpose.msra.mxu0 0
    %3615 = vmatprep.subr.bf16.mxu0 0
    %3616 = vmatpush1.bf16.xpose.msra.mxu0 0
    %3617 = vmatprep.subr.bf16.mxu0 0
    %3618 = vmatpush1.bf16.xpose.msra.mxu0 0
    %3619 = vmatprep.subr.bf16.mxu0 0
    %3620 = vmatpush1.bf16.xpose.msra.mxu0 0
    %3621 = vmatprep.subr.bf16.mxu0 0
    %3622 = vmatpush1.bf16.xpose.msra.mxu0 %v2725
    %3623 = vmatprep.subr.bf16.mxu0 0
    %3624 = vmatpush2.bf16.xpose.msra.mxu0 0
    %3625 = vmatprep.subr.bf16.mxu0 0
    %3626 = vmatpush2.bf16.xpose.msra.mxu0 0
    %3627 = vmatprep.subr.bf16.mxu0 0
    %3628 = vmatpush2.bf16.xpose.msra.mxu0 0
    %3629 = vmatprep.subr.bf16.mxu0 0
    %3630 = vmatpush2.bf16.xpose.msra.mxu0 0
    %3631 = vmatprep.subr.bf16.mxu0 0
    %3632 = vmatpush2.bf16.xpose.msra.mxu0 0
    %3633 = vmatprep.subr.bf16.mxu0 0
    %3634 = vmatpush2.bf16.xpose.msra.mxu0 0
    %3635 = vmatprep.subr.bf16.mxu0 0
    %3636 = vmatpush2.bf16.xpose.msra.mxu0 0
    %3637 = vmatprep.subr.bf16.mxu0 0
    %3638 = vmatpush2.bf16.xpose.msra.mxu0 0
    %3639 = vmatprep.mubr.bf16.mxu0 0
    %3640 = vmatmul.mubr.bf16.gmra.mxu0 %v3605
    %v3641 = vpop.f32.mrf.mxu0
    %v3642 = vadd.f32 0.0, %v3641
    %v3643 = vpop.f32.mrf.mxu0
    %v3644 = vpop.f32.mrf.mxu0
    %v3645 = vpop.f32.mrf.mxu0
    %3646 = vdwg.mxu0
    %v3647 = vmul.f32 %v3642, 0.35355338
    %3648 = vrot.lane.b32.xlu0 %v3394, 88
    %v3649 = vpop.permute.xlu0 %3648
    %v3651 = vsel %vm332, %v3649, 0
    %3653 = vmatprep.subr.bf16.mxu0 0
    %3654 = vmatpush1.bf16.xpose.msra.mxu0 0
    %3655 = vmatprep.subr.bf16.mxu0 0
    %3656 = vmatpush1.bf16.xpose.msra.mxu0 0
    %3657 = vmatprep.subr.bf16.mxu0 0
    %3658 = vmatpush1.bf16.xpose.msra.mxu0 0
    %3659 = vmatprep.subr.bf16.mxu0 0
    %3660 = vmatpush1.bf16.xpose.msra.mxu0 0
    %3661 = vmatprep.subr.bf16.mxu0 0
    %3662 = vmatpush1.bf16.xpose.msra.mxu0 0
    %3663 = vmatprep.subr.bf16.mxu0 0
    %3664 = vmatpush1.bf16.xpose.msra.mxu0 0
    %3665 = vmatprep.subr.bf16.mxu0 0
    %3666 = vmatpush1.bf16.xpose.msra.mxu0 0
    %3667 = vmatprep.subr.bf16.mxu0 0
    %3668 = vmatpush1.bf16.xpose.msra.mxu0 %v3651
    %3669 = vmatprep.subr.bf16.mxu0 0
    %3670 = vmatpush2.bf16.xpose.msra.mxu0 0
    %3671 = vmatprep.subr.bf16.mxu0 0
    %3672 = vmatpush2.bf16.xpose.msra.mxu0 0
    %3673 = vmatprep.subr.bf16.mxu0 0
    %3674 = vmatpush2.bf16.xpose.msra.mxu0 0
    %3675 = vmatprep.subr.bf16.mxu0 0
    %3676 = vmatpush2.bf16.xpose.msra.mxu0 0
    %3677 = vmatprep.subr.bf16.mxu0 0
    %3678 = vmatpush2.bf16.xpose.msra.mxu0 0
    %3679 = vmatprep.subr.bf16.mxu0 0
    %3680 = vmatpush2.bf16.xpose.msra.mxu0 0
    %3681 = vmatprep.subr.bf16.mxu0 0
    %3682 = vmatpush2.bf16.xpose.msra.mxu0 0
    %3683 = vmatprep.subr.bf16.mxu0 0
    %3684 = vmatpush2.bf16.xpose.msra.mxu0 0
    %3685 = vmatprep.mubr.bf16.mxu0 0
    %3686 = vmatmul.mubr.bf16.gmra.mxu0 %v3605
    %v3687 = vpop.f32.mrf.mxu0
    %v3688 = vadd.f32 0.0, %v3687
    %v3689 = vpop.f32.mrf.mxu0
    %v3690 = vpop.f32.mrf.mxu0
    %v3691 = vpop.f32.mrf.mxu0
    %3692 = vdwg.mxu0
    %v3693 = vmul.f32 %v3688, 0.35355338
    %v3694 = vadd.f32 %v3693, %v1334
    %v3695 = vsel %vm432, %v3647, -inf
    %3696 = vmax.xlane.f32.xlu0 %v3695
    %v3697 = vpop.xlane.xlu0 %3696
    %v3698 = vsel %vm332, %v3694, -inf
    %3699 = vmax.xlane.f32.xlu0 %v3698
    %v3700 = vpop.xlane.xlu0 %3699
    %v3701 = vmax.f32 %v3697, %v3700
    %v3702 = vsub.f32 %v3647, %v3701
    %v3703 = vmul.f32 %v3702, 1.442695
    %v3704 = vpow.pop %v3703
    %v3705 = vsub.f32 %v3694, %v3701
    %v3706 = vmul.f32 %v3705, 1.442695
    %v3707 = vpow.pop %v3706
    %v3708 = vsel %vm432, %v3704, 0.0
    %3709 = vadd.xlane.f32.xlu0 %v3708
    %v3710 = vpop.xlane.xlu0 %3709
    %v3711 = vsel %vm332, %v3707, 0.0
    %3712 = vadd.xlane.f32.xlu0 %v3711
    %v3713 = vpop.xlane.xlu0 %3712
    %v3714 = vadd.f32 %v3710, %v3713
    %v3715 = vpack.c.bf16 %v3704, %v3704
    %v3716 = vpack.c.bf16 %v3707, %v3707
    %3717 = vrot.lane.b32.xlu0 %v3394, 56
    %v3718 = vpop.permute.xlu0 %3717
    %v3720 = vsel %vm332, %v3716, 0
    %v3723 = vsel %vm121, %v3718, 0
    %3725 = vmatprep.subr.bf16.mxu0 0
    %3726 = vmatpush1.bf16.msra.mxu0 0
    %3727 = vmatprep.subr.bf16.mxu0 0
    %3728 = vmatpush1.bf16.msra.mxu0 0
    %3729 = vmatprep.subr.bf16.mxu0 0
    %3730 = vmatpush1.bf16.msra.mxu0 0
    %3731 = vmatprep.subr.bf16.mxu0 0
    %3732 = vmatpush1.bf16.msra.mxu0 0
    %3733 = vmatprep.subr.bf16.mxu0 0
    %3734 = vmatpush1.bf16.msra.mxu0 0
    %3735 = vmatprep.subr.bf16.mxu0 0
    %3736 = vmatpush1.bf16.msra.mxu0 0
    %3737 = vmatprep.subr.bf16.mxu0 0
    %3738 = vmatpush1.bf16.msra.mxu0 0
    %3739 = vmatprep.subr.bf16.mxu0 0
    %3740 = vmatpush1.bf16.msra.mxu0 %v3723
    %3741 = vmatprep.subr.bf16.mxu0 0
    %3742 = vmatpush2.bf16.msra.mxu0 0
    %3743 = vmatprep.subr.bf16.mxu0 0
    %3744 = vmatpush2.bf16.msra.mxu0 0
    %3745 = vmatprep.subr.bf16.mxu0 0
    %3746 = vmatpush2.bf16.msra.mxu0 0
    %3747 = vmatprep.subr.bf16.mxu0 0
    %3748 = vmatpush2.bf16.msra.mxu0 0
    %3749 = vmatprep.subr.bf16.mxu0 0
    %3750 = vmatpush2.bf16.msra.mxu0 0
    %3751 = vmatprep.subr.bf16.mxu0 0
    %3752 = vmatpush2.bf16.msra.mxu0 0
    %3753 = vmatprep.subr.bf16.mxu0 0
    %3754 = vmatpush2.bf16.msra.mxu0 0
    %3755 = vmatprep.subr.bf16.mxu0 0
    %3756 = vmatpush2.bf16.msra.mxu0 0
    %3757 = vmatprep.mubr.bf16.mxu0 0
    %3758 = vmatmul.mubr.bf16.gmra.mxu0 %v3720
    %v3759 = vpop.f32.mrf.mxu0
    %v3760 = vadd.f32 0.0, %v3759
    %v3761 = vpop.f32.mrf.mxu0
    %v3762 = vpop.f32.mrf.mxu0
    %v3763 = vpop.f32.mrf.mxu0
    %3764 = vdwg.mxu0
    %v3766 = vsel %vm432, %v3715, 0
    %3768 = vmatprep.subr.bf16.mxu0 0
    %3769 = vmatpush1.bf16.msra.mxu0 0
    %3770 = vmatprep.subr.bf16.mxu0 0
    %3771 = vmatpush1.bf16.msra.mxu0 0
    %3772 = vmatprep.subr.bf16.mxu0 0
    %3773 = vmatpush1.bf16.msra.mxu0 0
    %3774 = vmatprep.subr.bf16.mxu0 0
    %3775 = vmatpush1.bf16.msra.mxu0 0
    %3776 = vmatprep.subr.bf16.mxu0 0
    %3777 = vmatpush1.bf16.msra.mxu0 0
    %3778 = vmatprep.subr.bf16.mxu0 0
    %3779 = vmatpush1.bf16.msra.mxu0 0
    %3780 = vmatprep.subr.bf16.mxu0 0
    %3781 = vmatpush1.bf16.msra.mxu0 0
    %3782 = vmatprep.subr.bf16.mxu0 0
    %3783 = vmatpush1.bf16.msra.mxu0 %v2899
    %3784 = vmatprep.subr.bf16.mxu0 0
    %3785 = vmatpush2.bf16.msra.mxu0 0
    %3786 = vmatprep.subr.bf16.mxu0 0
    %3787 = vmatpush2.bf16.msra.mxu0 0
    %3788 = vmatprep.subr.bf16.mxu0 0
    %3789 = vmatpush2.bf16.msra.mxu0 0
    %3790 = vmatprep.subr.bf16.mxu0 0
    %3791 = vmatpush2.bf16.msra.mxu0 0
    %3792 = vmatprep.subr.bf16.mxu0 0
    %3793 = vmatpush2.bf16.msra.mxu0 0
    %3794 = vmatprep.subr.bf16.mxu0 0
    %3795 = vmatpush2.bf16.msra.mxu0 0
    %3796 = vmatprep.subr.bf16.mxu0 0
    %3797 = vmatpush2.bf16.msra.mxu0 0
    %3798 = vmatprep.subr.bf16.mxu0 0
    %3799 = vmatpush2.bf16.msra.mxu0 0
    %3800 = vmatprep.mubr.bf16.mxu0 0
    %3801 = vmatmul.mubr.bf16.gmra.mxu0 %v3766
    %v3802 = vpop.f32.mrf.mxu0
    %v3803 = vadd.f32 %v3760, %v3802
    %v3804 = vpop.f32.mrf.mxu0
    %v3805 = vpop.f32.mrf.mxu0
    %v3806 = vpop.f32.mrf.mxu0
    %3807 = vdwg.mxu0
    %v3808 = vrcp.pop %v3714
    %v3809 = vmul.f32 %v3803, %v3808
    %3810 = vrot.lane.b32.xlu0 %v3394, 112
    %v3811 = vpop.permute.xlu0 %3810
    %v3813 = vsel %vm332, %v3811, 0
    %3815 = vmatprep.subr.bf16.mxu0 0
    %3816 = vmatpush1.bf16.xpose.msra.mxu0 0
    %3817 = vmatprep.subr.bf16.mxu0 0
    %3818 = vmatpush1.bf16.xpose.msra.mxu0 0
    %3819 = vmatprep.subr.bf16.mxu0 0
    %3820 = vmatpush1.bf16.xpose.msra.mxu0 0
    %3821 = vmatprep.subr.bf16.mxu0 0
    %3822 = vmatpush1.bf16.xpose.msra.mxu0 0
    %3823 = vmatprep.subr.bf16.mxu0 0
    %3824 = vmatpush1.bf16.xpose.msra.mxu0 0
    %3825 = vmatprep.subr.bf16.mxu0 0
    %3826 = vmatpush1.bf16.xpose.msra.mxu0 0
    %3827 = vmatprep.subr.bf16.mxu0 0
    %3828 = vmatpush1.bf16.xpose.msra.mxu0 0
    %3829 = vmatprep.subr.bf16.mxu0 0
    %3830 = vmatpush1.bf16.xpose.msra.mxu0 %v2951
    %3831 = vmatprep.subr.bf16.mxu0 0
    %3832 = vmatpush2.bf16.xpose.msra.mxu0 0
    %3833 = vmatprep.subr.bf16.mxu0 0
    %3834 = vmatpush2.bf16.xpose.msra.mxu0 0
    %3835 = vmatprep.subr.bf16.mxu0 0
    %3836 = vmatpush2.bf16.xpose.msra.mxu0 0
    %3837 = vmatprep.subr.bf16.mxu0 0
    %3838 = vmatpush2.bf16.xpose.msra.mxu0 0
    %3839 = vmatprep.subr.bf16.mxu0 0
    %3840 = vmatpush2.bf16.xpose.msra.mxu0 0
    %3841 = vmatprep.subr.bf16.mxu0 0
    %3842 = vmatpush2.bf16.xpose.msra.mxu0 0
    %3843 = vmatprep.subr.bf16.mxu0 0
    %3844 = vmatpush2.bf16.xpose.msra.mxu0 0
    %3845 = vmatprep.subr.bf16.mxu0 0
    %3846 = vmatpush2.bf16.xpose.msra.mxu0 0
    %3847 = vmatprep.mubr.bf16.mxu0 0
    %3848 = vmatmul.mubr.bf16.gmra.mxu0 %v3813
    %v3849 = vpop.f32.mrf.mxu0
    %v3850 = vadd.f32 0.0, %v3849
    %v3851 = vpop.f32.mrf.mxu0
    %v3852 = vpop.f32.mrf.mxu0
    %v3853 = vpop.f32.mrf.mxu0
    %3854 = vdwg.mxu0
    %v3855 = vmul.f32 %v3850, 0.35355338
    %3856 = vrot.lane.b32.xlu0 %v3394, 80
    %v3857 = vpop.permute.xlu0 %3856
    %v3859 = vsel %vm332, %v3857, 0
    %3861 = vmatprep.subr.bf16.mxu0 0
    %3862 = vmatpush1.bf16.xpose.msra.mxu0 0
    %3863 = vmatprep.subr.bf16.mxu0 0
    %3864 = vmatpush1.bf16.xpose.msra.mxu0 0
    %3865 = vmatprep.subr.bf16.mxu0 0
    %3866 = vmatpush1.bf16.xpose.msra.mxu0 0
    %3867 = vmatprep.subr.bf16.mxu0 0
    %3868 = vmatpush1.bf16.xpose.msra.mxu0 0
    %3869 = vmatprep.subr.bf16.mxu0 0
    %3870 = vmatpush1.bf16.xpose.msra.mxu0 0
    %3871 = vmatprep.subr.bf16.mxu0 0
    %3872 = vmatpush1.bf16.xpose.msra.mxu0 0
    %3873 = vmatprep.subr.bf16.mxu0 0
    %3874 = vmatpush1.bf16.xpose.msra.mxu0 0
    %3875 = vmatprep.subr.bf16.mxu0 0
    %3876 = vmatpush1.bf16.xpose.msra.mxu0 %v3859
    %3877 = vmatprep.subr.bf16.mxu0 0
    %3878 = vmatpush2.bf16.xpose.msra.mxu0 0
    %3879 = vmatprep.subr.bf16.mxu0 0
    %3880 = vmatpush2.bf16.xpose.msra.mxu0 0
    %3881 = vmatprep.subr.bf16.mxu0 0
    %3882 = vmatpush2.bf16.xpose.msra.mxu0 0
    %3883 = vmatprep.subr.bf16.mxu0 0
    %3884 = vmatpush2.bf16.xpose.msra.mxu0 0
    %3885 = vmatprep.subr.bf16.mxu0 0
    %3886 = vmatpush2.bf16.xpose.msra.mxu0 0
    %3887 = vmatprep.subr.bf16.mxu0 0
    %3888 = vmatpush2.bf16.xpose.msra.mxu0 0
    %3889 = vmatprep.subr.bf16.mxu0 0
    %3890 = vmatpush2.bf16.xpose.msra.mxu0 0
    %3891 = vmatprep.subr.bf16.mxu0 0
    %3892 = vmatpush2.bf16.xpose.msra.mxu0 0
    %3893 = vmatprep.mubr.bf16.mxu0 0
    %3894 = vmatmul.mubr.bf16.gmra.mxu0 %v3813
    %v3895 = vpop.f32.mrf.mxu0
    %v3896 = vadd.f32 0.0, %v3895
    %v3897 = vpop.f32.mrf.mxu0
    %v3898 = vpop.f32.mrf.mxu0
    %v3899 = vpop.f32.mrf.mxu0
    %3900 = vdwg.mxu0
    %v3901 = vmul.f32 %v3896, 0.35355338
    %v3902 = vadd.f32 %v3901, %v1334
    %v3903 = vsel %vm432, %v3855, -inf
    %3904 = vmax.xlane.f32.xlu0 %v3903
    %v3905 = vpop.xlane.xlu0 %3904
    %v3906 = vsel %vm332, %v3902, -inf
    %3907 = vmax.xlane.f32.xlu0 %v3906
    %v3908 = vpop.xlane.xlu0 %3907
    %v3909 = vmax.f32 %v3905, %v3908
    %v3910 = vsub.f32 %v3855, %v3909
    %v3911 = vmul.f32 %v3910, 1.442695
    %v3912 = vpow.pop %v3911
    %v3913 = vsub.f32 %v3902, %v3909
    %v3914 = vmul.f32 %v3913, 1.442695
    %v3915 = vpow.pop %v3914
    %v3916 = vsel %vm432, %v3912, 0.0
    %3917 = vadd.xlane.f32.xlu0 %v3916
    %v3918 = vpop.xlane.xlu0 %3917
    %v3919 = vsel %vm332, %v3915, 0.0
    %3920 = vadd.xlane.f32.xlu0 %v3919
    %v3921 = vpop.xlane.xlu0 %3920
    %v3922 = vadd.f32 %v3918, %v3921
    %v3923 = vpack.c.bf16 %v3912, %v3912
    %v3924 = vpack.c.bf16 %v3915, %v3915
    %3925 = vrot.lane.b32.xlu0 %v3394, 48
    %v3926 = vpop.permute.xlu0 %3925
    %v3928 = vsel %vm332, %v3924, 0
    %v3931 = vsel %vm121, %v3926, 0
    %3933 = vmatprep.subr.bf16.mxu0 0
    %3934 = vmatpush1.bf16.msra.mxu0 0
    %3935 = vmatprep.subr.bf16.mxu0 0
    %3936 = vmatpush1.bf16.msra.mxu0 0
    %3937 = vmatprep.subr.bf16.mxu0 0
    %3938 = vmatpush1.bf16.msra.mxu0 0
    %3939 = vmatprep.subr.bf16.mxu0 0
    %3940 = vmatpush1.bf16.msra.mxu0 0
    %3941 = vmatprep.subr.bf16.mxu0 0
    %3942 = vmatpush1.bf16.msra.mxu0 0
    %3943 = vmatprep.subr.bf16.mxu0 0
    %3944 = vmatpush1.bf16.msra.mxu0 0
    %3945 = vmatprep.subr.bf16.mxu0 0
    %3946 = vmatpush1.bf16.msra.mxu0 0
    %3947 = vmatprep.subr.bf16.mxu0 0
    %3948 = vmatpush1.bf16.msra.mxu0 %v3931
    %3949 = vmatprep.subr.bf16.mxu0 0
    %3950 = vmatpush2.bf16.msra.mxu0 0
    %3951 = vmatprep.subr.bf16.mxu0 0
    %3952 = vmatpush2.bf16.msra.mxu0 0
    %3953 = vmatprep.subr.bf16.mxu0 0
    %3954 = vmatpush2.bf16.msra.mxu0 0
    %3955 = vmatprep.subr.bf16.mxu0 0
    %3956 = vmatpush2.bf16.msra.mxu0 0
    %3957 = vmatprep.subr.bf16.mxu0 0
    %3958 = vmatpush2.bf16.msra.mxu0 0
    %3959 = vmatprep.subr.bf16.mxu0 0
    %3960 = vmatpush2.bf16.msra.mxu0 0
    %3961 = vmatprep.subr.bf16.mxu0 0
    %3962 = vmatpush2.bf16.msra.mxu0 0
    %3963 = vmatprep.subr.bf16.mxu0 0
    %3964 = vmatpush2.bf16.msra.mxu0 0
    %3965 = vmatprep.mubr.bf16.mxu0 0
    %3966 = vmatmul.mubr.bf16.gmra.mxu0 %v3928
    %v3967 = vpop.f32.mrf.mxu0
    %v3968 = vadd.f32 0.0, %v3967
    %v3969 = vpop.f32.mrf.mxu0
    %v3970 = vpop.f32.mrf.mxu0
    %v3971 = vpop.f32.mrf.mxu0
    %3972 = vdwg.mxu0
    %v3974 = vsel %vm432, %v3923, 0
    %3976 = vmatprep.subr.bf16.mxu0 0
    %3977 = vmatpush1.bf16.msra.mxu0 0
    %3978 = vmatprep.subr.bf16.mxu0 0
    %3979 = vmatpush1.bf16.msra.mxu0 0
    %3980 = vmatprep.subr.bf16.mxu0 0
    %3981 = vmatpush1.bf16.msra.mxu0 0
    %3982 = vmatprep.subr.bf16.mxu0 0
    %3983 = vmatpush1.bf16.msra.mxu0 0
    %3984 = vmatprep.subr.bf16.mxu0 0
    %3985 = vmatpush1.bf16.msra.mxu0 0
    %3986 = vmatprep.subr.bf16.mxu0 0
    %3987 = vmatpush1.bf16.msra.mxu0 0
    %3988 = vmatprep.subr.bf16.mxu0 0
    %3989 = vmatpush1.bf16.msra.mxu0 0
    %3990 = vmatprep.subr.bf16.mxu0 0
    %3991 = vmatpush1.bf16.msra.mxu0 %v3117
    %3992 = vmatprep.subr.bf16.mxu0 0
    %3993 = vmatpush2.bf16.msra.mxu0 0
    %3994 = vmatprep.subr.bf16.mxu0 0
    %3995 = vmatpush2.bf16.msra.mxu0 0
    %3996 = vmatprep.subr.bf16.mxu0 0
    %3997 = vmatpush2.bf16.msra.mxu0 0
    %3998 = vmatprep.subr.bf16.mxu0 0
    %3999 = vmatpush2.bf16.msra.mxu0 0
    %4000 = vmatprep.subr.bf16.mxu0 0
    %4001 = vmatpush2.bf16.msra.mxu0 0
    %4002 = vmatprep.subr.bf16.mxu0 0
    %4003 = vmatpush2.bf16.msra.mxu0 0
    %4004 = vmatprep.subr.bf16.mxu0 0
    %4005 = vmatpush2.bf16.msra.mxu0 0
    %4006 = vmatprep.subr.bf16.mxu0 0
    %4007 = vmatpush2.bf16.msra.mxu0 0
    %4008 = vmatprep.mubr.bf16.mxu0 0
    %4009 = vmatmul.mubr.bf16.gmra.mxu0 %v3974
    %v4010 = vpop.f32.mrf.mxu0
    %v4011 = vadd.f32 %v3968, %v4010
    %v4012 = vpop.f32.mrf.mxu0
    %v4013 = vpop.f32.mrf.mxu0
    %v4014 = vpop.f32.mrf.mxu0
    %4015 = vdwg.mxu0
    %v4016 = vrcp.pop %v3922
    %v4017 = vmul.f32 %v4011, %v4016
    %4018 = vrot.lane.b32.xlu0 %v3394, 104
    %v4019 = vpop.permute.xlu0 %4018
    %v4021 = vsel %vm332, %v4019, 0
    %4023 = vmatprep.subr.bf16.mxu0 0
    %4024 = vmatpush1.bf16.xpose.msra.mxu0 0
    %4025 = vmatprep.subr.bf16.mxu0 0
    %4026 = vmatpush1.bf16.xpose.msra.mxu0 0
    %4027 = vmatprep.subr.bf16.mxu0 0
    %4028 = vmatpush1.bf16.xpose.msra.mxu0 0
    %4029 = vmatprep.subr.bf16.mxu0 0
    %4030 = vmatpush1.bf16.xpose.msra.mxu0 0
    %4031 = vmatprep.subr.bf16.mxu0 0
    %4032 = vmatpush1.bf16.xpose.msra.mxu0 0
    %4033 = vmatprep.subr.bf16.mxu0 0
    %4034 = vmatpush1.bf16.xpose.msra.mxu0 0
    %4035 = vmatprep.subr.bf16.mxu0 0
    %4036 = vmatpush1.bf16.xpose.msra.mxu0 0
    %4037 = vmatprep.subr.bf16.mxu0 0
    %4038 = vmatpush1.bf16.xpose.msra.mxu0 %v3169
    %4039 = vmatprep.subr.bf16.mxu0 0
    %4040 = vmatpush2.bf16.xpose.msra.mxu0 0
    %4041 = vmatprep.subr.bf16.mxu0 0
    %4042 = vmatpush2.bf16.xpose.msra.mxu0 0
    %4043 = vmatprep.subr.bf16.mxu0 0
    %4044 = vmatpush2.bf16.xpose.msra.mxu0 0
    %4045 = vmatprep.subr.bf16.mxu0 0
    %4046 = vmatpush2.bf16.xpose.msra.mxu0 0
    %4047 = vmatprep.subr.bf16.mxu0 0
    %4048 = vmatpush2.bf16.xpose.msra.mxu0 0
    %4049 = vmatprep.subr.bf16.mxu0 0
    %4050 = vmatpush2.bf16.xpose.msra.mxu0 0
    %4051 = vmatprep.subr.bf16.mxu0 0
    %4052 = vmatpush2.bf16.xpose.msra.mxu0 0
    %4053 = vmatprep.subr.bf16.mxu0 0
    %4054 = vmatpush2.bf16.xpose.msra.mxu0 0
    %4055 = vmatprep.mubr.bf16.mxu0 0
    %4056 = vmatmul.mubr.bf16.gmra.mxu0 %v4021
    %v4057 = vpop.f32.mrf.mxu0
    %v4058 = vadd.f32 0.0, %v4057
    %v4059 = vpop.f32.mrf.mxu0
    %v4060 = vpop.f32.mrf.mxu0
    %v4061 = vpop.f32.mrf.mxu0
    %4062 = vdwg.mxu0
    %v4063 = vmul.f32 %v4058, 0.35355338
    %4064 = vrot.lane.b32.xlu0 %v3394, 72
    %v4065 = vpop.permute.xlu0 %4064
    %v4067 = vsel %vm332, %v4065, 0
    %4069 = vmatprep.subr.bf16.mxu0 0
    %4070 = vmatpush1.bf16.xpose.msra.mxu0 0
    %4071 = vmatprep.subr.bf16.mxu0 0
    %4072 = vmatpush1.bf16.xpose.msra.mxu0 0
    %4073 = vmatprep.subr.bf16.mxu0 0
    %4074 = vmatpush1.bf16.xpose.msra.mxu0 0
    %4075 = vmatprep.subr.bf16.mxu0 0
    %4076 = vmatpush1.bf16.xpose.msra.mxu0 0
    %4077 = vmatprep.subr.bf16.mxu0 0
    %4078 = vmatpush1.bf16.xpose.msra.mxu0 0
    %4079 = vmatprep.subr.bf16.mxu0 0
    %4080 = vmatpush1.bf16.xpose.msra.mxu0 0
    %4081 = vmatprep.subr.bf16.mxu0 0
    %4082 = vmatpush1.bf16.xpose.msra.mxu0 0
    %4083 = vmatprep.subr.bf16.mxu0 0
    %4084 = vmatpush1.bf16.xpose.msra.mxu0 %v4067
    %4085 = vmatprep.subr.bf16.mxu0 0
    %4086 = vmatpush2.bf16.xpose.msra.mxu0 0
    %4087 = vmatprep.subr.bf16.mxu0 0
    %4088 = vmatpush2.bf16.xpose.msra.mxu0 0
    %4089 = vmatprep.subr.bf16.mxu0 0
    %4090 = vmatpush2.bf16.xpose.msra.mxu0 0
    %4091 = vmatprep.subr.bf16.mxu0 0
    %4092 = vmatpush2.bf16.xpose.msra.mxu0 0
    %4093 = vmatprep.subr.bf16.mxu0 0
    %4094 = vmatpush2.bf16.xpose.msra.mxu0 0
    %4095 = vmatprep.subr.bf16.mxu0 0
    %4096 = vmatpush2.bf16.xpose.msra.mxu0 0
    %4097 = vmatprep.subr.bf16.mxu0 0
    %4098 = vmatpush2.bf16.xpose.msra.mxu0 0
    %4099 = vmatprep.subr.bf16.mxu0 0
    %4100 = vmatpush2.bf16.xpose.msra.mxu0 0
    %4101 = vmatprep.mubr.bf16.mxu0 0
    %4102 = vmatmul.mubr.bf16.gmra.mxu0 %v4021
    %v4103 = vpop.f32.mrf.mxu0
    %v4104 = vadd.f32 0.0, %v4103
    %v4105 = vpop.f32.mrf.mxu0
    %v4106 = vpop.f32.mrf.mxu0
    %v4107 = vpop.f32.mrf.mxu0
    %4108 = vdwg.mxu0
    %v4109 = vmul.f32 %v4104, 0.35355338
    %v4110 = vadd.f32 %v4109, %v1334
    %v4111 = vsel %vm432, %v4063, -inf
    %4112 = vmax.xlane.f32.xlu0 %v4111
    %v4113 = vpop.xlane.xlu0 %4112
    %v4114 = vsel %vm332, %v4110, -inf
    %4115 = vmax.xlane.f32.xlu0 %v4114
    %v4116 = vpop.xlane.xlu0 %4115
    %v4117 = vmax.f32 %v4113, %v4116
    %v4118 = vsub.f32 %v4063, %v4117
    %v4119 = vmul.f32 %v4118, 1.442695
    %v4120 = vpow.pop %v4119
    %v4121 = vsub.f32 %v4110, %v4117
    %v4122 = vmul.f32 %v4121, 1.442695
    %v4123 = vpow.pop %v4122
    %v4124 = vsel %vm432, %v4120, 0.0
    %4125 = vadd.xlane.f32.xlu0 %v4124
    %v4126 = vpop.xlane.xlu0 %4125
    %v4127 = vsel %vm332, %v4123, 0.0
    %4128 = vadd.xlane.f32.xlu0 %v4127
    %v4129 = vpop.xlane.xlu0 %4128
    %v4130 = vadd.f32 %v4126, %v4129
    %v4131 = vpack.c.bf16 %v4120, %v4120
    %v4132 = vpack.c.bf16 %v4123, %v4123
    %4133 = vrot.lane.b32.xlu0 %v3394, 40
    %v4134 = vpop.permute.xlu0 %4133
    %v4136 = vsel %vm332, %v4132, 0
    %v4139 = vsel %vm121, %v4134, 0
    %4141 = vmatprep.subr.bf16.mxu0 0
    %4142 = vmatpush1.bf16.msra.mxu0 0
    %4143 = vmatprep.subr.bf16.mxu0 0
    %4144 = vmatpush1.bf16.msra.mxu0 0
    %4145 = vmatprep.subr.bf16.mxu0 0
    %4146 = vmatpush1.bf16.msra.mxu0 0
    %4147 = vmatprep.subr.bf16.mxu0 0
    %4148 = vmatpush1.bf16.msra.mxu0 0
    %4149 = vmatprep.subr.bf16.mxu0 0
    %4150 = vmatpush1.bf16.msra.mxu0 0
    %4151 = vmatprep.subr.bf16.mxu0 0
    %4152 = vmatpush1.bf16.msra.mxu0 0
    %4153 = vmatprep.subr.bf16.mxu0 0
    %4154 = vmatpush1.bf16.msra.mxu0 0
    %4155 = vmatprep.subr.bf16.mxu0 0
    %4156 = vmatpush1.bf16.msra.mxu0 %v4139
    %4157 = vmatprep.subr.bf16.mxu0 0
    %4158 = vmatpush2.bf16.msra.mxu0 0
    %4159 = vmatprep.subr.bf16.mxu0 0
    %4160 = vmatpush2.bf16.msra.mxu0 0
    %4161 = vmatprep.subr.bf16.mxu0 0
    %4162 = vmatpush2.bf16.msra.mxu0 0
    %4163 = vmatprep.subr.bf16.mxu0 0
    %4164 = vmatpush2.bf16.msra.mxu0 0
    %4165 = vmatprep.subr.bf16.mxu0 0
    %4166 = vmatpush2.bf16.msra.mxu0 0
    %4167 = vmatprep.subr.bf16.mxu0 0
    %4168 = vmatpush2.bf16.msra.mxu0 0
    %4169 = vmatprep.subr.bf16.mxu0 0
    %4170 = vmatpush2.bf16.msra.mxu0 0
    %4171 = vmatprep.subr.bf16.mxu0 0
    %4172 = vmatpush2.bf16.msra.mxu0 0
    %4173 = vmatprep.mubr.bf16.mxu0 0
    %4174 = vmatmul.mubr.bf16.gmra.mxu0 %v4136
    %v4175 = vpop.f32.mrf.mxu0
    %v4176 = vadd.f32 0.0, %v4175
    %v4177 = vpop.f32.mrf.mxu0
    %v4178 = vpop.f32.mrf.mxu0
    %v4179 = vpop.f32.mrf.mxu0
    %4180 = vdwg.mxu0
    %v4182 = vsel %vm432, %v4131, 0
    %4184 = vmatprep.subr.bf16.mxu0 0
    %4185 = vmatpush1.bf16.msra.mxu0 0
    %4186 = vmatprep.subr.bf16.mxu0 0
    %4187 = vmatpush1.bf16.msra.mxu0 0
    %4188 = vmatprep.subr.bf16.mxu0 0
    %4189 = vmatpush1.bf16.msra.mxu0 0
    %4190 = vmatprep.subr.bf16.mxu0 0
    %4191 = vmatpush1.bf16.msra.mxu0 0
    %4192 = vmatprep.subr.bf16.mxu0 0
    %4193 = vmatpush1.bf16.msra.mxu0 0
    %4194 = vmatprep.subr.bf16.mxu0 0
    %4195 = vmatpush1.bf16.msra.mxu0 0
    %4196 = vmatprep.subr.bf16.mxu0 0
    %4197 = vmatpush1.bf16.msra.mxu0 0
    %4198 = vmatprep.subr.bf16.mxu0 0
    %4199 = vmatpush1.bf16.msra.mxu0 %v3335
    %4200 = vmatprep.subr.bf16.mxu0 0
    %4201 = vmatpush2.bf16.msra.mxu0 0
    %4202 = vmatprep.subr.bf16.mxu0 0
    %4203 = vmatpush2.bf16.msra.mxu0 0
    %4204 = vmatprep.subr.bf16.mxu0 0
    %4205 = vmatpush2.bf16.msra.mxu0 0
    %4206 = vmatprep.subr.bf16.mxu0 0
    %4207 = vmatpush2.bf16.msra.mxu0 0
    %4208 = vmatprep.subr.bf16.mxu0 0
    %4209 = vmatpush2.bf16.msra.mxu0 0
    %4210 = vmatprep.subr.bf16.mxu0 0
    %4211 = vmatpush2.bf16.msra.mxu0 0
    %4212 = vmatprep.subr.bf16.mxu0 0
    %4213 = vmatpush2.bf16.msra.mxu0 0
    %4214 = vmatprep.subr.bf16.mxu0 0
    %4215 = vmatpush2.bf16.msra.mxu0 0
    %4216 = vmatprep.mubr.bf16.mxu0 0
    %4217 = vmatmul.mubr.bf16.gmra.mxu0 %v4182
    %v4218 = vpop.f32.mrf.mxu0
    %v4219 = vadd.f32 %v4176, %v4218
    %v4220 = vpop.f32.mrf.mxu0
    %v4221 = vpop.f32.mrf.mxu0
    %v4222 = vpop.f32.mrf.mxu0
    %4223 = vdwg.mxu0
    %v4224 = vrcp.pop %v4130
    %v4225 = vmul.f32 %v4219, %v4224
    %4227 = vrot.lane.b32.xlu0 %v3809, 8
    %v4228 = vpop.permute.xlu0 %4227
    %4231 = vrot.lane.b32.xlu0 %v4017, 16
    %v4232 = vpop.permute.xlu0 %4231
    %4235 = vrot.lane.b32.xlu0 %v4225, 24
    %v4236 = vpop.permute.xlu0 %4235
    %v4238 = vsel %vm332, %v3601, %v4228
    %v4239 = vsel %vm1235, %v4238, %v4232
    %v4240 = vsel %vm1237, %v4239, %v4236
    %v4241 = vpack.c.bf16 %v4240, %v3393
    %s4242 = scalar_lea.vmem %s9, 16
    %v4243 = vld [vmem:[%s4242] sm:$0xf]
    %v4244 = vld [vmem:[%s4242 + $0x4] sm:$0xf]
    %v4245 = vld [vmem:[%s4242 + $0x8] sm:$0xf]
    %v4246 = vld [vmem:[%s4242 + $0xc] sm:$0xf]
    %s4247 = scalar_lea.vmem %s10, 1
    %v4248 = vld [vmem:[%s4247] sm:$0x1]
    %v4250 = vlaneseq
    %v4251 = vshrl.u32 %v4250, 7
    %v4252 = vsub.s32 0, %v4251
    %v4253 = vrot.slane %v4248, %v4252
    %v4259 = vunpack.c.l.b16 %v4243
    %v4260 = vunpack.c.l.b16 %v4244
    %v4261 = vunpack.c.l.b16 %v4245
    %v4262 = vunpack.c.l.b16 %v4246
    %v4263 = vpack.c.b16 %v4260, %v4259
    %v4264 = vpack.c.b16 %v4262, %v4261
    %v4268 = vsel %vm213, %v4241, 0
    %4270 = vmatprep.subr.bf16.mxu0 0
    %4271 = vmatpush1.bf16.msra.mxu0 0
    %4272 = vmatprep.subr.bf16.mxu0 0
    %4273 = vmatpush1.bf16.msra.mxu0 0
    %4274 = vmatprep.subr.bf16.mxu0 0
    %4275 = vmatpush1.bf16.msra.mxu0 0
    %4276 = vmatprep.subr.bf16.mxu0 0
    %4277 = vmatpush1.bf16.msra.mxu0 0
    %4278 = vmatprep.subr.bf16.mxu0 0
    %4279 = vmatpush1.bf16.msra.mxu0 0
    %4280 = vmatprep.subr.bf16.mxu0 0
    %4281 = vmatpush1.bf16.msra.mxu0 0
    %4282 = vmatprep.subr.bf16.mxu0 0
    %4283 = vmatpush1.bf16.msra.mxu0 %v4264
    %4284 = vmatprep.subr.bf16.mxu0 0
    %4285 = vmatpush1.bf16.msra.mxu0 %v4263
    %4286 = vmatprep.subr.bf16.mxu0 0
    %4287 = vmatpush2.bf16.msra.mxu0 0
    %4288 = vmatprep.subr.bf16.mxu0 0
    %4289 = vmatpush2.bf16.msra.mxu0 0
    %4290 = vmatprep.subr.bf16.mxu0 0
    %4291 = vmatpush2.bf16.msra.mxu0 0
    %4292 = vmatprep.subr.bf16.mxu0 0
    %4293 = vmatpush2.bf16.msra.mxu0 0
    %4294 = vmatprep.subr.bf16.mxu0 0
    %4295 = vmatpush2.bf16.msra.mxu0 0
    %4296 = vmatprep.subr.bf16.mxu0 0
    %4297 = vmatpush2.bf16.msra.mxu0 0
    %4298 = vmatprep.subr.bf16.mxu0 0
    %4299 = vmatpush2.bf16.msra.mxu0 0
    %4300 = vmatprep.subr.bf16.mxu0 0
    %4301 = vmatpush2.bf16.msra.mxu0 0
    %4302 = vmatprep.mubr.bf16.mxu0 0
    %4303 = vmatmul.mubr.bf16.gmra.mxu0 %v4268
    %v4304 = vpop.f32.mrf.mxu0
    %v4305 = vadd.f32 %v4253, %v4304
    %v4306 = vpop.f32.mrf.mxu0
    %v4307 = vpop.f32.mrf.mxu0
    %v4308 = vadd.f32 %v4253, %v4307
    %v4309 = vpop.f32.mrf.mxu0
    %4310 = vdwg.mxu0
    %v4311 = vadd.f32 %v4305, %v2419
    %v4312 = vadd.f32 %v4308, %v2420
    %s4313 = scalar_lea.vmem %s11, 1
    %v4314 = vld [vmem:[%s4313] sm:$0x1]
    %s4315 = scalar_lea.vmem %s12, 1
    %v4316 = vld [vmem:[%s4315] sm:$0x1]
    %v4317 = vsel %vm213, %v4311, 0.0
    %4318 = vadd.xlane.f32.xlu0 %v4317
    %v4319 = vpop.xlane.xlu0 %4318
    %v4320 = vsel %vm213, %v4312, 0.0
    %4321 = vadd.xlane.f32.xlu0 %v4320
    %v4322 = vpop.xlane.xlu0 %4321
    %v4323 = vmul.f32 %v4319, %v220
    %v4324 = vmul.f32 %v4322, %v220
    %v4325 = vsub.f32 %v4311, %v4323
    %v4326 = vsub.f32 %v4312, %v4324
    %v4327 = vmul.f32 %v4325, %v4325
    %v4328 = vmul.f32 %v4326, %v4326
    %v4329 = vsel %vm213, %v4327, 0.0
    %4330 = vadd.xlane.f32.xlu0 %v4329
    %v4331 = vpop.xlane.xlu0 %4330
    %v4332 = vsel %vm213, %v4328, 0.0
    %4333 = vadd.xlane.f32.xlu0 %v4332
    %v4334 = vpop.xlane.xlu0 %4333
    %v4335 = vmul.f32 %v4331, %v220
    %v4336 = vmul.f32 %v4334, %v220
    %v4337 = vadd.f32 %v4335, 1e-12
    %v4338 = vadd.f32 %v4336, 1e-12
    %v4339 = vrsqrt.pop %v4337
    %v4340 = vrsqrt.pop %v4338
    %v4341 = vmul.f32 %v4325, %v4339
    %v4342 = vmul.f32 %v4326, %v4340
    %v4344 = vlaneseq
    %v4345 = vshrl.u32 %v4344, 7
    %v4346 = vsub.s32 0, %v4345
    %v4347 = vrot.slane %v4314, %v4346
    %v4349 = vmul.f32 %v4341, %v4347
    %v4350 = vmul.f32 %v4342, %v4347
    %v4352 = vlaneseq
    %v4353 = vshrl.u32 %v4352, 7
    %v4354 = vsub.s32 0, %v4353
    %v4355 = vrot.slane %v4316, %v4354
    %v4357 = vadd.f32 %v4349, %v4355
    %v4358 = vadd.f32 %v4350, %v4355
    %v4359 = vpack.c.bf16 %v4358, %v4357
    %s4360 = scalar_lea.vmem %s13, 16
    %v4361 = vld [vmem:[%s4360] sm:$0xf]
    %v4362 = vld [vmem:[%s4360 + $0x4] sm:$0xf]
    %v4363 = vld [vmem:[%s4360 + $0x8] sm:$0xf]
    %v4364 = vld [vmem:[%s4360 + $0xc] sm:$0xf]
    %s4365 = scalar_lea.vmem %s14, 1
    %v4366 = vld [vmem:[%s4365] sm:$0x1]
    %v4368 = vlaneseq
    %v4369 = vshrl.u32 %v4368, 7
    %v4370 = vsub.s32 0, %v4369
    %v4371 = vrot.slane %v4366, %v4370
    %v4377 = vunpack.c.l.b16 %v4361
    %v4378 = vunpack.c.l.b16 %v4362
    %v4379 = vunpack.c.l.b16 %v4363
    %v4380 = vunpack.c.l.b16 %v4364
    %v4381 = vpack.c.b16 %v4378, %v4377
    %v4382 = vpack.c.b16 %v4380, %v4379
    %v4386 = vsel %vm213, %v4359, 0
    %4388 = vmatprep.subr.bf16.mxu0 0
    %4389 = vmatpush1.bf16.msra.mxu0 0
    %4390 = vmatprep.subr.bf16.mxu0 0
    %4391 = vmatpush1.bf16.msra.mxu0 0
    %4392 = vmatprep.subr.bf16.mxu0 0
    %4393 = vmatpush1.bf16.msra.mxu0 0
    %4394 = vmatprep.subr.bf16.mxu0 0
    %4395 = vmatpush1.bf16.msra.mxu0 0
    %4396 = vmatprep.subr.bf16.mxu0 0
    %4397 = vmatpush1.bf16.msra.mxu0 0
    %4398 = vmatprep.subr.bf16.mxu0 0
    %4399 = vmatpush1.bf16.msra.mxu0 0
    %4400 = vmatprep.subr.bf16.mxu0 0
    %4401 = vmatpush1.bf16.msra.mxu0 %v4382
    %4402 = vmatprep.subr.bf16.mxu0 0
    %4403 = vmatpush1.bf16.msra.mxu0 %v4381
    %4404 = vmatprep.subr.bf16.mxu0 0
    %4405 = vmatpush2.bf16.msra.mxu0 0
    %4406 = vmatprep.subr.bf16.mxu0 0
    %4407 = vmatpush2.bf16.msra.mxu0 0
    %4408 = vmatprep.subr.bf16.mxu0 0
    %4409 = vmatpush2.bf16.msra.mxu0 0
    %4410 = vmatprep.subr.bf16.mxu0 0
    %4411 = vmatpush2.bf16.msra.mxu0 0
    %4412 = vmatprep.subr.bf16.mxu0 0
    %4413 = vmatpush2.bf16.msra.mxu0 0
    %4414 = vmatprep.subr.bf16.mxu0 0
    %4415 = vmatpush2.bf16.msra.mxu0 0
    %4416 = vmatprep.subr.bf16.mxu0 0
    %4417 = vmatpush2.bf16.msra.mxu0 0
    %4418 = vmatprep.subr.bf16.mxu0 0
    %4419 = vmatpush2.bf16.msra.mxu0 0
    %4420 = vmatprep.mubr.bf16.mxu0 0
    %4421 = vmatmul.mubr.bf16.gmra.mxu0 %v4386
    %v4422 = vpop.f32.mrf.mxu0
    %v4423 = vadd.f32 %v4371, %v4422
    %v4424 = vpop.f32.mrf.mxu0
    %v4425 = vpop.f32.mrf.mxu0
    %v4426 = vadd.f32 %v4371, %v4425
    %v4427 = vpop.f32.mrf.mxu0
    %4428 = vdwg.mxu0
    %v4429 = vmul.f32 %v4423, 0.5
    %v4430 = vmul.f32 %v4426, 0.5
    %v4431 = vmul.f32 %v4423, 0.044715
    %v4432 = vmul.f32 %v4426, 0.044715
    %v4433 = vmul.f32 %v4431, %v4423
    %v4434 = vmul.f32 %v4432, %v4426
    %v4435 = vmul.f32 %v4433, %v4423
    %v4436 = vmul.f32 %v4434, %v4426
    %v4437 = vadd.f32 %v4423, %v4435
    %v4438 = vadd.f32 %v4426, %v4436
    %v4439 = vmul.f32 %v4437, 0.7978846
    %v4440 = vmul.f32 %v4438, 0.7978846
    %v4441 = vtanh.pop %v4439
    %v4442 = vtanh.pop %v4440
    %v4443 = vadd.f32 %v4441, 1.0
    %v4444 = vadd.f32 %v4442, 1.0
    %v4445 = vmul.f32 %v4429, %v4443
    %v4446 = vmul.f32 %v4430, %v4444
    %v4447 = vpack.c.bf16 %v4446, %v4445
    %s4448 = scalar_lea.vmem %s15, 32
    %v4449 = vld [vmem:[%s4448] sm:$0xf]
    %v4450 = vld [vmem:[%s4448 + $0x4] sm:$0xf]
    %v4451 = vld [vmem:[%s4448 + $0x8] sm:$0xf]
    %v4452 = vld [vmem:[%s4448 + $0xc] sm:$0xf]
    %v4453 = vld [vmem:[%s4448 + $0x10] sm:$0xf]
    %v4454 = vld [vmem:[%s4448 + $0x14] sm:$0xf]
    %v4455 = vld [vmem:[%s4448 + $0x18] sm:$0xf]
    %v4456 = vld [vmem:[%s4448 + $0x1c] sm:$0xf]
    %s4457 = scalar_lea.vmem %s16, 1
    %v4458 = vld [vmem:[%s4457] sm:$0x1]
    %v4460 = vlaneseq
    %v4461 = vshrl.u32 %v4460, 7
    %v4462 = vsub.s32 0, %v4461
    %v4463 = vrot.slane %v4458, %v4462
    %v4473 = vunpack.c.l.b16 %v4449
    %v4474 = vunpack.c.l.b16 %v4450
    %v4475 = vunpack.c.l.b16 %v4451
    %v4476 = vunpack.c.l.b16 %v4452
    %v4477 = vunpack.c.l.b16 %v4453
    %v4478 = vunpack.c.l.b16 %v4454
    %v4479 = vunpack.c.l.b16 %v4455
    %v4480 = vunpack.c.l.b16 %v4456
    %v4481 = vpack.c.b16 %v4474, %v4473
    %v4482 = vpack.c.b16 %v4476, %v4475
    %v4483 = vpack.c.b16 %v4478, %v4477
    %v4484 = vpack.c.b16 %v4480, %v4479
    %v4490 = vsel %vm2330, %v4447, 0
    %4492 = vmatprep.subr.bf16.mxu0 0
    %4493 = vmatpush1.bf16.msra.mxu0 0
    %4494 = vmatprep.subr.bf16.mxu0 0
    %4495 = vmatpush1.bf16.msra.mxu0 0
    %4496 = vmatprep.subr.bf16.mxu0 0
    %4497 = vmatpush1.bf16.msra.mxu0 0
    %4498 = vmatprep.subr.bf16.mxu0 0
    %4499 = vmatpush1.bf16.msra.mxu0 0
    %4500 = vmatprep.subr.bf16.mxu0 0
    %4501 = vmatpush1.bf16.msra.mxu0 %v4484
    %4502 = vmatprep.subr.bf16.mxu0 0
    %4503 = vmatpush1.bf16.msra.mxu0 %v4483
    %4504 = vmatprep.subr.bf16.mxu0 0
    %4505 = vmatpush1.bf16.msra.mxu0 %v4482
    %4506 = vmatprep.subr.bf16.mxu0 0
    %4507 = vmatpush1.bf16.msra.mxu0 %v4481
    %4508 = vmatprep.subr.bf16.mxu0 0
    %4509 = vmatpush2.bf16.msra.mxu0 0
    %4510 = vmatprep.subr.bf16.mxu0 0
    %4511 = vmatpush2.bf16.msra.mxu0 0
    %4512 = vmatprep.subr.bf16.mxu0 0
    %4513 = vmatpush2.bf16.msra.mxu0 0
    %4514 = vmatprep.subr.bf16.mxu0 0
    %4515 = vmatpush2.bf16.msra.mxu0 0
    %4516 = vmatprep.subr.bf16.mxu0 0
    %4517 = vmatpush2.bf16.msra.mxu0 0
    %4518 = vmatprep.subr.bf16.mxu0 0
    %4519 = vmatpush2.bf16.msra.mxu0 0
    %4520 = vmatprep.subr.bf16.mxu0 0
    %4521 = vmatpush2.bf16.msra.mxu0 0
    %4522 = vmatprep.subr.bf16.mxu0 0
    %4523 = vmatpush2.bf16.msra.mxu0 0
    %4524 = vmatprep.mubr.bf16.mxu0 0
    %4525 = vmatmul.mubr.bf16.gmra.mxu0 %v4490
    %v4526 = vpop.f32.mrf.mxu0
    %v4527 = vadd.f32 %v4463, %v4526
    %v4528 = vpop.f32.mrf.mxu0
    %v4529 = vpop.f32.mrf.mxu0
    %v4530 = vadd.f32 %v4463, %v4529
    %v4531 = vpop.f32.mrf.mxu0
    %4532 = vdwg.mxu0
    %v4533 = vadd.f32 %v4527, %v4357
    %v4534 = vadd.f32 %v4530, %v4358
    %s4535 = scalar_lea.vmem %s17, 1
    %v4536 = vld [vmem:[%s4535] sm:$0x1]
    %s4537 = scalar_lea.vmem %s18, 1
    %v4538 = vld [vmem:[%s4537] sm:$0x1]
    %v4539 = vsel %vm213, %v4533, 0.0
    %4540 = vadd.xlane.f32.xlu0 %v4539
    %v4541 = vpop.xlane.xlu0 %4540
    %v4542 = vsel %vm213, %v4534, 0.0
    %4543 = vadd.xlane.f32.xlu0 %v4542
    %v4544 = vpop.xlane.xlu0 %4543
    %v4545 = vmul.f32 %v4541, %v220
    %v4546 = vmul.f32 %v4544, %v220
    %v4547 = vsub.f32 %v4533, %v4545
    %v4548 = vsub.f32 %v4534, %v4546
    %v4549 = vmul.f32 %v4547, %v4547
    %v4550 = vmul.f32 %v4548, %v4548
    %v4551 = vsel %vm213, %v4549, 0.0
    %4552 = vadd.xlane.f32.xlu0 %v4551
    %v4553 = vpop.xlane.xlu0 %4552
    %v4554 = vsel %vm213, %v4550, 0.0
    %4555 = vadd.xlane.f32.xlu0 %v4554
    %v4556 = vpop.xlane.xlu0 %4555
    %v4557 = vmul.f32 %v4553, %v220
    %v4558 = vmul.f32 %v4556, %v220
    %v4559 = vadd.f32 %v4557, 1e-12
    %v4560 = vadd.f32 %v4558, 1e-12
    %v4561 = vrsqrt.pop %v4559
    %v4562 = vrsqrt.pop %v4560
    %v4563 = vmul.f32 %v4547, %v4561
    %v4564 = vmul.f32 %v4548, %v4562
    %v4566 = vlaneseq
    %v4567 = vshrl.u32 %v4566, 7
    %v4568 = vsub.s32 0, %v4567
    %v4569 = vrot.slane %v4536, %v4568
    %v4571 = vmul.f32 %v4563, %v4569
    %v4572 = vmul.f32 %v4564, %v4569
    %v4574 = vlaneseq
    %v4575 = vshrl.u32 %v4574, 7
    %v4576 = vsub.s32 0, %v4575
    %v4577 = vrot.slane %v4538, %v4576
    %v4579 = vadd.f32 %v4571, %v4577
    %v4580 = vadd.f32 %v4572, %v4577
    %v4582 = vrot.slane %v4580, 7
    %vm4584 = vcmask 1040384
    %v4585 = vsel %vm4584, %v4579, %v4582
    %v4587 = vrot.slane %v256, 4
    %v4590 = vrot.slane %v2420, 4
    %v4592 = vrot.slane %v4580, 4
    %v4594 = vsel %vm121, %v255, %v4587
    %v4595 = vsel %vm121, %v2419, %v4590
    %v4596 = vsel %vm121, %v4579, %v4592
    %v4597 = vpack.c.bf16 %v4585, %v4585
    %v4598 = vld [vmem:[%s21] sm:$0xf]
    %v4599 = vld [vmem:[%s21 + $0x4] sm:$0xf]
    %v4600 = vld [vmem:[%s21 + $0x8] sm:$0xf]
    %v4601 = vld [vmem:[%s21 + $0xc] sm:$0xf]
    %v4602 = vld [vmem:[%s22] sm:$0x1]
    %v4604 = vlaneseq
    %v4605 = vshrl.u32 %v4604, 7
    %v4606 = vsub.s32 0, %v4605
    %v4607 = vrot.slane %v4602, %v4606
    %v4613 = vunpack.c.l.b16 %v4598
    %v4614 = vunpack.c.l.b16 %v4599
    %v4615 = vunpack.c.l.b16 %v4600
    %v4616 = vunpack.c.l.b16 %v4601
    %v4617 = vpack.c.b16 %v4614, %v4613
    %v4618 = vpack.c.b16 %v4616, %v4615
    %v4622 = vsel %vm213, %v4597, 0
    %4624 = vmatprep.subr.bf16.mxu0 0
    %4625 = vmatpush1.bf16.msra.mxu0 0
    %4626 = vmatprep.subr.bf16.mxu0 0
    %4627 = vmatpush1.bf16.msra.mxu0 0
    %4628 = vmatprep.subr.bf16.mxu0 0
    %4629 = vmatpush1.bf16.msra.mxu0 0
    %4630 = vmatprep.subr.bf16.mxu0 0
    %4631 = vmatpush1.bf16.msra.mxu0 0
    %4632 = vmatprep.subr.bf16.mxu0 0
    %4633 = vmatpush1.bf16.msra.mxu0 0
    %4634 = vmatprep.subr.bf16.mxu0 0
    %4635 = vmatpush1.bf16.msra.mxu0 0
    %4636 = vmatprep.subr.bf16.mxu0 0
    %4637 = vmatpush1.bf16.msra.mxu0 %v4618
    %4638 = vmatprep.subr.bf16.mxu0 0
    %4639 = vmatpush1.bf16.msra.mxu0 %v4617
    %4640 = vmatprep.subr.bf16.mxu0 0
    %4641 = vmatpush2.bf16.msra.mxu0 0
    %4642 = vmatprep.subr.bf16.mxu0 0
    %4643 = vmatpush2.bf16.msra.mxu0 0
    %4644 = vmatprep.subr.bf16.mxu0 0
    %4645 = vmatpush2.bf16.msra.mxu0 0
    %4646 = vmatprep.subr.bf16.mxu0 0
    %4647 = vmatpush2.bf16.msra.mxu0 0
    %4648 = vmatprep.subr.bf16.mxu0 0
    %4649 = vmatpush2.bf16.msra.mxu0 0
    %4650 = vmatprep.subr.bf16.mxu0 0
    %4651 = vmatpush2.bf16.msra.mxu0 0
    %4652 = vmatprep.subr.bf16.mxu0 0
    %4653 = vmatpush2.bf16.msra.mxu0 0
    %4654 = vmatprep.subr.bf16.mxu0 0
    %4655 = vmatpush2.bf16.msra.mxu0 0
    %4656 = vmatprep.mubr.bf16.mxu0 0
    %4657 = vmatmul.mubr.bf16.gmra.mxu0 %v4622
    %v4658 = vpop.f32.mrf.mxu0
    %v4659 = vadd.f32 %v4607, %v4658
    %v4660 = vpop.f32.mrf.mxu0
    %v4661 = vpop.f32.mrf.mxu0
    %v4662 = vpop.f32.mrf.mxu0
    %4663 = vdwg.mxu0
    %v4664 = vpack.c.bf16 %v4595, %v4594
    %v4665 = vpack.c.bf16 %v4596, %v4596
    %v4666 = vld [vmem:[%s23] sm:$0xf]
    %v4667 = vld [vmem:[%s23 + $0x4] sm:$0xf]
    %v4668 = vld [vmem:[%s23 + $0x8] sm:$0xf]
    %v4669 = vld [vmem:[%s23 + $0xc] sm:$0xf]
    %v4670 = vld [vmem:[%s24] sm:$0x1]
    %v4672 = vlaneseq
    %v4673 = vshrl.u32 %v4672, 7
    %v4674 = vsub.s32 0, %v4673
    %v4675 = vrot.slane %v4670, %v4674
    %v4681 = vunpack.c.l.b16 %v4666
    %v4682 = vunpack.c.l.b16 %v4667
    %v4683 = vunpack.c.l.b16 %v4668
    %v4684 = vunpack.c.l.b16 %v4669
    %v4685 = vpack.c.b16 %v4682, %v4681
    %v4686 = vpack.c.b16 %v4684, %v4683
    %v4690 = vsel %vm213, %v4664, 0
    %v4693 = vsel %vm213, %v4665, 0
    %4695 = vmatprep.subr.bf16.mxu0 0
    %4696 = vmatpush1.bf16.msra.mxu0 0
    %4697 = vmatprep.subr.bf16.mxu0 0
    %4698 = vmatpush1.bf16.msra.mxu0 0
    %4699 = vmatprep.subr.bf16.mxu0 0
    %4700 = vmatpush1.bf16.msra.mxu0 0
    %4701 = vmatprep.subr.bf16.mxu0 0
    %4702 = vmatpush1.bf16.msra.mxu0 0
    %4703 = vmatprep.subr.bf16.mxu0 0
    %4704 = vmatpush1.bf16.msra.mxu0 0
    %4705 = vmatprep.subr.bf16.mxu0 0
    %4706 = vmatpush1.bf16.msra.mxu0 0
    %4707 = vmatprep.subr.bf16.mxu0 0
    %4708 = vmatpush1.bf16.msra.mxu0 %v4686
    %4709 = vmatprep.subr.bf16.mxu0 0
    %4710 = vmatpush1.bf16.msra.mxu0 %v4685
    %4711 = vmatprep.subr.bf16.mxu0 0
    %4712 = vmatpush2.bf16.msra.mxu0 0
    %4713 = vmatprep.subr.bf16.mxu0 0
    %4714 = vmatpush2.bf16.msra.mxu0 0
    %4715 = vmatprep.subr.bf16.mxu0 0
    %4716 = vmatpush2.bf16.msra.mxu0 0
    %4717 = vmatprep.subr.bf16.mxu0 0
    %4718 = vmatpush2.bf16.msra.mxu0 0
    %4719 = vmatprep.subr.bf16.mxu0 0
    %4720 = vmatpush2.bf16.msra.mxu0 0
    %4721 = vmatprep.subr.bf16.mxu0 0
    %4722 = vmatpush2.bf16.msra.mxu0 0
    %4723 = vmatprep.subr.bf16.mxu0 0
    %4724 = vmatpush2.bf16.msra.mxu0 0
    %4725 = vmatprep.subr.bf16.mxu0 0
    %4726 = vmatpush2.bf16.msra.mxu0 0
    %4727 = vmatprep.mubr.bf16.mxu0 0
    %4728 = vmatmul.mubr.bf16.gmra.mxu0 %v4690
    %v4729 = vpop.f32.mrf.mxu0
    %v4730 = vadd.f32 %v4675, %v4729
    %v4731 = vpop.f32.mrf.mxu0
    %v4732 = vpop.f32.mrf.mxu0
    %v4733 = vadd.f32 %v4675, %v4732
    %v4734 = vpop.f32.mrf.mxu0
    %4735 = vmatprep.mubr.bf16.mxu0 0
    %4736 = vmatmul.mubr.bf16.gmra.mxu0 %v4693
    %v4737 = vpop.f32.mrf.mxu0
    %v4738 = vadd.f32 %v4675, %v4737
    %v4739 = vpop.f32.mrf.mxu0
    %v4740 = vpop.f32.mrf.mxu0
    %v4741 = vpop.f32.mrf.mxu0
    %4742 = vdwg.mxu0
    %v4743 = vld [vmem:[%s4] sm:$0xff]
    %v4744 = vld [vmem:[%s4 + $0x8] sm:$0xff]
    %v4745 = vld [vmem:[%s4 + $0x10] sm:$0xff]
    %v4746 = vpack.c.bf16 %v4659, %v4659
    %v4747 = vpack.c.bf16 %v4733, %v4730
    %v4748 = vpack.c.bf16 %v4738, %v4738
    %v4750 = vsel %vm332, %v4746, 0
    %v4753 = vsel %vm332, %v4747, 0
    %v4756 = vsel %vm332, %v4748, 0
    %4758 = vmatprep.subr.bf16.mxu0 0
    %4759 = vmatpush1.bf16.xpose.msra.mxu0 0
    %4760 = vmatprep.subr.bf16.mxu0 0
    %4761 = vmatpush1.bf16.xpose.msra.mxu0 0
    %4762 = vmatprep.subr.bf16.mxu0 0
    %4763 = vmatpush1.bf16.xpose.msra.mxu0 0
    %4764 = vmatprep.subr.bf16.mxu0 0
    %4765 = vmatpush1.bf16.xpose.msra.mxu0 0
    %4766 = vmatprep.subr.bf16.mxu0 0
    %4767 = vmatpush1.bf16.xpose.msra.mxu0 0
    %4768 = vmatprep.subr.bf16.mxu0 0
    %4769 = vmatpush1.bf16.xpose.msra.mxu0 0
    %4770 = vmatprep.subr.bf16.mxu0 0
    %4771 = vmatpush1.bf16.xpose.msra.mxu0 %v4756
    %4772 = vmatprep.subr.bf16.mxu0 0
    %4773 = vmatpush1.bf16.xpose.msra.mxu0 %v4753
    %4774 = vmatprep.subr.bf16.mxu0 0
    %4775 = vmatpush2.bf16.xpose.msra.mxu0 0
    %4776 = vmatprep.subr.bf16.mxu0 0
    %4777 = vmatpush2.bf16.xpose.msra.mxu0 0
    %4778 = vmatprep.subr.bf16.mxu0 0
    %4779 = vmatpush2.bf16.xpose.msra.mxu0 0
    %4780 = vmatprep.subr.bf16.mxu0 0
    %4781 = vmatpush2.bf16.xpose.msra.mxu0 0
    %4782 = vmatprep.subr.bf16.mxu0 0
    %4783 = vmatpush2.bf16.xpose.msra.mxu0 0
    %4784 = vmatprep.subr.bf16.mxu0 0
    %4785 = vmatpush2.bf16.xpose.msra.mxu0 0
    %4786 = vmatprep.subr.bf16.mxu0 0
    %4787 = vmatpush2.bf16.xpose.msra.mxu0 0
    %4788 = vmatprep.subr.bf16.mxu0 0
    %4789 = vmatpush2.bf16.xpose.msra.mxu0 0
    %4790 = vmatprep.mubr.bf16.mxu0 0
    %4791 = vmatmul.mubr.bf16.gmra.mxu0 %v4750
    %v4792 = vpop.f32.mrf.mxu0
    %v4793 = vadd.f32 0.0, %v4792
    %v4794 = vpop.f32.mrf.mxu0
    %v4795 = vpop.f32.mrf.mxu0
    %v4796 = vpop.f32.mrf.mxu0
    %4797 = vdwg.mxu0
    %v4798 = vmul.f32 %v4793, 0.35355338
    %vm4799 = vcmask 189440
    %v4800 = vsel %vm4799, %v4798, -inf
    %4801 = vmax.xlane.f32.xlu0 %v4800
    %v4802 = vpop.xlane.xlu0 %4801
    %v4803 = vsub.f32 %v4798, %v4802
    %v4804 = vmul.f32 %v4803, 1.442695
    %v4805 = vpow.pop %v4804
    %v4807 = vsel %vm1237, %v4805, 0
    %4809 = vmatprep.subr.mxu0 0.0
    %4810 = vmatpush1.msra.mxu0 0.0
    %4811 = vmatprep.subr.mxu0 0.0
    %4812 = vmatpush1.msra.mxu0 0.0
    %4813 = vmatprep.subr.mxu0 0.0
    %4814 = vmatpush1.msra.mxu0 0.0
    %4815 = vmatprep.subr.mxu0 0.0
    %4816 = vmatpush1.msra.mxu0 0.0
    %4817 = vmatprep.subr.mxu0 0.0
    %4818 = vmatpush1.msra.mxu0 0.0
    %4819 = vmatprep.subr.mxu0 0.0
    %4820 = vmatpush1.msra.mxu0 0.0
    %4821 = vmatprep.subr.mxu0 0.0
    %4822 = vmatpush1.msra.mxu0 0.0
    %4823 = vmatprep.subr.mxu0 0.0
    %4824 = vmatpush1.msra.mxu0 0.0
    %4825 = vmatprep.subr.mxu0 0.0
    %4826 = vmatpush1.msra.mxu0 0.0
    %4827 = vmatprep.subr.mxu0 0.0
    %4828 = vmatpush1.msra.mxu0 0.0
    %4829 = vmatprep.subr.mxu0 0.0
    %4830 = vmatpush1.msra.mxu0 0.0
    %4831 = vmatprep.subr.mxu0 0.0
    %4832 = vmatpush1.msra.mxu0 0.0
    %4833 = vmatprep.subr.mxu0 0.0
    %4834 = vmatpush1.msra.mxu0 0.0
    %4835 = vmatprep.subr.mxu0 0.0
    %4836 = vmatpush1.msra.mxu0 %v4745
    %4837 = vmatprep.subr.mxu0 0.0
    %4838 = vmatpush1.msra.mxu0 %v4744
    %4839 = vmatprep.subr.mxu0 0.0
    %4840 = vmatpush1.msra.mxu0 %v4743
    %4841 = vmatprep.subr.mxu0 0.0
    %4842 = vmatpush2.msra.mxu0 0.0
    %4843 = vmatprep.subr.mxu0 0.0
    %4844 = vmatpush2.msra.mxu0 0.0
    %4845 = vmatprep.subr.mxu0 0.0
    %4846 = vmatpush2.msra.mxu0 0.0
    %4847 = vmatprep.subr.mxu0 0.0
    %4848 = vmatpush2.msra.mxu0 0.0
    %4849 = vmatprep.subr.mxu0 0.0
    %4850 = vmatpush2.msra.mxu0 0.0
    %4851 = vmatprep.subr.mxu0 0.0
    %4852 = vmatpush2.msra.mxu0 0.0
    %4853 = vmatprep.subr.mxu0 0.0
    %4854 = vmatpush2.msra.mxu0 0.0
    %4855 = vmatprep.subr.mxu0 0.0
    %4856 = vmatpush2.msra.mxu0 0.0
    %4857 = vmatprep.subr.mxu0 0.0
    %4858 = vmatpush2.msra.mxu0 0.0
    %4859 = vmatprep.subr.mxu0 0.0
    %4860 = vmatpush2.msra.mxu0 0.0
    %4861 = vmatprep.subr.mxu0 0.0
    %4862 = vmatpush2.msra.mxu0 0.0
    %4863 = vmatprep.subr.mxu0 0.0
    %4864 = vmatpush2.msra.mxu0 0.0
    %4865 = vmatprep.subr.mxu0 0.0
    %4866 = vmatpush2.msra.mxu0 0.0
    %4867 = vmatprep.subr.mxu0 0.0
    %4868 = vmatpush2.msra.mxu0 0.0
    %4869 = vmatprep.subr.mxu0 0.0
    %4870 = vmatpush2.msra.mxu0 0.0
    %4871 = vmatprep.subr.mxu0 0.0
    %4872 = vmatpush2.msra.mxu0 0.0
    %4873 = vmatprep.mubr.f32.mxu0 0.0
    %4874 = vmatmul.mubr.f32.gmra.mxu0 %v4807
    %v4875 = vpop.f32.mrf.mxu0
    %v4876 = vadd.f32 0.0, %v4875
    %v4877 = vpop.f32.mrf.mxu0
    %4878 = vdwg.mxu0
    %v4879 = vrcp.pop %v4876
    %v4880 = vmul.f32 %v4805, %v4879
    %v4881 = vpack.c.bf16 %v4880, %v4880
    %4884 = vrot.lane.b32.xlu0 %v4747, 96
    %v4885 = vpop.permute.xlu0 %4884
    %4886 = vrot.lane.b32.xlu0 %v4748, 96
    %v4887 = vpop.permute.xlu0 %4886
    %v4890 = vsel %vm1237, %v4881, 0
    %v4893 = vsel %vm121, %v4887, 0
    %4895 = vmatprep.subr.bf16.mxu0 0
    %4896 = vmatpush1.bf16.msra.mxu0 0
    %4897 = vmatprep.subr.bf16.mxu0 0
    %4898 = vmatpush1.bf16.msra.mxu0 0
    %4899 = vmatprep.subr.bf16.mxu0 0
    %4900 = vmatpush1.bf16.msra.mxu0 0
    %4901 = vmatprep.subr.bf16.mxu0 0
    %4902 = vmatpush1.bf16.msra.mxu0 0
    %4903 = vmatprep.subr.bf16.mxu0 0
    %4904 = vmatpush1.bf16.msra.mxu0 0
    %4905 = vmatprep.subr.bf16.mxu0 0
    %4906 = vmatpush1.bf16.msra.mxu0 0
    %4907 = vmatprep.subr.bf16.mxu0 0
    %4908 = vmatpush1.bf16.msra.mxu0 %v4893
    %4909 = vmatprep.subr.bf16.mxu0 0
    %4910 = vmatpush1.bf16.msra.mxu0 %v4885
    %4911 = vmatprep.subr.bf16.mxu0 0
    %4912 = vmatpush2.bf16.msra.mxu0 0
    %4913 = vmatprep.subr.bf16.mxu0 0
    %4914 = vmatpush2.bf16.msra.mxu0 0
    %4915 = vmatprep.subr.bf16.mxu0 0
    %4916 = vmatpush2.bf16.msra.mxu0 0
    %4917 = vmatprep.subr.bf16.mxu0 0
    %4918 = vmatpush2.bf16.msra.mxu0 0
    %4919 = vmatprep.subr.bf16.mxu0 0
    %4920 = vmatpush2.bf16.msra.mxu0 0
    %4921 = vmatprep.subr.bf16.mxu0 0
    %4922 = vmatpush2.bf16.msra.mxu0 0
    %4923 = vmatprep.subr.bf16.mxu0 0
    %4924 = vmatpush2.bf16.msra.mxu0 0
    %4925 = vmatprep.subr.bf16.mxu0 0
    %4926 = vmatpush2.bf16.msra.mxu0 0
    %4927 = vmatprep.mubr.bf16.mxu0 0
    %4928 = vmatmul.mubr.bf16.gmra.mxu0 %v4890
    %v4929 = vpop.f32.mrf.mxu0
    %v4930 = vadd.f32 0.0, %v4929
    %v4931 = vpop.f32.mrf.mxu0
    %v4932 = vpop.f32.mrf.mxu0
    %v4933 = vpop.f32.mrf.mxu0
    %4934 = vdwg.mxu0
    %4936 = vrot.lane.b32.xlu0 %v4746, 120
    %v4937 = vpop.permute.xlu0 %4936
    %4938 = vrot.lane.b32.xlu0 %v4747, 120
    %v4939 = vpop.permute.xlu0 %4938
    %4940 = vrot.lane.b32.xlu0 %v4748, 120
    %v4941 = vpop.permute.xlu0 %4940
    %v4943 = vsel %vm332, %v4937, 0
    %v4946 = vsel %vm332, %v4939, 0
    %v4949 = vsel %vm332, %v4941, 0
    %4951 = vmatprep.subr.bf16.mxu0 0
    %4952 = vmatpush1.bf16.xpose.msra.mxu0 0
    %4953 = vmatprep.subr.bf16.mxu0 0
    %4954 = vmatpush1.bf16.xpose.msra.mxu0 0
    %4955 = vmatprep.subr.bf16.mxu0 0
    %4956 = vmatpush1.bf16.xpose.msra.mxu0 0
    %4957 = vmatprep.subr.bf16.mxu0 0
    %4958 = vmatpush1.bf16.xpose.msra.mxu0 0
    %4959 = vmatprep.subr.bf16.mxu0 0
    %4960 = vmatpush1.bf16.xpose.msra.mxu0 0
    %4961 = vmatprep.subr.bf16.mxu0 0
    %4962 = vmatpush1.bf16.xpose.msra.mxu0 0
    %4963 = vmatprep.subr.bf16.mxu0 0
    %4964 = vmatpush1.bf16.xpose.msra.mxu0 %v4949
    %4965 = vmatprep.subr.bf16.mxu0 0
    %4966 = vmatpush1.bf16.xpose.msra.mxu0 %v4946
    %4967 = vmatprep.subr.bf16.mxu0 0
    %4968 = vmatpush2.bf16.xpose.msra.mxu0 0
    %4969 = vmatprep.subr.bf16.mxu0 0
    %4970 = vmatpush2.bf16.xpose.msra.mxu0 0
    %4971 = vmatprep.subr.bf16.mxu0 0
    %4972 = vmatpush2.bf16.xpose.msra.mxu0 0
    %4973 = vmatprep.subr.bf16.mxu0 0
    %4974 = vmatpush2.bf16.xpose.msra.mxu0 0
    %4975 = vmatprep.subr.bf16.mxu0 0
    %4976 = vmatpush2.bf16.xpose.msra.mxu0 0
    %4977 = vmatprep.subr.bf16.mxu0 0
    %4978 = vmatpush2.bf16.xpose.msra.mxu0 0
    %4979 = vmatprep.subr.bf16.mxu0 0
    %4980 = vmatpush2.bf16.xpose.msra.mxu0 0
    %4981 = vmatprep.subr.bf16.mxu0 0
    %4982 = vmatpush2.bf16.xpose.msra.mxu0 0
    %4983 = vmatprep.mubr.bf16.mxu0 0
    %4984 = vmatmul.mubr.bf16.gmra.mxu0 %v4943
    %v4985 = vpop.f32.mrf.mxu0
    %v4986 = vadd.f32 0.0, %v4985
    %v4987 = vpop.f32.mrf.mxu0
    %v4988 = vpop.f32.mrf.mxu0
    %v4989 = vpop.f32.mrf.mxu0
    %4990 = vdwg.mxu0
    %v4991 = vmul.f32 %v4986, 0.35355338
    %v4992 = vsel %vm4799, %v4991, -inf
    %4993 = vmax.xlane.f32.xlu0 %v4992
    %v4994 = vpop.xlane.xlu0 %4993
    %v4995 = vsub.f32 %v4991, %v4994
    %v4996 = vmul.f32 %v4995, 1.442695
    %v4997 = vpow.pop %v4996
    %v4999 = vsel %vm1237, %v4997, 0
    %5001 = vmatprep.subr.mxu0 0.0
    %5002 = vmatpush1.msra.mxu0 0.0
    %5003 = vmatprep.subr.mxu0 0.0
    %5004 = vmatpush1.msra.mxu0 0.0
    %5005 = vmatprep.subr.mxu0 0.0
    %5006 = vmatpush1.msra.mxu0 0.0
    %5007 = vmatprep.subr.mxu0 0.0
    %5008 = vmatpush1.msra.mxu0 0.0
    %5009 = vmatprep.subr.mxu0 0.0
    %5010 = vmatpush1.msra.mxu0 0.0
    %5011 = vmatprep.subr.mxu0 0.0
    %5012 = vmatpush1.msra.mxu0 0.0
    %5013 = vmatprep.subr.mxu0 0.0
    %5014 = vmatpush1.msra.mxu0 0.0
    %5015 = vmatprep.subr.mxu0 0.0
    %5016 = vmatpush1.msra.mxu0 0.0
    %5017 = vmatprep.subr.mxu0 0.0
    %5018 = vmatpush1.msra.mxu0 0.0
    %5019 = vmatprep.subr.mxu0 0.0
    %5020 = vmatpush1.msra.mxu0 0.0
    %5021 = vmatprep.subr.mxu0 0.0
    %5022 = vmatpush1.msra.mxu0 0.0
    %5023 = vmatprep.subr.mxu0 0.0
    %5024 = vmatpush1.msra.mxu0 0.0
    %5025 = vmatprep.subr.mxu0 0.0
    %5026 = vmatpush1.msra.mxu0 0.0
    %5027 = vmatprep.subr.mxu0 0.0
    %5028 = vmatpush1.msra.mxu0 %v4745
    %5029 = vmatprep.subr.mxu0 0.0
    %5030 = vmatpush1.msra.mxu0 %v4744
    %5031 = vmatprep.subr.mxu0 0.0
    %5032 = vmatpush1.msra.mxu0 %v4743
    %5033 = vmatprep.subr.mxu0 0.0
    %5034 = vmatpush2.msra.mxu0 0.0
    %5035 = vmatprep.subr.mxu0 0.0
    %5036 = vmatpush2.msra.mxu0 0.0
    %5037 = vmatprep.subr.mxu0 0.0
    %5038 = vmatpush2.msra.mxu0 0.0
    %5039 = vmatprep.subr.mxu0 0.0
    %5040 = vmatpush2.msra.mxu0 0.0
    %5041 = vmatprep.subr.mxu0 0.0
    %5042 = vmatpush2.msra.mxu0 0.0
    %5043 = vmatprep.subr.mxu0 0.0
    %5044 = vmatpush2.msra.mxu0 0.0
    %5045 = vmatprep.subr.mxu0 0.0
    %5046 = vmatpush2.msra.mxu0 0.0
    %5047 = vmatprep.subr.mxu0 0.0
    %5048 = vmatpush2.msra.mxu0 0.0
    %5049 = vmatprep.subr.mxu0 0.0
    %5050 = vmatpush2.msra.mxu0 0.0
    %5051 = vmatprep.subr.mxu0 0.0
    %5052 = vmatpush2.msra.mxu0 0.0
    %5053 = vmatprep.subr.mxu0 0.0
    %5054 = vmatpush2.msra.mxu0 0.0
    %5055 = vmatprep.subr.mxu0 0.0
    %5056 = vmatpush2.msra.mxu0 0.0
    %5057 = vmatprep.subr.mxu0 0.0
    %5058 = vmatpush2.msra.mxu0 0.0
    %5059 = vmatprep.subr.mxu0 0.0
    %5060 = vmatpush2.msra.mxu0 0.0
    %5061 = vmatprep.subr.mxu0 0.0
    %5062 = vmatpush2.msra.mxu0 0.0
    %5063 = vmatprep.subr.mxu0 0.0
    %5064 = vmatpush2.msra.mxu0 0.0
    %5065 = vmatprep.mubr.f32.mxu0 0.0
    %5066 = vmatmul.mubr.f32.gmra.mxu0 %v4999
    %v5067 = vpop.f32.mrf.mxu0
    %v5068 = vadd.f32 0.0, %v5067
    %v5069 = vpop.f32.mrf.mxu0
    %5070 = vdwg.mxu0
    %v5071 = vrcp.pop %v5068
    %v5072 = vmul.f32 %v4997, %v5071
    %v5073 = vpack.c.bf16 %v5072, %v5072
    %5074 = vrot.lane.b32.xlu0 %v4747, 88
    %v5075 = vpop.permute.xlu0 %5074
    %5076 = vrot.lane.b32.xlu0 %v4748, 88
    %v5077 = vpop.permute.xlu0 %5076
    %v5080 = vsel %vm1237, %v5073, 0
    %v5083 = vsel %vm121, %v5077, 0
    %5085 = vmatprep.subr.bf16.mxu0 0
    %5086 = vmatpush1.bf16.msra.mxu0 0
    %5087 = vmatprep.subr.bf16.mxu0 0
    %5088 = vmatpush1.bf16.msra.mxu0 0
    %5089 = vmatprep.subr.bf16.mxu0 0
    %5090 = vmatpush1.bf16.msra.mxu0 0
    %5091 = vmatprep.subr.bf16.mxu0 0
    %5092 = vmatpush1.bf16.msra.mxu0 0
    %5093 = vmatprep.subr.bf16.mxu0 0
    %5094 = vmatpush1.bf16.msra.mxu0 0
    %5095 = vmatprep.subr.bf16.mxu0 0
    %5096 = vmatpush1.bf16.msra.mxu0 0
    %5097 = vmatprep.subr.bf16.mxu0 0
    %5098 = vmatpush1.bf16.msra.mxu0 %v5083
    %5099 = vmatprep.subr.bf16.mxu0 0
    %5100 = vmatpush1.bf16.msra.mxu0 %v5075
    %5101 = vmatprep.subr.bf16.mxu0 0
    %5102 = vmatpush2.bf16.msra.mxu0 0
    %5103 = vmatprep.subr.bf16.mxu0 0
    %5104 = vmatpush2.bf16.msra.mxu0 0
    %5105 = vmatprep.subr.bf16.mxu0 0
    %5106 = vmatpush2.bf16.msra.mxu0 0
    %5107 = vmatprep.subr.bf16.mxu0 0
    %5108 = vmatpush2.bf16.msra.mxu0 0
    %5109 = vmatprep.subr.bf16.mxu0 0
    %5110 = vmatpush2.bf16.msra.mxu0 0
    %5111 = vmatprep.subr.bf16.mxu0 0
    %5112 = vmatpush2.bf16.msra.mxu0 0
    %5113 = vmatprep.subr.bf16.mxu0 0
    %5114 = vmatpush2.bf16.msra.mxu0 0
    %5115 = vmatprep.subr.bf16.mxu0 0
    %5116 = vmatpush2.bf16.msra.mxu0 0
    %5117 = vmatprep.mubr.bf16.mxu0 0
    %5118 = vmatmul.mubr.bf16.gmra.mxu0 %v5080
    %v5119 = vpop.f32.mrf.mxu0
    %v5120 = vadd.f32 0.0, %v5119
    %v5121 = vpop.f32.mrf.mxu0
    %v5122 = vpop.f32.mrf.mxu0
    %v5123 = vpop.f32.mrf.mxu0
    %5124 = vdwg.mxu0
    %5125 = vrot.lane.b32.xlu0 %v4746, 112
    %v5126 = vpop.permute.xlu0 %5125
    %5127 = vrot.lane.b32.xlu0 %v4747, 112
    %v5128 = vpop.permute.xlu0 %5127
    %5129 = vrot.lane.b32.xlu0 %v4748, 112
    %v5130 = vpop.permute.xlu0 %5129
    %v5132 = vsel %vm332, %v5126, 0
    %v5135 = vsel %vm332, %v5128, 0
    %v5138 = vsel %vm332, %v5130, 0
    %5140 = vmatprep.subr.bf16.mxu0 0
    %5141 = vmatpush1.bf16.xpose.msra.mxu0 0
    %5142 = vmatprep.subr.bf16.mxu0 0
    %5143 = vmatpush1.bf16.xpose.msra.mxu0 0
    %5144 = vmatprep.subr.bf16.mxu0 0
    %5145 = vmatpush1.bf16.xpose.msra.mxu0 0
    %5146 = vmatprep.subr.bf16.mxu0 0
    %5147 = vmatpush1.bf16.xpose.msra.mxu0 0
    %5148 = vmatprep.subr.bf16.mxu0 0
    %5149 = vmatpush1.bf16.xpose.msra.mxu0 0
    %5150 = vmatprep.subr.bf16.mxu0 0
    %5151 = vmatpush1.bf16.xpose.msra.mxu0 0
    %5152 = vmatprep.subr.bf16.mxu0 0
    %5153 = vmatpush1.bf16.xpose.msra.mxu0 %v5138
    %5154 = vmatprep.subr.bf16.mxu0 0
    %5155 = vmatpush1.bf16.xpose.msra.mxu0 %v5135
    %5156 = vmatprep.subr.bf16.mxu0 0
    %5157 = vmatpush2.bf16.xpose.msra.mxu0 0
    %5158 = vmatprep.subr.bf16.mxu0 0
    %5159 = vmatpush2.bf16.xpose.msra.mxu0 0
    %5160 = vmatprep.subr.bf16.mxu0 0
    %5161 = vmatpush2.bf16.xpose.msra.mxu0 0
    %5162 = vmatprep.subr.bf16.mxu0 0
    %5163 = vmatpush2.bf16.xpose.msra.mxu0 0
    %5164 = vmatprep.subr.bf16.mxu0 0
    %5165 = vmatpush2.bf16.xpose.msra.mxu0 0
    %5166 = vmatprep.subr.bf16.mxu0 0
    %5167 = vmatpush2.bf16.xpose.msra.mxu0 0
    %5168 = vmatprep.subr.bf16.mxu0 0
    %5169 = vmatpush2.bf16.xpose.msra.mxu0 0
    %5170 = vmatprep.subr.bf16.mxu0 0
    %5171 = vmatpush2.bf16.xpose.msra.mxu0 0
    %5172 = vmatprep.mubr.bf16.mxu0 0
    %5173 = vmatmul.mubr.bf16.gmra.mxu0 %v5132
    %v5174 = vpop.f32.mrf.mxu0
    %v5175 = vadd.f32 0.0, %v5174
    %v5176 = vpop.f32.mrf.mxu0
    %v5177 = vpop.f32.mrf.mxu0
    %v5178 = vpop.f32.mrf.mxu0
    %5179 = vdwg.mxu0
    %v5180 = vmul.f32 %v5175, 0.35355338
    %v5181 = vsel %vm4799, %v5180, -inf
    %5182 = vmax.xlane.f32.xlu0 %v5181
    %v5183 = vpop.xlane.xlu0 %5182
    %v5184 = vsub.f32 %v5180, %v5183
    %v5185 = vmul.f32 %v5184, 1.442695
    %v5186 = vpow.pop %v5185
    %v5188 = vsel %vm1237, %v5186, 0
    %5190 = vmatprep.subr.mxu0 0.0
    %5191 = vmatpush1.msra.mxu0 0.0
    %5192 = vmatprep.subr.mxu0 0.0
    %5193 = vmatpush1.msra.mxu0 0.0
    %5194 = vmatprep.subr.mxu0 0.0
    %5195 = vmatpush1.msra.mxu0 0.0
    %5196 = vmatprep.subr.mxu0 0.0
    %5197 = vmatpush1.msra.mxu0 0.0
    %5198 = vmatprep.subr.mxu0 0.0
    %5199 = vmatpush1.msra.mxu0 0.0
    %5200 = vmatprep.subr.mxu0 0.0
    %5201 = vmatpush1.msra.mxu0 0.0
    %5202 = vmatprep.subr.mxu0 0.0
    %5203 = vmatpush1.msra.mxu0 0.0
    %5204 = vmatprep.subr.mxu0 0.0
    %5205 = vmatpush1.msra.mxu0 0.0
    %5206 = vmatprep.subr.mxu0 0.0
    %5207 = vmatpush1.msra.mxu0 0.0
    %5208 = vmatprep.subr.mxu0 0.0
    %5209 = vmatpush1.msra.mxu0 0.0
    %5210 = vmatprep.subr.mxu0 0.0
    %5211 = vmatpush1.msra.mxu0 0.0
    %5212 = vmatprep.subr.mxu0 0.0
    %5213 = vmatpush1.msra.mxu0 0.0
    %5214 = vmatprep.subr.mxu0 0.0
    %5215 = vmatpush1.msra.mxu0 0.0
    %5216 = vmatprep.subr.mxu0 0.0
    %5217 = vmatpush1.msra.mxu0 %v4745
    %5218 = vmatprep.subr.mxu0 0.0
    %5219 = vmatpush1.msra.mxu0 %v4744
    %5220 = vmatprep.subr.mxu0 0.0
    %5221 = vmatpush1.msra.mxu0 %v4743
    %5222 = vmatprep.subr.mxu0 0.0
    %5223 = vmatpush2.msra.mxu0 0.0
    %5224 = vmatprep.subr.mxu0 0.0
    %5225 = vmatpush2.msra.mxu0 0.0
    %5226 = vmatprep.subr.mxu0 0.0
    %5227 = vmatpush2.msra.mxu0 0.0
    %5228 = vmatprep.subr.mxu0 0.0
    %5229 = vmatpush2.msra.mxu0 0.0
    %5230 = vmatprep.subr.mxu0 0.0
    %5231 = vmatpush2.msra.mxu0 0.0
    %5232 = vmatprep.subr.mxu0 0.0
    %5233 = vmatpush2.msra.mxu0 0.0
    %5234 = vmatprep.subr.mxu0 0.0
    %5235 = vmatpush2.msra.mxu0 0.0
    %5236 = vmatprep.subr.mxu0 0.0
    %5237 = vmatpush2.msra.mxu0 0.0
    %5238 = vmatprep.subr.mxu0 0.0
    %5239 = vmatpush2.msra.mxu0 0.0
    %5240 = vmatprep.subr.mxu0 0.0
    %5241 = vmatpush2.msra.mxu0 0.0
    %5242 = vmatprep.subr.mxu0 0.0
    %5243 = vmatpush2.msra.mxu0 0.0
    %5244 = vmatprep.subr.mxu0 0.0
    %5245 = vmatpush2.msra.mxu0 0.0
    %5246 = vmatprep.subr.mxu0 0.0
    %5247 = vmatpush2.msra.mxu0 0.0
    %5248 = vmatprep.subr.mxu0 0.0
    %5249 = vmatpush2.msra.mxu0 0.0
    %5250 = vmatprep.subr.mxu0 0.0
    %5251 = vmatpush2.msra.mxu0 0.0
    %5252 = vmatprep.subr.mxu0 0.0
    %5253 = vmatpush2.msra.mxu0 0.0
    %5254 = vmatprep.mubr.f32.mxu0 0.0
    %5255 = vmatmul.mubr.f32.gmra.mxu0 %v5188
    %v5256 = vpop.f32.mrf.mxu0
    %v5257 = vadd.f32 0.0, %v5256
    %v5258 = vpop.f32.mrf.mxu0
    %5259 = vdwg.mxu0
    %v5260 = vrcp.pop %v5257
    %v5261 = vmul.f32 %v5186, %v5260
    %v5262 = vpack.c.bf16 %v5261, %v5261
    %5263 = vrot.lane.b32.xlu0 %v4747, 80
    %v5264 = vpop.permute.xlu0 %5263
    %5265 = vrot.lane.b32.xlu0 %v4748, 80
    %v5266 = vpop.permute.xlu0 %5265
    %v5269 = vsel %vm1237, %v5262, 0
    %v5272 = vsel %vm121, %v5266, 0
    %5274 = vmatprep.subr.bf16.mxu0 0
    %5275 = vmatpush1.bf16.msra.mxu0 0
    %5276 = vmatprep.subr.bf16.mxu0 0
    %5277 = vmatpush1.bf16.msra.mxu0 0
    %5278 = vmatprep.subr.bf16.mxu0 0
    %5279 = vmatpush1.bf16.msra.mxu0 0
    %5280 = vmatprep.subr.bf16.mxu0 0
    %5281 = vmatpush1.bf16.msra.mxu0 0
    %5282 = vmatprep.subr.bf16.mxu0 0
    %5283 = vmatpush1.bf16.msra.mxu0 0
    %5284 = vmatprep.subr.bf16.mxu0 0
    %5285 = vmatpush1.bf16.msra.mxu0 0
    %5286 = vmatprep.subr.bf16.mxu0 0
    %5287 = vmatpush1.bf16.msra.mxu0 %v5272
    %5288 = vmatprep.subr.bf16.mxu0 0
    %5289 = vmatpush1.bf16.msra.mxu0 %v5264
    %5290 = vmatprep.subr.bf16.mxu0 0
    %5291 = vmatpush2.bf16.msra.mxu0 0
    %5292 = vmatprep.subr.bf16.mxu0 0
    %5293 = vmatpush2.bf16.msra.mxu0 0
    %5294 = vmatprep.subr.bf16.mxu0 0
    %5295 = vmatpush2.bf16.msra.mxu0 0
    %5296 = vmatprep.subr.bf16.mxu0 0
    %5297 = vmatpush2.bf16.msra.mxu0 0
    %5298 = vmatprep.subr.bf16.mxu0 0
    %5299 = vmatpush2.bf16.msra.mxu0 0
    %5300 = vmatprep.subr.bf16.mxu0 0
    %5301 = vmatpush2.bf16.msra.mxu0 0
    %5302 = vmatprep.subr.bf16.mxu0 0
    %5303 = vmatpush2.bf16.msra.mxu0 0
    %5304 = vmatprep.subr.bf16.mxu0 0
    %5305 = vmatpush2.bf16.msra.mxu0 0
    %5306 = vmatprep.mubr.bf16.mxu0 0
    %5307 = vmatmul.mubr.bf16.gmra.mxu0 %v5269
    %v5308 = vpop.f32.mrf.mxu0
    %v5309 = vadd.f32 0.0, %v5308
    %v5310 = vpop.f32.mrf.mxu0
    %v5311 = vpop.f32.mrf.mxu0
    %v5312 = vpop.f32.mrf.mxu0
    %5313 = vdwg.mxu0
    %5314 = vrot.lane.b32.xlu0 %v4746, 104
    %v5315 = vpop.permute.xlu0 %5314
    %5316 = vrot.lane.b32.xlu0 %v4747, 104
    %v5317 = vpop.permute.xlu0 %5316
    %5318 = vrot.lane.b32.xlu0 %v4748, 104
    %v5319 = vpop.permute.xlu0 %5318
    %v5321 = vsel %vm332, %v5315, 0
    %v5324 = vsel %vm332, %v5317, 0
    %v5327 = vsel %vm332, %v5319, 0
    %5329 = vmatprep.subr.bf16.mxu0 0
    %5330 = vmatpush1.bf16.xpose.msra.mxu0 0
    %5331 = vmatprep.subr.bf16.mxu0 0
    %5332 = vmatpush1.bf16.xpose.msra.mxu0 0
    %5333 = vmatprep.subr.bf16.mxu0 0
    %5334 = vmatpush1.bf16.xpose.msra.mxu0 0
    %5335 = vmatprep.subr.bf16.mxu0 0
    %5336 = vmatpush1.bf16.xpose.msra.mxu0 0
    %5337 = vmatprep.subr.bf16.mxu0 0
    %5338 = vmatpush1.bf16.xpose.msra.mxu0 0
    %5339 = vmatprep.subr.bf16.mxu0 0
    %5340 = vmatpush1.bf16.xpose.msra.mxu0 0
    %5341 = vmatprep.subr.bf16.mxu0 0
    %5342 = vmatpush1.bf16.xpose.msra.mxu0 %v5327
    %5343 = vmatprep.subr.bf16.mxu0 0
    %5344 = vmatpush1.bf16.xpose.msra.mxu0 %v5324
    %5345 = vmatprep.subr.bf16.mxu0 0
    %5346 = vmatpush2.bf16.xpose.msra.mxu0 0
    %5347 = vmatprep.subr.bf16.mxu0 0
    %5348 = vmatpush2.bf16.xpose.msra.mxu0 0
    %5349 = vmatprep.subr.bf16.mxu0 0
    %5350 = vmatpush2.bf16.xpose.msra.mxu0 0
    %5351 = vmatprep.subr.bf16.mxu0 0
    %5352 = vmatpush2.bf16.xpose.msra.mxu0 0
    %5353 = vmatprep.subr.bf16.mxu0 0
    %5354 = vmatpush2.bf16.xpose.msra.mxu0 0
    %5355 = vmatprep.subr.bf16.mxu0 0
    %5356 = vmatpush2.bf16.xpose.msra.mxu0 0
    %5357 = vmatprep.subr.bf16.mxu0 0
    %5358 = vmatpush2.bf16.xpose.msra.mxu0 0
    %5359 = vmatprep.subr.bf16.mxu0 0
    %5360 = vmatpush2.bf16.xpose.msra.mxu0 0
    %5361 = vmatprep.mubr.bf16.mxu0 0
    %5362 = vmatmul.mubr.bf16.gmra.mxu0 %v5321
    %v5363 = vpop.f32.mrf.mxu0
    %v5364 = vadd.f32 0.0, %v5363
    %v5365 = vpop.f32.mrf.mxu0
    %v5366 = vpop.f32.mrf.mxu0
    %v5367 = vpop.f32.mrf.mxu0
    %5368 = vdwg.mxu0
    %v5369 = vmul.f32 %v5364, 0.35355338
    %v5370 = vsel %vm4799, %v5369, -inf
    %5371 = vmax.xlane.f32.xlu0 %v5370
    %v5372 = vpop.xlane.xlu0 %5371
    %v5373 = vsub.f32 %v5369, %v5372
    %v5374 = vmul.f32 %v5373, 1.442695
    %v5375 = vpow.pop %v5374
    %v5377 = vsel %vm1237, %v5375, 0
    %5379 = vmatprep.subr.mxu0 0.0
    %5380 = vmatpush1.msra.mxu0 0.0
    %5381 = vmatprep.subr.mxu0 0.0
    %5382 = vmatpush1.msra.mxu0 0.0
    %5383 = vmatprep.subr.mxu0 0.0
    %5384 = vmatpush1.msra.mxu0 0.0
    %5385 = vmatprep.subr.mxu0 0.0
    %5386 = vmatpush1.msra.mxu0 0.0
    %5387 = vmatprep.subr.mxu0 0.0
    %5388 = vmatpush1.msra.mxu0 0.0
    %5389 = vmatprep.subr.mxu0 0.0
    %5390 = vmatpush1.msra.mxu0 0.0
    %5391 = vmatprep.subr.mxu0 0.0
    %5392 = vmatpush1.msra.mxu0 0.0
    %5393 = vmatprep.subr.mxu0 0.0
    %5394 = vmatpush1.msra.mxu0 0.0
    %5395 = vmatprep.subr.mxu0 0.0
    %5396 = vmatpush1.msra.mxu0 0.0
    %5397 = vmatprep.subr.mxu0 0.0
    %5398 = vmatpush1.msra.mxu0 0.0
    %5399 = vmatprep.subr.mxu0 0.0
    %5400 = vmatpush1.msra.mxu0 0.0
    %5401 = vmatprep.subr.mxu0 0.0
    %5402 = vmatpush1.msra.mxu0 0.0
    %5403 = vmatprep.subr.mxu0 0.0
    %5404 = vmatpush1.msra.mxu0 0.0
    %5405 = vmatprep.subr.mxu0 0.0
    %5406 = vmatpush1.msra.mxu0 %v4745
    %5407 = vmatprep.subr.mxu0 0.0
    %5408 = vmatpush1.msra.mxu0 %v4744
    %5409 = vmatprep.subr.mxu0 0.0
    %5410 = vmatpush1.msra.mxu0 %v4743
    %5411 = vmatprep.subr.mxu0 0.0
    %5412 = vmatpush2.msra.mxu0 0.0
    %5413 = vmatprep.subr.mxu0 0.0
    %5414 = vmatpush2.msra.mxu0 0.0
    %5415 = vmatprep.subr.mxu0 0.0
    %5416 = vmatpush2.msra.mxu0 0.0
    %5417 = vmatprep.subr.mxu0 0.0
    %5418 = vmatpush2.msra.mxu0 0.0
    %5419 = vmatprep.subr.mxu0 0.0
    %5420 = vmatpush2.msra.mxu0 0.0
    %5421 = vmatprep.subr.mxu0 0.0
    %5422 = vmatpush2.msra.mxu0 0.0
    %5423 = vmatprep.subr.mxu0 0.0
    %5424 = vmatpush2.msra.mxu0 0.0
    %5425 = vmatprep.subr.mxu0 0.0
    %5426 = vmatpush2.msra.mxu0 0.0
    %5427 = vmatprep.subr.mxu0 0.0
    %5428 = vmatpush2.msra.mxu0 0.0
    %5429 = vmatprep.subr.mxu0 0.0
    %5430 = vmatpush2.msra.mxu0 0.0
    %5431 = vmatprep.subr.mxu0 0.0
    %5432 = vmatpush2.msra.mxu0 0.0
    %5433 = vmatprep.subr.mxu0 0.0
    %5434 = vmatpush2.msra.mxu0 0.0
    %5435 = vmatprep.subr.mxu0 0.0
    %5436 = vmatpush2.msra.mxu0 0.0
    %5437 = vmatprep.subr.mxu0 0.0
    %5438 = vmatpush2.msra.mxu0 0.0
    %5439 = vmatprep.subr.mxu0 0.0
    %5440 = vmatpush2.msra.mxu0 0.0
    %5441 = vmatprep.subr.mxu0 0.0
    %5442 = vmatpush2.msra.mxu0 0.0
    %5443 = vmatprep.mubr.f32.mxu0 0.0
    %5444 = vmatmul.mubr.f32.gmra.mxu0 %v5377
    %v5445 = vpop.f32.mrf.mxu0
    %v5446 = vadd.f32 0.0, %v5445
    %v5447 = vpop.f32.mrf.mxu0
    %5448 = vdwg.mxu0
    %v5449 = vrcp.pop %v5446
    %v5450 = vmul.f32 %v5375, %v5449
    %v5451 = vpack.c.bf16 %v5450, %v5450
    %5452 = vrot.lane.b32.xlu0 %v4747, 72
    %v5453 = vpop.permute.xlu0 %5452
    %5454 = vrot.lane.b32.xlu0 %v4748, 72
    %v5455 = vpop.permute.xlu0 %5454
    %v5458 = vsel %vm1237, %v5451, 0
    %v5461 = vsel %vm121, %v5455, 0
    %5463 = vmatprep.subr.bf16.mxu0 0
    %5464 = vmatpush1.bf16.msra.mxu0 0
    %5465 = vmatprep.subr.bf16.mxu0 0
    %5466 = vmatpush1.bf16.msra.mxu0 0
    %5467 = vmatprep.subr.bf16.mxu0 0
    %5468 = vmatpush1.bf16.msra.mxu0 0
    %5469 = vmatprep.subr.bf16.mxu0 0
    %5470 = vmatpush1.bf16.msra.mxu0 0
    %5471 = vmatprep.subr.bf16.mxu0 0
    %5472 = vmatpush1.bf16.msra.mxu0 0
    %5473 = vmatprep.subr.bf16.mxu0 0
    %5474 = vmatpush1.bf16.msra.mxu0 0
    %5475 = vmatprep.subr.bf16.mxu0 0
    %5476 = vmatpush1.bf16.msra.mxu0 %v5461
    %5477 = vmatprep.subr.bf16.mxu0 0
    %5478 = vmatpush1.bf16.msra.mxu0 %v5453
    %5479 = vmatprep.subr.bf16.mxu0 0
    %5480 = vmatpush2.bf16.msra.mxu0 0
    %5481 = vmatprep.subr.bf16.mxu0 0
    %5482 = vmatpush2.bf16.msra.mxu0 0
    %5483 = vmatprep.subr.bf16.mxu0 0
    %5484 = vmatpush2.bf16.msra.mxu0 0
    %5485 = vmatprep.subr.bf16.mxu0 0
    %5486 = vmatpush2.bf16.msra.mxu0 0
    %5487 = vmatprep.subr.bf16.mxu0 0
    %5488 = vmatpush2.bf16.msra.mxu0 0
    %5489 = vmatprep.subr.bf16.mxu0 0
    %5490 = vmatpush2.bf16.msra.mxu0 0
    %5491 = vmatprep.subr.bf16.mxu0 0
    %5492 = vmatpush2.bf16.msra.mxu0 0
    %5493 = vmatprep.subr.bf16.mxu0 0
    %5494 = vmatpush2.bf16.msra.mxu0 0
    %5495 = vmatprep.mubr.bf16.mxu0 0
    %5496 = vmatmul.mubr.bf16.gmra.mxu0 %v5458
    %v5497 = vpop.f32.mrf.mxu0
    %v5498 = vadd.f32 0.0, %v5497
    %v5499 = vpop.f32.mrf.mxu0
    %v5500 = vpop.f32.mrf.mxu0
    %v5501 = vpop.f32.mrf.mxu0
    %5502 = vdwg.mxu0
    %5504 = vrot.lane.b32.xlu0 %v5120, 8
    %v5505 = vpop.permute.xlu0 %5504
    %5508 = vrot.lane.b32.xlu0 %v5309, 16
    %v5509 = vpop.permute.xlu0 %5508
    %5512 = vrot.lane.b32.xlu0 %v5498, 24
    %v5513 = vpop.permute.xlu0 %5512
    %v5515 = vsel %vm332, %v4930, %v5505
    %v5516 = vsel %vm1235, %v5515, %v5509
    %v5517 = vsel %vm1237, %v5516, %v5513
    %v5518 = vmul.f32 %v5517, 0.16666667
    %v5519 = vadd.f32 %v5518, %v4585
    %v5520 = vpack.c.bf16 %v5519, %v5519
    %v5521 = vld [vmem:[%s25] sm:$0xf]
    %v5522 = vld [vmem:[%s25 + $0x4] sm:$0xf]
    %v5523 = vld [vmem:[%s25 + $0x8] sm:$0xf]
    %v5524 = vld [vmem:[%s25 + $0xc] sm:$0xf]
    %v5525 = vld [vmem:[%s26] sm:$0x1]
    %v5527 = vlaneseq
    %v5528 = vshrl.u32 %v5527, 7
    %v5529 = vsub.s32 0, %v5528
    %v5530 = vrot.slane %v5525, %v5529
    %v5536 = vunpack.c.l.b16 %v5521
    %v5537 = vunpack.c.l.b16 %v5522
    %v5538 = vunpack.c.l.b16 %v5523
    %v5539 = vunpack.c.l.b16 %v5524
    %v5540 = vpack.c.b16 %v5537, %v5536
    %v5541 = vpack.c.b16 %v5539, %v5538
    %v5545 = vsel %vm213, %v5520, 0
    %5547 = vmatprep.subr.bf16.mxu0 0
    %5548 = vmatpush1.bf16.msra.mxu0 0
    %5549 = vmatprep.subr.bf16.mxu0 0
    %5550 = vmatpush1.bf16.msra.mxu0 0
    %5551 = vmatprep.subr.bf16.mxu0 0
    %5552 = vmatpush1.bf16.msra.mxu0 0
    %5553 = vmatprep.subr.bf16.mxu0 0
    %5554 = vmatpush1.bf16.msra.mxu0 0
    %5555 = vmatprep.subr.bf16.mxu0 0
    %5556 = vmatpush1.bf16.msra.mxu0 0
    %5557 = vmatprep.subr.bf16.mxu0 0
    %5558 = vmatpush1.bf16.msra.mxu0 0
    %5559 = vmatprep.subr.bf16.mxu0 0
    %5560 = vmatpush1.bf16.msra.mxu0 %v5541
    %5561 = vmatprep.subr.bf16.mxu0 0
    %5562 = vmatpush1.bf16.msra.mxu0 %v5540
    %5563 = vmatprep.subr.bf16.mxu0 0
    %5564 = vmatpush2.bf16.msra.mxu0 0
    %5565 = vmatprep.subr.bf16.mxu0 0
    %5566 = vmatpush2.bf16.msra.mxu0 0
    %5567 = vmatprep.subr.bf16.mxu0 0
    %5568 = vmatpush2.bf16.msra.mxu0 0
    %5569 = vmatprep.subr.bf16.mxu0 0
    %5570 = vmatpush2.bf16.msra.mxu0 0
    %5571 = vmatprep.subr.bf16.mxu0 0
    %5572 = vmatpush2.bf16.msra.mxu0 0
    %5573 = vmatprep.subr.bf16.mxu0 0
    %5574 = vmatpush2.bf16.msra.mxu0 0
    %5575 = vmatprep.subr.bf16.mxu0 0
    %5576 = vmatpush2.bf16.msra.mxu0 0
    %5577 = vmatprep.subr.bf16.mxu0 0
    %5578 = vmatpush2.bf16.msra.mxu0 0
    %5579 = vmatprep.mubr.bf16.mxu0 0
    %5580 = vmatmul.mubr.bf16.gmra.mxu0 %v5545
    %v5581 = vpop.f32.mrf.mxu0
    %v5582 = vadd.f32 %v5530, %v5581
    %v5583 = vpop.f32.mrf.mxu0
    %v5584 = vpop.f32.mrf.mxu0
    %v5585 = vpop.f32.mrf.mxu0
    %5586 = vdwg.mxu0
    %vm5587 = vcmask 17408
    %v5588 = vsel %vm5587, %v5582, -inf
    %5589 = vmax.xlane.f32.xlu0 %v5588
    %v5590 = vpop.xlane.xlu0 %5589
    %v5591 = vsub.f32 %v5582, %v5590
    %v5592 = vmul.f32 %v5591, 1.442695
    %v5593 = vpow.pop %v5592
    %v5594 = vsel %vm5587, %v5593, 0.0
    %5595 = vadd.xlane.f32.xlu0 %v5594
    %v5596 = vpop.xlane.xlu0 %5595
    %v5597 = vrcp.pop %v5596
    %v5598 = vmul.f32 %v5593, %v5597
    %5599 = vst.msk [vmem:[#allocation2] sm:$0x3] %vm5587, %v5598
    // Predicated region
    $region110: #{acd_forward.1} parent=1 // pred_check
      _
    $region111: #{acd_forward.1} parent=1 // pred_check_branch
      %5601 = sbr.rel (0) target = $region113
    $region112: #{acd_forward.1} parent=1 // pred_region
      %s5603 = ssub.s32 32, 32
      %5604 = vsyncadd [#allocation3], %s5603
      %s5606 = sshll.u32 [#allocation2], 4
      %s5607 = int_to_ptr.vmem [resolvable:$true] %s5606
      %5609 = dma.vmem_to_hbm [thread:$0]  %s5607, 32, %s27, [#allocation3]
    $region113: #{acd_forward.1} parent=1 // pred_fallthru
      _
    // Predicated region
    $region114: #{acd_forward.1} parent=1 // pred_check
      _
    $region115: #{acd_forward.1} parent=1 // pred_check_branch
      %5611 = sbr.rel (0) target = $region117
    $region116: #{acd_forward.1} parent=1 // pred_region
      %5612 = dma.done [#allocation3], 32
    $region117: #{acd_forward.1} parent=1 // pred_fallthru
      _
    %5613 = vsyncpa [#allocation3], 1

</llo_original>
